<compile_context>
chip_gen: v5e
topology: v5e:2x2
jax: 0.10.0
libtpu: 0.0.40
codegen_flags: <defaults>
</compile_context>

<pallas_src>
import jax
import jax.numpy as jnp
from jax.experimental import pallas as pl
from jax.experimental.pallas import tpu as pltpu

# Lane granularity of the padded graph-feature dim.  128 is native everywhere;
# at real P2M widths (hidden=192, Fin~963) set 256 on v6e/v7x for full MXU width.
LANE_MULT = 128


def round_up(v, m):
    return ((v + m - 1) // m) * m


def _vmem_limit_bytes():
    """~0.75 * physical VMEM, capped at 100 MiB: ~48 MiB on v7x, 96 MiB on v5e/v6e."""
    try:
        cap = pltpu.get_tpu_info().vmem_capacity_bytes
        return int(min(0.75 * cap, 100 * 1024 * 1024))
    except Exception:
        return 64 * 1024 * 1024


# ----------------------------------------------------------------------------
# Pallas kernel 1: 3x3 "same" conv + bias + ReLU, taps built inside the kernel
# from the flattened zero-padded image (no HBM im2col), bf16 in / bf16 out.
# ----------------------------------------------------------------------------
def conv3x3_relu(x_nhwc, w, b):
    """x_nhwc: (B, H, W, Cin), w: (3, 3, Cin, Cout), b: (Cout,) -> (B, H, W, Cout) bf16."""
    B, H, W, Cin = x_nhwc.shape
    Cout = w.shape[-1]
    Wp = W + 2
    rows_out = H * Wp                      # includes 2 junk cols/row, cropped outside
    rows_in = (H + 2) * Wp + 8             # +8 pad rows keep the last shifted slice in-bounds

    xp = jnp.pad(x_nhwc, ((0, 0), (1, 1), (1, 1), (0, 0))).astype(jnp.bfloat16)
    xflat = jnp.pad(xp.reshape(B, (H + 2) * Wp, Cin), ((0, 0), (0, 8), (0, 0)))
    wt = w.reshape(9, Cin, Cout).astype(jnp.bfloat16)
    b2 = b.reshape(1, Cout).astype(jnp.float32)

    def kernel(x_ref, w_ref, b_ref, o_ref):
        acc = jnp.zeros((rows_out, Cout), jnp.float32)
        for dh in range(3):
            for dw in range(3):
                sh = dh * Wp + dw                                 # static shift per tap
                v = x_ref[0, sh:sh + rows_out, :]                 # (rows_out, Cin) bf16
                acc = acc + jnp.dot(v, w_ref[dh * 3 + dw],
                                    preferred_element_type=jnp.float32)
        o_ref[0] = jnp.maximum(acc + b_ref[...], 0.0).astype(jnp.bfloat16)

    cost = pl.CostEstimate(
        flops=2 * B * rows_out * 9 * Cin * Cout,
        transcendentals=0,
        bytes_accessed=B * rows_in * Cin * 2 + 9 * Cin * Cout * 2 + B * rows_out * Cout * 2)

    out = pl.pallas_call(
        kernel,
        out_shape=jax.ShapeDtypeStruct((B, rows_out, Cout), jnp.bfloat16),
        grid=(B,),
        in_specs=[
            pl.BlockSpec((1, rows_in, Cin), lambda i: (i, 0, 0)),
            pl.BlockSpec((9, Cin, Cout), lambda i: (0, 0, 0)),
            pl.BlockSpec((1, Cout), lambda i: (0, 0)),
        ],
        out_specs=pl.BlockSpec((1, rows_out, Cout), lambda i: (i, 0, 0)),
        compiler_params=pltpu.CompilerParams(
            dimension_semantics=("parallel",),
            vmem_limit_bytes=_vmem_limit_bytes()),
        cost_estimate=cost,
    )(xflat, wt, b2)
    # TODO(synk): at 224^2 VGG scale, tile H with a halo (extra row-tile grid axis)
    # and fuse the 2x2 maxpool epilogue into the kernel to halve the HBM stores.
    return out.reshape(B, H, Wp, Cout)[:, :, :W, :]


def maxpool2(x):  # NHWC 2x2 stride 2 (plain JAX; tiny at these sizes)
    B, H, W, C = x.shape
    return x.reshape(B, H // 2, 2, W // 2, 2, C).max(axis=(2, 4))


def encoder(params, cfg, img_nchw):
    x = jnp.transpose(img_nchw, (0, 2, 3, 1))        # NCHW -> NHWC
    feats = []
    for i in range(len(cfg["enc_channels"])):
        x = conv3x3_relu(x, params[f"enc_w{i}"], params[f"enc_b{i}"])
        x = maxpool2(x)
        feats.append(x)
    return feats


# ----------------------------------------------------------------------------
# Pallas kernel 2: a whole GBottleneck (optionally + the model's final GConv)
# in one call.  Grid = (layers,), per-layer weights streamed; x / adj DMA'd once
# into single-copy VMEM scratch; current layer input lives in bf16 scratch.
#   layer l:  out = adj @ (x @ W_l) + x @ Wloop_l + b_l
#   l == 0              : conv1            -> residual stream h, cur
#   odd  mid layers     : resblock conv1   -> cur
#   even mid layers     : resblock conv2   -> h = (h + out) * 0.5, cur = h
#   l == L_bneck - 1    : conv2 (no ReLU)  -> x_out (or cur=relu(out) if fused)
#   l == L_bneck (fused): final GConv      -> x_out
# ----------------------------------------------------------------------------
def gbottleneck_pallas(x_bf16, adj_bf16, w_stack, b_stack, activation, fuse_final=False):
    """x_bf16: (B, N, FP) bf16 zero-padded, adj_bf16: (N, N) bf16,
    w_stack: (L, FP, 2*FP) bf16 ([:,:, :FP]=W, [:,:, FP:]=W_loop), b_stack: (L, 1, FP) f32.
    Returns (x_out, x_hidden), both (B, N, FP) f32."""
    B, N, FP = x_bf16.shape
    L = w_stack.shape[0]
    lb_last = L - 2 if fuse_final else L - 1   # index of the bottleneck's conv2

    def kernel(x_hbm, adj_hbm, w_ref, b_ref, out_ref, hid_ref,
               adj_scr, cur_scr, h_scr, dma_sem):
        l = pl.program_id(0)
        is_first = l == 0
        is_mid = jnp.logical_and(l > 0, l < lb_last)
        is_odd = (l % 2) == 1
        is_conv2 = l == lb_last

        @pl.when(is_first)
        def _():                                   # one-shot DMA of x and adj into VMEM
            cpa = pltpu.make_async_copy(adj_hbm, adj_scr, dma_sem.at[0])
            cpx = pltpu.make_async_copy(x_hbm, cur_scr, dma_sem.at[1])
            cpa.start()
            cpx.start()
            cpa.wait()
            cpx.wait()

        wl = w_ref[0]                              # (FP, 2*FP) bf16, loaded once per layer
        bias = b_ref[0]                            # (1, FP) f32
        adj = adj_scr[...]

        def act_fn(v):
            return jnp.maximum(v, 0.0) if activation else v

        for bi in range(B):                        # B collapsed into the block (static loop)
            cur = cur_scr[bi]                      # (N, FP) bf16: this layer's input
            sup = jnp.dot(cur, wl, preferred_element_type=jnp.float32)     # x @ [W|Wloop]
            out = jnp.dot(adj, sup[:, :FP].astype(jnp.bfloat16),
                          preferred_element_type=jnp.float32)
            out = out + sup[:, FP:] + bias

            @pl.when(is_first)
            def _():                               # conv1 -> start residual stream
                r = act_fn(out)
                h_scr[bi] = r
                cur_scr[bi] = r.astype(jnp.bfloat16)

            @pl.when(jnp.logical_and(is_mid, is_odd))
            def _():                               # resblock conv1
                cur_scr[bi] = act_fn(out).astype(jnp.bfloat16)

            @pl.when(jnp.logical_and(is_mid, jnp.logical_not(is_odd)))
            def _():                               # resblock conv2 + residual (f32)
                h = (h_scr[bi] + act_fn(out)) * 0.5
                h_scr[bi] = h
                cur_scr[bi] = h.astype(jnp.bfloat16)

            @pl.when(is_conv2)
            def _():                               # bottleneck conv2 (no ReLU)
                hid_ref[bi] = h_scr[bi]
                if fuse_final:                     # feed ReLU'd x_out to the fused final GConv
                    cur_scr[bi] = act_fn(out).astype(jnp.bfloat16)
                else:
                    out_ref[bi] = out

            if fuse_final:
                @pl.when(l == lb_last + 1)
                def _():                           # fused final GConv output
                    out_ref[bi] = out

    flops_layer = 2 * N * FP * 2 * FP + 2 * N * N * FP
    cost = pl.CostEstimate(
        flops=B * L * flops_layer,
        transcendentals=0,
        bytes_accessed=(x_bf16.size * 2 + adj_bf16.size * 2 + w_stack.size * 2
                        + b_stack.size * 4 + 2 * B * N * FP * 4))

    out, hid = pl.pallas_call(
        kernel,
        out_shape=(jax.ShapeDtypeStruct((B, N, FP), jnp.float32),
                   jax.ShapeDtypeStruct((B, N, FP), jnp.float32)),
        grid=(L,),
        in_specs=[
            pl.BlockSpec(memory_space=pl.ANY),                   # x      (manual DMA once)
            pl.BlockSpec(memory_space=pl.ANY),                   # adj    (manual DMA once)
            pl.BlockSpec((1, FP, 2 * FP), lambda l: (l, 0, 0)),  # per-layer fused weights
            pl.BlockSpec((1, 1, FP), lambda l: (l, 0, 0)),       # per-layer bias
        ],
        out_specs=(pl.BlockSpec((B, N, FP), lambda l: (0, 0, 0)),
                   pl.BlockSpec((B, N, FP), lambda l: (0, 0, 0))),
        scratch_shapes=[pltpu.VMEM((N, N), jnp.bfloat16),        # adjacency (single copy)
                        pltpu.VMEM((B, N, FP), jnp.bfloat16),    # current layer input
                        pltpu.VMEM((B, N, FP), jnp.float32),     # residual stream h
                        pltpu.SemaphoreType.DMA((2,))],
        compiler_params=pltpu.CompilerParams(
            dimension_semantics=("arbitrary",),
            vmem_limit_bytes=_vmem_limit_bytes()),
        cost_estimate=cost,
    )(x_bf16, adj_bf16, w_stack, b_stack)
    return out, hid


# ----------------------------------------------------------------------------
# Graph glue: unpooling, perspective projection + bilinear grid_sample
# ----------------------------------------------------------------------------
def gunpooling(unpool_idx, x):
    # new vertex = midpoint of the two edge endpoints (data-dependent gather, JAX glue)
    new = x[:, unpool_idx, :]          # (B, E, 2, F)
    new = 0.5 * new.sum(axis=2)
    return jnp.concatenate([x, new], axis=1)


def grid_sample_bilinear_nhwc(feat, grid_xy):
    """feat: (B, H, W, C) NHWC; grid_xy: (B, N, 2) in [-1, 1], (x=w, y=h).
    align_corners=True mapping (original Pixel2Mesh PyTorch default)."""
    B, H, W, C = feat.shape
    x = (grid_xy[..., 0] + 1.0) * 0.5 * (W - 1)
    y = (grid_xy[..., 1] + 1.0) * 0.5 * (H - 1)
    x0 = jnp.floor(x)
    y0 = jnp.floor(y)
    x1 = x0 + 1.0
    y1 = y0 + 1.0
    wx1 = x - x0
    wx0 = 1.0 - wx1
    wy1 = y - y0
    wy0 = 1.0 - wy1
    feat_flat = feat.reshape(B, H * W, C)

    def gather(ix, iy):
        valid = ((ix >= 0) & (ix <= W - 1) & (iy >= 0) & (iy <= H - 1)).astype(jnp.float32)
        ixc = jnp.clip(ix, 0, W - 1).astype(jnp.int32)
        iyc = jnp.clip(iy, 0, H - 1).astype(jnp.int32)
        idx = iyc * W + ixc                                            # (B, N)
        vals = jnp.take_along_axis(feat_flat, idx[..., None], axis=1)  # (B, N, C)
        return vals.astype(jnp.float32) * valid[..., None]

    return (gather(x0, y0) * (wx0 * wy0)[..., None]
            + gather(x1, y0) * (wx1 * wy0)[..., None]
            + gather(x0, y1) * (wx0 * wy1)[..., None]
            + gather(x1, y1) * (wx1 * wy1)[..., None])


def gprojection(cfg, img_shape, img_feats, inputs):
    half_resolution = (img_shape - 1.0) / 2.0
    camera_c_offset = jnp.array(cfg["camera_c"], jnp.float32) - half_resolution
    positions = inputs + jnp.array(cfg["mesh_pos"], jnp.float32)
    z = positions[:, :, 2]                   # z_threshold = 0 -> no bound clamp
    w = -cfg["camera_f"][0] * (positions[:, :, 0] / z) + camera_c_offset[0]
    h = cfg["camera_f"][1] * (positions[:, :, 1] / z) + camera_c_offset[1]
    w = jnp.clip(w / half_resolution[0], -1.0, 1.0)
    h = jnp.clip(h / half_resolution[1], -1.0, 1.0)
    grid = jnp.stack([w, h], axis=-1)
    feats = [grid_sample_bilinear_nhwc(f, grid) for f in img_feats]
    return jnp.concatenate([inputs] + feats, axis=2)


def pad_cast(x, fp):
    return jnp.pad(x, ((0, 0), (0, 0), (0, fp - x.shape[-1]))).astype(jnp.bfloat16)


def stage_fps(cfg):
    feat = sum(cfg["enc_channels"]) + cfg["coord_dim"]
    h, c, lh = cfg["hidden_dim"], cfg["coord_dim"], cfg["last_hidden_dim"]
    fp0 = round_up(max(feat, h, c), LANE_MULT)
    fp1 = round_up(max(feat + h, h, c), LANE_MULT)
    fp2 = round_up(max(feat + h, h, lh, c), LANE_MULT)
    return fp0, fp1, fp2


# ----------------------------------------------------------------------------
# Full P2MModel forward
# ----------------------------------------------------------------------------
def p2m_forward(params, cfg, img_nchw):
    B = img_nchw.shape[0]
    coord = cfg["coord_dim"]
    hidden = cfg["hidden_dim"]
    act = cfg["gconv_activation"]
    fp0, fp1, fp2 = stage_fps(cfg)

    img_feats = encoder(params, cfg, img_nchw)
    # image_feature_shape -> np.array([W, H])
    img_shape = jnp.array([img_nchw.shape[-1], img_nchw.shape[-2]], jnp.float32)
    init_pts = jnp.broadcast_to(params["init_pts"][None], (B,) + params["init_pts"].shape)

    # --- stage 0 ----------------------------------------------------------
    x = gprojection(cfg, img_shape, img_feats, init_pts)               # (B, N1, 31)
    x1o, hid0 = gbottleneck_pallas(pad_cast(x, fp0), params["adj0"],
                                   params["gcn0_w"], params["gcn0_b"], act)
    x1 = x1o[:, :, :coord]
    x1_up = gunpooling(params["unpool0"], x1)

    # --- stage 1 ----------------------------------------------------------
    xp = gprojection(cfg, img_shape, img_feats, x1)
    xcat = jnp.concatenate([xp, hid0[:, :, :hidden]], axis=2)
    xup = gunpooling(params["unpool0"], xcat)
    x2o, hid1 = gbottleneck_pallas(pad_cast(xup, fp1), params["adj1"],
                                   params["gcn1_w"], params["gcn1_b"], act)
    x2 = x2o[:, :, :coord]
    x2_up = gunpooling(params["unpool1"], x2)

    # --- stage 2 (final ReLU + GConv fused in as the 15th streamed layer) --
    xp = gprojection(cfg, img_shape, img_feats, x2)
    xcat = jnp.concatenate([xp, hid1[:, :, :hidden]], axis=2)
    xup = gunpooling(params["unpool1"], xcat)
    w23 = jnp.concatenate([params["gcn2_w"], params["gconv_final_w"]], axis=0)
    b23 = jnp.concatenate([params["gcn2_b"], params["gconv_final_b"]], axis=0)
    x3o, _ = gbottleneck_pallas(pad_cast(xup, fp2), params["adj2"],
                                w23, b23, act, fuse_final=True)
    x3 = x3o[:, :, :coord]

    reconst = None  # nn_decoder is None for this backbone configuration
    return {
        "pred_coord": [x1, x2, x3],
        "pred_coord_before_deform": [init_pts, x1_up, x2_up],
        "reconst": reconst,
    }


# ----------------------------------------------------------------------------
# Deterministic synthetic parameters / ellipsoid
# ----------------------------------------------------------------------------
def ring_adj(n):
    idx = jnp.arange(n)
    a = jnp.zeros((n, n), jnp.float32)
    a = a.at[idx, (idx + 1) % n].set(0.5)
    a = a.at[idx, (idx - 1) % n].set(0.5)
    return a


def pack_gconv_layers(layers, fp):
    """layers: list of (W, W_loop, b) -> (w_stack bf16 (L,fp,2fp), b_stack f32 (L,1,fp))."""
    ws, bs = [], []
    for w, wl, b in layers:
        fin, fout = w.shape
        wp = jnp.zeros((fp, 2 * fp), jnp.float32)
        wp = wp.at[:fin, :fout].set(w)
        wp = wp.at[:fin, fp:fp + fout].set(wl)
        bp = jnp.zeros((1, fp), jnp.float32).at[0, :fout].set(b)
        ws.append(wp)
        bs.append(bp)
    return jnp.stack(ws).astype(jnp.bfloat16), jnp.stack(bs)


def init_params(key, cfg):
    keys = list(jax.random.split(key, 256))
    kit = iter(keys)
    p = {}
    fp0, fp1, fp2 = stage_fps(cfg)

    # encoder weights
    chans = [3] + list(cfg["enc_channels"])
    for i in range(len(cfg["enc_channels"])):
        cin, cout = chans[i], chans[i + 1]
        p[f"enc_w{i}"] = 0.1 * jax.random.normal(next(kit), (3, 3, cin, cout), jnp.float32)
        p[f"enc_b{i}"] = jnp.zeros((cout,), jnp.float32)

    def make_gconv(fin, fout):
        w = 0.1 * jax.random.normal(next(kit), (fin, fout), jnp.float32)
        wl = 0.1 * jax.random.normal(next(kit), (fin, fout), jnp.float32)
        b = jnp.zeros((fout,), jnp.float32)
        return (w, wl, b)

    def make_gbottleneck(in_dim, hidden, out_dim, fp, block_num=6):
        layers = [make_gconv(in_dim, hidden)]
        for _ in range(block_num):
            layers.append(make_gconv(hidden, hidden))   # resblock conv1
            layers.append(make_gconv(hidden, hidden))   # resblock conv2
        layers.append(make_gconv(hidden, out_dim))
        return pack_gconv_layers(layers, fp)

    features_dim = sum(cfg["enc_channels"]) + cfg["coord_dim"]
    p["gcn0_w"], p["gcn0_b"] = make_gbottleneck(features_dim, cfg["hidden_dim"],
                                                cfg["coord_dim"], fp0)
    p["gcn1_w"], p["gcn1_b"] = make_gbottleneck(features_dim + cfg["hidden_dim"],
                                                cfg["hidden_dim"], cfg["coord_dim"], fp1)
    p["gcn2_w"], p["gcn2_b"] = make_gbottleneck(features_dim + cfg["hidden_dim"],
                                                cfg["hidden_dim"], cfg["last_hidden_dim"], fp2)
    # final GConv packed with the stage-2 pad so it can be streamed in the same stack
    p["gconv_final_w"], p["gconv_final_b"] = pack_gconv_layers(
        [make_gconv(cfg["last_hidden_dim"], cfg["coord_dim"])], fp2)

    # synthetic ellipsoid: 3 mesh levels, ring adjacency, edge-midpoint unpooling
    n1 = cfg["n_verts"]
    n2, n3 = 2 * n1, 4 * n1
    p["init_pts"] = jax.random.uniform(next(kit), (n1, cfg["coord_dim"]),
                                       jnp.float32, minval=-0.25, maxval=0.25)
    p["adj0"] = ring_adj(n1).astype(jnp.bfloat16)
    p["adj1"] = ring_adj(n2).astype(jnp.bfloat16)
    p["adj2"] = ring_adj(n3).astype(jnp.bfloat16)
    p["unpool0"] = jnp.stack([jnp.arange(n1), (jnp.arange(n1) + 1) % n1], axis=1).astype(jnp.int32)
    p["unpool1"] = jnp.stack([jnp.arange(n2), (jnp.arange(n2) + 1) % n2], axis=1).astype(jnp.int32)
    return p


if __name__ == "__main__":
    cfg = {
        "enc_channels": (4, 8, 16),     # features_dim = 28 (+ coord_dim 3 = 31)
        "hidden_dim": 32,
        "last_hidden_dim": 16,
        "coord_dim": 3,
        "gconv_activation": True,
        "n_verts": 16,                  # mesh levels: 16 -> 32 -> 64 vertices
        "camera_f": (8.0, 8.0),
        "camera_c": (8.0, 8.0),
        "mesh_pos": (0.0, 0.0, -0.8),
        "z_threshold": 0.0,
    }

    key = jax.random.PRNGKey(0)
    kp, kx = jax.random.split(key)
    params = init_params(kp, cfg)
    images = jax.random.normal(kx, (2, 3, 16, 16), jnp.float32)   # NCHW like PyTorch

    fwd = jax.jit(lambda prm, img: p2m_forward(prm, cfg, img))
    out = fwd(params, images)
    jax.block_until_ready(out["pred_coord"])
    jax.block_until_ready(out["pred_coord_before_deform"])

    # sanity on shapes implied by the forward
    assert out["pred_coord"][0].shape == (2, 16, 3)
    assert out["pred_coord"][1].shape == (2, 32, 3)
    assert out["pred_coord"][2].shape == (2, 64, 3)
    assert out["pred_coord_before_deform"][1].shape == (2, 32, 3)
    assert out["pred_coord_before_deform"][2].shape == (2, 64, 3)
    assert out["reconst"] is None

    print("KERNEL_OK")
</pallas_src>

<mosaic_0001>
module attributes {stable_mosaic.version = 11 : i64} {
  func.func @kernel(%arg0: i32, %arg1: memref<1x332x3xbf16, #tpu.memory_space<vmem>>, %arg2: memref<9x3x4xbf16, #tpu.memory_space<vmem>>, %arg3: memref<1x4xf32, #tpu.memory_space<vmem>>, %arg4: memref<1x288x4xbf16, #tpu.memory_space<vmem>>) attributes {dimension_semantics = [#tpu.dimension_semantics<parallel>], iteration_bounds = array<i64: 2>, scalar_prefetch = 0 : i64, scratch_operands = 0 : i64, tpu.core_type = #tpu.core_type<tc>, window_params = [{transform_indices = @transform_0, window_bounds = array<i64: 1, 332, 3>}, {pipeline_mode = #tpu.pipeline_mode<synchronous>, transform_indices = @transform_1, window_bounds = array<i64: 9, 3, 4>}, {pipeline_mode = #tpu.pipeline_mode<synchronous>, transform_indices = @transform_2, window_bounds = array<i64: 1, 4>}, {transform_indices = @transform_3, window_bounds = array<i64: 1, 288, 4>}]} {
    %cst = arith.constant 0.000000e+00 : f32
    %0 = vector.broadcast %cst : f32 to vector<288x4xf32>
    %c0 = arith.constant 0 : index
    %c0_0 = arith.constant 0 : index
    %c0_1 = arith.constant 0 : index
    %1 = vector.load %arg1[%c0, %c0_0, %c0_1] : memref<1x332x3xbf16, #tpu.memory_space<vmem>>, vector<1x288x3xbf16>
    %2 = vector.shape_cast %1 : vector<1x288x3xbf16> to vector<288x3xbf16>
    %c0_2 = arith.constant 0 : index
    %c0_3 = arith.constant 0 : index
    %c0_4 = arith.constant 0 : index
    %3 = vector.load %arg2[%c0_2, %c0_3, %c0_4] : memref<9x3x4xbf16, #tpu.memory_space<vmem>>, vector<1x3x4xbf16>
    %4 = vector.shape_cast %3 : vector<1x3x4xbf16> to vector<3x4xbf16>
    %cst_5 = arith.constant dense<0.000000e+00> : vector<288x4xf32>
    %5 = tpu.matmul %2, %4, %cst_5 {dimension_numbers = #tpu.dot_dimension_numbers<[1], [0], [0], [1], [0, 0, 1, 1], [], []>} : vector<288x3xbf16>, vector<3x4xbf16>, vector<288x4xf32> -> vector<288x4xf32>
    %6 = arith.addf %0, %5 : vector<288x4xf32>
    %c0_6 = arith.constant 0 : index
    %c1 = arith.constant 1 : index
    %c0_7 = arith.constant 0 : index
    %7 = vector.load %arg1[%c0_6, %c1, %c0_7] : memref<1x332x3xbf16, #tpu.memory_space<vmem>>, vector<1x288x3xbf16>
    %8 = vector.shape_cast %7 : vector<1x288x3xbf16> to vector<288x3xbf16>
    %c1_8 = arith.constant 1 : index
    %c0_9 = arith.constant 0 : index
    %c0_10 = arith.constant 0 : index
    %9 = vector.load %arg2[%c1_8, %c0_9, %c0_10] : memref<9x3x4xbf16, #tpu.memory_space<vmem>>, vector<1x3x4xbf16>
    %10 = vector.shape_cast %9 : vector<1x3x4xbf16> to vector<3x4xbf16>
    %cst_11 = arith.constant dense<0.000000e+00> : vector<288x4xf32>
    %11 = tpu.matmul %8, %10, %cst_11 {dimension_numbers = #tpu.dot_dimension_numbers<[1], [0], [0], [1], [0, 0, 1, 1], [], []>} : vector<288x3xbf16>, vector<3x4xbf16>, vector<288x4xf32> -> vector<288x4xf32>
    %12 = arith.addf %6, %11 : vector<288x4xf32>
    %c0_12 = arith.constant 0 : index
    %c2 = arith.constant 2 : index
    %c0_13 = arith.constant 0 : index
    %13 = vector.load %arg1[%c0_12, %c2, %c0_13] : memref<1x332x3xbf16, #tpu.memory_space<vmem>>, vector<1x288x3xbf16>
    %14 = vector.shape_cast %13 : vector<1x288x3xbf16> to vector<288x3xbf16>
    %c2_14 = arith.constant 2 : index
    %c0_15 = arith.constant 0 : index
    %c0_16 = arith.constant 0 : index
    %15 = vector.load %arg2[%c2_14, %c0_15, %c0_16] : memref<9x3x4xbf16, #tpu.memory_space<vmem>>, vector<1x3x4xbf16>
    %16 = vector.shape_cast %15 : vector<1x3x4xbf16> to vector<3x4xbf16>
    %cst_17 = arith.constant dense<0.000000e+00> : vector<288x4xf32>
    %17 = tpu.matmul %14, %16, %cst_17 {dimension_numbers = #tpu.dot_dimension_numbers<[1], [0], [0], [1], [0, 0, 1, 1], [], []>} : vector<288x3xbf16>, vector<3x4xbf16>, vector<288x4xf32> -> vector<288x4xf32>
    %18 = arith.addf %12, %17 : vector<288x4xf32>
    %c0_18 = arith.constant 0 : index
    %c18 = arith.constant 18 : index
    %c0_19 = arith.constant 0 : index
    %19 = vector.load %arg1[%c0_18, %c18, %c0_19] : memref<1x332x3xbf16, #tpu.memory_space<vmem>>, vector<1x288x3xbf16>
    %20 = vector.shape_cast %19 : vector<1x288x3xbf16> to vector<288x3xbf16>
    %c3 = arith.constant 3 : index
    %c0_20 = arith.constant 0 : index
    %c0_21 = arith.constant 0 : index
    %21 = vector.load %arg2[%c3, %c0_20, %c0_21] : memref<9x3x4xbf16, #tpu.memory_space<vmem>>, vector<1x3x4xbf16>
    %22 = vector.shape_cast %21 : vector<1x3x4xbf16> to vector<3x4xbf16>
    %cst_22 = arith.constant dense<0.000000e+00> : vector<288x4xf32>
    %23 = tpu.matmul %20, %22, %cst_22 {dimension_numbers = #tpu.dot_dimension_numbers<[1], [0], [0], [1], [0, 0, 1, 1], [], []>} : vector<288x3xbf16>, vector<3x4xbf16>, vector<288x4xf32> -> vector<288x4xf32>
    %24 = arith.addf %18, %23 : vector<288x4xf32>
    %c0_23 = arith.constant 0 : index
    %c19 = arith.constant 19 : index
    %c0_24 = arith.constant 0 : index
    %25 = vector.load %arg1[%c0_23, %c19, %c0_24] : memref<1x332x3xbf16, #tpu.memory_space<vmem>>, vector<1x288x3xbf16>
    %26 = vector.shape_cast %25 : vector<1x288x3xbf16> to vector<288x3xbf16>
    %c4 = arith.constant 4 : index
    %c0_25 = arith.constant 0 : index
    %c0_26 = arith.constant 0 : index
    %27 = vector.load %arg2[%c4, %c0_25, %c0_26] : memref<9x3x4xbf16, #tpu.memory_space<vmem>>, vector<1x3x4xbf16>
    %28 = vector.shape_cast %27 : vector<1x3x4xbf16> to vector<3x4xbf16>
    %cst_27 = arith.constant dense<0.000000e+00> : vector<288x4xf32>
    %29 = tpu.matmul %26, %28, %cst_27 {dimension_numbers = #tpu.dot_dimension_numbers<[1], [0], [0], [1], [0, 0, 1, 1], [], []>} : vector<288x3xbf16>, vector<3x4xbf16>, vector<288x4xf32> -> vector<288x4xf32>
    %30 = arith.addf %24, %29 : vector<288x4xf32>
    %c0_28 = arith.constant 0 : index
    %c20 = arith.constant 20 : index
    %c0_29 = arith.constant 0 : index
    %31 = vector.load %arg1[%c0_28, %c20, %c0_29] : memref<1x332x3xbf16, #tpu.memory_space<vmem>>, vector<1x288x3xbf16>
    %32 = vector.shape_cast %31 : vector<1x288x3xbf16> to vector<288x3xbf16>
    %c5 = arith.constant 5 : index
    %c0_30 = arith.constant 0 : index
    %c0_31 = arith.constant 0 : index
    %33 = vector.load %arg2[%c5, %c0_30, %c0_31] : memref<9x3x4xbf16, #tpu.memory_space<vmem>>, vector<1x3x4xbf16>
    %34 = vector.shape_cast %33 : vector<1x3x4xbf16> to vector<3x4xbf16>
    %cst_32 = arith.constant dense<0.000000e+00> : vector<288x4xf32>
    %35 = tpu.matmul %32, %34, %cst_32 {dimension_numbers = #tpu.dot_dimension_numbers<[1], [0], [0], [1], [0, 0, 1, 1], [], []>} : vector<288x3xbf16>, vector<3x4xbf16>, vector<288x4xf32> -> vector<288x4xf32>
    %36 = arith.addf %30, %35 : vector<288x4xf32>
    %c0_33 = arith.constant 0 : index
    %c36 = arith.constant 36 : index
    %c0_34 = arith.constant 0 : index
    %37 = vector.load %arg1[%c0_33, %c36, %c0_34] : memref<1x332x3xbf16, #tpu.memory_space<vmem>>, vector<1x288x3xbf16>
    %38 = vector.shape_cast %37 : vector<1x288x3xbf16> to vector<288x3xbf16>
    %c6 = arith.constant 6 : index
    %c0_35 = arith.constant 0 : index
    %c0_36 = arith.constant 0 : index
    %39 = vector.load %arg2[%c6, %c0_35, %c0_36] : memref<9x3x4xbf16, #tpu.memory_space<vmem>>, vector<1x3x4xbf16>
    %40 = vector.shape_cast %39 : vector<1x3x4xbf16> to vector<3x4xbf16>
    %cst_37 = arith.constant dense<0.000000e+00> : vector<288x4xf32>
    %41 = tpu.matmul %38, %40, %cst_37 {dimension_numbers = #tpu.dot_dimension_numbers<[1], [0], [0], [1], [0, 0, 1, 1], [], []>} : vector<288x3xbf16>, vector<3x4xbf16>, vector<288x4xf32> -> vector<288x4xf32>
    %42 = arith.addf %36, %41 : vector<288x4xf32>
    %c0_38 = arith.constant 0 : index
    %c37 = arith.constant 37 : index
    %c0_39 = arith.constant 0 : index
    %43 = vector.load %arg1[%c0_38, %c37, %c0_39] : memref<1x332x3xbf16, #tpu.memory_space<vmem>>, vector<1x288x3xbf16>
    %44 = vector.shape_cast %43 : vector<1x288x3xbf16> to vector<288x3xbf16>
    %c7 = arith.constant 7 : index
    %c0_40 = arith.constant 0 : index
    %c0_41 = arith.constant 0 : index
    %45 = vector.load %arg2[%c7, %c0_40, %c0_41] : memref<9x3x4xbf16, #tpu.memory_space<vmem>>, vector<1x3x4xbf16>
    %46 = vector.shape_cast %45 : vector<1x3x4xbf16> to vector<3x4xbf16>
    %cst_42 = arith.constant dense<0.000000e+00> : vector<288x4xf32>
    %47 = tpu.matmul %44, %46, %cst_42 {dimension_numbers = #tpu.dot_dimension_numbers<[1], [0], [0], [1], [0, 0, 1, 1], [], []>} : vector<288x3xbf16>, vector<3x4xbf16>, vector<288x4xf32> -> vector<288x4xf32>
    %48 = arith.addf %42, %47 : vector<288x4xf32>
    %c0_43 = arith.constant 0 : index
    %c38 = arith.constant 38 : index
    %c0_44 = arith.constant 0 : index
    %49 = vector.load %arg1[%c0_43, %c38, %c0_44] : memref<1x332x3xbf16, #tpu.memory_space<vmem>>, vector<1x288x3xbf16>
    %50 = vector.shape_cast %49 : vector<1x288x3xbf16> to vector<288x3xbf16>
    %c8 = arith.constant 8 : index
    %c0_45 = arith.constant 0 : index
    %c0_46 = arith.constant 0 : index
    %51 = vector.load %arg2[%c8, %c0_45, %c0_46] : memref<9x3x4xbf16, #tpu.memory_space<vmem>>, vector<1x3x4xbf16>
    %52 = vector.shape_cast %51 : vector<1x3x4xbf16> to vector<3x4xbf16>
    %cst_47 = arith.constant dense<0.000000e+00> : vector<288x4xf32>
    %53 = tpu.matmul %50, %52, %cst_47 {dimension_numbers = #tpu.dot_dimension_numbers<[1], [0], [0], [1], [0, 0, 1, 1], [], []>} : vector<288x3xbf16>, vector<3x4xbf16>, vector<288x4xf32> -> vector<288x4xf32>
    %54 = arith.addf %48, %53 : vector<288x4xf32>
    %c0_48 = arith.constant 0 : index
    %c0_49 = arith.constant 0 : index
    %55 = vector.load %arg3[%c0_48, %c0_49] : memref<1x4xf32, #tpu.memory_space<vmem>>, vector<1x4xf32>
    %56 = vector.broadcast %55 : vector<1x4xf32> to vector<288x4xf32>
    %57 = arith.addf %54, %56 : vector<288x4xf32>
    %cst_50 = arith.constant 0.000000e+00 : f32
    %58 = vector.broadcast %cst_50 : f32 to vector<288x4xf32>
    %59 = arith.maximumf %57, %58 : vector<288x4xf32>
    %60 = arith.truncf %59 : vector<288x4xf32> to vector<288x4xbf16>
    %c0_51 = arith.constant 0 : index
    %c0_52 = arith.constant 0 : index
    %c0_53 = arith.constant 0 : index
    %61 = vector.load %arg4[%c0_51, %c0_52, %c0_53] : memref<1x288x4xbf16, #tpu.memory_space<vmem>>, vector<1x288x4xbf16>
    %62 = vector.shape_cast %61 : vector<1x288x4xbf16> to vector<288x4xbf16>
    %63 = vector.shape_cast %60 : vector<288x4xbf16> to vector<1x288x4xbf16>
    tpu.vector_store %arg4[%c0_51, %c0_52, %c0_53], %63 {strides = array<i32>} : memref<1x288x4xbf16, #tpu.memory_space<vmem>>, vector<1x288x4xbf16>,
    return
  }
  func.func @transform_0(%arg0: i32) -> (i32, i32, i32) {
    %c0_i32 = arith.constant 0 : i32
    %c0_i32_0 = arith.constant 0 : i32
    %c0_i32_1 = arith.constant 0 : i32
    return %arg0, %c0_i32, %c0_i32_0 : i32, i32, i32
  }
  func.func @transform_1(%arg0: i32) -> (i32, i32, i32) {
    %c0_i32 = arith.constant 0 : i32
    %c0_i32_0 = arith.constant 0 : i32
    %c0_i32_1 = arith.constant 0 : i32
    %c0_i32_2 = arith.constant 0 : i32
    return %c0_i32, %c0_i32_0, %c0_i32_1 : i32, i32, i32
  }
  func.func @transform_2(%arg0: i32) -> (i32, i32) {
    %c0_i32 = arith.constant 0 : i32
    %c0_i32_0 = arith.constant 0 : i32
    %c0_i32_1 = arith.constant 0 : i32
    return %c0_i32, %c0_i32_0 : i32, i32
  }
  func.func @transform_3(%arg0: i32) -> (i32, i32, i32) {
    %c0_i32 = arith.constant 0 : i32
    %c0_i32_0 = arith.constant 0 : i32
    %c0_i32_1 = arith.constant 0 : i32
    return %arg0, %c0_i32, %c0_i32_0 : i32, i32, i32
  }
}

module attributes {stable_mosaic.version = 11 : i64} {
  func.func @kernel(%arg0: i32, %arg1: memref<1x108x4xbf16, #tpu.memory_space<vmem>>, %arg2: memref<9x4x8xbf16, #tpu.memory_space<vmem>>, %arg3: memref<1x8xf32, #tpu.memory_space<vmem>>, %arg4: memref<1x80x8xbf16, #tpu.memory_space<vmem>>) attributes {dimension_semantics = [#tpu.dimension_semantics<parallel>], iteration_bounds = array<i64: 2>, scalar_prefetch = 0 : i64, scratch_operands = 0 : i64, tpu.core_type = #tpu.core_type<tc>, window_params = [{transform_indices = @transform_0, window_bounds = array<i64: 1, 108, 4>}, {pipeline_mode = #tpu.pipeline_mode<synchronous>, transform_indices = @transform_1, window_bounds = array<i64: 9, 4, 8>}, {pipeline_mode = #tpu.pipeline_mode<synchronous>, transform_indices = @transform_2, window_bounds = array<i64: 1, 8>}, {transform_indices = @transform_3, window_bounds = array<i64: 1, 80, 8>}]} {
    %cst = arith.constant 0.000000e+00 : f32
    %0 = vector.broadcast %cst : f32 to vector<80x8xf32>
    %c0 = arith.constant 0 : index
    %c0_0 = arith.constant 0 : index
    %c0_1 = arith.constant 0 : index
    %1 = vector.load %arg1[%c0, %c0_0, %c0_1] : memref<1x108x4xbf16, #tpu.memory_space<vmem>>, vector<1x80x4xbf16>
    %2 = vector.shape_cast %1 : vector<1x80x4xbf16> to vector<80x4xbf16>
    %c0_2 = arith.constant 0 : index
    %c0_3 = arith.constant 0 : index
    %c0_4 = arith.constant 0 : index
    %3 = vector.load %arg2[%c0_2, %c0_3, %c0_4] : memref<9x4x8xbf16, #tpu.memory_space<vmem>>, vector<1x4x8xbf16>
    %4 = vector.shape_cast %3 : vector<1x4x8xbf16> to vector<4x8xbf16>
    %cst_5 = arith.constant dense<0.000000e+00> : vector<80x8xf32>
    %5 = tpu.matmul %2, %4, %cst_5 {dimension_numbers = #tpu.dot_dimension_numbers<[1], [0], [0], [1], [0, 0, 1, 1], [], []>} : vector<80x4xbf16>, vector<4x8xbf16>, vector<80x8xf32> -> vector<80x8xf32>
    %6 = arith.addf %0, %5 : vector<80x8xf32>
    %c0_6 = arith.constant 0 : index
    %c1 = arith.constant 1 : index
    %c0_7 = arith.constant 0 : index
    %7 = vector.load %arg1[%c0_6, %c1, %c0_7] : memref<1x108x4xbf16, #tpu.memory_space<vmem>>, vector<1x80x4xbf16>
    %8 = vector.shape_cast %7 : vector<1x80x4xbf16> to vector<80x4xbf16>
    %c1_8 = arith.constant 1 : index
    %c0_9 = arith.constant 0 : index
    %c0_10 = arith.constant 0 : index
    %9 = vector.load %arg2[%c1_8, %c0_9, %c0_10] : memref<9x4x8xbf16, #tpu.memory_space<vmem>>, vector<1x4x8xbf16>
    %10 = vector.shape_cast %9 : vector<1x4x8xbf16> to vector<4x8xbf16>
    %cst_11 = arith.constant dense<0.000000e+00> : vector<80x8xf32>
    %11 = tpu.matmul %8, %10, %cst_11 {dimension_numbers = #tpu.dot_dimension_numbers<[1], [0], [0], [1], [0, 0, 1, 1], [], []>} : vector<80x4xbf16>, vector<4x8xbf16>, vector<80x8xf32> -> vector<80x8xf32>
    %12 = arith.addf %6, %11 : vector<80x8xf32>
    %c0_12 = arith.constant 0 : index
    %c2 = arith.constant 2 : index
    %c0_13 = arith.constant 0 : index
    %13 = vector.load %arg1[%c0_12, %c2, %c0_13] : memref<1x108x4xbf16, #tpu.memory_space<vmem>>, vector<1x80x4xbf16>
    %14 = vector.shape_cast %13 : vector<1x80x4xbf16> to vector<80x4xbf16>
    %c2_14 = arith.constant 2 : index
    %c0_15 = arith.constant 0 : index
    %c0_16 = arith.constant 0 : index
    %15 = vector.load %arg2[%c2_14, %c0_15, %c0_16] : memref<9x4x8xbf16, #tpu.memory_space<vmem>>, vector<1x4x8xbf16>
    %16 = vector.shape_cast %15 : vector<1x4x8xbf16> to vector<4x8xbf16>
    %cst_17 = arith.constant dense<0.000000e+00> : vector<80x8xf32>
    %17 = tpu.matmul %14, %16, %cst_17 {dimension_numbers = #tpu.dot_dimension_numbers<[1], [0], [0], [1], [0, 0, 1, 1], [], []>} : vector<80x4xbf16>, vector<4x8xbf16>, vector<80x8xf32> -> vector<80x8xf32>
    %18 = arith.addf %12, %17 : vector<80x8xf32>
    %c0_18 = arith.constant 0 : index
    %c10 = arith.constant 10 : index
    %c0_19 = arith.constant 0 : index
    %19 = vector.load %arg1[%c0_18, %c10, %c0_19] : memref<1x108x4xbf16, #tpu.memory_space<vmem>>, vector<1x80x4xbf16>
    %20 = vector.shape_cast %19 : vector<1x80x4xbf16> to vector<80x4xbf16>
    %c3 = arith.constant 3 : index
    %c0_20 = arith.constant 0 : index
    %c0_21 = arith.constant 0 : index
    %21 = vector.load %arg2[%c3, %c0_20, %c0_21] : memref<9x4x8xbf16, #tpu.memory_space<vmem>>, vector<1x4x8xbf16>
    %22 = vector.shape_cast %21 : vector<1x4x8xbf16> to vector<4x8xbf16>
    %cst_22 = arith.constant dense<0.000000e+00> : vector<80x8xf32>
    %23 = tpu.matmul %20, %22, %cst_22 {dimension_numbers = #tpu.dot_dimension_numbers<[1], [0], [0], [1], [0, 0, 1, 1], [], []>} : vector<80x4xbf16>, vector<4x8xbf16>, vector<80x8xf32> -> vector<80x8xf32>
    %24 = arith.addf %18, %23 : vector<80x8xf32>
    %c0_23 = arith.constant 0 : index
    %c11 = arith.constant 11 : index
    %c0_24 = arith.constant 0 : index
    %25 = vector.load %arg1[%c0_23, %c11, %c0_24] : memref<1x108x4xbf16, #tpu.memory_space<vmem>>, vector<1x80x4xbf16>
    %26 = vector.shape_cast %25 : vector<1x80x4xbf16> to vector<80x4xbf16>
    %c4 = arith.constant 4 : index
    %c0_25 = arith.constant 0 : index
    %c0_26 = arith.constant 0 : index
    %27 = vector.load %arg2[%c4, %c0_25, %c0_26] : memref<9x4x8xbf16, #tpu.memory_space<vmem>>, vector<1x4x8xbf16>
    %28 = vector.shape_cast %27 : vector<1x4x8xbf16> to vector<4x8xbf16>
    %cst_27 = arith.constant dense<0.000000e+00> : vector<80x8xf32>
    %29 = tpu.matmul %26, %28, %cst_27 {dimension_numbers = #tpu.dot_dimension_numbers<[1], [0], [0], [1], [0, 0, 1, 1], [], []>} : vector<80x4xbf16>, vector<4x8xbf16>, vector<80x8xf32> -> vector<80x8xf32>
    %30 = arith.addf %24, %29 : vector<80x8xf32>
    %c0_28 = arith.constant 0 : index
    %c12 = arith.constant 12 : index
    %c0_29 = arith.constant 0 : index
    %31 = vector.load %arg1[%c0_28, %c12, %c0_29] : memref<1x108x4xbf16, #tpu.memory_space<vmem>>, vector<1x80x4xbf16>
    %32 = vector.shape_cast %31 : vector<1x80x4xbf16> to vector<80x4xbf16>
    %c5 = arith.constant 5 : index
    %c0_30 = arith.constant 0 : index
    %c0_31 = arith.constant 0 : index
    %33 = vector.load %arg2[%c5, %c0_30, %c0_31] : memref<9x4x8xbf16, #tpu.memory_space<vmem>>, vector<1x4x8xbf16>
    %34 = vector.shape_cast %33 : vector<1x4x8xbf16> to vector<4x8xbf16>
    %cst_32 = arith.constant dense<0.000000e+00> : vector<80x8xf32>
    %35 = tpu.matmul %32, %34, %cst_32 {dimension_numbers = #tpu.dot_dimension_numbers<[1], [0], [0], [1], [0, 0, 1, 1], [], []>} : vector<80x4xbf16>, vector<4x8xbf16>, vector<80x8xf32> -> vector<80x8xf32>
    %36 = arith.addf %30, %35 : vector<80x8xf32>
    %c0_33 = arith.constant 0 : index
    %c20 = arith.constant 20 : index
    %c0_34 = arith.constant 0 : index
    %37 = vector.load %arg1[%c0_33, %c20, %c0_34] : memref<1x108x4xbf16, #tpu.memory_space<vmem>>, vector<1x80x4xbf16>
    %38 = vector.shape_cast %37 : vector<1x80x4xbf16> to vector<80x4xbf16>
    %c6 = arith.constant 6 : index
    %c0_35 = arith.constant 0 : index
    %c0_36 = arith.constant 0 : index
    %39 = vector.load %arg2[%c6, %c0_35, %c0_36] : memref<9x4x8xbf16, #tpu.memory_space<vmem>>, vector<1x4x8xbf16>
    %40 = vector.shape_cast %39 : vector<1x4x8xbf16> to vector<4x8xbf16>
    %cst_37 = arith.constant dense<0.000000e+00> : vector<80x8xf32>
    %41 = tpu.matmul %38, %40, %cst_37 {dimension_numbers = #tpu.dot_dimension_numbers<[1], [0], [0], [1], [0, 0, 1, 1], [], []>} : vector<80x4xbf16>, vector<4x8xbf16>, vector<80x8xf32> -> vector<80x8xf32>
    %42 = arith.addf %36, %41 : vector<80x8xf32>
    %c0_38 = arith.constant 0 : index
    %c21 = arith.constant 21 : index
    %c0_39 = arith.constant 0 : index
    %43 = vector.load %arg1[%c0_38, %c21, %c0_39] : memref<1x108x4xbf16, #tpu.memory_space<vmem>>, vector<1x80x4xbf16>
    %44 = vector.shape_cast %43 : vector<1x80x4xbf16> to vector<80x4xbf16>
    %c7 = arith.constant 7 : index
    %c0_40 = arith.constant 0 : index
    %c0_41 = arith.constant 0 : index
    %45 = vector.load %arg2[%c7, %c0_40, %c0_41] : memref<9x4x8xbf16, #tpu.memory_space<vmem>>, vector<1x4x8xbf16>
    %46 = vector.shape_cast %45 : vector<1x4x8xbf16> to vector<4x8xbf16>
    %cst_42 = arith.constant dense<0.000000e+00> : vector<80x8xf32>
    %47 = tpu.matmul %44, %46, %cst_42 {dimension_numbers = #tpu.dot_dimension_numbers<[1], [0], [0], [1], [0, 0, 1, 1], [], []>} : vector<80x4xbf16>, vector<4x8xbf16>, vector<80x8xf32> -> vector<80x8xf32>
    %48 = arith.addf %42, %47 : vector<80x8xf32>
    %c0_43 = arith.constant 0 : index
    %c22 = arith.constant 22 : index
    %c0_44 = arith.constant 0 : index
    %49 = vector.load %arg1[%c0_43, %c22, %c0_44] : memref<1x108x4xbf16, #tpu.memory_space<vmem>>, vector<1x80x4xbf16>
    %50 = vector.shape_cast %49 : vector<1x80x4xbf16> to vector<80x4xbf16>
    %c8 = arith.constant 8 : index
    %c0_45 = arith.constant 0 : index
    %c0_46 = arith.constant 0 : index
    %51 = vector.load %arg2[%c8, %c0_45, %c0_46] : memref<9x4x8xbf16, #tpu.memory_space<vmem>>, vector<1x4x8xbf16>
    %52 = vector.shape_cast %51 : vector<1x4x8xbf16> to vector<4x8xbf16>
    %cst_47 = arith.constant dense<0.000000e+00> : vector<80x8xf32>
    %53 = tpu.matmul %50, %52, %cst_47 {dimension_numbers = #tpu.dot_dimension_numbers<[1], [0], [0], [1], [0, 0, 1, 1], [], []>} : vector<80x4xbf16>, vector<4x8xbf16>, vector<80x8xf32> -> vector<80x8xf32>
    %54 = arith.addf %48, %53 : vector<80x8xf32>
    %c0_48 = arith.constant 0 : index
    %c0_49 = arith.constant 0 : index
    %55 = vector.load %arg3[%c0_48, %c0_49] : memref<1x8xf32, #tpu.memory_space<vmem>>, vector<1x8xf32>
    %56 = vector.broadcast %55 : vector<1x8xf32> to vector<80x8xf32>
    %57 = arith.addf %54, %56 : vector<80x8xf32>
    %cst_50 = arith.constant 0.000000e+00 : f32
    %58 = vector.broadcast %cst_50 : f32 to vector<80x8xf32>
    %59 = arith.maximumf %57, %58 : vector<80x8xf32>
    %60 = arith.truncf %59 : vector<80x8xf32> to vector<80x8xbf16>
    %c0_51 = arith.constant 0 : index
    %c0_52 = arith.constant 0 : index
    %c0_53 = arith.constant 0 : index
    %61 = vector.load %arg4[%c0_51, %c0_52, %c0_53] : memref<1x80x8xbf16, #tpu.memory_space<vmem>>, vector<1x80x8xbf16>
    %62 = vector.shape_cast %61 : vector<1x80x8xbf16> to vector<80x8xbf16>
    %63 = vector.shape_cast %60 : vector<80x8xbf16> to vector<1x80x8xbf16>
    tpu.vector_store %arg4[%c0_51, %c0_52, %c0_53], %63 {strides = array<i32>} : memref<1x80x8xbf16, #tpu.memory_space<vmem>>, vector<1x80x8xbf16>,
    return
  }
  func.func @transform_0(%arg0: i32) -> (i32, i32, i32) {
    %c0_i32 = arith.constant 0 : i32
    %c0_i32_0 = arith.constant 0 : i32
    %c0_i32_1 = arith.constant 0 : i32
    return %arg0, %c0_i32, %c0_i32_0 : i32, i32, i32
  }
  func.func @transform_1(%arg0: i32) -> (i32, i32, i32) {
    %c0_i32 = arith.constant 0 : i32
    %c0_i32_0 = arith.constant 0 : i32
    %c0_i32_1 = arith.constant 0 : i32
    %c0_i32_2 = arith.constant 0 : i32
    return %c0_i32, %c0_i32_0, %c0_i32_1 : i32, i32, i32
  }
  func.func @transform_2(%arg0: i32) -> (i32, i32) {
    %c0_i32 = arith.constant 0 : i32
    %c0_i32_0 = arith.constant 0 : i32
    %c0_i32_1 = arith.constant 0 : i32
    return %c0_i32, %c0_i32_0 : i32, i32
  }
  func.func @transform_3(%arg0: i32) -> (i32, i32, i32) {
    %c0_i32 = arith.constant 0 : i32
    %c0_i32_0 = arith.constant 0 : i32
    %c0_i32_1 = arith.constant 0 : i32
    return %arg0, %c0_i32, %c0_i32_0 : i32, i32, i32
  }
}

module attributes {stable_mosaic.version = 11 : i64} {
  func.func @kernel(%arg0: i32, %arg1: memref<1x44x8xbf16, #tpu.memory_space<vmem>>, %arg2: memref<9x8x16xbf16, #tpu.memory_space<vmem>>, %arg3: memref<1x16xf32, #tpu.memory_space<vmem>>, %arg4: memref<1x24x16xbf16, #tpu.memory_space<vmem>>) attributes {dimension_semantics = [#tpu.dimension_semantics<parallel>], iteration_bounds = array<i64: 2>, scalar_prefetch = 0 : i64, scratch_operands = 0 : i64, tpu.core_type = #tpu.core_type<tc>, window_params = [{transform_indices = @transform_0, window_bounds = array<i64: 1, 44, 8>}, {pipeline_mode = #tpu.pipeline_mode<synchronous>, transform_indices = @transform_1, window_bounds = array<i64: 9, 8, 16>}, {pipeline_mode = #tpu.pipeline_mode<synchronous>, transform_indices = @transform_2, window_bounds = array<i64: 1, 16>}, {transform_indices = @transform_3, window_bounds = array<i64: 1, 24, 16>}]} {
    %cst = arith.constant 0.000000e+00 : f32
    %0 = vector.broadcast %cst : f32 to vector<24x16xf32>
    %c0 = arith.constant 0 : index
    %c0_0 = arith.constant 0 : index
    %c0_1 = arith.constant 0 : index
    %1 = vector.load %arg1[%c0, %c0_0, %c0_1] : memref<1x44x8xbf16, #tpu.memory_space<vmem>>, vector<1x24x8xbf16>
    %2 = vector.shape_cast %1 : vector<1x24x8xbf16> to vector<24x8xbf16>
    %c0_2 = arith.constant 0 : index
    %c0_3 = arith.constant 0 : index
    %c0_4 = arith.constant 0 : index
    %3 = vector.load %arg2[%c0_2, %c0_3, %c0_4] : memref<9x8x16xbf16, #tpu.memory_space<vmem>>, vector<1x8x16xbf16>
    %4 = vector.shape_cast %3 : vector<1x8x16xbf16> to vector<8x16xbf16>
    %cst_5 = arith.constant dense<0.000000e+00> : vector<24x16xf32>
    %5 = tpu.matmul %2, %4, %cst_5 {dimension_numbers = #tpu.dot_dimension_numbers<[1], [0], [0], [1], [0, 0, 1, 1], [], []>} : vector<24x8xbf16>, vector<8x16xbf16>, vector<24x16xf32> -> vector<24x16xf32>
    %6 = arith.addf %0, %5 : vector<24x16xf32>
    %c0_6 = arith.constant 0 : index
    %c1 = arith.constant 1 : index
    %c0_7 = arith.constant 0 : index
    %7 = vector.load %arg1[%c0_6, %c1, %c0_7] : memref<1x44x8xbf16, #tpu.memory_space<vmem>>, vector<1x24x8xbf16>
    %8 = vector.shape_cast %7 : vector<1x24x8xbf16> to vector<24x8xbf16>
    %c1_8 = arith.constant 1 : index
    %c0_9 = arith.constant 0 : index
    %c0_10 = arith.constant 0 : index
    %9 = vector.load %arg2[%c1_8, %c0_9, %c0_10] : memref<9x8x16xbf16, #tpu.memory_space<vmem>>, vector<1x8x16xbf16>
    %10 = vector.shape_cast %9 : vector<1x8x16xbf16> to vector<8x16xbf16>
    %cst_11 = arith.constant dense<0.000000e+00> : vector<24x16xf32>
    %11 = tpu.matmul %8, %10, %cst_11 {dimension_numbers = #tpu.dot_dimension_numbers<[1], [0], [0], [1], [0, 0, 1, 1], [], []>} : vector<24x8xbf16>, vector<8x16xbf16>, vector<24x16xf32> -> vector<24x16xf32>
    %12 = arith.addf %6, %11 : vector<24x16xf32>
    %c0_12 = arith.constant 0 : index
    %c2 = arith.constant 2 : index
    %c0_13 = arith.constant 0 : index
    %13 = vector.load %arg1[%c0_12, %c2, %c0_13] : memref<1x44x8xbf16, #tpu.memory_space<vmem>>, vector<1x24x8xbf16>
    %14 = vector.shape_cast %13 : vector<1x24x8xbf16> to vector<24x8xbf16>
    %c2_14 = arith.constant 2 : index
    %c0_15 = arith.constant 0 : index
    %c0_16 = arith.constant 0 : index
    %15 = vector.load %arg2[%c2_14, %c0_15, %c0_16] : memref<9x8x16xbf16, #tpu.memory_space<vmem>>, vector<1x8x16xbf16>
    %16 = vector.shape_cast %15 : vector<1x8x16xbf16> to vector<8x16xbf16>
    %cst_17 = arith.constant dense<0.000000e+00> : vector<24x16xf32>
    %17 = tpu.matmul %14, %16, %cst_17 {dimension_numbers = #tpu.dot_dimension_numbers<[1], [0], [0], [1], [0, 0, 1, 1], [], []>} : vector<24x8xbf16>, vector<8x16xbf16>, vector<24x16xf32> -> vector<24x16xf32>
    %18 = arith.addf %12, %17 : vector<24x16xf32>
    %c0_18 = arith.constant 0 : index
    %c6 = arith.constant 6 : index
    %c0_19 = arith.constant 0 : index
    %19 = vector.load %arg1[%c0_18, %c6, %c0_19] : memref<1x44x8xbf16, #tpu.memory_space<vmem>>, vector<1x24x8xbf16>
    %20 = vector.shape_cast %19 : vector<1x24x8xbf16> to vector<24x8xbf16>
    %c3 = arith.constant 3 : index
    %c0_20 = arith.constant 0 : index
    %c0_21 = arith.constant 0 : index
    %21 = vector.load %arg2[%c3, %c0_20, %c0_21] : memref<9x8x16xbf16, #tpu.memory_space<vmem>>, vector<1x8x16xbf16>
    %22 = vector.shape_cast %21 : vector<1x8x16xbf16> to vector<8x16xbf16>
    %cst_22 = arith.constant dense<0.000000e+00> : vector<24x16xf32>
    %23 = tpu.matmul %20, %22, %cst_22 {dimension_numbers = #tpu.dot_dimension_numbers<[1], [0], [0], [1], [0, 0, 1, 1], [], []>} : vector<24x8xbf16>, vector<8x16xbf16>, vector<24x16xf32> -> vector<24x16xf32>
    %24 = arith.addf %18, %23 : vector<24x16xf32>
    %c0_23 = arith.constant 0 : index
    %c7 = arith.constant 7 : index
    %c0_24 = arith.constant 0 : index
    %25 = vector.load %arg1[%c0_23, %c7, %c0_24] : memref<1x44x8xbf16, #tpu.memory_space<vmem>>, vector<1x24x8xbf16>
    %26 = vector.shape_cast %25 : vector<1x24x8xbf16> to vector<24x8xbf16>
    %c4 = arith.constant 4 : index
    %c0_25 = arith.constant 0 : index
    %c0_26 = arith.constant 0 : index
    %27 = vector.load %arg2[%c4, %c0_25, %c0_26] : memref<9x8x16xbf16, #tpu.memory_space<vmem>>, vector<1x8x16xbf16>
    %28 = vector.shape_cast %27 : vector<1x8x16xbf16> to vector<8x16xbf16>
    %cst_27 = arith.constant dense<0.000000e+00> : vector<24x16xf32>
    %29 = tpu.matmul %26, %28, %cst_27 {dimension_numbers = #tpu.dot_dimension_numbers<[1], [0], [0], [1], [0, 0, 1, 1], [], []>} : vector<24x8xbf16>, vector<8x16xbf16>, vector<24x16xf32> -> vector<24x16xf32>
    %30 = arith.addf %24, %29 : vector<24x16xf32>
    %c0_28 = arith.constant 0 : index
    %c8 = arith.constant 8 : index
    %c0_29 = arith.constant 0 : index
    %31 = vector.load %arg1[%c0_28, %c8, %c0_29] : memref<1x44x8xbf16, #tpu.memory_space<vmem>>, vector<1x24x8xbf16>
    %32 = vector.shape_cast %31 : vector<1x24x8xbf16> to vector<24x8xbf16>
    %c5 = arith.constant 5 : index
    %c0_30 = arith.constant 0 : index
    %c0_31 = arith.constant 0 : index
    %33 = vector.load %arg2[%c5, %c0_30, %c0_31] : memref<9x8x16xbf16, #tpu.memory_space<vmem>>, vector<1x8x16xbf16>
    %34 = vector.shape_cast %33 : vector<1x8x16xbf16> to vector<8x16xbf16>
    %cst_32 = arith.constant dense<0.000000e+00> : vector<24x16xf32>
    %35 = tpu.matmul %32, %34, %cst_32 {dimension_numbers = #tpu.dot_dimension_numbers<[1], [0], [0], [1], [0, 0, 1, 1], [], []>} : vector<24x8xbf16>, vector<8x16xbf16>, vector<24x16xf32> -> vector<24x16xf32>
    %36 = arith.addf %30, %35 : vector<24x16xf32>
    %c0_33 = arith.constant 0 : index
    %c12 = arith.constant 12 : index
    %c0_34 = arith.constant 0 : index
    %37 = vector.load %arg1[%c0_33, %c12, %c0_34] : memref<1x44x8xbf16, #tpu.memory_space<vmem>>, vector<1x24x8xbf16>
    %38 = vector.shape_cast %37 : vector<1x24x8xbf16> to vector<24x8xbf16>
    %c6_35 = arith.constant 6 : index
    %c0_36 = arith.constant 0 : index
    %c0_37 = arith.constant 0 : index
    %39 = vector.load %arg2[%c6_35, %c0_36, %c0_37] : memref<9x8x16xbf16, #tpu.memory_space<vmem>>, vector<1x8x16xbf16>
    %40 = vector.shape_cast %39 : vector<1x8x16xbf16> to vector<8x16xbf16>
    %cst_38 = arith.constant dense<0.000000e+00> : vector<24x16xf32>
    %41 = tpu.matmul %38, %40, %cst_38 {dimension_numbers = #tpu.dot_dimension_numbers<[1], [0], [0], [1], [0, 0, 1, 1], [], []>} : vector<24x8xbf16>, vector<8x16xbf16>, vector<24x16xf32> -> vector<24x16xf32>
    %42 = arith.addf %36, %41 : vector<24x16xf32>
    %c0_39 = arith.constant 0 : index
    %c13 = arith.constant 13 : index
    %c0_40 = arith.constant 0 : index
    %43 = vector.load %arg1[%c0_39, %c13, %c0_40] : memref<1x44x8xbf16, #tpu.memory_space<vmem>>, vector<1x24x8xbf16>
    %44 = vector.shape_cast %43 : vector<1x24x8xbf16> to vector<24x8xbf16>
    %c7_41 = arith.constant 7 : index
    %c0_42 = arith.constant 0 : index
    %c0_43 = arith.constant 0 : index
    %45 = vector.load %arg2[%c7_41, %c0_42, %c0_43] : memref<9x8x16xbf16, #tpu.memory_space<vmem>>, vector<1x8x16xbf16>
    %46 = vector.shape_cast %45 : vector<1x8x16xbf16> to vector<8x16xbf16>
    %cst_44 = arith.constant dense<0.000000e+00> : vector<24x16xf32>
    %47 = tpu.matmul %44, %46, %cst_44 {dimension_numbers = #tpu.dot_dimension_numbers<[1], [0], [0], [1], [0, 0, 1, 1], [], []>} : vector<24x8xbf16>, vector<8x16xbf16>, vector<24x16xf32> -> vector<24x16xf32>
    %48 = arith.addf %42, %47 : vector<24x16xf32>
    %c0_45 = arith.constant 0 : index
    %c14 = arith.constant 14 : index
    %c0_46 = arith.constant 0 : index
    %49 = vector.load %arg1[%c0_45, %c14, %c0_46] : memref<1x44x8xbf16, #tpu.memory_space<vmem>>, vector<1x24x8xbf16>
    %50 = vector.shape_cast %49 : vector<1x24x8xbf16> to vector<24x8xbf16>
    %c8_47 = arith.constant 8 : index
    %c0_48 = arith.constant 0 : index
    %c0_49 = arith.constant 0 : index
    %51 = vector.load %arg2[%c8_47, %c0_48, %c0_49] : memref<9x8x16xbf16, #tpu.memory_space<vmem>>, vector<1x8x16xbf16>
    %52 = vector.shape_cast %51 : vector<1x8x16xbf16> to vector<8x16xbf16>
    %cst_50 = arith.constant dense<0.000000e+00> : vector<24x16xf32>
    %53 = tpu.matmul %50, %52, %cst_50 {dimension_numbers = #tpu.dot_dimension_numbers<[1], [0], [0], [1], [0, 0, 1, 1], [], []>} : vector<24x8xbf16>, vector<8x16xbf16>, vector<24x16xf32> -> vector<24x16xf32>
    %54 = arith.addf %48, %53 : vector<24x16xf32>
    %c0_51 = arith.constant 0 : index
    %c0_52 = arith.constant 0 : index
    %55 = vector.load %arg3[%c0_51, %c0_52] : memref<1x16xf32, #tpu.memory_space<vmem>>, vector<1x16xf32>
    %56 = vector.broadcast %55 : vector<1x16xf32> to vector<24x16xf32>
    %57 = arith.addf %54, %56 : vector<24x16xf32>
    %cst_53 = arith.constant 0.000000e+00 : f32
    %58 = vector.broadcast %cst_53 : f32 to vector<24x16xf32>
    %59 = arith.maximumf %57, %58 : vector<24x16xf32>
    %60 = arith.truncf %59 : vector<24x16xf32> to vector<24x16xbf16>
    %c0_54 = arith.constant 0 : index
    %c0_55 = arith.constant 0 : index
    %c0_56 = arith.constant 0 : index
    %61 = vector.load %arg4[%c0_54, %c0_55, %c0_56] : memref<1x24x16xbf16, #tpu.memory_space<vmem>>, vector<1x24x16xbf16>
    %62 = vector.shape_cast %61 : vector<1x24x16xbf16> to vector<24x16xbf16>
    %63 = vector.shape_cast %60 : vector<24x16xbf16> to vector<1x24x16xbf16>
    tpu.vector_store %arg4[%c0_54, %c0_55, %c0_56], %63 {strides = array<i32>} : memref<1x24x16xbf16, #tpu.memory_space<vmem>>, vector<1x24x16xbf16>,
    return
  }
  func.func @transform_0(%arg0: i32) -> (i32, i32, i32) {
    %c0_i32 = arith.constant 0 : i32
    %c0_i32_0 = arith.constant 0 : i32
    %c0_i32_1 = arith.constant 0 : i32
    return %arg0, %c0_i32, %c0_i32_0 : i32, i32, i32
  }
  func.func @transform_1(%arg0: i32) -> (i32, i32, i32) {
    %c0_i32 = arith.constant 0 : i32
    %c0_i32_0 = arith.constant 0 : i32
    %c0_i32_1 = arith.constant 0 : i32
    %c0_i32_2 = arith.constant 0 : i32
    return %c0_i32, %c0_i32_0, %c0_i32_1 : i32, i32, i32
  }
  func.func @transform_2(%arg0: i32) -> (i32, i32) {
    %c0_i32 = arith.constant 0 : i32
    %c0_i32_0 = arith.constant 0 : i32
    %c0_i32_1 = arith.constant 0 : i32
    return %c0_i32, %c0_i32_0 : i32, i32
  }
  func.func @transform_3(%arg0: i32) -> (i32, i32, i32) {
    %c0_i32 = arith.constant 0 : i32
    %c0_i32_0 = arith.constant 0 : i32
    %c0_i32_1 = arith.constant 0 : i32
    return %arg0, %c0_i32, %c0_i32_0 : i32, i32, i32
  }
}

module attributes {stable_mosaic.version = 11 : i64} {
  func.func @kernel(%arg0: i32, %arg1: memref<2x16x128xbf16, #tpu.memory_space<any>>, %arg2: memref<16x16xbf16, #tpu.memory_space<any>>, %arg3: memref<1x128x256xbf16, #tpu.memory_space<vmem>>, %arg4: memref<1x1x128xf32, #tpu.memory_space<vmem>>, %arg5: memref<2x16x128xf32, #tpu.memory_space<vmem>>, %arg6: memref<2x16x128xf32, #tpu.memory_space<vmem>>, %arg7: memref<16x16xbf16, #tpu.memory_space<vmem>>, %arg8: memref<2x16x128xbf16, #tpu.memory_space<vmem>>, %arg9: memref<2x16x128xf32, #tpu.memory_space<vmem>>, %arg10: memref<2x!tpu.dma_semaphore, #tpu.memory_space<semaphore_mem>>) attributes {dimension_semantics = [#tpu.dimension_semantics<arbitrary>], iteration_bounds = array<i64: 14>, scalar_prefetch = 0 : i64, scratch_operands = 4 : i64, tpu.core_type = #tpu.core_type<tc>, window_params = [{}, {}, {transform_indices = @transform_2, window_bounds = array<i64: 1, 128, 256>}, {transform_indices = @transform_3, window_bounds = array<i64: 1, 1, 128>}, {pipeline_mode = #tpu.pipeline_mode<synchronous>, transform_indices = @transform_4, window_bounds = array<i64: 2, 16, 128>}, {pipeline_mode = #tpu.pipeline_mode<synchronous>, transform_indices = @transform_5, window_bounds = array<i64: 2, 16, 128>}]} {
    %c0_i32 = arith.constant 0 : i32
    %0 = arith.cmpi eq, %arg0, %c0_i32 : i32
    %c0_i32_0 = arith.constant 0 : i32
    %1 = arith.cmpi sgt, %arg0, %c0_i32_0 : i32
    %c13_i32 = arith.constant 13 : i32
    %2 = arith.cmpi slt, %arg0, %c13_i32 : i32
    %3 = arith.andi %1, %2 : i1
    %c2_i32 = arith.constant 2 : i32
    %c0_i32_1 = arith.constant 0 : i32
    %4 = arith.cmpi eq, %c2_i32, %c0_i32_1 : i32
    %c1_i32 = arith.constant 1 : i32
    %5 = arith.select %4, %c1_i32, %c2_i32 : i32
    %6 = arith.remsi %arg0, %5 : i32
    %c0_i32_2 = arith.constant 0 : i32
    %7 = arith.cmpi ne, %6, %c0_i32_2 : i32
    %c0_i32_3 = arith.constant 0 : i32
    %8 = arith.cmpi slt, %6, %c0_i32_3 : i32
    %c0_i32_4 = arith.constant 0 : i32
    %9 = arith.cmpi slt, %5, %c0_i32_4 : i32
    %10 = arith.xori %8, %9 : i1
    %11 = arith.andi %10, %7 : i1
    %12 = arith.addi %6, %5 : i32
    %13 = arith.select %11, %12, %6 : i32
    %c1_i32_5 = arith.constant 1 : i32
    %14 = arith.cmpi eq, %13, %c1_i32_5 : i32
    %c13_i32_6 = arith.constant 13 : i32
    %15 = arith.cmpi eq, %arg0, %c13_i32_6 : i32
    %16 = arith.extui %0 : i1 to i32
    %c0_i32_7 = arith.constant 0 : i32
    %17 = arith.cmpi ne, %16, %c0_i32_7 : i32
    scf.if %17 {
      %c0_i32_32 = arith.constant 0 : i32
      %65 = tpu.memref_slice %arg10[%c0_i32_32] : memref<2x!tpu.dma_semaphore, #tpu.memory_space<semaphore_mem>> -> memref<1x!tpu.dma_semaphore, #tpu.memory_space<semaphore_mem>>
      %66 = tpu.memref_squeeze %65 : memref<1x!tpu.dma_semaphore, #tpu.memory_space<semaphore_mem>> -> memref<!tpu.dma_semaphore, #tpu.memory_space<semaphore_mem>>
      tpu.enqueue_dma source(%arg2 : memref<16x16xbf16, #tpu.memory_space<any>>) target(%arg7 : memref<16x16xbf16, #tpu.memory_space<vmem>>) target_semaphore(%66 : memref<!tpu.dma_semaphore, #tpu.memory_space<semaphore_mem>>)
      %c1_i32_33 = arith.constant 1 : i32
      %67 = tpu.memref_slice %arg10[%c1_i32_33] : memref<2x!tpu.dma_semaphore, #tpu.memory_space<semaphore_mem>> -> memref<1x!tpu.dma_semaphore, #tpu.memory_space<semaphore_mem>>
      %68 = tpu.memref_squeeze %67 : memref<1x!tpu.dma_semaphore, #tpu.memory_space<semaphore_mem>> -> memref<!tpu.dma_semaphore, #tpu.memory_space<semaphore_mem>>
      tpu.enqueue_dma source(%arg1 : memref<2x16x128xbf16, #tpu.memory_space<any>>) target(%arg8 : memref<2x16x128xbf16, #tpu.memory_space<vmem>>) target_semaphore(%68 : memref<!tpu.dma_semaphore, #tpu.memory_space<semaphore_mem>>)
      %c0_i32_34 = arith.constant 0 : i32
      %69 = tpu.memref_slice %arg10[%c0_i32_34] : memref<2x!tpu.dma_semaphore, #tpu.memory_space<semaphore_mem>> -> memref<1x!tpu.dma_semaphore, #tpu.memory_space<semaphore_mem>>
      %70 = tpu.memref_squeeze %69 : memref<1x!tpu.dma_semaphore, #tpu.memory_space<semaphore_mem>> -> memref<!tpu.dma_semaphore, #tpu.memory_space<semaphore_mem>>
      tpu.wait_dma2 semaphore(%70 : memref<!tpu.dma_semaphore, #tpu.memory_space<semaphore_mem>>) src(%arg2 : memref<16x16xbf16, #tpu.memory_space<any>>) dst(%arg7 : memref<16x16xbf16, #tpu.memory_space<vmem>>)
      %c1_i32_35 = arith.constant 1 : i32
      %71 = tpu.memref_slice %arg10[%c1_i32_35] : memref<2x!tpu.dma_semaphore, #tpu.memory_space<semaphore_mem>> -> memref<1x!tpu.dma_semaphore, #tpu.memory_space<semaphore_mem>>
      %72 = tpu.memref_squeeze %71 : memref<1x!tpu.dma_semaphore, #tpu.memory_space<semaphore_mem>> -> memref<!tpu.dma_semaphore, #tpu.memory_space<semaphore_mem>>
      tpu.wait_dma2 semaphore(%72 : memref<!tpu.dma_semaphore, #tpu.memory_space<semaphore_mem>>) src(%arg1 : memref<2x16x128xbf16, #tpu.memory_space<any>>) dst(%arg8 : memref<2x16x128xbf16, #tpu.memory_space<vmem>>)
    } else {
    }
    %c0 = arith.constant 0 : index
    %c0_8 = arith.constant 0 : index
    %c0_9 = arith.constant 0 : index
    %18 = vector.load %arg3[%c0, %c0_8, %c0_9] : memref<1x128x256xbf16, #tpu.memory_space<vmem>>, vector<1x128x256xbf16>
    %19 = vector.shape_cast %18 : vector<1x128x256xbf16> to vector<128x256xbf16>
    %c0_10 = arith.constant 0 : index
    %c0_11 = arith.constant 0 : index
    %c0_12 = arith.constant 0 : index
    %20 = vector.load %arg4[%c0_10, %c0_11, %c0_12] : memref<1x1x128xf32, #tpu.memory_space<vmem>>, vector<1x1x128xf32>
    %21 = vector.shape_cast %20 : vector<1x1x128xf32> to vector<1x128xf32>
    %c0_13 = arith.constant 0 : index
    %c0_14 = arith.constant 0 : index
    %22 = vector.load %arg7[%c0_13, %c0_14] : memref<16x16xbf16, #tpu.memory_space<vmem>>, vector<16x16xbf16>
    %c0_15 = arith.constant 0 : index
    %c0_16 = arith.constant 0 : index
    %c0_17 = arith.constant 0 : index
    %23 = vector.load %arg8[%c0_15, %c0_16, %c0_17] : memref<2x16x128xbf16, #tpu.memory_space<vmem>>, vector<1x16x128xbf16>
    %24 = vector.shape_cast %23 : vector<1x16x128xbf16> to vector<16x128xbf16>
    %cst = arith.constant dense<0.000000e+00> : vector<16x256xf32>
    %25 = tpu.matmul %24, %19, %cst {dimension_numbers = #tpu.dot_dimension_numbers<[1], [0], [0], [1], [0, 0, 1, 1], [], []>} : vector<16x128xbf16>, vector<128x256xbf16>, vector<16x256xf32> -> vector<16x256xf32>
    %26 = vector.extract_strided_slice %25 {offsets = [0, 0], sizes = [16, 128], strides = [1, 1]} : vector<16x256xf32> to vector<16x128xf32>
    %27 = arith.truncf %26 : vector<16x128xf32> to vector<16x128xbf16>
    %cst_18 = arith.constant dense<0.000000e+00> : vector<16x128xf32>
    %28 = tpu.matmul %22, %27, %cst_18 {dimension_numbers = #tpu.dot_dimension_numbers<[1], [0], [0], [1], [0, 0, 1, 1], [], []>} : vector<16x16xbf16>, vector<16x128xbf16>, vector<16x128xf32> -> vector<16x128xf32>
    %29 = vector.extract_strided_slice %25 {offsets = [0, 128], sizes = [16, 128], strides = [1, 1]} : vector<16x256xf32> to vector<16x128xf32>
    %30 = arith.addf %28, %29 : vector<16x128xf32>
    %31 = vector.broadcast %21 : vector<1x128xf32> to vector<16x128xf32>
    %32 = arith.addf %30, %31 : vector<16x128xf32>
    %33 = arith.extui %0 : i1 to i32
    %c0_i32_19 = arith.constant 0 : i32
    %34 = arith.cmpi ne, %33, %c0_i32_19 : i32
    scf.if %34 {
      %cst_32 = arith.constant 0.000000e+00 : f32
      %65 = vector.broadcast %cst_32 : f32 to vector<16x128xf32>
      %66 = arith.maximumf %32, %65 : vector<16x128xf32>
      %c0_33 = arith.constant 0 : index
      %c0_34 = arith.constant 0 : index
      %c0_35 = arith.constant 0 : index
      %67 = vector.load %arg9[%c0_33, %c0_34, %c0_35] : memref<2x16x128xf32, #tpu.memory_space<vmem>>, vector<1x16x128xf32>
      %68 = vector.shape_cast %67 : vector<1x16x128xf32> to vector<16x128xf32>
      %69 = vector.shape_cast %66 : vector<16x128xf32> to vector<1x16x128xf32>
      tpu.vector_store %arg9[%c0_33, %c0_34, %c0_35], %69 {strides = array<i32>} : memref<2x16x128xf32, #tpu.memory_space<vmem>>, vector<1x16x128xf32>,
      %70 = arith.truncf %66 : vector<16x128xf32> to vector<16x128xbf16>
      %c0_36 = arith.constant 0 : index
      %c0_37 = arith.constant 0 : index
      %c0_38 = arith.constant 0 : index
      %71 = vector.load %arg8[%c0_36, %c0_37, %c0_38] : memref<2x16x128xbf16, #tpu.memory_space<vmem>>, vector<1x16x128xbf16>
      %72 = vector.shape_cast %71 : vector<1x16x128xbf16> to vector<16x128xbf16>
      %73 = vector.shape_cast %70 : vector<16x128xbf16> to vector<1x16x128xbf16>
      tpu.vector_store %arg8[%c0_36, %c0_37, %c0_38], %73 {strides = array<i32>} : memref<2x16x128xbf16, #tpu.memory_space<vmem>>, vector<1x16x128xbf16>,
    } else {
    }
    %35 = arith.andi %3, %14 : i1
    %36 = arith.extui %35 : i1 to i32
    %c0_i32_20 = arith.constant 0 : i32
    %37 = arith.cmpi ne, %36, %c0_i32_20 : i32
    scf.if %37 {
      %cst_32 = arith.constant 0.000000e+00 : f32
      %65 = vector.broadcast %cst_32 : f32 to vector<16x128xf32>
      %66 = arith.maximumf %32, %65 : vector<16x128xf32>
      %67 = arith.truncf %66 : vector<16x128xf32> to vector<16x128xbf16>
      %c0_33 = arith.constant 0 : index
      %c0_34 = arith.constant 0 : index
      %c0_35 = arith.constant 0 : index
      %68 = vector.load %arg8[%c0_33, %c0_34, %c0_35] : memref<2x16x128xbf16, #tpu.memory_space<vmem>>, vector<1x16x128xbf16>
      %69 = vector.shape_cast %68 : vector<1x16x128xbf16> to vector<16x128xbf16>
      %70 = vector.shape_cast %67 : vector<16x128xbf16> to vector<1x16x128xbf16>
      tpu.vector_store %arg8[%c0_33, %c0_34, %c0_35], %70 {strides = array<i32>} : memref<2x16x128xbf16, #tpu.memory_space<vmem>>, vector<1x16x128xbf16>,
    } else {
    }
    %true = arith.constant true
    %38 = arith.xori %14, %true : i1
    %39 = arith.andi %3, %38 : i1
    %40 = arith.extui %39 : i1 to i32
    %c0_i32_21 = arith.constant 0 : i32
    %41 = arith.cmpi ne, %40, %c0_i32_21 : i32
    scf.if %41 {
      %c0_32 = arith.constant 0 : index
      %c0_33 = arith.constant 0 : index
      %c0_34 = arith.constant 0 : index
      %65 = vector.load %arg9[%c0_32, %c0_33, %c0_34] : memref<2x16x128xf32, #tpu.memory_space<vmem>>, vector<1x16x128xf32>
      %66 = vector.shape_cast %65 : vector<1x16x128xf32> to vector<16x128xf32>
      %cst_35 = arith.constant 0.000000e+00 : f32
      %67 = vector.broadcast %cst_35 : f32 to vector<16x128xf32>
      %68 = arith.maximumf %32, %67 : vector<16x128xf32>
      %69 = arith.addf %66, %68 : vector<16x128xf32>
      %cst_36 = arith.constant 5.000000e-01 : f32
      %70 = vector.broadcast %cst_36 : f32 to vector<16x128xf32>
      %71 = arith.mulf %69, %70 : vector<16x128xf32>
      %c0_37 = arith.constant 0 : index
      %c0_38 = arith.constant 0 : index
      %c0_39 = arith.constant 0 : index
      %72 = vector.load %arg9[%c0_37, %c0_38, %c0_39] : memref<2x16x128xf32, #tpu.memory_space<vmem>>, vector<1x16x128xf32>
      %73 = vector.shape_cast %72 : vector<1x16x128xf32> to vector<16x128xf32>
      %74 = vector.shape_cast %71 : vector<16x128xf32> to vector<1x16x128xf32>
      tpu.vector_store %arg9[%c0_37, %c0_38, %c0_39], %74 {strides = array<i32>} : memref<2x16x128xf32, #tpu.memory_space<vmem>>, vector<1x16x128xf32>,
      %75 = arith.truncf %71 : vector<16x128xf32> to vector<16x128xbf16>
      %c0_40 = arith.constant 0 : index
      %c0_41 = arith.constant 0 : index
      %c0_42 = arith.constant 0 : index
      %76 = vector.load %arg8[%c0_40, %c0_41, %c0_42] : memref<2x16x128xbf16, #tpu.memory_space<vmem>>, vector<1x16x128xbf16>
      %77 = vector.shape_cast %76 : vector<1x16x128xbf16> to vector<16x128xbf16>
      %78 = vector.shape_cast %75 : vector<16x128xbf16> to vector<1x16x128xbf16>
      tpu.vector_store %arg8[%c0_40, %c0_41, %c0_42], %78 {strides = array<i32>} : memref<2x16x128xbf16, #tpu.memory_space<vmem>>, vector<1x16x128xbf16>,
    } else {
    }
    %42 = arith.extui %15 : i1 to i32
    %c0_i32_22 = arith.constant 0 : i32
    %43 = arith.cmpi ne, %42, %c0_i32_22 : i32
    scf.if %43 {
      %c0_32 = arith.constant 0 : index
      %c0_33 = arith.constant 0 : index
      %c0_34 = arith.constant 0 : index
      %65 = vector.load %arg9[%c0_32, %c0_33, %c0_34] : memref<2x16x128xf32, #tpu.memory_space<vmem>>, vector<1x16x128xf32>
      %66 = vector.shape_cast %65 : vector<1x16x128xf32> to vector<16x128xf32>
      %c0_35 = arith.constant 0 : index
      %c0_36 = arith.constant 0 : index
      %c0_37 = arith.constant 0 : index
      %67 = vector.load %arg6[%c0_35, %c0_36, %c0_37] : memref<2x16x128xf32, #tpu.memory_space<vmem>>, vector<1x16x128xf32>
      %68 = vector.shape_cast %67 : vector<1x16x128xf32> to vector<16x128xf32>
      %69 = vector.shape_cast %66 : vector<16x128xf32> to vector<1x16x128xf32>
      tpu.vector_store %arg6[%c0_35, %c0_36, %c0_37], %69 {strides = array<i32>} : memref<2x16x128xf32, #tpu.memory_space<vmem>>, vector<1x16x128xf32>,
      %c0_38 = arith.constant 0 : index
      %c0_39 = arith.constant 0 : index
      %c0_40 = arith.constant 0 : index
      %70 = vector.load %arg5[%c0_38, %c0_39, %c0_40] : memref<2x16x128xf32, #tpu.memory_space<vmem>>, vector<1x16x128xf32>
      %71 = vector.shape_cast %70 : vector<1x16x128xf32> to vector<16x128xf32>
      %72 = vector.shape_cast %32 : vector<16x128xf32> to vector<1x16x128xf32>
      tpu.vector_store %arg5[%c0_38, %c0_39, %c0_40], %72 {strides = array<i32>} : memref<2x16x128xf32, #tpu.memory_space<vmem>>, vector<1x16x128xf32>,
    } else {
    }
    %c1 = arith.constant 1 : index
    %c0_23 = arith.constant 0 : index
    %c0_24 = arith.constant 0 : index
    %44 = vector.load %arg8[%c1, %c0_23, %c0_24] : memref<2x16x128xbf16, #tpu.memory_space<vmem>>, vector<1x16x128xbf16>
    %45 = vector.shape_cast %44 : vector<1x16x128xbf16> to vector<16x128xbf16>
    %cst_25 = arith.constant dense<0.000000e+00> : vector<16x256xf32>
    %46 = tpu.matmul %45, %19, %cst_25 {dimension_numbers = #tpu.dot_dimension_numbers<[1], [0], [0], [1], [0, 0, 1, 1], [], []>} : vector<16x128xbf16>, vector<128x256xbf16>, vector<16x256xf32> -> vector<16x256xf32>
    %47 = vector.extract_strided_slice %46 {offsets = [0, 0], sizes = [16, 128], strides = [1, 1]} : vector<16x256xf32> to vector<16x128xf32>
    %48 = arith.truncf %47 : vector<16x128xf32> to vector<16x128xbf16>
    %cst_26 = arith.constant dense<0.000000e+00> : vector<16x128xf32>
    %49 = tpu.matmul %22, %48, %cst_26 {dimension_numbers = #tpu.dot_dimension_numbers<[1], [0], [0], [1], [0, 0, 1, 1], [], []>} : vector<16x16xbf16>, vector<16x128xbf16>, vector<16x128xf32> -> vector<16x128xf32>
    %50 = vector.extract_strided_slice %46 {offsets = [0, 128], sizes = [16, 128], strides = [1, 1]} : vector<16x256xf32> to vector<16x128xf32>
    %51 = arith.addf %49, %50 : vector<16x128xf32>
    %52 = vector.broadcast %21 : vector<1x128xf32> to vector<16x128xf32>
    %53 = arith.addf %51, %52 : vector<16x128xf32>
    %54 = arith.extui %0 : i1 to i32
    %c0_i32_27 = arith.constant 0 : i32
    %55 = arith.cmpi ne, %54, %c0_i32_27 : i32
    scf.if %55 {
      %cst_32 = arith.constant 0.000000e+00 : f32
      %65 = vector.broadcast %cst_32 : f32 to vector<16x128xf32>
      %66 = arith.maximumf %53, %65 : vector<16x128xf32>
      %c1_33 = arith.constant 1 : index
      %c0_34 = arith.constant 0 : index
      %c0_35 = arith.constant 0 : index
      %67 = vector.load %arg9[%c1_33, %c0_34, %c0_35] : memref<2x16x128xf32, #tpu.memory_space<vmem>>, vector<1x16x128xf32>
      %68 = vector.shape_cast %67 : vector<1x16x128xf32> to vector<16x128xf32>
      %69 = vector.shape_cast %66 : vector<16x128xf32> to vector<1x16x128xf32>
      tpu.vector_store %arg9[%c1_33, %c0_34, %c0_35], %69 {strides = array<i32>} : memref<2x16x128xf32, #tpu.memory_space<vmem>>, vector<1x16x128xf32>,
      %70 = arith.truncf %66 : vector<16x128xf32> to vector<16x128xbf16>
      %c1_36 = arith.constant 1 : index
      %c0_37 = arith.constant 0 : index
      %c0_38 = arith.constant 0 : index
      %71 = vector.load %arg8[%c1_36, %c0_37, %c0_38] : memref<2x16x128xbf16, #tpu.memory_space<vmem>>, vector<1x16x128xbf16>
      %72 = vector.shape_cast %71 : vector<1x16x128xbf16> to vector<16x128xbf16>
      %73 = vector.shape_cast %70 : vector<16x128xbf16> to vector<1x16x128xbf16>
      tpu.vector_store %arg8[%c1_36, %c0_37, %c0_38], %73 {strides = array<i32>} : memref<2x16x128xbf16, #tpu.memory_space<vmem>>, vector<1x16x128xbf16>,
    } else {
    }
    %56 = arith.andi %3, %14 : i1
    %57 = arith.extui %56 : i1 to i32
    %c0_i32_28 = arith.constant 0 : i32
    %58 = arith.cmpi ne, %57, %c0_i32_28 : i32
    scf.if %58 {
      %cst_32 = arith.constant 0.000000e+00 : f32
      %65 = vector.broadcast %cst_32 : f32 to vector<16x128xf32>
      %66 = arith.maximumf %53, %65 : vector<16x128xf32>
      %67 = arith.truncf %66 : vector<16x128xf32> to vector<16x128xbf16>
      %c1_33 = arith.constant 1 : index
      %c0_34 = arith.constant 0 : index
      %c0_35 = arith.constant 0 : index
      %68 = vector.load %arg8[%c1_33, %c0_34, %c0_35] : memref<2x16x128xbf16, #tpu.memory_space<vmem>>, vector<1x16x128xbf16>
      %69 = vector.shape_cast %68 : vector<1x16x128xbf16> to vector<16x128xbf16>
      %70 = vector.shape_cast %67 : vector<16x128xbf16> to vector<1x16x128xbf16>
      tpu.vector_store %arg8[%c1_33, %c0_34, %c0_35], %70 {strides = array<i32>} : memref<2x16x128xbf16, #tpu.memory_space<vmem>>, vector<1x16x128xbf16>,
    } else {
    }
    %true_29 = arith.constant true
    %59 = arith.xori %14, %true_29 : i1
    %60 = arith.andi %3, %59 : i1
    %61 = arith.extui %60 : i1 to i32
    %c0_i32_30 = arith.constant 0 : i32
    %62 = arith.cmpi ne, %61, %c0_i32_30 : i32
    scf.if %62 {
      %c1_32 = arith.constant 1 : index
      %c0_33 = arith.constant 0 : index
      %c0_34 = arith.constant 0 : index
      %65 = vector.load %arg9[%c1_32, %c0_33, %c0_34] : memref<2x16x128xf32, #tpu.memory_space<vmem>>, vector<1x16x128xf32>
      %66 = vector.shape_cast %65 : vector<1x16x128xf32> to vector<16x128xf32>
      %cst_35 = arith.constant 0.000000e+00 : f32
      %67 = vector.broadcast %cst_35 : f32 to vector<16x128xf32>
      %68 = arith.maximumf %53, %67 : vector<16x128xf32>
      %69 = arith.addf %66, %68 : vector<16x128xf32>
      %cst_36 = arith.constant 5.000000e-01 : f32
      %70 = vector.broadcast %cst_36 : f32 to vector<16x128xf32>
      %71 = arith.mulf %69, %70 : vector<16x128xf32>
      %c1_37 = arith.constant 1 : index
      %c0_38 = arith.constant 0 : index
      %c0_39 = arith.constant 0 : index
      %72 = vector.load %arg9[%c1_37, %c0_38, %c0_39] : memref<2x16x128xf32, #tpu.memory_space<vmem>>, vector<1x16x128xf32>
      %73 = vector.shape_cast %72 : vector<1x16x128xf32> to vector<16x128xf32>
      %74 = vector.shape_cast %71 : vector<16x128xf32> to vector<1x16x128xf32>
      tpu.vector_store %arg9[%c1_37, %c0_38, %c0_39], %74 {strides = array<i32>} : memref<2x16x128xf32, #tpu.memory_space<vmem>>, vector<1x16x128xf32>,
      %75 = arith.truncf %71 : vector<16x128xf32> to vector<16x128xbf16>
      %c1_40 = arith.constant 1 : index
      %c0_41 = arith.constant 0 : index
      %c0_42 = arith.constant 0 : index
      %76 = vector.load %arg8[%c1_40, %c0_41, %c0_42] : memref<2x16x128xbf16, #tpu.memory_space<vmem>>, vector<1x16x128xbf16>
      %77 = vector.shape_cast %76 : vector<1x16x128xbf16> to vector<16x128xbf16>
      %78 = vector.shape_cast %75 : vector<16x128xbf16> to vector<1x16x128xbf16>
      tpu.vector_store %arg8[%c1_40, %c0_41, %c0_42], %78 {strides = array<i32>} : memref<2x16x128xbf16, #tpu.memory_space<vmem>>, vector<1x16x128xbf16>,
    } else {
    }
    %63 = arith.extui %15 : i1 to i32
    %c0_i32_31 = arith.constant 0 : i32
    %64 = arith.cmpi ne, %63, %c0_i32_31 : i32
    scf.if %64 {
      %c1_32 = arith.constant 1 : index
      %c0_33 = arith.constant 0 : index
      %c0_34 = arith.constant 0 : index
      %65 = vector.load %arg9[%c1_32, %c0_33, %c0_34] : memref<2x16x128xf32, #tpu.memory_space<vmem>>, vector<1x16x128xf32>
      %66 = vector.shape_cast %65 : vector<1x16x128xf32> to vector<16x128xf32>
      %c1_35 = arith.constant 1 : index
      %c0_36 = arith.constant 0 : index
      %c0_37 = arith.constant 0 : index
      %67 = vector.load %arg6[%c1_35, %c0_36, %c0_37] : memref<2x16x128xf32, #tpu.memory_space<vmem>>, vector<1x16x128xf32>
      %68 = vector.shape_cast %67 : vector<1x16x128xf32> to vector<16x128xf32>
      %69 = vector.shape_cast %66 : vector<16x128xf32> to vector<1x16x128xf32>
      tpu.vector_store %arg6[%c1_35, %c0_36, %c0_37], %69 {strides = array<i32>} : memref<2x16x128xf32, #tpu.memory_space<vmem>>, vector<1x16x128xf32>,
      %c1_38 = arith.constant 1 : index
      %c0_39 = arith.constant 0 : index
      %c0_40 = arith.constant 0 : index
      %70 = vector.load %arg5[%c1_38, %c0_39, %c0_40] : memref<2x16x128xf32, #tpu.memory_space<vmem>>, vector<1x16x128xf32>
      %71 = vector.shape_cast %70 : vector<1x16x128xf32> to vector<16x128xf32>
      %72 = vector.shape_cast %53 : vector<16x128xf32> to vector<1x16x128xf32>
      tpu.vector_store %arg5[%c1_38, %c0_39, %c0_40], %72 {strides = array<i32>} : memref<2x16x128xf32, #tpu.memory_space<vmem>>, vector<1x16x128xf32>,
    } else {
    }
    return
  }
  func.func @transform_2(%arg0: i32) -> (i32, i32, i32) {
    %c0_i32 = arith.constant 0 : i32
    %c0_i32_0 = arith.constant 0 : i32
    %c0_i32_1 = arith.constant 0 : i32
    return %arg0, %c0_i32, %c0_i32_0 : i32, i32, i32
  }
  func.func @transform_3(%arg0: i32) -> (i32, i32, i32) {
    %c0_i32 = arith.constant 0 : i32
    %c0_i32_0 = arith.constant 0 : i32
    %c0_i32_1 = arith.constant 0 : i32
    return %arg0, %c0_i32, %c0_i32_0 : i32, i32, i32
  }
  func.func @transform_4(%arg0: i32) -> (i32, i32, i32) {
    %c0_i32 = arith.constant 0 : i32
    %c0_i32_0 = arith.constant 0 : i32
    %c0_i32_1 = arith.constant 0 : i32
    %c0_i32_2 = arith.constant 0 : i32
    return %c0_i32, %c0_i32_0, %c0_i32_1 : i32, i32, i32
  }
  func.func @transform_5(%arg0: i32) -> (i32, i32, i32) {
    %c0_i32 = arith.constant 0 : i32
    %c0_i32_0 = arith.constant 0 : i32
    %c0_i32_1 = arith.constant 0 : i32
    %c0_i32_2 = arith.constant 0 : i32
    return %c0_i32, %c0_i32_0, %c0_i32_1 : i32, i32, i32
  }
}

module attributes {stable_mosaic.version = 11 : i64} {
  func.func @kernel(%arg0: i32, %arg1: memref<2x32x128xbf16, #tpu.memory_space<any>>, %arg2: memref<32x32xbf16, #tpu.memory_space<any>>, %arg3: memref<1x128x256xbf16, #tpu.memory_space<vmem>>, %arg4: memref<1x1x128xf32, #tpu.memory_space<vmem>>, %arg5: memref<2x32x128xf32, #tpu.memory_space<vmem>>, %arg6: memref<2x32x128xf32, #tpu.memory_space<vmem>>, %arg7: memref<32x32xbf16, #tpu.memory_space<vmem>>, %arg8: memref<2x32x128xbf16, #tpu.memory_space<vmem>>, %arg9: memref<2x32x128xf32, #tpu.memory_space<vmem>>, %arg10: memref<2x!tpu.dma_semaphore, #tpu.memory_space<semaphore_mem>>) attributes {dimension_semantics = [#tpu.dimension_semantics<arbitrary>], iteration_bounds = array<i64: 14>, scalar_prefetch = 0 : i64, scratch_operands = 4 : i64, tpu.core_type = #tpu.core_type<tc>, window_params = [{}, {}, {transform_indices = @transform_2, window_bounds = array<i64: 1, 128, 256>}, {transform_indices = @transform_3, window_bounds = array<i64: 1, 1, 128>}, {pipeline_mode = #tpu.pipeline_mode<synchronous>, transform_indices = @transform_4, window_bounds = array<i64: 2, 32, 128>}, {pipeline_mode = #tpu.pipeline_mode<synchronous>, transform_indices = @transform_5, window_bounds = array<i64: 2, 32, 128>}]} {
    %c0_i32 = arith.constant 0 : i32
    %0 = arith.cmpi eq, %arg0, %c0_i32 : i32
    %c0_i32_0 = arith.constant 0 : i32
    %1 = arith.cmpi sgt, %arg0, %c0_i32_0 : i32
    %c13_i32 = arith.constant 13 : i32
    %2 = arith.cmpi slt, %arg0, %c13_i32 : i32
    %3 = arith.andi %1, %2 : i1
    %c2_i32 = arith.constant 2 : i32
    %c0_i32_1 = arith.constant 0 : i32
    %4 = arith.cmpi eq, %c2_i32, %c0_i32_1 : i32
    %c1_i32 = arith.constant 1 : i32
    %5 = arith.select %4, %c1_i32, %c2_i32 : i32
    %6 = arith.remsi %arg0, %5 : i32
    %c0_i32_2 = arith.constant 0 : i32
    %7 = arith.cmpi ne, %6, %c0_i32_2 : i32
    %c0_i32_3 = arith.constant 0 : i32
    %8 = arith.cmpi slt, %6, %c0_i32_3 : i32
    %c0_i32_4 = arith.constant 0 : i32
    %9 = arith.cmpi slt, %5, %c0_i32_4 : i32
    %10 = arith.xori %8, %9 : i1
    %11 = arith.andi %10, %7 : i1
    %12 = arith.addi %6, %5 : i32
    %13 = arith.select %11, %12, %6 : i32
    %c1_i32_5 = arith.constant 1 : i32
    %14 = arith.cmpi eq, %13, %c1_i32_5 : i32
    %c13_i32_6 = arith.constant 13 : i32
    %15 = arith.cmpi eq, %arg0, %c13_i32_6 : i32
    %16 = arith.extui %0 : i1 to i32
    %c0_i32_7 = arith.constant 0 : i32
    %17 = arith.cmpi ne, %16, %c0_i32_7 : i32
    scf.if %17 {
      %c0_i32_32 = arith.constant 0 : i32
      %65 = tpu.memref_slice %arg10[%c0_i32_32] : memref<2x!tpu.dma_semaphore, #tpu.memory_space<semaphore_mem>> -> memref<1x!tpu.dma_semaphore, #tpu.memory_space<semaphore_mem>>
      %66 = tpu.memref_squeeze %65 : memref<1x!tpu.dma_semaphore, #tpu.memory_space<semaphore_mem>> -> memref<!tpu.dma_semaphore, #tpu.memory_space<semaphore_mem>>
      tpu.enqueue_dma source(%arg2 : memref<32x32xbf16, #tpu.memory_space<any>>) target(%arg7 : memref<32x32xbf16, #tpu.memory_space<vmem>>) target_semaphore(%66 : memref<!tpu.dma_semaphore, #tpu.memory_space<semaphore_mem>>)
      %c1_i32_33 = arith.constant 1 : i32
      %67 = tpu.memref_slice %arg10[%c1_i32_33] : memref<2x!tpu.dma_semaphore, #tpu.memory_space<semaphore_mem>> -> memref<1x!tpu.dma_semaphore, #tpu.memory_space<semaphore_mem>>
      %68 = tpu.memref_squeeze %67 : memref<1x!tpu.dma_semaphore, #tpu.memory_space<semaphore_mem>> -> memref<!tpu.dma_semaphore, #tpu.memory_space<semaphore_mem>>
      tpu.enqueue_dma source(%arg1 : memref<2x32x128xbf16, #tpu.memory_space<any>>) target(%arg8 : memref<2x32x128xbf16, #tpu.memory_space<vmem>>) target_semaphore(%68 : memref<!tpu.dma_semaphore, #tpu.memory_space<semaphore_mem>>)
      %c0_i32_34 = arith.constant 0 : i32
      %69 = tpu.memref_slice %arg10[%c0_i32_34] : memref<2x!tpu.dma_semaphore, #tpu.memory_space<semaphore_mem>> -> memref<1x!tpu.dma_semaphore, #tpu.memory_space<semaphore_mem>>
      %70 = tpu.memref_squeeze %69 : memref<1x!tpu.dma_semaphore, #tpu.memory_space<semaphore_mem>> -> memref<!tpu.dma_semaphore, #tpu.memory_space<semaphore_mem>>
      tpu.wait_dma2 semaphore(%70 : memref<!tpu.dma_semaphore, #tpu.memory_space<semaphore_mem>>) src(%arg2 : memref<32x32xbf16, #tpu.memory_space<any>>) dst(%arg7 : memref<32x32xbf16, #tpu.memory_space<vmem>>)
      %c1_i32_35 = arith.constant 1 : i32
      %71 = tpu.memref_slice %arg10[%c1_i32_35] : memref<2x!tpu.dma_semaphore, #tpu.memory_space<semaphore_mem>> -> memref<1x!tpu.dma_semaphore, #tpu.memory_space<semaphore_mem>>
      %72 = tpu.memref_squeeze %71 : memref<1x!tpu.dma_semaphore, #tpu.memory_space<semaphore_mem>> -> memref<!tpu.dma_semaphore, #tpu.memory_space<semaphore_mem>>
      tpu.wait_dma2 semaphore(%72 : memref<!tpu.dma_semaphore, #tpu.memory_space<semaphore_mem>>) src(%arg1 : memref<2x32x128xbf16, #tpu.memory_space<any>>) dst(%arg8 : memref<2x32x128xbf16, #tpu.memory_space<vmem>>)
    } else {
    }
    %c0 = arith.constant 0 : index
    %c0_8 = arith.constant 0 : index
    %c0_9 = arith.constant 0 : index
    %18 = vector.load %arg3[%c0, %c0_8, %c0_9] : memref<1x128x256xbf16, #tpu.memory_space<vmem>>, vector<1x128x256xbf16>
    %19 = vector.shape_cast %18 : vector<1x128x256xbf16> to vector<128x256xbf16>
    %c0_10 = arith.constant 0 : index
    %c0_11 = arith.constant 0 : index
    %c0_12 = arith.constant 0 : index
    %20 = vector.load %arg4[%c0_10, %c0_11, %c0_12] : memref<1x1x128xf32, #tpu.memory_space<vmem>>, vector<1x1x128xf32>
    %21 = vector.shape_cast %20 : vector<1x1x128xf32> to vector<1x128xf32>
    %c0_13 = arith.constant 0 : index
    %c0_14 = arith.constant 0 : index
    %22 = vector.load %arg7[%c0_13, %c0_14] : memref<32x32xbf16, #tpu.memory_space<vmem>>, vector<32x32xbf16>
    %c0_15 = arith.constant 0 : index
    %c0_16 = arith.constant 0 : index
    %c0_17 = arith.constant 0 : index
    %23 = vector.load %arg8[%c0_15, %c0_16, %c0_17] : memref<2x32x128xbf16, #tpu.memory_space<vmem>>, vector<1x32x128xbf16>
    %24 = vector.shape_cast %23 : vector<1x32x128xbf16> to vector<32x128xbf16>
    %cst = arith.constant dense<0.000000e+00> : vector<32x256xf32>
    %25 = tpu.matmul %24, %19, %cst {dimension_numbers = #tpu.dot_dimension_numbers<[1], [0], [0], [1], [0, 0, 1, 1], [], []>} : vector<32x128xbf16>, vector<128x256xbf16>, vector<32x256xf32> -> vector<32x256xf32>
    %26 = vector.extract_strided_slice %25 {offsets = [0, 0], sizes = [32, 128], strides = [1, 1]} : vector<32x256xf32> to vector<32x128xf32>
    %27 = arith.truncf %26 : vector<32x128xf32> to vector<32x128xbf16>
    %cst_18 = arith.constant dense<0.000000e+00> : vector<32x128xf32>
    %28 = tpu.matmul %22, %27, %cst_18 {dimension_numbers = #tpu.dot_dimension_numbers<[1], [0], [0], [1], [0, 0, 1, 1], [], []>} : vector<32x32xbf16>, vector<32x128xbf16>, vector<32x128xf32> -> vector<32x128xf32>
    %29 = vector.extract_strided_slice %25 {offsets = [0, 128], sizes = [32, 128], strides = [1, 1]} : vector<32x256xf32> to vector<32x128xf32>
    %30 = arith.addf %28, %29 : vector<32x128xf32>
    %31 = vector.broadcast %21 : vector<1x128xf32> to vector<32x128xf32>
    %32 = arith.addf %30, %31 : vector<32x128xf32>
    %33 = arith.extui %0 : i1 to i32
    %c0_i32_19 = arith.constant 0 : i32
    %34 = arith.cmpi ne, %33, %c0_i32_19 : i32
    scf.if %34 {
      %cst_32 = arith.constant 0.000000e+00 : f32
      %65 = vector.broadcast %cst_32 : f32 to vector<32x128xf32>
      %66 = arith.maximumf %32, %65 : vector<32x128xf32>
      %c0_33 = arith.constant 0 : index
      %c0_34 = arith.constant 0 : index
      %c0_35 = arith.constant 0 : index
      %67 = vector.load %arg9[%c0_33, %c0_34, %c0_35] : memref<2x32x128xf32, #tpu.memory_space<vmem>>, vector<1x32x128xf32>
      %68 = vector.shape_cast %67 : vector<1x32x128xf32> to vector<32x128xf32>
      %69 = vector.shape_cast %66 : vector<32x128xf32> to vector<1x32x128xf32>
      tpu.vector_store %arg9[%c0_33, %c0_34, %c0_35], %69 {strides = array<i32>} : memref<2x32x128xf32, #tpu.memory_space<vmem>>, vector<1x32x128xf32>,
      %70 = arith.truncf %66 : vector<32x128xf32> to vector<32x128xbf16>
      %c0_36 = arith.constant 0 : index
      %c0_37 = arith.constant 0 : index
      %c0_38 = arith.constant 0 : index
      %71 = vector.load %arg8[%c0_36, %c0_37, %c0_38] : memref<2x32x128xbf16, #tpu.memory_space<vmem>>, vector<1x32x128xbf16>
      %72 = vector.shape_cast %71 : vector<1x32x128xbf16> to vector<32x128xbf16>
      %73 = vector.shape_cast %70 : vector<32x128xbf16> to vector<1x32x128xbf16>
      tpu.vector_store %arg8[%c0_36, %c0_37, %c0_38], %73 {strides = array<i32>} : memref<2x32x128xbf16, #tpu.memory_space<vmem>>, vector<1x32x128xbf16>,
    } else {
    }
    %35 = arith.andi %3, %14 : i1
    %36 = arith.extui %35 : i1 to i32
    %c0_i32_20 = arith.constant 0 : i32
    %37 = arith.cmpi ne, %36, %c0_i32_20 : i32
    scf.if %37 {
      %cst_32 = arith.constant 0.000000e+00 : f32
      %65 = vector.broadcast %cst_32 : f32 to vector<32x128xf32>
      %66 = arith.maximumf %32, %65 : vector<32x128xf32>
      %67 = arith.truncf %66 : vector<32x128xf32> to vector<32x128xbf16>
      %c0_33 = arith.constant 0 : index
      %c0_34 = arith.constant 0 : index
      %c0_35 = arith.constant 0 : index
      %68 = vector.load %arg8[%c0_33, %c0_34, %c0_35] : memref<2x32x128xbf16, #tpu.memory_space<vmem>>, vector<1x32x128xbf16>
      %69 = vector.shape_cast %68 : vector<1x32x128xbf16> to vector<32x128xbf16>
      %70 = vector.shape_cast %67 : vector<32x128xbf16> to vector<1x32x128xbf16>
      tpu.vector_store %arg8[%c0_33, %c0_34, %c0_35], %70 {strides = array<i32>} : memref<2x32x128xbf16, #tpu.memory_space<vmem>>, vector<1x32x128xbf16>,
    } else {
    }
    %true = arith.constant true
    %38 = arith.xori %14, %true : i1
    %39 = arith.andi %3, %38 : i1
    %40 = arith.extui %39 : i1 to i32
    %c0_i32_21 = arith.constant 0 : i32
    %41 = arith.cmpi ne, %40, %c0_i32_21 : i32
    scf.if %41 {
      %c0_32 = arith.constant 0 : index
      %c0_33 = arith.constant 0 : index
      %c0_34 = arith.constant 0 : index
      %65 = vector.load %arg9[%c0_32, %c0_33, %c0_34] : memref<2x32x128xf32, #tpu.memory_space<vmem>>, vector<1x32x128xf32>
      %66 = vector.shape_cast %65 : vector<1x32x128xf32> to vector<32x128xf32>
      %cst_35 = arith.constant 0.000000e+00 : f32
      %67 = vector.broadcast %cst_35 : f32 to vector<32x128xf32>
      %68 = arith.maximumf %32, %67 : vector<32x128xf32>
      %69 = arith.addf %66, %68 : vector<32x128xf32>
      %cst_36 = arith.constant 5.000000e-01 : f32
      %70 = vector.broadcast %cst_36 : f32 to vector<32x128xf32>
      %71 = arith.mulf %69, %70 : vector<32x128xf32>
      %c0_37 = arith.constant 0 : index
      %c0_38 = arith.constant 0 : index
      %c0_39 = arith.constant 0 : index
      %72 = vector.load %arg9[%c0_37, %c0_38, %c0_39] : memref<2x32x128xf32, #tpu.memory_space<vmem>>, vector<1x32x128xf32>
      %73 = vector.shape_cast %72 : vector<1x32x128xf32> to vector<32x128xf32>
      %74 = vector.shape_cast %71 : vector<32x128xf32> to vector<1x32x128xf32>
      tpu.vector_store %arg9[%c0_37, %c0_38, %c0_39], %74 {strides = array<i32>} : memref<2x32x128xf32, #tpu.memory_space<vmem>>, vector<1x32x128xf32>,
      %75 = arith.truncf %71 : vector<32x128xf32> to vector<32x128xbf16>
      %c0_40 = arith.constant 0 : index
      %c0_41 = arith.constant 0 : index
      %c0_42 = arith.constant 0 : index
      %76 = vector.load %arg8[%c0_40, %c0_41, %c0_42] : memref<2x32x128xbf16, #tpu.memory_space<vmem>>, vector<1x32x128xbf16>
      %77 = vector.shape_cast %76 : vector<1x32x128xbf16> to vector<32x128xbf16>
      %78 = vector.shape_cast %75 : vector<32x128xbf16> to vector<1x32x128xbf16>
      tpu.vector_store %arg8[%c0_40, %c0_41, %c0_42], %78 {strides = array<i32>} : memref<2x32x128xbf16, #tpu.memory_space<vmem>>, vector<1x32x128xbf16>,
    } else {
    }
    %42 = arith.extui %15 : i1 to i32
    %c0_i32_22 = arith.constant 0 : i32
    %43 = arith.cmpi ne, %42, %c0_i32_22 : i32
    scf.if %43 {
      %c0_32 = arith.constant 0 : index
      %c0_33 = arith.constant 0 : index
      %c0_34 = arith.constant 0 : index
      %65 = vector.load %arg9[%c0_32, %c0_33, %c0_34] : memref<2x32x128xf32, #tpu.memory_space<vmem>>, vector<1x32x128xf32>
      %66 = vector.shape_cast %65 : vector<1x32x128xf32> to vector<32x128xf32>
      %c0_35 = arith.constant 0 : index
      %c0_36 = arith.constant 0 : index
      %c0_37 = arith.constant 0 : index
      %67 = vector.load %arg6[%c0_35, %c0_36, %c0_37] : memref<2x32x128xf32, #tpu.memory_space<vmem>>, vector<1x32x128xf32>
      %68 = vector.shape_cast %67 : vector<1x32x128xf32> to vector<32x128xf32>
      %69 = vector.shape_cast %66 : vector<32x128xf32> to vector<1x32x128xf32>
      tpu.vector_store %arg6[%c0_35, %c0_36, %c0_37], %69 {strides = array<i32>} : memref<2x32x128xf32, #tpu.memory_space<vmem>>, vector<1x32x128xf32>,
      %c0_38 = arith.constant 0 : index
      %c0_39 = arith.constant 0 : index
      %c0_40 = arith.constant 0 : index
      %70 = vector.load %arg5[%c0_38, %c0_39, %c0_40] : memref<2x32x128xf32, #tpu.memory_space<vmem>>, vector<1x32x128xf32>
      %71 = vector.shape_cast %70 : vector<1x32x128xf32> to vector<32x128xf32>
      %72 = vector.shape_cast %32 : vector<32x128xf32> to vector<1x32x128xf32>
      tpu.vector_store %arg5[%c0_38, %c0_39, %c0_40], %72 {strides = array<i32>} : memref<2x32x128xf32, #tpu.memory_space<vmem>>, vector<1x32x128xf32>,
    } else {
    }
    %c1 = arith.constant 1 : index
    %c0_23 = arith.constant 0 : index
    %c0_24 = arith.constant 0 : index
    %44 = vector.load %arg8[%c1, %c0_23, %c0_24] : memref<2x32x128xbf16, #tpu.memory_space<vmem>>, vector<1x32x128xbf16>
    %45 = vector.shape_cast %44 : vector<1x32x128xbf16> to vector<32x128xbf16>
    %cst_25 = arith.constant dense<0.000000e+00> : vector<32x256xf32>
    %46 = tpu.matmul %45, %19, %cst_25 {dimension_numbers = #tpu.dot_dimension_numbers<[1], [0], [0], [1], [0, 0, 1, 1], [], []>} : vector<32x128xbf16>, vector<128x256xbf16>, vector<32x256xf32> -> vector<32x256xf32>
    %47 = vector.extract_strided_slice %46 {offsets = [0, 0], sizes = [32, 128], strides = [1, 1]} : vector<32x256xf32> to vector<32x128xf32>
    %48 = arith.truncf %47 : vector<32x128xf32> to vector<32x128xbf16>
    %cst_26 = arith.constant dense<0.000000e+00> : vector<32x128xf32>
    %49 = tpu.matmul %22, %48, %cst_26 {dimension_numbers = #tpu.dot_dimension_numbers<[1], [0], [0], [1], [0, 0, 1, 1], [], []>} : vector<32x32xbf16>, vector<32x128xbf16>, vector<32x128xf32> -> vector<32x128xf32>
    %50 = vector.extract_strided_slice %46 {offsets = [0, 128], sizes = [32, 128], strides = [1, 1]} : vector<32x256xf32> to vector<32x128xf32>
    %51 = arith.addf %49, %50 : vector<32x128xf32>
    %52 = vector.broadcast %21 : vector<1x128xf32> to vector<32x128xf32>
    %53 = arith.addf %51, %52 : vector<32x128xf32>
    %54 = arith.extui %0 : i1 to i32
    %c0_i32_27 = arith.constant 0 : i32
    %55 = arith.cmpi ne, %54, %c0_i32_27 : i32
    scf.if %55 {
      %cst_32 = arith.constant 0.000000e+00 : f32
      %65 = vector.broadcast %cst_32 : f32 to vector<32x128xf32>
      %66 = arith.maximumf %53, %65 : vector<32x128xf32>
      %c1_33 = arith.constant 1 : index
      %c0_34 = arith.constant 0 : index
      %c0_35 = arith.constant 0 : index
      %67 = vector.load %arg9[%c1_33, %c0_34, %c0_35] : memref<2x32x128xf32, #tpu.memory_space<vmem>>, vector<1x32x128xf32>
      %68 = vector.shape_cast %67 : vector<1x32x128xf32> to vector<32x128xf32>
      %69 = vector.shape_cast %66 : vector<32x128xf32> to vector<1x32x128xf32>
      tpu.vector_store %arg9[%c1_33, %c0_34, %c0_35], %69 {strides = array<i32>} : memref<2x32x128xf32, #tpu.memory_space<vmem>>, vector<1x32x128xf32>,
      %70 = arith.truncf %66 : vector<32x128xf32> to vector<32x128xbf16>
      %c1_36 = arith.constant 1 : index
      %c0_37 = arith.constant 0 : index
      %c0_38 = arith.constant 0 : index
      %71 = vector.load %arg8[%c1_36, %c0_37, %c0_38] : memref<2x32x128xbf16, #tpu.memory_space<vmem>>, vector<1x32x128xbf16>
      %72 = vector.shape_cast %71 : vector<1x32x128xbf16> to vector<32x128xbf16>
      %73 = vector.shape_cast %70 : vector<32x128xbf16> to vector<1x32x128xbf16>
      tpu.vector_store %arg8[%c1_36, %c0_37, %c0_38], %73 {strides = array<i32>} : memref<2x32x128xbf16, #tpu.memory_space<vmem>>, vector<1x32x128xbf16>,
    } else {
    }
    %56 = arith.andi %3, %14 : i1
    %57 = arith.extui %56 : i1 to i32
    %c0_i32_28 = arith.constant 0 : i32
    %58 = arith.cmpi ne, %57, %c0_i32_28 : i32
    scf.if %58 {
      %cst_32 = arith.constant 0.000000e+00 : f32
      %65 = vector.broadcast %cst_32 : f32 to vector<32x128xf32>
      %66 = arith.maximumf %53, %65 : vector<32x128xf32>
      %67 = arith.truncf %66 : vector<32x128xf32> to vector<32x128xbf16>
      %c1_33 = arith.constant 1 : index
      %c0_34 = arith.constant 0 : index
      %c0_35 = arith.constant 0 : index
      %68 = vector.load %arg8[%c1_33, %c0_34, %c0_35] : memref<2x32x128xbf16, #tpu.memory_space<vmem>>, vector<1x32x128xbf16>
      %69 = vector.shape_cast %68 : vector<1x32x128xbf16> to vector<32x128xbf16>
      %70 = vector.shape_cast %67 : vector<32x128xbf16> to vector<1x32x128xbf16>
      tpu.vector_store %arg8[%c1_33, %c0_34, %c0_35], %70 {strides = array<i32>} : memref<2x32x128xbf16, #tpu.memory_space<vmem>>, vector<1x32x128xbf16>,
    } else {
    }
    %true_29 = arith.constant true
    %59 = arith.xori %14, %true_29 : i1
    %60 = arith.andi %3, %59 : i1
    %61 = arith.extui %60 : i1 to i32
    %c0_i32_30 = arith.constant 0 : i32
    %62 = arith.cmpi ne, %61, %c0_i32_30 : i32
    scf.if %62 {
      %c1_32 = arith.constant 1 : index
      %c0_33 = arith.constant 0 : index
      %c0_34 = arith.constant 0 : index
      %65 = vector.load %arg9[%c1_32, %c0_33, %c0_34] : memref<2x32x128xf32, #tpu.memory_space<vmem>>, vector<1x32x128xf32>
      %66 = vector.shape_cast %65 : vector<1x32x128xf32> to vector<32x128xf32>
      %cst_35 = arith.constant 0.000000e+00 : f32
      %67 = vector.broadcast %cst_35 : f32 to vector<32x128xf32>
      %68 = arith.maximumf %53, %67 : vector<32x128xf32>
      %69 = arith.addf %66, %68 : vector<32x128xf32>
      %cst_36 = arith.constant 5.000000e-01 : f32
      %70 = vector.broadcast %cst_36 : f32 to vector<32x128xf32>
      %71 = arith.mulf %69, %70 : vector<32x128xf32>
      %c1_37 = arith.constant 1 : index
      %c0_38 = arith.constant 0 : index
      %c0_39 = arith.constant 0 : index
      %72 = vector.load %arg9[%c1_37, %c0_38, %c0_39] : memref<2x32x128xf32, #tpu.memory_space<vmem>>, vector<1x32x128xf32>
      %73 = vector.shape_cast %72 : vector<1x32x128xf32> to vector<32x128xf32>
      %74 = vector.shape_cast %71 : vector<32x128xf32> to vector<1x32x128xf32>
      tpu.vector_store %arg9[%c1_37, %c0_38, %c0_39], %74 {strides = array<i32>} : memref<2x32x128xf32, #tpu.memory_space<vmem>>, vector<1x32x128xf32>,
      %75 = arith.truncf %71 : vector<32x128xf32> to vector<32x128xbf16>
      %c1_40 = arith.constant 1 : index
      %c0_41 = arith.constant 0 : index
      %c0_42 = arith.constant 0 : index
      %76 = vector.load %arg8[%c1_40, %c0_41, %c0_42] : memref<2x32x128xbf16, #tpu.memory_space<vmem>>, vector<1x32x128xbf16>
      %77 = vector.shape_cast %76 : vector<1x32x128xbf16> to vector<32x128xbf16>
      %78 = vector.shape_cast %75 : vector<32x128xbf16> to vector<1x32x128xbf16>
      tpu.vector_store %arg8[%c1_40, %c0_41, %c0_42], %78 {strides = array<i32>} : memref<2x32x128xbf16, #tpu.memory_space<vmem>>, vector<1x32x128xbf16>,
    } else {
    }
    %63 = arith.extui %15 : i1 to i32
    %c0_i32_31 = arith.constant 0 : i32
    %64 = arith.cmpi ne, %63, %c0_i32_31 : i32
    scf.if %64 {
      %c1_32 = arith.constant 1 : index
      %c0_33 = arith.constant 0 : index
      %c0_34 = arith.constant 0 : index
      %65 = vector.load %arg9[%c1_32, %c0_33, %c0_34] : memref<2x32x128xf32, #tpu.memory_space<vmem>>, vector<1x32x128xf32>
      %66 = vector.shape_cast %65 : vector<1x32x128xf32> to vector<32x128xf32>
      %c1_35 = arith.constant 1 : index
      %c0_36 = arith.constant 0 : index
      %c0_37 = arith.constant 0 : index
      %67 = vector.load %arg6[%c1_35, %c0_36, %c0_37] : memref<2x32x128xf32, #tpu.memory_space<vmem>>, vector<1x32x128xf32>
      %68 = vector.shape_cast %67 : vector<1x32x128xf32> to vector<32x128xf32>
      %69 = vector.shape_cast %66 : vector<32x128xf32> to vector<1x32x128xf32>
      tpu.vector_store %arg6[%c1_35, %c0_36, %c0_37], %69 {strides = array<i32>} : memref<2x32x128xf32, #tpu.memory_space<vmem>>, vector<1x32x128xf32>,
      %c1_38 = arith.constant 1 : index
      %c0_39 = arith.constant 0 : index
      %c0_40 = arith.constant 0 : index
      %70 = vector.load %arg5[%c1_38, %c0_39, %c0_40] : memref<2x32x128xf32, #tpu.memory_space<vmem>>, vector<1x32x128xf32>
      %71 = vector.shape_cast %70 : vector<1x32x128xf32> to vector<32x128xf32>
      %72 = vector.shape_cast %53 : vector<32x128xf32> to vector<1x32x128xf32>
      tpu.vector_store %arg5[%c1_38, %c0_39, %c0_40], %72 {strides = array<i32>} : memref<2x32x128xf32, #tpu.memory_space<vmem>>, vector<1x32x128xf32>,
    } else {
    }
    return
  }
  func.func @transform_2(%arg0: i32) -> (i32, i32, i32) {
    %c0_i32 = arith.constant 0 : i32
    %c0_i32_0 = arith.constant 0 : i32
    %c0_i32_1 = arith.constant 0 : i32
    return %arg0, %c0_i32, %c0_i32_0 : i32, i32, i32
  }
  func.func @transform_3(%arg0: i32) -> (i32, i32, i32) {
    %c0_i32 = arith.constant 0 : i32
    %c0_i32_0 = arith.constant 0 : i32
    %c0_i32_1 = arith.constant 0 : i32
    return %arg0, %c0_i32, %c0_i32_0 : i32, i32, i32
  }
  func.func @transform_4(%arg0: i32) -> (i32, i32, i32) {
    %c0_i32 = arith.constant 0 : i32
    %c0_i32_0 = arith.constant 0 : i32
    %c0_i32_1 = arith.constant 0 : i32
    %c0_i32_2 = arith.constant 0 : i32
    return %c0_i32, %c0_i32_0, %c0_i32_1 : i32, i32, i32
  }
  func.func @transform_5(%arg0: i32) -> (i32, i32, i32) {
    %c0_i32 = arith.constant 0 : i32
    %c0_i32_0 = arith.constant 0 : i32
    %c0_i32_1 = arith.constant 0 : i32
    %c0_i32_2 = arith.constant 0 : i32
    return %c0_i32, %c0_i32_0, %c0_i32_1 : i32, i32, i32
  }
}

module attributes {stable_mosaic.version = 11 : i64} {
  func.func @kernel(%arg0: i32, %arg1: memref<2x64x128xbf16, #tpu.memory_space<any>>, %arg2: memref<64x64xbf16, #tpu.memory_space<any>>, %arg3: memref<1x128x256xbf16, #tpu.memory_space<vmem>>, %arg4: memref<1x1x128xf32, #tpu.memory_space<vmem>>, %arg5: memref<2x64x128xf32, #tpu.memory_space<vmem>>, %arg6: memref<2x64x128xf32, #tpu.memory_space<vmem>>, %arg7: memref<64x64xbf16, #tpu.memory_space<vmem>>, %arg8: memref<2x64x128xbf16, #tpu.memory_space<vmem>>, %arg9: memref<2x64x128xf32, #tpu.memory_space<vmem>>, %arg10: memref<2x!tpu.dma_semaphore, #tpu.memory_space<semaphore_mem>>) attributes {dimension_semantics = [#tpu.dimension_semantics<arbitrary>], iteration_bounds = array<i64: 15>, scalar_prefetch = 0 : i64, scratch_operands = 4 : i64, tpu.core_type = #tpu.core_type<tc>, window_params = [{}, {}, {transform_indices = @transform_2, window_bounds = array<i64: 1, 128, 256>}, {transform_indices = @transform_3, window_bounds = array<i64: 1, 1, 128>}, {pipeline_mode = #tpu.pipeline_mode<synchronous>, transform_indices = @transform_4, window_bounds = array<i64: 2, 64, 128>}, {pipeline_mode = #tpu.pipeline_mode<synchronous>, transform_indices = @transform_5, window_bounds = array<i64: 2, 64, 128>}]} {
    %c0_i32 = arith.constant 0 : i32
    %0 = arith.cmpi eq, %arg0, %c0_i32 : i32
    %c0_i32_0 = arith.constant 0 : i32
    %1 = arith.cmpi sgt, %arg0, %c0_i32_0 : i32
    %c13_i32 = arith.constant 13 : i32
    %2 = arith.cmpi slt, %arg0, %c13_i32 : i32
    %3 = arith.andi %1, %2 : i1
    %c2_i32 = arith.constant 2 : i32
    %c0_i32_1 = arith.constant 0 : i32
    %4 = arith.cmpi eq, %c2_i32, %c0_i32_1 : i32
    %c1_i32 = arith.constant 1 : i32
    %5 = arith.select %4, %c1_i32, %c2_i32 : i32
    %6 = arith.remsi %arg0, %5 : i32
    %c0_i32_2 = arith.constant 0 : i32
    %7 = arith.cmpi ne, %6, %c0_i32_2 : i32
    %c0_i32_3 = arith.constant 0 : i32
    %8 = arith.cmpi slt, %6, %c0_i32_3 : i32
    %c0_i32_4 = arith.constant 0 : i32
    %9 = arith.cmpi slt, %5, %c0_i32_4 : i32
    %10 = arith.xori %8, %9 : i1
    %11 = arith.andi %10, %7 : i1
    %12 = arith.addi %6, %5 : i32
    %13 = arith.select %11, %12, %6 : i32
    %c1_i32_5 = arith.constant 1 : i32
    %14 = arith.cmpi eq, %13, %c1_i32_5 : i32
    %c13_i32_6 = arith.constant 13 : i32
    %15 = arith.cmpi eq, %arg0, %c13_i32_6 : i32
    %16 = arith.extui %0 : i1 to i32
    %c0_i32_7 = arith.constant 0 : i32
    %17 = arith.cmpi ne, %16, %c0_i32_7 : i32
    scf.if %17 {
      %c0_i32_35 = arith.constant 0 : i32
      %71 = tpu.memref_slice %arg10[%c0_i32_35] : memref<2x!tpu.dma_semaphore, #tpu.memory_space<semaphore_mem>> -> memref<1x!tpu.dma_semaphore, #tpu.memory_space<semaphore_mem>>
      %72 = tpu.memref_squeeze %71 : memref<1x!tpu.dma_semaphore, #tpu.memory_space<semaphore_mem>> -> memref<!tpu.dma_semaphore, #tpu.memory_space<semaphore_mem>>
      tpu.enqueue_dma source(%arg2 : memref<64x64xbf16, #tpu.memory_space<any>>) target(%arg7 : memref<64x64xbf16, #tpu.memory_space<vmem>>) target_semaphore(%72 : memref<!tpu.dma_semaphore, #tpu.memory_space<semaphore_mem>>)
      %c1_i32_36 = arith.constant 1 : i32
      %73 = tpu.memref_slice %arg10[%c1_i32_36] : memref<2x!tpu.dma_semaphore, #tpu.memory_space<semaphore_mem>> -> memref<1x!tpu.dma_semaphore, #tpu.memory_space<semaphore_mem>>
      %74 = tpu.memref_squeeze %73 : memref<1x!tpu.dma_semaphore, #tpu.memory_space<semaphore_mem>> -> memref<!tpu.dma_semaphore, #tpu.memory_space<semaphore_mem>>
      tpu.enqueue_dma source(%arg1 : memref<2x64x128xbf16, #tpu.memory_space<any>>) target(%arg8 : memref<2x64x128xbf16, #tpu.memory_space<vmem>>) target_semaphore(%74 : memref<!tpu.dma_semaphore, #tpu.memory_space<semaphore_mem>>)
      %c0_i32_37 = arith.constant 0 : i32
      %75 = tpu.memref_slice %arg10[%c0_i32_37] : memref<2x!tpu.dma_semaphore, #tpu.memory_space<semaphore_mem>> -> memref<1x!tpu.dma_semaphore, #tpu.memory_space<semaphore_mem>>
      %76 = tpu.memref_squeeze %75 : memref<1x!tpu.dma_semaphore, #tpu.memory_space<semaphore_mem>> -> memref<!tpu.dma_semaphore, #tpu.memory_space<semaphore_mem>>
      tpu.wait_dma2 semaphore(%76 : memref<!tpu.dma_semaphore, #tpu.memory_space<semaphore_mem>>) src(%arg2 : memref<64x64xbf16, #tpu.memory_space<any>>) dst(%arg7 : memref<64x64xbf16, #tpu.memory_space<vmem>>)
      %c1_i32_38 = arith.constant 1 : i32
      %77 = tpu.memref_slice %arg10[%c1_i32_38] : memref<2x!tpu.dma_semaphore, #tpu.memory_space<semaphore_mem>> -> memref<1x!tpu.dma_semaphore, #tpu.memory_space<semaphore_mem>>
      %78 = tpu.memref_squeeze %77 : memref<1x!tpu.dma_semaphore, #tpu.memory_space<semaphore_mem>> -> memref<!tpu.dma_semaphore, #tpu.memory_space<semaphore_mem>>
      tpu.wait_dma2 semaphore(%78 : memref<!tpu.dma_semaphore, #tpu.memory_space<semaphore_mem>>) src(%arg1 : memref<2x64x128xbf16, #tpu.memory_space<any>>) dst(%arg8 : memref<2x64x128xbf16, #tpu.memory_space<vmem>>)
    } else {
    }
    %c0 = arith.constant 0 : index
    %c0_8 = arith.constant 0 : index
    %c0_9 = arith.constant 0 : index
    %18 = vector.load %arg3[%c0, %c0_8, %c0_9] : memref<1x128x256xbf16, #tpu.memory_space<vmem>>, vector<1x128x256xbf16>
    %19 = vector.shape_cast %18 : vector<1x128x256xbf16> to vector<128x256xbf16>
    %c0_10 = arith.constant 0 : index
    %c0_11 = arith.constant 0 : index
    %c0_12 = arith.constant 0 : index
    %20 = vector.load %arg4[%c0_10, %c0_11, %c0_12] : memref<1x1x128xf32, #tpu.memory_space<vmem>>, vector<1x1x128xf32>
    %21 = vector.shape_cast %20 : vector<1x1x128xf32> to vector<1x128xf32>
    %c0_13 = arith.constant 0 : index
    %c0_14 = arith.constant 0 : index
    %22 = vector.load %arg7[%c0_13, %c0_14] : memref<64x64xbf16, #tpu.memory_space<vmem>>, vector<64x64xbf16>
    %c0_15 = arith.constant 0 : index
    %c0_16 = arith.constant 0 : index
    %c0_17 = arith.constant 0 : index
    %23 = vector.load %arg8[%c0_15, %c0_16, %c0_17] : memref<2x64x128xbf16, #tpu.memory_space<vmem>>, vector<1x64x128xbf16>
    %24 = vector.shape_cast %23 : vector<1x64x128xbf16> to vector<64x128xbf16>
    %cst = arith.constant dense<0.000000e+00> : vector<64x256xf32>
    %25 = tpu.matmul %24, %19, %cst {dimension_numbers = #tpu.dot_dimension_numbers<[1], [0], [0], [1], [0, 0, 1, 1], [], []>} : vector<64x128xbf16>, vector<128x256xbf16>, vector<64x256xf32> -> vector<64x256xf32>
    %26 = vector.extract_strided_slice %25 {offsets = [0, 0], sizes = [64, 128], strides = [1, 1]} : vector<64x256xf32> to vector<64x128xf32>
    %27 = arith.truncf %26 : vector<64x128xf32> to vector<64x128xbf16>
    %cst_18 = arith.constant dense<0.000000e+00> : vector<64x128xf32>
    %28 = tpu.matmul %22, %27, %cst_18 {dimension_numbers = #tpu.dot_dimension_numbers<[1], [0], [0], [1], [0, 0, 1, 1], [], []>} : vector<64x64xbf16>, vector<64x128xbf16>, vector<64x128xf32> -> vector<64x128xf32>
    %29 = vector.extract_strided_slice %25 {offsets = [0, 128], sizes = [64, 128], strides = [1, 1]} : vector<64x256xf32> to vector<64x128xf32>
    %30 = arith.addf %28, %29 : vector<64x128xf32>
    %31 = vector.broadcast %21 : vector<1x128xf32> to vector<64x128xf32>
    %32 = arith.addf %30, %31 : vector<64x128xf32>
    %33 = arith.extui %0 : i1 to i32
    %c0_i32_19 = arith.constant 0 : i32
    %34 = arith.cmpi ne, %33, %c0_i32_19 : i32
    scf.if %34 {
      %cst_35 = arith.constant 0.000000e+00 : f32
      %71 = vector.broadcast %cst_35 : f32 to vector<64x128xf32>
      %72 = arith.maximumf %32, %71 : vector<64x128xf32>
      %c0_36 = arith.constant 0 : index
      %c0_37 = arith.constant 0 : index
      %c0_38 = arith.constant 0 : index
      %73 = vector.load %arg9[%c0_36, %c0_37, %c0_38] : memref<2x64x128xf32, #tpu.memory_space<vmem>>, vector<1x64x128xf32>
      %74 = vector.shape_cast %73 : vector<1x64x128xf32> to vector<64x128xf32>
      %75 = vector.shape_cast %72 : vector<64x128xf32> to vector<1x64x128xf32>
      tpu.vector_store %arg9[%c0_36, %c0_37, %c0_38], %75 {strides = array<i32>} : memref<2x64x128xf32, #tpu.memory_space<vmem>>, vector<1x64x128xf32>,
      %76 = arith.truncf %72 : vector<64x128xf32> to vector<64x128xbf16>
      %c0_39 = arith.constant 0 : index
      %c0_40 = arith.constant 0 : index
      %c0_41 = arith.constant 0 : index
      %77 = vector.load %arg8[%c0_39, %c0_40, %c0_41] : memref<2x64x128xbf16, #tpu.memory_space<vmem>>, vector<1x64x128xbf16>
      %78 = vector.shape_cast %77 : vector<1x64x128xbf16> to vector<64x128xbf16>
      %79 = vector.shape_cast %76 : vector<64x128xbf16> to vector<1x64x128xbf16>
      tpu.vector_store %arg8[%c0_39, %c0_40, %c0_41], %79 {strides = array<i32>} : memref<2x64x128xbf16, #tpu.memory_space<vmem>>, vector<1x64x128xbf16>,
    } else {
    }
    %35 = arith.andi %3, %14 : i1
    %36 = arith.extui %35 : i1 to i32
    %c0_i32_20 = arith.constant 0 : i32
    %37 = arith.cmpi ne, %36, %c0_i32_20 : i32
    scf.if %37 {
      %cst_35 = arith.constant 0.000000e+00 : f32
      %71 = vector.broadcast %cst_35 : f32 to vector<64x128xf32>
      %72 = arith.maximumf %32, %71 : vector<64x128xf32>
      %73 = arith.truncf %72 : vector<64x128xf32> to vector<64x128xbf16>
      %c0_36 = arith.constant 0 : index
      %c0_37 = arith.constant 0 : index
      %c0_38 = arith.constant 0 : index
      %74 = vector.load %arg8[%c0_36, %c0_37, %c0_38] : memref<2x64x128xbf16, #tpu.memory_space<vmem>>, vector<1x64x128xbf16>
      %75 = vector.shape_cast %74 : vector<1x64x128xbf16> to vector<64x128xbf16>
      %76 = vector.shape_cast %73 : vector<64x128xbf16> to vector<1x64x128xbf16>
      tpu.vector_store %arg8[%c0_36, %c0_37, %c0_38], %76 {strides = array<i32>} : memref<2x64x128xbf16, #tpu.memory_space<vmem>>, vector<1x64x128xbf16>,
    } else {
    }
    %true = arith.constant true
    %38 = arith.xori %14, %true : i1
    %39 = arith.andi %3, %38 : i1
    %40 = arith.extui %39 : i1 to i32
    %c0_i32_21 = arith.constant 0 : i32
    %41 = arith.cmpi ne, %40, %c0_i32_21 : i32
    scf.if %41 {
      %c0_35 = arith.constant 0 : index
      %c0_36 = arith.constant 0 : index
      %c0_37 = arith.constant 0 : index
      %71 = vector.load %arg9[%c0_35, %c0_36, %c0_37] : memref<2x64x128xf32, #tpu.memory_space<vmem>>, vector<1x64x128xf32>
      %72 = vector.shape_cast %71 : vector<1x64x128xf32> to vector<64x128xf32>
      %cst_38 = arith.constant 0.000000e+00 : f32
      %73 = vector.broadcast %cst_38 : f32 to vector<64x128xf32>
      %74 = arith.maximumf %32, %73 : vector<64x128xf32>
      %75 = arith.addf %72, %74 : vector<64x128xf32>
      %cst_39 = arith.constant 5.000000e-01 : f32
      %76 = vector.broadcast %cst_39 : f32 to vector<64x128xf32>
      %77 = arith.mulf %75, %76 : vector<64x128xf32>
      %c0_40 = arith.constant 0 : index
      %c0_41 = arith.constant 0 : index
      %c0_42 = arith.constant 0 : index
      %78 = vector.load %arg9[%c0_40, %c0_41, %c0_42] : memref<2x64x128xf32, #tpu.memory_space<vmem>>, vector<1x64x128xf32>
      %79 = vector.shape_cast %78 : vector<1x64x128xf32> to vector<64x128xf32>
      %80 = vector.shape_cast %77 : vector<64x128xf32> to vector<1x64x128xf32>
      tpu.vector_store %arg9[%c0_40, %c0_41, %c0_42], %80 {strides = array<i32>} : memref<2x64x128xf32, #tpu.memory_space<vmem>>, vector<1x64x128xf32>,
      %81 = arith.truncf %77 : vector<64x128xf32> to vector<64x128xbf16>
      %c0_43 = arith.constant 0 : index
      %c0_44 = arith.constant 0 : index
      %c0_45 = arith.constant 0 : index
      %82 = vector.load %arg8[%c0_43, %c0_44, %c0_45] : memref<2x64x128xbf16, #tpu.memory_space<vmem>>, vector<1x64x128xbf16>
      %83 = vector.shape_cast %82 : vector<1x64x128xbf16> to vector<64x128xbf16>
      %84 = vector.shape_cast %81 : vector<64x128xbf16> to vector<1x64x128xbf16>
      tpu.vector_store %arg8[%c0_43, %c0_44, %c0_45], %84 {strides = array<i32>} : memref<2x64x128xbf16, #tpu.memory_space<vmem>>, vector<1x64x128xbf16>,
    } else {
    }
    %42 = arith.extui %15 : i1 to i32
    %c0_i32_22 = arith.constant 0 : i32
    %43 = arith.cmpi ne, %42, %c0_i32_22 : i32
    scf.if %43 {
      %c0_35 = arith.constant 0 : index
      %c0_36 = arith.constant 0 : index
      %c0_37 = arith.constant 0 : index
      %71 = vector.load %arg9[%c0_35, %c0_36, %c0_37] : memref<2x64x128xf32, #tpu.memory_space<vmem>>, vector<1x64x128xf32>
      %72 = vector.shape_cast %71 : vector<1x64x128xf32> to vector<64x128xf32>
      %c0_38 = arith.constant 0 : index
      %c0_39 = arith.constant 0 : index
      %c0_40 = arith.constant 0 : index
      %73 = vector.load %arg6[%c0_38, %c0_39, %c0_40] : memref<2x64x128xf32, #tpu.memory_space<vmem>>, vector<1x64x128xf32>
      %74 = vector.shape_cast %73 : vector<1x64x128xf32> to vector<64x128xf32>
      %75 = vector.shape_cast %72 : vector<64x128xf32> to vector<1x64x128xf32>
      tpu.vector_store %arg6[%c0_38, %c0_39, %c0_40], %75 {strides = array<i32>} : memref<2x64x128xf32, #tpu.memory_space<vmem>>, vector<1x64x128xf32>,
      %cst_41 = arith.constant 0.000000e+00 : f32
      %76 = vector.broadcast %cst_41 : f32 to vector<64x128xf32>
      %77 = arith.maximumf %32, %76 : vector<64x128xf32>
      %78 = arith.truncf %77 : vector<64x128xf32> to vector<64x128xbf16>
      %c0_42 = arith.constant 0 : index
      %c0_43 = arith.constant 0 : index
      %c0_44 = arith.constant 0 : index
      %79 = vector.load %arg8[%c0_42, %c0_43, %c0_44] : memref<2x64x128xbf16, #tpu.memory_space<vmem>>, vector<1x64x128xbf16>
      %80 = vector.shape_cast %79 : vector<1x64x128xbf16> to vector<64x128xbf16>
      %81 = vector.shape_cast %78 : vector<64x128xbf16> to vector<1x64x128xbf16>
      tpu.vector_store %arg8[%c0_42, %c0_43, %c0_44], %81 {strides = array<i32>} : memref<2x64x128xbf16, #tpu.memory_space<vmem>>, vector<1x64x128xbf16>,
    } else {
    }
    %c14_i32 = arith.constant 14 : i32
    %44 = arith.cmpi eq, %arg0, %c14_i32 : i32
    %45 = arith.extui %44 : i1 to i32
    %c0_i32_23 = arith.constant 0 : i32
    %46 = arith.cmpi ne, %45, %c0_i32_23 : i32
    scf.if %46 {
      %c0_35 = arith.constant 0 : index
      %c0_36 = arith.constant 0 : index
      %c0_37 = arith.constant 0 : index
      %71 = vector.load %arg5[%c0_35, %c0_36, %c0_37] : memref<2x64x128xf32, #tpu.memory_space<vmem>>, vector<1x64x128xf32>
      %72 = vector.shape_cast %71 : vector<1x64x128xf32> to vector<64x128xf32>
      %73 = vector.shape_cast %32 : vector<64x128xf32> to vector<1x64x128xf32>
      tpu.vector_store %arg5[%c0_35, %c0_36, %c0_37], %73 {strides = array<i32>} : memref<2x64x128xf32, #tpu.memory_space<vmem>>, vector<1x64x128xf32>,
    } else {
    }
    %c1 = arith.constant 1 : index
    %c0_24 = arith.constant 0 : index
    %c0_25 = arith.constant 0 : index
    %47 = vector.load %arg8[%c1, %c0_24, %c0_25] : memref<2x64x128xbf16, #tpu.memory_space<vmem>>, vector<1x64x128xbf16>
    %48 = vector.shape_cast %47 : vector<1x64x128xbf16> to vector<64x128xbf16>
    %cst_26 = arith.constant dense<0.000000e+00> : vector<64x256xf32>
    %49 = tpu.matmul %48, %19, %cst_26 {dimension_numbers = #tpu.dot_dimension_numbers<[1], [0], [0], [1], [0, 0, 1, 1], [], []>} : vector<64x128xbf16>, vector<128x256xbf16>, vector<64x256xf32> -> vector<64x256xf32>
    %50 = vector.extract_strided_slice %49 {offsets = [0, 0], sizes = [64, 128], strides = [1, 1]} : vector<64x256xf32> to vector<64x128xf32>
    %51 = arith.truncf %50 : vector<64x128xf32> to vector<64x128xbf16>
    %cst_27 = arith.constant dense<0.000000e+00> : vector<64x128xf32>
    %52 = tpu.matmul %22, %51, %cst_27 {dimension_numbers = #tpu.dot_dimension_numbers<[1], [0], [0], [1], [0, 0, 1, 1], [], []>} : vector<64x64xbf16>, vector<64x128xbf16>, vector<64x128xf32> -> vector<64x128xf32>
    %53 = vector.extract_strided_slice %49 {offsets = [0, 128], sizes = [64, 128], strides = [1, 1]} : vector<64x256xf32> to vector<64x128xf32>
    %54 = arith.addf %52, %53 : vector<64x128xf32>
    %55 = vector.broadcast %21 : vector<1x128xf32> to vector<64x128xf32>
    %56 = arith.addf %54, %55 : vector<64x128xf32>
    %57 = arith.extui %0 : i1 to i32
    %c0_i32_28 = arith.constant 0 : i32
    %58 = arith.cmpi ne, %57, %c0_i32_28 : i32
    scf.if %58 {
      %cst_35 = arith.constant 0.000000e+00 : f32
      %71 = vector.broadcast %cst_35 : f32 to vector<64x128xf32>
      %72 = arith.maximumf %56, %71 : vector<64x128xf32>
      %c1_36 = arith.constant 1 : index
      %c0_37 = arith.constant 0 : index
      %c0_38 = arith.constant 0 : index
      %73 = vector.load %arg9[%c1_36, %c0_37, %c0_38] : memref<2x64x128xf32, #tpu.memory_space<vmem>>, vector<1x64x128xf32>
      %74 = vector.shape_cast %73 : vector<1x64x128xf32> to vector<64x128xf32>
      %75 = vector.shape_cast %72 : vector<64x128xf32> to vector<1x64x128xf32>
      tpu.vector_store %arg9[%c1_36, %c0_37, %c0_38], %75 {strides = array<i32>} : memref<2x64x128xf32, #tpu.memory_space<vmem>>, vector<1x64x128xf32>,
      %76 = arith.truncf %72 : vector<64x128xf32> to vector<64x128xbf16>
      %c1_39 = arith.constant 1 : index
      %c0_40 = arith.constant 0 : index
      %c0_41 = arith.constant 0 : index
      %77 = vector.load %arg8[%c1_39, %c0_40, %c0_41] : memref<2x64x128xbf16, #tpu.memory_space<vmem>>, vector<1x64x128xbf16>
      %78 = vector.shape_cast %77 : vector<1x64x128xbf16> to vector<64x128xbf16>
      %79 = vector.shape_cast %76 : vector<64x128xbf16> to vector<1x64x128xbf16>
      tpu.vector_store %arg8[%c1_39, %c0_40, %c0_41], %79 {strides = array<i32>} : memref<2x64x128xbf16, #tpu.memory_space<vmem>>, vector<1x64x128xbf16>,
    } else {
    }
    %59 = arith.andi %3, %14 : i1
    %60 = arith.extui %59 : i1 to i32
    %c0_i32_29 = arith.constant 0 : i32
    %61 = arith.cmpi ne, %60, %c0_i32_29 : i32
    scf.if %61 {
      %cst_35 = arith.constant 0.000000e+00 : f32
      %71 = vector.broadcast %cst_35 : f32 to vector<64x128xf32>
      %72 = arith.maximumf %56, %71 : vector<64x128xf32>
      %73 = arith.truncf %72 : vector<64x128xf32> to vector<64x128xbf16>
      %c1_36 = arith.constant 1 : index
      %c0_37 = arith.constant 0 : index
      %c0_38 = arith.constant 0 : index
      %74 = vector.load %arg8[%c1_36, %c0_37, %c0_38] : memref<2x64x128xbf16, #tpu.memory_space<vmem>>, vector<1x64x128xbf16>
      %75 = vector.shape_cast %74 : vector<1x64x128xbf16> to vector<64x128xbf16>
      %76 = vector.shape_cast %73 : vector<64x128xbf16> to vector<1x64x128xbf16>
      tpu.vector_store %arg8[%c1_36, %c0_37, %c0_38], %76 {strides = array<i32>} : memref<2x64x128xbf16, #tpu.memory_space<vmem>>, vector<1x64x128xbf16>,
    } else {
    }
    %true_30 = arith.constant true
    %62 = arith.xori %14, %true_30 : i1
    %63 = arith.andi %3, %62 : i1
    %64 = arith.extui %63 : i1 to i32
    %c0_i32_31 = arith.constant 0 : i32
    %65 = arith.cmpi ne, %64, %c0_i32_31 : i32
    scf.if %65 {
      %c1_35 = arith.constant 1 : index
      %c0_36 = arith.constant 0 : index
      %c0_37 = arith.constant 0 : index
      %71 = vector.load %arg9[%c1_35, %c0_36, %c0_37] : memref<2x64x128xf32, #tpu.memory_space<vmem>>, vector<1x64x128xf32>
      %72 = vector.shape_cast %71 : vector<1x64x128xf32> to vector<64x128xf32>
      %cst_38 = arith.constant 0.000000e+00 : f32
      %73 = vector.broadcast %cst_38 : f32 to vector<64x128xf32>
      %74 = arith.maximumf %56, %73 : vector<64x128xf32>
      %75 = arith.addf %72, %74 : vector<64x128xf32>
      %cst_39 = arith.constant 5.000000e-01 : f32
      %76 = vector.broadcast %cst_39 : f32 to vector<64x128xf32>
      %77 = arith.mulf %75, %76 : vector<64x128xf32>
      %c1_40 = arith.constant 1 : index
      %c0_41 = arith.constant 0 : index
      %c0_42 = arith.constant 0 : index
      %78 = vector.load %arg9[%c1_40, %c0_41, %c0_42] : memref<2x64x128xf32, #tpu.memory_space<vmem>>, vector<1x64x128xf32>
      %79 = vector.shape_cast %78 : vector<1x64x128xf32> to vector<64x128xf32>
      %80 = vector.shape_cast %77 : vector<64x128xf32> to vector<1x64x128xf32>
      tpu.vector_store %arg9[%c1_40, %c0_41, %c0_42], %80 {strides = array<i32>} : memref<2x64x128xf32, #tpu.memory_space<vmem>>, vector<1x64x128xf32>,
      %81 = arith.truncf %77 : vector<64x128xf32> to vector<64x128xbf16>
      %c1_43 = arith.constant 1 : index
      %c0_44 = arith.constant 0 : index
      %c0_45 = arith.constant 0 : index
      %82 = vector.load %arg8[%c1_43, %c0_44, %c0_45] : memref<2x64x128xbf16, #tpu.memory_space<vmem>>, vector<1x64x128xbf16>
      %83 = vector.shape_cast %82 : vector<1x64x128xbf16> to vector<64x128xbf16>
      %84 = vector.shape_cast %81 : vector<64x128xbf16> to vector<1x64x128xbf16>
      tpu.vector_store %arg8[%c1_43, %c0_44, %c0_45], %84 {strides = array<i32>} : memref<2x64x128xbf16, #tpu.memory_space<vmem>>, vector<1x64x128xbf16>,
    } else {
    }
    %66 = arith.extui %15 : i1 to i32
    %c0_i32_32 = arith.constant 0 : i32
    %67 = arith.cmpi ne, %66, %c0_i32_32 : i32
    scf.if %67 {
      %c1_35 = arith.constant 1 : index
      %c0_36 = arith.constant 0 : index
      %c0_37 = arith.constant 0 : index
      %71 = vector.load %arg9[%c1_35, %c0_36, %c0_37] : memref<2x64x128xf32, #tpu.memory_space<vmem>>, vector<1x64x128xf32>
      %72 = vector.shape_cast %71 : vector<1x64x128xf32> to vector<64x128xf32>
      %c1_38 = arith.constant 1 : index
      %c0_39 = arith.constant 0 : index
      %c0_40 = arith.constant 0 : index
      %73 = vector.load %arg6[%c1_38, %c0_39, %c0_40] : memref<2x64x128xf32, #tpu.memory_space<vmem>>, vector<1x64x128xf32>
      %74 = vector.shape_cast %73 : vector<1x64x128xf32> to vector<64x128xf32>
      %75 = vector.shape_cast %72 : vector<64x128xf32> to vector<1x64x128xf32>
      tpu.vector_store %arg6[%c1_38, %c0_39, %c0_40], %75 {strides = array<i32>} : memref<2x64x128xf32, #tpu.memory_space<vmem>>, vector<1x64x128xf32>,
      %cst_41 = arith.constant 0.000000e+00 : f32
      %76 = vector.broadcast %cst_41 : f32 to vector<64x128xf32>
      %77 = arith.maximumf %56, %76 : vector<64x128xf32>
      %78 = arith.truncf %77 : vector<64x128xf32> to vector<64x128xbf16>
      %c1_42 = arith.constant 1 : index
      %c0_43 = arith.constant 0 : index
      %c0_44 = arith.constant 0 : index
      %79 = vector.load %arg8[%c1_42, %c0_43, %c0_44] : memref<2x64x128xbf16, #tpu.memory_space<vmem>>, vector<1x64x128xbf16>
      %80 = vector.shape_cast %79 : vector<1x64x128xbf16> to vector<64x128xbf16>
      %81 = vector.shape_cast %78 : vector<64x128xbf16> to vector<1x64x128xbf16>
      tpu.vector_store %arg8[%c1_42, %c0_43, %c0_44], %81 {strides = array<i32>} : memref<2x64x128xbf16, #tpu.memory_space<vmem>>, vector<1x64x128xbf16>,
    } else {
    }
    %c14_i32_33 = arith.constant 14 : i32
    %68 = arith.cmpi eq, %arg0, %c14_i32_33 : i32
    %69 = arith.extui %68 : i1 to i32
    %c0_i32_34 = arith.constant 0 : i32
    %70 = arith.cmpi ne, %69, %c0_i32_34 : i32
    scf.if %70 {
      %c1_35 = arith.constant 1 : index
      %c0_36 = arith.constant 0 : index
      %c0_37 = arith.constant 0 : index
      %71 = vector.load %arg5[%c1_35, %c0_36, %c0_37] : memref<2x64x128xf32, #tpu.memory_space<vmem>>, vector<1x64x128xf32>
      %72 = vector.shape_cast %71 : vector<1x64x128xf32> to vector<64x128xf32>
      %73 = vector.shape_cast %56 : vector<64x128xf32> to vector<1x64x128xf32>
      tpu.vector_store %arg5[%c1_35, %c0_36, %c0_37], %73 {strides = array<i32>} : memref<2x64x128xf32, #tpu.memory_space<vmem>>, vector<1x64x128xf32>,
    } else {
    }
    return
  }
  func.func @transform_2(%arg0: i32) -> (i32, i32, i32) {
    %c0_i32 = arith.constant 0 : i32
    %c0_i32_0 = arith.constant 0 : i32
    %c0_i32_1 = arith.constant 0 : i32
    return %arg0, %c0_i32, %c0_i32_0 : i32, i32, i32
  }
  func.func @transform_3(%arg0: i32) -> (i32, i32, i32) {
    %c0_i32 = arith.constant 0 : i32
    %c0_i32_0 = arith.constant 0 : i32
    %c0_i32_1 = arith.constant 0 : i32
    return %arg0, %c0_i32, %c0_i32_0 : i32, i32, i32
  }
  func.func @transform_4(%arg0: i32) -> (i32, i32, i32) {
    %c0_i32 = arith.constant 0 : i32
    %c0_i32_0 = arith.constant 0 : i32
    %c0_i32_1 = arith.constant 0 : i32
    %c0_i32_2 = arith.constant 0 : i32
    return %c0_i32, %c0_i32_0, %c0_i32_1 : i32, i32, i32
  }
  func.func @transform_5(%arg0: i32) -> (i32, i32, i32) {
    %c0_i32 = arith.constant 0 : i32
    %c0_i32_0 = arith.constant 0 : i32
    %c0_i32_1 = arith.constant 0 : i32
    %c0_i32_2 = arith.constant 0 : i32
    return %c0_i32, %c0_i32_0, %c0_i32_1 : i32, i32, i32
  }
}

</mosaic_0001>

<llo_original>
// kernel: _lambda_.7
$region0: #{_lambda_.7}
  #allocation0 [shape = 'u32[]', space=smem, size = 0x4, offset = 0x4, fixed_abs, tag = 'smem constant byte address 0x4 - core index']
  #allocation1 [shape = 'u32[72,128]{1,0:T(1,128)}', space=vmem, size = 0x9000, scoped, tag = 'internal scratch']
  %s0 = inlined_call_operand.vmem [shape: bf16[2,108,4], index: 0, kind: input, shape index: {}]
  %s1 = inlined_call_operand.vmem [shape: bf16[9,4,8], index: 1, kind: input, shape index: {}]
  %s2 = inlined_call_operand.vmem [shape: f32[1,8], index: 2, kind: input, shape index: {}]
  %s3 = inlined_call_operand.vmem [shape: bf16[2,80,8], index: 3, kind: output, shape index: {}]
  %s4 = sld [smem:[#allocation0]]
  $region45: #{_lambda_.7} parent=0
    _
  %s6 = ssub.s32 1, %s4
  %s7 = scalar_select 0, %s6, %s4
  loop: start=0, step=1, limit=4
  $region2: #{_lambda_.7} parent=0 // loop_pre_header
    _
  $region3: #{_lambda_.7} parent=0 // loop_header
    %s9 = sphi 0, %s13
    %p10 = scmp.ge.s32.totalorder %s9, 4
    %s19 = sphi 0, %s21
    %s22 = sphi 0, %s19
    %s23 = sphi 0, %s22
    %s39 = sphi 0, %s23
    %s43 = sphi 0, %s43
    %s45 = sphi 0, %s43
    %s46 = sphi 0, %s45
    %s60 = sphi 0, %s46
    %s64 = sphi 0, %s64
    %s66 = sphi 0, %s64
    %s67 = sphi 0, %s66
    %s81 = sphi 0, %s67
    %s87 = sphi 0, %s89
    %s90 = sphi 0, %s87
    %s91 = sphi 0, %s90
    %s107 = sphi 0, %s91
  $region4: #{_lambda_.7} parent=0 // loop_header_branch
    %12 = sbr.rel (%p10) target = $region8
  $region5: #{_lambda_.7} parent=0 // loop_body
    %s14 = ssub.s32 %s9, 1
    %s15 = ssub.s32 %s9, 2
    %s16 = sadd.s32 %s9, 1
    %s17 = ssub.s32 %s9, %s16
    %p18 = scmp.eq.s32.totalorder %s17, 0
    %s20 = sadd.s32 %s19, 1
    %s21 = scalar_select %p18, %s19, %s20
    %p24 = pneg %p18
    %p25 = scmp.eq.s32.totalorder %s9, 1
    %p26 = por %p24, %p25
    %p27 = scmp.ne.s32.totalorder %s19, %s22
    %p28 = scmp.eq.s32.totalorder %s9, 0
    %p29 = por %p27, %p28
    %p30 = scmp.ne.s32.totalorder %s19, %s22
    %p31 = scmp.eq.s32.totalorder %s14, 1
    %p32 = por %p30, %p31
    %p33 = scmp.ne.s32.totalorder %s22, %s23
    %p34 = scmp.eq.s32.totalorder %s14, 0
    %p35 = por %p33, %p34
    %p36 = scmp.ne.s32.totalorder %s22, %s23
    %p37 = scmp.eq.s32.totalorder %s15, 1
    %p38 = por %p36, %p37
    %p40 = scmp.ne.s32.totalorder %s23, %s39
    %p41 = scmp.eq.s32.totalorder %s15, 0
    %p42 = por %p40, %p41
    %s44 = sadd.s32 %s43, 1
    %p47 = scmp.eq.s32.totalorder %s9, 1
    %p48 = scmp.ne.s32.totalorder %s43, %s45
    %p49 = scmp.eq.s32.totalorder %s9, 0
    %p50 = por %p48, %p49
    %p51 = scmp.ne.s32.totalorder %s43, %s45
    %p52 = scmp.eq.s32.totalorder %s14, 1
    %p53 = por %p51, %p52
    %p54 = scmp.ne.s32.totalorder %s45, %s46
    %p55 = scmp.eq.s32.totalorder %s14, 0
    %p56 = por %p54, %p55
    %p57 = scmp.ne.s32.totalorder %s45, %s46
    %p58 = scmp.eq.s32.totalorder %s15, 1
    %p59 = por %p57, %p58
    %p61 = scmp.ne.s32.totalorder %s46, %s60
    %p62 = scmp.eq.s32.totalorder %s15, 0
    %p63 = por %p61, %p62
    %s65 = sadd.s32 %s64, 1
    %p68 = scmp.eq.s32.totalorder %s9, 1
    %p69 = scmp.ne.s32.totalorder %s64, %s66
    %p70 = scmp.eq.s32.totalorder %s9, 0
    %p71 = por %p69, %p70
    %p72 = scmp.ne.s32.totalorder %s64, %s66
    %p73 = scmp.eq.s32.totalorder %s14, 1
    %p74 = por %p72, %p73
    %p75 = scmp.ne.s32.totalorder %s66, %s67
    %p76 = scmp.eq.s32.totalorder %s14, 0
    %p77 = por %p75, %p76
    %p78 = scmp.ne.s32.totalorder %s66, %s67
    %p79 = scmp.eq.s32.totalorder %s15, 1
    %p80 = por %p78, %p79
    %p82 = scmp.ne.s32.totalorder %s67, %s81
    %p83 = scmp.eq.s32.totalorder %s15, 0
    %p84 = por %p82, %p83
    %s85 = ssub.s32 %s9, %s16
    %p86 = scmp.eq.s32.totalorder %s85, 0
    %s88 = sadd.s32 %s87, 1
    %s89 = scalar_select %p86, %s87, %s88
    %p92 = pneg %p86
    %p93 = scmp.eq.s32.totalorder %s9, 1
    %p94 = por %p92, %p93
    %p95 = scmp.ne.s32.totalorder %s87, %s90
    %p96 = scmp.eq.s32.totalorder %s9, 0
    %p97 = por %p95, %p96
    %p98 = scmp.ne.s32.totalorder %s87, %s90
    %p99 = scmp.eq.s32.totalorder %s14, 1
    %p100 = por %p98, %p99
    %p101 = scmp.ne.s32.totalorder %s90, %s91
    %p102 = scmp.eq.s32.totalorder %s14, 0
    %p103 = por %p101, %p102
    %p104 = scmp.ne.s32.totalorder %s90, %s91
    %p105 = scmp.eq.s32.totalorder %s15, 1
    %p106 = por %p104, %p105
    %p108 = scmp.ne.s32.totalorder %s91, %s107
    %p109 = scmp.eq.s32.totalorder %s15, 0
    %p110 = por %p108, %p109
    %p111 = scmp.le.s32.totalorder 1, %s9
    %p112 = scmp.lt.s32.totalorder %s9, 3
    %p113 = pnand %p111, %p112
    %p114 = pneg %p113
    // Predicated region
    $region9: #{_lambda_.7} parent=5 // pred_check
      _
    $region10: #{_lambda_.7} parent=5 // pred_check_branch
      %116 = sbr.rel (%p113) target = $region12
    $region11: #{_lambda_.7} parent=5 // pred_region
      %s117 = ssub.s32 %s9, 1
      // Predicated region
      $region13: #{_lambda_.7} parent=11 // pred_check
        %p118 = pneg %p56
      $region14: #{_lambda_.7} parent=11 // pred_check_branch
        %120 = sbr.rel (%p118) target = $region16
      $region15: #{_lambda_.7} parent=11 // pred_region
        _
      $region16: #{_lambda_.7} parent=11 // pred_fallthru
        _
      // Predicated region
      $region17: #{_lambda_.7} parent=11 // pred_check
        %p121 = pneg %p77
      $region18: #{_lambda_.7} parent=11 // pred_check_branch
        %123 = sbr.rel (%p121) target = $region20
      $region19: #{_lambda_.7} parent=11 // pred_region
        _
      $region20: #{_lambda_.7} parent=11 // pred_fallthru
        _
    $region12: #{_lambda_.7} parent=5 // pred_fallthru
      _
    %p124 = scmp.lt.s32.totalorder %s9, 2
    // Predicated region
    $region21: #{_lambda_.7} parent=5 // pred_check
      %p125 = pneg %p124
    $region22: #{_lambda_.7} parent=5 // pred_check_branch
      %127 = sbr.rel (%p125) target = $region24
    $region23: #{_lambda_.7} parent=5 // pred_region
      // Predicated region
      $region25: #{_lambda_.7} parent=23 // pred_check
        %p128 = pneg %p29
      $region26: #{_lambda_.7} parent=23 // pred_check_branch
        %130 = sbr.rel (%p128) target = $region28
      $region27: #{_lambda_.7} parent=23 // pred_region
        %p131 = scmp.lt.s32.totalorder %s9, 1
        %s132 = scalar_select %p131, %s9, 1
        %s133 = smul.addr %s132, 14
        %s134 = smul.addr %s133, 4
        %s135 = scalar_lea.vmem %s0, %s134
      $region28: #{_lambda_.7} parent=23 // pred_fallthru
        _
    $region24: #{_lambda_.7} parent=5 // pred_fallthru
      _
    %p136 = scmp.le.s32.totalorder 1, %s9
    %p137 = scmp.lt.s32.totalorder %s9, 3
    %p138 = pnand %p136, %p137
    %p139 = pneg %p138
    // Predicated region
    $region29: #{_lambda_.7} parent=5 // pred_check
      _
    $region30: #{_lambda_.7} parent=5 // pred_check_branch
      %141 = sbr.rel (%p138) target = $region32
    $region31: #{_lambda_.7} parent=5 // pred_region
      %s142 = ssub.s32 %s9, 1
      %p143 = scmp.lt.s32.totalorder %s14, 1
      %s144 = scalar_select %p143, %s14, 1
      %s145 = smul.addr %s144, 14
      %s146 = smul.addr %s145, 4
      %s147 = scalar_lea.vmem %s0, %s146
      %p148 = pneg %p35
      %p149 = pneg %p32
      %p150 = pneg %p56
      %p151 = pneg %p53
      %p152 = pneg %p77
      %p153 = pneg %p74
      %p154 = pneg %p103
      %p155 = pneg %p100
      %p156 = scmp.lt.s32.totalorder %s14, 1
      %s157 = scalar_select %p156, %s14, 1
      %s158 = smul.addr %s157, 10
      %s159 = smul.addr %s158, 4
      %s160 = scalar_lea.vmem %s3, %s159
      %p161 = scmp.lt.s32.totalorder %s14, 1
      %s162 = scalar_select %p161, %s14, 1
      %s163 = smul.addr %s162, 14
      %s164 = smul.addr %s163, 4
      %s165 = scalar_lea.vmem %s0, %s164
      %p166 = scmp.lt.s32.totalorder %s14, 1
      %s167 = scalar_select %p166, %s14, 1
      %s168 = smul.addr %s167, 10
      %s169 = smul.addr %s168, 4
      %s170 = scalar_lea.vmem %s3, %s169
      %v172 = vld [vmem:[%s165] sm:$0xf]
      %v173 = vld [vmem:[%s165 + $0x4] sm:$0xf]
      %v174 = vld [vmem:[%s165 + $0x8] sm:$0xf]
      %v175 = vld [vmem:[%s165 + $0xc] sm:$0xf]
      %v176 = vld [vmem:[%s165 + $0x10] sm:$0xf]
      %v177 = vld [vmem:[%s165 + $0x14] sm:$0xf]
      %v178 = vld [vmem:[%s165 + $0x18] sm:$0xf]
      %v179 = vld [vmem:[%s165 + $0x1c] sm:$0xf]
      %v180 = vld [vmem:[%s165 + $0x20] sm:$0xf]
      %v181 = vld [vmem:[%s165 + $0x24] sm:$0xf]
      %v182 = vld [vmem:[%s1] sm:$0x3]
      %v183 = vld [vmem:[%s165 + $0x28] sm:$0x1]
      %s184 = scalar_lea.vmem %s1, 2
      %v185 = vld [vmem:[%s184] sm:$0x3]
      %v197 = vunpack.c.l.b16 %v172
      %v198 = vunpack.c.l.b16 %v173
      %v199 = vunpack.c.l.b16 %v174
      %v200 = vunpack.c.l.b16 %v175
      %v201 = vunpack.c.l.b16 %v176
      %v202 = vunpack.c.l.b16 %v177
      %v203 = vunpack.c.l.b16 %v178
      %v204 = vunpack.c.l.b16 %v179
      %v205 = vunpack.c.l.b16 %v180
      %v206 = vunpack.c.l.b16 %v181
      %v207 = vunpack.c.l.b16 %v183
      %v208 = vpack.c.b16 %v198, %v197
      %v209 = vpack.c.b16 %v200, %v199
      %v210 = vpack.c.b16 %v202, %v201
      %v211 = vpack.c.b16 %v204, %v203
      %v212 = vpack.c.b16 %v206, %v205
      %v213 = vpack.c.b16 %v207, %v207
      %vm214 = vsmask.f32 7424
      %v216 = vshrl.u32 %v208, 16
      %v218 = vshll.u32 %v208, 16
      %v220 = vrot.slane %v218, 1
      %v221 = vor.u32 %v216, %v220
      %v223 = vshll.u32 %v209, 16
      %v225 = vrot.slane %v223, 1
      %v226 = vsel %vm214, %v221, %v225
      %v227 = vshrl.u32 %v209, 16
      %v229 = vor.u32 %v227, %v225
      %v231 = vshll.u32 %v210, 16
      %v233 = vrot.slane %v231, 1
      %v234 = vsel %vm214, %v229, %v233
      %v235 = vshrl.u32 %v210, 16
      %v237 = vor.u32 %v235, %v233
      %v239 = vshll.u32 %v211, 16
      %v241 = vrot.slane %v239, 1
      %v242 = vsel %vm214, %v237, %v241
      %v243 = vshrl.u32 %v211, 16
      %v245 = vor.u32 %v243, %v241
      %v247 = vshll.u32 %v212, 16
      %v249 = vrot.slane %v247, 1
      %v250 = vsel %vm214, %v245, %v249
      %v251 = vshrl.u32 %v212, 16
      %v253 = vor.u32 %v251, %v249
      %v255 = vshll.u32 %v213, 16
      %v257 = vrot.slane %v255, 1
      %v258 = vsel %vm214, %v253, %v257
      %vm259 = vcmask 31744
      %v261 = vsel %vm259, %v226, 0
      %v264 = vsel %vm259, %v234, 0
      %v267 = vsel %vm259, %v242, 0
      %v270 = vsel %vm259, %v250, 0
      %v273 = vsel %vm259, %v258, 0
      %vm275 = vcmask 1041408
      %v277 = vsel %vm275, %v185, 0
      %279 = vmatpush.bf16.msra.mxu0 0
      %280 = vmatpush.bf16.msra.mxu0 0
      %281 = vmatpush.bf16.msra.mxu0 0
      %282 = vmatpush.bf16.msra.mxu0 0
      %283 = vmatpush.bf16.msra.mxu0 0
      %284 = vmatpush.bf16.msra.mxu0 0
      %285 = vmatpush.bf16.msra.mxu0 0
      %286 = vmatpush.bf16.msra.mxu0 %v277
      %287 = vmatmul.bf16.gmra.mxu0 %v261
      %v288 = vpop.f32.mrf.mxu0
      %v289 = vadd.f32 0.0, %v288
      %v290 = vpop.f32.mrf.mxu0
      %v291 = vadd.f32 0.0, %v290
      %292 = vmatmul.bf16.gmra.mxu0 %v264
      %v293 = vpop.f32.mrf.mxu0
      %v294 = vadd.f32 0.0, %v293
      %v295 = vpop.f32.mrf.mxu0
      %v296 = vadd.f32 0.0, %v295
      %297 = vmatmul.bf16.gmra.mxu0 %v267
      %v298 = vpop.f32.mrf.mxu0
      %v299 = vadd.f32 0.0, %v298
      %v300 = vpop.f32.mrf.mxu0
      %v301 = vadd.f32 0.0, %v300
      %302 = vmatmul.bf16.gmra.mxu0 %v270
      %v303 = vpop.f32.mrf.mxu0
      %v304 = vadd.f32 0.0, %v303
      %v305 = vpop.f32.mrf.mxu0
      %v306 = vadd.f32 0.0, %v305
      %307 = vmatmul.bf16.gmra.mxu0 %v273
      %v308 = vpop.f32.mrf.mxu0
      %v309 = vadd.f32 0.0, %v308
      %v310 = vpop.f32.mrf.mxu0
      %v311 = vadd.f32 0.0, %v310
      %312 = vdwg.mxu0
      %v313 = vsel %vm259, %v208, 0
      %v315 = vsel %vm259, %v209, 0
      %v317 = vsel %vm259, %v210, 0
      %v319 = vsel %vm259, %v211, 0
      %v321 = vsel %vm259, %v212, 0
      %v324 = vsel %vm275, %v182, 0
      %326 = vmatpush.bf16.msra.mxu0 0
      %327 = vmatpush.bf16.msra.mxu0 0
      %328 = vmatpush.bf16.msra.mxu0 0
      %329 = vmatpush.bf16.msra.mxu0 0
      %330 = vmatpush.bf16.msra.mxu0 0
      %331 = vmatpush.bf16.msra.mxu0 0
      %332 = vmatpush.bf16.msra.mxu0 0
      %333 = vmatpush.bf16.msra.mxu0 %v324
      %334 = vmatmul.bf16.gmra.mxu0 %v313
      %v335 = vpop.f32.mrf.mxu0
      %v336 = vadd.f32 %v289, %v335
      %v337 = vpop.f32.mrf.mxu0
      %v338 = vadd.f32 %v291, %v337
      %339 = vmatmul.bf16.gmra.mxu0 %v315
      %v340 = vpop.f32.mrf.mxu0
      %v341 = vadd.f32 %v294, %v340
      %v342 = vpop.f32.mrf.mxu0
      %v343 = vadd.f32 %v296, %v342
      %344 = vmatmul.bf16.gmra.mxu0 %v317
      %v345 = vpop.f32.mrf.mxu0
      %v346 = vadd.f32 %v299, %v345
      %v347 = vpop.f32.mrf.mxu0
      %v348 = vadd.f32 %v301, %v347
      %349 = vmatmul.bf16.gmra.mxu0 %v319
      %v350 = vpop.f32.mrf.mxu0
      %v351 = vadd.f32 %v304, %v350
      %v352 = vpop.f32.mrf.mxu0
      %v353 = vadd.f32 %v306, %v352
      %354 = vmatmul.bf16.gmra.mxu0 %v321
      %v355 = vpop.f32.mrf.mxu0
      %v356 = vadd.f32 %v309, %v355
      %v357 = vpop.f32.mrf.mxu0
      %v358 = vadd.f32 %v311, %v357
      %359 = vdwg.mxu0
      %v360 = vld [vmem:[%s165] sm:$0xe]
      %s361 = scalar_lea.vmem %s1, 4
      %v362 = vld [vmem:[%s361] sm:$0x3]
      %v364 = vunpack.c.l.b16 %v360
      %v365 = vpack.c.b16 %v198, %v364
      %vm366 = vcmask 1046528
      %v367 = vrot.slane %v365, 1
      %v368 = vrot.slane %v209, 1
      %v369 = vsel %vm366, %v367, %v368
      %v370 = vrot.slane %v210, 1
      %v371 = vsel %vm366, %v368, %v370
      %v372 = vrot.slane %v211, 1
      %v373 = vsel %vm366, %v370, %v372
      %v374 = vrot.slane %v212, 1
      %v375 = vsel %vm366, %v372, %v374
      %v376 = vrot.slane %v213, 1
      %v377 = vsel %vm366, %v374, %v376
      %v379 = vsel %vm259, %v369, 0
      %v382 = vsel %vm259, %v371, 0
      %v385 = vsel %vm259, %v373, 0
      %v388 = vsel %vm259, %v375, 0
      %v391 = vsel %vm259, %v377, 0
      %v394 = vsel %vm275, %v362, 0
      %396 = vmatpush.bf16.msra.mxu0 0
      %397 = vmatpush.bf16.msra.mxu0 0
      %398 = vmatpush.bf16.msra.mxu0 0
      %399 = vmatpush.bf16.msra.mxu0 0
      %400 = vmatpush.bf16.msra.mxu0 0
      %401 = vmatpush.bf16.msra.mxu0 0
      %402 = vmatpush.bf16.msra.mxu0 0
      %403 = vmatpush.bf16.msra.mxu0 %v394
      %404 = vmatmul.bf16.gmra.mxu0 %v379
      %v405 = vpop.f32.mrf.mxu0
      %v406 = vadd.f32 0.0, %v405
      %v407 = vpop.f32.mrf.mxu0
      %v408 = vadd.f32 0.0, %v407
      %409 = vmatmul.bf16.gmra.mxu0 %v382
      %v410 = vpop.f32.mrf.mxu0
      %v411 = vadd.f32 0.0, %v410
      %v412 = vpop.f32.mrf.mxu0
      %v413 = vadd.f32 0.0, %v412
      %414 = vmatmul.bf16.gmra.mxu0 %v385
      %v415 = vpop.f32.mrf.mxu0
      %v416 = vadd.f32 0.0, %v415
      %v417 = vpop.f32.mrf.mxu0
      %v418 = vadd.f32 0.0, %v417
      %419 = vmatmul.bf16.gmra.mxu0 %v388
      %v420 = vpop.f32.mrf.mxu0
      %v421 = vadd.f32 0.0, %v420
      %v422 = vpop.f32.mrf.mxu0
      %v423 = vadd.f32 0.0, %v422
      %424 = vmatmul.bf16.gmra.mxu0 %v391
      %v425 = vpop.f32.mrf.mxu0
      %v426 = vadd.f32 0.0, %v425
      %v427 = vpop.f32.mrf.mxu0
      %v428 = vadd.f32 0.0, %v427
      %429 = vdwg.mxu0
      %v430 = vadd.f32 %v336, %v406
      %v431 = vadd.f32 %v338, %v408
      %v432 = vadd.f32 %v341, %v411
      %v433 = vadd.f32 %v343, %v413
      %v434 = vadd.f32 %v346, %v416
      %v435 = vadd.f32 %v348, %v418
      %v436 = vadd.f32 %v351, %v421
      %v437 = vadd.f32 %v353, %v423
      %v438 = vadd.f32 %v356, %v426
      %v439 = vadd.f32 %v358, %v428
      %v440 = vld [vmem:[%s165 + $0x4] sm:$0xe]
      %v441 = vld [vmem:[%s165 + $0x8] sm:$0xf]
      %v442 = vld [vmem:[%s165 + $0xc] sm:$0xf]
      %v443 = vld [vmem:[%s165 + $0x10] sm:$0xf]
      %v444 = vld [vmem:[%s165 + $0x14] sm:$0xf]
      %v445 = vld [vmem:[%s165 + $0x18] sm:$0xf]
      %v446 = vld [vmem:[%s165 + $0x1c] sm:$0xf]
      %v447 = vld [vmem:[%s165 + $0x20] sm:$0xf]
      %v448 = vld [vmem:[%s165 + $0x24] sm:$0xf]
      %v449 = vld [vmem:[%s165 + $0x28] sm:$0xf]
      %v450 = vld [vmem:[%s165 + $0x2c] sm:$0x1]
      %s451 = scalar_lea.vmem %s1, 6
      %v452 = vld [vmem:[%s451] sm:$0x3]
      %v464 = vunpack.c.l.b16 %v440
      %v465 = vunpack.c.l.b16 %v441
      %v466 = vunpack.c.l.b16 %v442
      %v467 = vunpack.c.l.b16 %v443
      %v468 = vunpack.c.l.b16 %v444
      %v469 = vunpack.c.l.b16 %v445
      %v470 = vunpack.c.l.b16 %v446
      %v471 = vunpack.c.l.b16 %v447
      %v472 = vunpack.c.l.b16 %v448
      %v473 = vunpack.c.l.b16 %v449
      %v474 = vunpack.c.l.b16 %v450
      %v475 = vpack.c.b16 %v465, %v464
      %v476 = vpack.c.b16 %v467, %v466
      %v477 = vpack.c.b16 %v469, %v468
      %v478 = vpack.c.b16 %v471, %v470
      %v479 = vpack.c.b16 %v473, %v472
      %v480 = vpack.c.b16 %v474, %v474
      %v481 = vrot.slane %v475, 1
      %v482 = vrot.slane %v476, 1
      %v483 = vsel %vm366, %v481, %v482
      %v484 = vrot.slane %v477, 1
      %v485 = vsel %vm366, %v482, %v484
      %v486 = vrot.slane %v478, 1
      %v487 = vsel %vm366, %v484, %v486
      %v488 = vrot.slane %v479, 1
      %v489 = vsel %vm366, %v486, %v488
      %v490 = vrot.slane %v480, 1
      %v491 = vsel %vm366, %v488, %v490
      %v493 = vsel %vm259, %v483, 0
      %v496 = vsel %vm259, %v485, 0
      %v499 = vsel %vm259, %v487, 0
      %v502 = vsel %vm259, %v489, 0
      %v505 = vsel %vm259, %v491, 0
      %v508 = vsel %vm275, %v452, 0
      %510 = vmatpush.bf16.msra.mxu0 0
      %511 = vmatpush.bf16.msra.mxu0 0
      %512 = vmatpush.bf16.msra.mxu0 0
      %513 = vmatpush.bf16.msra.mxu0 0
      %514 = vmatpush.bf16.msra.mxu0 0
      %515 = vmatpush.bf16.msra.mxu0 0
      %516 = vmatpush.bf16.msra.mxu0 0
      %517 = vmatpush.bf16.msra.mxu0 %v508
      %518 = vmatmul.bf16.gmra.mxu0 %v493
      %v519 = vpop.f32.mrf.mxu0
      %v520 = vadd.f32 0.0, %v519
      %v521 = vpop.f32.mrf.mxu0
      %v522 = vadd.f32 0.0, %v521
      %523 = vmatmul.bf16.gmra.mxu0 %v496
      %v524 = vpop.f32.mrf.mxu0
      %v525 = vadd.f32 0.0, %v524
      %v526 = vpop.f32.mrf.mxu0
      %v527 = vadd.f32 0.0, %v526
      %528 = vmatmul.bf16.gmra.mxu0 %v499
      %v529 = vpop.f32.mrf.mxu0
      %v530 = vadd.f32 0.0, %v529
      %v531 = vpop.f32.mrf.mxu0
      %v532 = vadd.f32 0.0, %v531
      %533 = vmatmul.bf16.gmra.mxu0 %v502
      %v534 = vpop.f32.mrf.mxu0
      %v535 = vadd.f32 0.0, %v534
      %v536 = vpop.f32.mrf.mxu0
      %v537 = vadd.f32 0.0, %v536
      %538 = vmatmul.bf16.gmra.mxu0 %v505
      %v539 = vpop.f32.mrf.mxu0
      %v540 = vadd.f32 0.0, %v539
      %v541 = vpop.f32.mrf.mxu0
      %v542 = vadd.f32 0.0, %v541
      %543 = vdwg.mxu0
      %v544 = vadd.f32 %v430, %v520
      %v545 = vadd.f32 %v431, %v522
      %v546 = vadd.f32 %v432, %v525
      %v547 = vadd.f32 %v433, %v527
      %v548 = vadd.f32 %v434, %v530
      %v549 = vadd.f32 %v435, %v532
      %v550 = vadd.f32 %v436, %v535
      %v551 = vadd.f32 %v437, %v537
      %v552 = vadd.f32 %v438, %v540
      %v553 = vadd.f32 %v439, %v542
      %v554 = vld [vmem:[%s165 + $0x2c] sm:$0x3]
      %s555 = scalar_lea.vmem %s1, 8
      %v556 = vld [vmem:[%s555] sm:$0x3]
      %v558 = vunpack.c.l.b16 %v554
      %v559 = vpack.c.b16 %v558, %v558
      %vm560 = vsmask.f32 6400
      %v562 = vshrl.u32 %v475, 16
      %v564 = vrot.slane %v562, 1
      %v565 = vshll.u32 %v475, 16
      %v567 = vrot.slane %v565, 2
      %v568 = vor.u32 %v564, %v567
      %v570 = vshrl.u32 %v476, 16
      %v572 = vrot.slane %v570, 1
      %v573 = vshll.u32 %v476, 16
      %v575 = vrot.slane %v573, 2
      %v576 = vor.u32 %v572, %v575
      %v577 = vsel %vm560, %v568, %v576
      %v579 = vshrl.u32 %v477, 16
      %v581 = vrot.slane %v579, 1
      %v582 = vshll.u32 %v477, 16
      %v584 = vrot.slane %v582, 2
      %v585 = vor.u32 %v581, %v584
      %v586 = vsel %vm560, %v576, %v585
      %v588 = vshrl.u32 %v478, 16
      %v590 = vrot.slane %v588, 1
      %v591 = vshll.u32 %v478, 16
      %v593 = vrot.slane %v591, 2
      %v594 = vor.u32 %v590, %v593
      %v595 = vsel %vm560, %v585, %v594
      %v597 = vshrl.u32 %v479, 16
      %v599 = vrot.slane %v597, 1
      %v600 = vshll.u32 %v479, 16
      %v602 = vrot.slane %v600, 2
      %v603 = vor.u32 %v599, %v602
      %v604 = vsel %vm560, %v594, %v603
      %v606 = vshrl.u32 %v559, 16
      %v608 = vrot.slane %v606, 1
      %v609 = vshll.u32 %v559, 16
      %v611 = vrot.slane %v609, 2
      %v612 = vor.u32 %v608, %v611
      %v613 = vsel %vm560, %v603, %v612
      %v615 = vsel %vm259, %v577, 0
      %v618 = vsel %vm259, %v586, 0
      %v621 = vsel %vm259, %v595, 0
      %v624 = vsel %vm259, %v604, 0
      %v627 = vsel %vm259, %v613, 0
      %v630 = vsel %vm275, %v556, 0
      %632 = vmatpush.bf16.msra.mxu0 0
      %633 = vmatpush.bf16.msra.mxu0 0
      %634 = vmatpush.bf16.msra.mxu0 0
      %635 = vmatpush.bf16.msra.mxu0 0
      %636 = vmatpush.bf16.msra.mxu0 0
      %637 = vmatpush.bf16.msra.mxu0 0
      %638 = vmatpush.bf16.msra.mxu0 0
      %639 = vmatpush.bf16.msra.mxu0 %v630
      %640 = vmatmul.bf16.gmra.mxu0 %v615
      %v641 = vpop.f32.mrf.mxu0
      %v642 = vadd.f32 0.0, %v641
      %v643 = vpop.f32.mrf.mxu0
      %v644 = vadd.f32 0.0, %v643
      %645 = vmatmul.bf16.gmra.mxu0 %v618
      %v646 = vpop.f32.mrf.mxu0
      %v647 = vadd.f32 0.0, %v646
      %v648 = vpop.f32.mrf.mxu0
      %v649 = vadd.f32 0.0, %v648
      %650 = vmatmul.bf16.gmra.mxu0 %v621
      %v651 = vpop.f32.mrf.mxu0
      %v652 = vadd.f32 0.0, %v651
      %v653 = vpop.f32.mrf.mxu0
      %v654 = vadd.f32 0.0, %v653
      %655 = vmatmul.bf16.gmra.mxu0 %v624
      %v656 = vpop.f32.mrf.mxu0
      %v657 = vadd.f32 0.0, %v656
      %v658 = vpop.f32.mrf.mxu0
      %v659 = vadd.f32 0.0, %v658
      %660 = vmatmul.bf16.gmra.mxu0 %v627
      %v661 = vpop.f32.mrf.mxu0
      %v662 = vadd.f32 0.0, %v661
      %v663 = vpop.f32.mrf.mxu0
      %v664 = vadd.f32 0.0, %v663
      %665 = vdwg.mxu0
      %v666 = vadd.f32 %v544, %v642
      %v667 = vadd.f32 %v545, %v644
      %v668 = vadd.f32 %v546, %v647
      %v669 = vadd.f32 %v547, %v649
      %v670 = vadd.f32 %v548, %v652
      %v671 = vadd.f32 %v549, %v654
      %v672 = vadd.f32 %v550, %v657
      %v673 = vadd.f32 %v551, %v659
      %v674 = vadd.f32 %v552, %v662
      %v675 = vadd.f32 %v553, %v664
      %v676 = vld [vmem:[%s165 + $0x4] sm:$0xc]
      %s677 = scalar_lea.vmem %s1, 10
      %v678 = vld [vmem:[%s677] sm:$0x3]
      %v680 = vunpack.c.l.b16 %v676
      %v681 = vpack.c.b16 %v465, %v680
      %vm682 = vcmask 1045504
      %v683 = vrot.slane %v681, 2
      %v684 = vrot.slane %v476, 2
      %v685 = vsel %vm682, %v683, %v684
      %v686 = vrot.slane %v477, 2
      %v687 = vsel %vm682, %v684, %v686
      %v688 = vrot.slane %v478, 2
      %v689 = vsel %vm682, %v686, %v688
      %v690 = vrot.slane %v479, 2
      %v691 = vsel %vm682, %v688, %v690
      %v692 = vrot.slane %v559, 2
      %v693 = vsel %vm682, %v690, %v692
      %v695 = vsel %vm259, %v685, 0
      %v698 = vsel %vm259, %v687, 0
      %v701 = vsel %vm259, %v689, 0
      %v704 = vsel %vm259, %v691, 0
      %v707 = vsel %vm259, %v693, 0
      %v710 = vsel %vm275, %v678, 0
      %712 = vmatpush.bf16.msra.mxu0 0
      %713 = vmatpush.bf16.msra.mxu0 0
      %714 = vmatpush.bf16.msra.mxu0 0
      %715 = vmatpush.bf16.msra.mxu0 0
      %716 = vmatpush.bf16.msra.mxu0 0
      %717 = vmatpush.bf16.msra.mxu0 0
      %718 = vmatpush.bf16.msra.mxu0 0
      %719 = vmatpush.bf16.msra.mxu0 %v710
      %720 = vmatmul.bf16.gmra.mxu0 %v695
      %v721 = vpop.f32.mrf.mxu0
      %v722 = vadd.f32 0.0, %v721
      %v723 = vpop.f32.mrf.mxu0
      %v724 = vadd.f32 0.0, %v723
      %725 = vmatmul.bf16.gmra.mxu0 %v698
      %v726 = vpop.f32.mrf.mxu0
      %v727 = vadd.f32 0.0, %v726
      %v728 = vpop.f32.mrf.mxu0
      %v729 = vadd.f32 0.0, %v728
      %730 = vmatmul.bf16.gmra.mxu0 %v701
      %v731 = vpop.f32.mrf.mxu0
      %v732 = vadd.f32 0.0, %v731
      %v733 = vpop.f32.mrf.mxu0
      %v734 = vadd.f32 0.0, %v733
      %735 = vmatmul.bf16.gmra.mxu0 %v704
      %v736 = vpop.f32.mrf.mxu0
      %v737 = vadd.f32 0.0, %v736
      %v738 = vpop.f32.mrf.mxu0
      %v739 = vadd.f32 0.0, %v738
      %740 = vmatmul.bf16.gmra.mxu0 %v707
      %v741 = vpop.f32.mrf.mxu0
      %v742 = vadd.f32 0.0, %v741
      %v743 = vpop.f32.mrf.mxu0
      %v744 = vadd.f32 0.0, %v743
      %745 = vdwg.mxu0
      %v746 = vadd.f32 %v666, %v722
      %v747 = vadd.f32 %v667, %v724
      %v748 = vadd.f32 %v668, %v727
      %v749 = vadd.f32 %v669, %v729
      %v750 = vadd.f32 %v670, %v732
      %v751 = vadd.f32 %v671, %v734
      %v752 = vadd.f32 %v672, %v737
      %v753 = vadd.f32 %v673, %v739
      %v754 = vadd.f32 %v674, %v742
      %v755 = vadd.f32 %v675, %v744
      %v756 = vld [vmem:[%s165 + $0x8] sm:$0xc]
      %v757 = vld [vmem:[%s165 + $0xc] sm:$0xf]
      %v758 = vld [vmem:[%s165 + $0x10] sm:$0xf]
      %v759 = vld [vmem:[%s165 + $0x14] sm:$0xf]
      %v760 = vld [vmem:[%s165 + $0x18] sm:$0xf]
      %v761 = vld [vmem:[%s165 + $0x1c] sm:$0xf]
      %v762 = vld [vmem:[%s165 + $0x20] sm:$0xf]
      %v763 = vld [vmem:[%s165 + $0x24] sm:$0xf]
      %v764 = vld [vmem:[%s165 + $0x28] sm:$0xf]
      %v765 = vld [vmem:[%s165 + $0x2c] sm:$0xf]
      %v766 = vld [vmem:[%s165 + $0x30] sm:$0x3]
      %s767 = scalar_lea.vmem %s1, 12
      %v768 = vld [vmem:[%s767] sm:$0x3]
      %v780 = vunpack.c.l.b16 %v756
      %v781 = vunpack.c.l.b16 %v757
      %v782 = vunpack.c.l.b16 %v758
      %v783 = vunpack.c.l.b16 %v759
      %v784 = vunpack.c.l.b16 %v760
      %v785 = vunpack.c.l.b16 %v761
      %v786 = vunpack.c.l.b16 %v762
      %v787 = vunpack.c.l.b16 %v763
      %v788 = vunpack.c.l.b16 %v764
      %v789 = vunpack.c.l.b16 %v765
      %v790 = vunpack.c.l.b16 %v766
      %v791 = vpack.c.b16 %v781, %v780
      %v792 = vpack.c.b16 %v783, %v782
      %v793 = vpack.c.b16 %v785, %v784
      %v794 = vpack.c.b16 %v787, %v786
      %v795 = vpack.c.b16 %v789, %v788
      %v796 = vpack.c.b16 %v790, %v790
      %v797 = vrot.slane %v791, 2
      %v798 = vrot.slane %v792, 2
      %v799 = vsel %vm682, %v797, %v798
      %v800 = vrot.slane %v793, 2
      %v801 = vsel %vm682, %v798, %v800
      %v802 = vrot.slane %v794, 2
      %v803 = vsel %vm682, %v800, %v802
      %v804 = vrot.slane %v795, 2
      %v805 = vsel %vm682, %v802, %v804
      %v806 = vrot.slane %v796, 2
      %v807 = vsel %vm682, %v804, %v806
      %v809 = vsel %vm259, %v799, 0
      %v812 = vsel %vm259, %v801, 0
      %v815 = vsel %vm259, %v803, 0
      %v818 = vsel %vm259, %v805, 0
      %v821 = vsel %vm259, %v807, 0
      %v824 = vsel %vm275, %v768, 0
      %826 = vmatpush.bf16.msra.mxu0 0
      %827 = vmatpush.bf16.msra.mxu0 0
      %828 = vmatpush.bf16.msra.mxu0 0
      %829 = vmatpush.bf16.msra.mxu0 0
      %830 = vmatpush.bf16.msra.mxu0 0
      %831 = vmatpush.bf16.msra.mxu0 0
      %832 = vmatpush.bf16.msra.mxu0 0
      %833 = vmatpush.bf16.msra.mxu0 %v824
      %834 = vmatmul.bf16.gmra.mxu0 %v809
      %v835 = vpop.f32.mrf.mxu0
      %v836 = vadd.f32 0.0, %v835
      %v837 = vpop.f32.mrf.mxu0
      %v838 = vadd.f32 0.0, %v837
      %839 = vmatmul.bf16.gmra.mxu0 %v812
      %v840 = vpop.f32.mrf.mxu0
      %v841 = vadd.f32 0.0, %v840
      %v842 = vpop.f32.mrf.mxu0
      %v843 = vadd.f32 0.0, %v842
      %844 = vmatmul.bf16.gmra.mxu0 %v815
      %v845 = vpop.f32.mrf.mxu0
      %v846 = vadd.f32 0.0, %v845
      %v847 = vpop.f32.mrf.mxu0
      %v848 = vadd.f32 0.0, %v847
      %849 = vmatmul.bf16.gmra.mxu0 %v818
      %v850 = vpop.f32.mrf.mxu0
      %v851 = vadd.f32 0.0, %v850
      %v852 = vpop.f32.mrf.mxu0
      %v853 = vadd.f32 0.0, %v852
      %854 = vmatmul.bf16.gmra.mxu0 %v821
      %v855 = vpop.f32.mrf.mxu0
      %v856 = vadd.f32 0.0, %v855
      %v857 = vpop.f32.mrf.mxu0
      %v858 = vadd.f32 0.0, %v857
      %859 = vdwg.mxu0
      %v860 = vadd.f32 %v746, %v836
      %v861 = vadd.f32 %v747, %v838
      %v862 = vadd.f32 %v748, %v841
      %v863 = vadd.f32 %v749, %v843
      %v864 = vadd.f32 %v750, %v846
      %v865 = vadd.f32 %v751, %v848
      %v866 = vadd.f32 %v752, %v851
      %v867 = vadd.f32 %v753, %v853
      %v868 = vadd.f32 %v754, %v856
      %v869 = vadd.f32 %v755, %v858
      %v870 = vld [vmem:[%s165 + $0x30] sm:$0x7]
      %s871 = scalar_lea.vmem %s1, 14
      %v872 = vld [vmem:[%s871] sm:$0x3]
      %v874 = vunpack.c.l.b16 %v870
      %v875 = vpack.c.b16 %v874, %v874
      %vm876 = vsmask.f32 5376
      %v878 = vshrl.u32 %v791, 16
      %v880 = vrot.slane %v878, 2
      %v881 = vshll.u32 %v791, 16
      %v883 = vrot.slane %v881, 3
      %v884 = vor.u32 %v880, %v883
      %v886 = vshrl.u32 %v792, 16
      %v888 = vrot.slane %v886, 2
      %v889 = vshll.u32 %v792, 16
      %v891 = vrot.slane %v889, 3
      %v892 = vor.u32 %v888, %v891
      %v893 = vsel %vm876, %v884, %v892
      %v895 = vshrl.u32 %v793, 16
      %v897 = vrot.slane %v895, 2
      %v898 = vshll.u32 %v793, 16
      %v900 = vrot.slane %v898, 3
      %v901 = vor.u32 %v897, %v900
      %v902 = vsel %vm876, %v892, %v901
      %v904 = vshrl.u32 %v794, 16
      %v906 = vrot.slane %v904, 2
      %v907 = vshll.u32 %v794, 16
      %v909 = vrot.slane %v907, 3
      %v910 = vor.u32 %v906, %v909
      %v911 = vsel %vm876, %v901, %v910
      %v913 = vshrl.u32 %v795, 16
      %v915 = vrot.slane %v913, 2
      %v916 = vshll.u32 %v795, 16
      %v918 = vrot.slane %v916, 3
      %v919 = vor.u32 %v915, %v918
      %v920 = vsel %vm876, %v910, %v919
      %v922 = vshrl.u32 %v875, 16
      %v924 = vrot.slane %v922, 2
      %v925 = vshll.u32 %v875, 16
      %v927 = vrot.slane %v925, 3
      %v928 = vor.u32 %v924, %v927
      %v929 = vsel %vm876, %v919, %v928
      %v931 = vsel %vm259, %v893, 0
      %v934 = vsel %vm259, %v902, 0
      %v937 = vsel %vm259, %v911, 0
      %v940 = vsel %vm259, %v920, 0
      %v943 = vsel %vm259, %v929, 0
      %v946 = vsel %vm275, %v872, 0
      %948 = vmatpush.bf16.msra.mxu0 0
      %949 = vmatpush.bf16.msra.mxu0 0
      %950 = vmatpush.bf16.msra.mxu0 0
      %951 = vmatpush.bf16.msra.mxu0 0
      %952 = vmatpush.bf16.msra.mxu0 0
      %953 = vmatpush.bf16.msra.mxu0 0
      %954 = vmatpush.bf16.msra.mxu0 0
      %955 = vmatpush.bf16.msra.mxu0 %v946
      %956 = vmatmul.bf16.gmra.mxu0 %v931
      %v957 = vpop.f32.mrf.mxu0
      %v958 = vadd.f32 0.0, %v957
      %v959 = vpop.f32.mrf.mxu0
      %v960 = vadd.f32 0.0, %v959
      %961 = vmatmul.bf16.gmra.mxu0 %v934
      %v962 = vpop.f32.mrf.mxu0
      %v963 = vadd.f32 0.0, %v962
      %v964 = vpop.f32.mrf.mxu0
      %v965 = vadd.f32 0.0, %v964
      %966 = vmatmul.bf16.gmra.mxu0 %v937
      %v967 = vpop.f32.mrf.mxu0
      %v968 = vadd.f32 0.0, %v967
      %v969 = vpop.f32.mrf.mxu0
      %v970 = vadd.f32 0.0, %v969
      %971 = vmatmul.bf16.gmra.mxu0 %v940
      %v972 = vpop.f32.mrf.mxu0
      %v973 = vadd.f32 0.0, %v972
      %v974 = vpop.f32.mrf.mxu0
      %v975 = vadd.f32 0.0, %v974
      %976 = vmatmul.bf16.gmra.mxu0 %v943
      %v977 = vpop.f32.mrf.mxu0
      %v978 = vadd.f32 0.0, %v977
      %v979 = vpop.f32.mrf.mxu0
      %v980 = vadd.f32 0.0, %v979
      %981 = vdwg.mxu0
      %v982 = vadd.f32 %v860, %v958
      %v983 = vadd.f32 %v861, %v960
      %v984 = vadd.f32 %v862, %v963
      %v985 = vadd.f32 %v863, %v965
      %v986 = vadd.f32 %v864, %v968
      %v987 = vadd.f32 %v865, %v970
      %v988 = vadd.f32 %v866, %v973
      %v989 = vadd.f32 %v867, %v975
      %v990 = vadd.f32 %v868, %v978
      %v991 = vadd.f32 %v869, %v980
      %v992 = vld [vmem:[%s165 + $0x8] sm:$0x8]
      %s993 = scalar_lea.vmem %s1, 16
      %v994 = vld [vmem:[%s993] sm:$0x3]
      %v996 = vunpack.c.l.b16 %v992
      %v997 = vpack.c.b16 %v781, %v996
      %vm998 = vcmask 1044480
      %v999 = vrot.slane %v997, 3
      %v1000 = vrot.slane %v792, 3
      %v1001 = vsel %vm998, %v999, %v1000
      %v1002 = vrot.slane %v793, 3
      %v1003 = vsel %vm998, %v1000, %v1002
      %v1004 = vrot.slane %v794, 3
      %v1005 = vsel %vm998, %v1002, %v1004
      %v1006 = vrot.slane %v795, 3
      %v1007 = vsel %vm998, %v1004, %v1006
      %v1008 = vrot.slane %v875, 3
      %v1009 = vsel %vm998, %v1006, %v1008
      %v1011 = vsel %vm259, %v1001, 0
      %v1014 = vsel %vm259, %v1003, 0
      %v1017 = vsel %vm259, %v1005, 0
      %v1020 = vsel %vm259, %v1007, 0
      %v1023 = vsel %vm259, %v1009, 0
      %v1026 = vsel %vm275, %v994, 0
      %1028 = vmatpush.bf16.msra.mxu0 0
      %1029 = vmatpush.bf16.msra.mxu0 0
      %1030 = vmatpush.bf16.msra.mxu0 0
      %1031 = vmatpush.bf16.msra.mxu0 0
      %1032 = vmatpush.bf16.msra.mxu0 0
      %1033 = vmatpush.bf16.msra.mxu0 0
      %1034 = vmatpush.bf16.msra.mxu0 0
      %1035 = vmatpush.bf16.msra.mxu0 %v1026
      %1036 = vmatmul.bf16.gmra.mxu0 %v1011
      %v1037 = vpop.f32.mrf.mxu0
      %v1038 = vadd.f32 0.0, %v1037
      %v1039 = vpop.f32.mrf.mxu0
      %v1040 = vadd.f32 0.0, %v1039
      %1041 = vmatmul.bf16.gmra.mxu0 %v1014
      %v1042 = vpop.f32.mrf.mxu0
      %v1043 = vadd.f32 0.0, %v1042
      %v1044 = vpop.f32.mrf.mxu0
      %v1045 = vadd.f32 0.0, %v1044
      %1046 = vmatmul.bf16.gmra.mxu0 %v1017
      %v1047 = vpop.f32.mrf.mxu0
      %v1048 = vadd.f32 0.0, %v1047
      %v1049 = vpop.f32.mrf.mxu0
      %v1050 = vadd.f32 0.0, %v1049
      %1051 = vmatmul.bf16.gmra.mxu0 %v1020
      %v1052 = vpop.f32.mrf.mxu0
      %v1053 = vadd.f32 0.0, %v1052
      %v1054 = vpop.f32.mrf.mxu0
      %v1055 = vadd.f32 0.0, %v1054
      %1056 = vmatmul.bf16.gmra.mxu0 %v1023
      %v1057 = vpop.f32.mrf.mxu0
      %v1058 = vadd.f32 0.0, %v1057
      %v1059 = vpop.f32.mrf.mxu0
      %v1060 = vadd.f32 0.0, %v1059
      %1061 = vdwg.mxu0
      %v1062 = vadd.f32 %v982, %v1038
      %v1063 = vadd.f32 %v983, %v1040
      %v1064 = vadd.f32 %v984, %v1043
      %v1065 = vadd.f32 %v985, %v1045
      %v1066 = vadd.f32 %v986, %v1048
      %v1067 = vadd.f32 %v987, %v1050
      %v1068 = vadd.f32 %v988, %v1053
      %v1069 = vadd.f32 %v989, %v1055
      %v1070 = vadd.f32 %v990, %v1058
      %v1071 = vadd.f32 %v991, %v1060
      %v1072 = vld [vmem:[%s2] sm:$0x1]
      %v1074 = vperm.slane %v1072, 0
      %v1076 = vadd.f32 %v1062, %v1074
      %v1077 = vadd.f32 %v1063, %v1074
      %v1078 = vadd.f32 %v1064, %v1074
      %v1079 = vadd.f32 %v1065, %v1074
      %v1080 = vadd.f32 %v1066, %v1074
      %v1081 = vadd.f32 %v1067, %v1074
      %v1082 = vadd.f32 %v1068, %v1074
      %v1083 = vadd.f32 %v1069, %v1074
      %v1084 = vadd.f32 %v1070, %v1074
      %v1085 = vadd.f32 %v1071, %v1074
      %v1086 = vmax.f32 %v1076, 0.0
      %v1087 = vmax.f32 %v1077, 0.0
      %v1088 = vmax.f32 %v1078, 0.0
      %v1089 = vmax.f32 %v1079, 0.0
      %v1090 = vmax.f32 %v1080, 0.0
      %v1091 = vmax.f32 %v1081, 0.0
      %v1092 = vmax.f32 %v1082, 0.0
      %v1093 = vmax.f32 %v1083, 0.0
      %v1094 = vmax.f32 %v1084, 0.0
      %v1095 = vmax.f32 %v1085, 0.0
      %v1096 = vpack.c.bf16 %v1086, %v1086
      %v1097 = vpack.c.bf16 %v1087, %v1087
      %v1098 = vpack.c.bf16 %v1088, %v1088
      %v1099 = vpack.c.bf16 %v1089, %v1089
      %v1100 = vpack.c.bf16 %v1090, %v1090
      %v1101 = vpack.c.bf16 %v1091, %v1091
      %v1102 = vpack.c.bf16 %v1092, %v1092
      %v1103 = vpack.c.bf16 %v1093, %v1093
      %v1104 = vpack.c.bf16 %v1094, %v1094
      %v1105 = vpack.c.bf16 %v1095, %v1095
      %vm1106 = vcmask 60416
      %1107 = vst.msk [vmem:[%s170] sm:$0xf] %vm1106, %v1096
      %1108 = vst.msk [vmem:[%s170 + $0x4] sm:$0xf] %vm1106, %v1097
      %1109 = vst.msk [vmem:[%s170 + $0x8] sm:$0xf] %vm1106, %v1098
      %1110 = vst.msk [vmem:[%s170 + $0xc] sm:$0xf] %vm1106, %v1099
      %1111 = vst.msk [vmem:[%s170 + $0x10] sm:$0xf] %vm1106, %v1100
      %1112 = vst.msk [vmem:[%s170 + $0x14] sm:$0xf] %vm1106, %v1101
      %1113 = vst.msk [vmem:[%s170 + $0x18] sm:$0xf] %vm1106, %v1102
      %1114 = vst.msk [vmem:[%s170 + $0x1c] sm:$0xf] %vm1106, %v1103
      %1115 = vst.msk [vmem:[%s170 + $0x20] sm:$0xf] %vm1106, %v1104
      %1116 = vst.msk [vmem:[%s170 + $0x24] sm:$0xf] %vm1106, %v1105
      %p1117 = scmp.lt.s32.totalorder %s14, 1
      %s1118 = scalar_select %p1117, %s14, 1
      %s1119 = smul.addr %s1118, 10
      %s1120 = smul.addr %s1119, 4
      %s1121 = scalar_lea.vmem %s3, %s1120
      // Predicated region
      $region33: #{_lambda_.7} parent=31 // pred_check
        %p1122 = pneg %p100
      $region34: #{_lambda_.7} parent=31 // pred_check_branch
        %1124 = sbr.rel (%p1122) target = $region36
      $region35: #{_lambda_.7} parent=31 // pred_region
        _
      $region36: #{_lambda_.7} parent=31 // pred_fallthru
        _
    $region32: #{_lambda_.7} parent=5 // pred_fallthru
      _
    %p1125 = scmp.le.s32.totalorder 2, %s9
    // Predicated region
    $region37: #{_lambda_.7} parent=5 // pred_check
      %p1126 = pneg %p1125
    $region38: #{_lambda_.7} parent=5 // pred_check_branch
      %1128 = sbr.rel (%p1126) target = $region40
    $region39: #{_lambda_.7} parent=5 // pred_region
      %s1129 = ssub.s32 %s9, 2
      // Predicated region
      $region41: #{_lambda_.7} parent=39 // pred_check
        %p1130 = pneg %p106
      $region42: #{_lambda_.7} parent=39 // pred_check_branch
        %1132 = sbr.rel (%p1130) target = $region44
      $region43: #{_lambda_.7} parent=39 // pred_region
        %p1133 = scmp.lt.s32.totalorder %s15, 1
        %s1134 = scalar_select %p1133, %s15, 1
        %s1135 = smul.addr %s1134, 10
        %s1136 = smul.addr %s1135, 4
        %s1137 = scalar_lea.vmem %s3, %s1136
      $region44: #{_lambda_.7} parent=39 // pred_fallthru
        _
    $region40: #{_lambda_.7} parent=5 // pred_fallthru
      _
  $region6: #{_lambda_.7} parent=0 // loop_footer
    %s13 = sadd.s32 1, %s9
  $region7: #{_lambda_.7} parent=0 // loop_footer_branch
    %8 = sbr.rel target = $region3
  $region8: #{_lambda_.7} parent=0 // loop_exit
    _

// kernel: _lambda_.6
$region0: #{_lambda_.6}
  #allocation0 [shape = 'u32[]', space=smem, size = 0x4, offset = 0x4, fixed_abs, tag = 'smem constant byte address 0x4 - core index']
  #allocation1 [shape = 'u32[72,128]{1,0:T(1,128)}', space=vmem, size = 0x9000, scoped, tag = 'internal scratch']
  %s0 = inlined_call_operand.vmem [shape: bf16[2,332,3], index: 0, kind: input, shape index: {}]
  %s1 = inlined_call_operand.vmem [shape: bf16[9,3,4], index: 1, kind: input, shape index: {}]
  %s2 = inlined_call_operand.vmem [shape: f32[1,4], index: 2, kind: input, shape index: {}]
  %s3 = inlined_call_operand.vmem [shape: bf16[2,288,4], index: 3, kind: output, shape index: {}]
  %s4 = sld [smem:[#allocation0]]
  $region45: #{_lambda_.6} parent=0
    _
  %s6 = ssub.s32 1, %s4
  %s7 = scalar_select 0, %s6, %s4
  loop: start=0, step=1, limit=4
  $region2: #{_lambda_.6} parent=0 // loop_pre_header
    _
  $region3: #{_lambda_.6} parent=0 // loop_header
    %s9 = sphi 0, %s13
    %p10 = scmp.ge.s32.totalorder %s9, 4
    %s19 = sphi 0, %s21
    %s22 = sphi 0, %s19
    %s23 = sphi 0, %s22
    %s39 = sphi 0, %s23
    %s43 = sphi 0, %s43
    %s45 = sphi 0, %s43
    %s46 = sphi 0, %s45
    %s60 = sphi 0, %s46
    %s64 = sphi 0, %s64
    %s66 = sphi 0, %s64
    %s67 = sphi 0, %s66
    %s81 = sphi 0, %s67
    %s87 = sphi 0, %s89
    %s90 = sphi 0, %s87
    %s91 = sphi 0, %s90
    %s107 = sphi 0, %s91
  $region4: #{_lambda_.6} parent=0 // loop_header_branch
    %12 = sbr.rel (%p10) target = $region8
  $region5: #{_lambda_.6} parent=0 // loop_body
    %s14 = ssub.s32 %s9, 1
    %s15 = ssub.s32 %s9, 2
    %s16 = sadd.s32 %s9, 1
    %s17 = ssub.s32 %s9, %s16
    %p18 = scmp.eq.s32.totalorder %s17, 0
    %s20 = sadd.s32 %s19, 1
    %s21 = scalar_select %p18, %s19, %s20
    %p24 = pneg %p18
    %p25 = scmp.eq.s32.totalorder %s9, 1
    %p26 = por %p24, %p25
    %p27 = scmp.ne.s32.totalorder %s19, %s22
    %p28 = scmp.eq.s32.totalorder %s9, 0
    %p29 = por %p27, %p28
    %p30 = scmp.ne.s32.totalorder %s19, %s22
    %p31 = scmp.eq.s32.totalorder %s14, 1
    %p32 = por %p30, %p31
    %p33 = scmp.ne.s32.totalorder %s22, %s23
    %p34 = scmp.eq.s32.totalorder %s14, 0
    %p35 = por %p33, %p34
    %p36 = scmp.ne.s32.totalorder %s22, %s23
    %p37 = scmp.eq.s32.totalorder %s15, 1
    %p38 = por %p36, %p37
    %p40 = scmp.ne.s32.totalorder %s23, %s39
    %p41 = scmp.eq.s32.totalorder %s15, 0
    %p42 = por %p40, %p41
    %s44 = sadd.s32 %s43, 1
    %p47 = scmp.eq.s32.totalorder %s9, 1
    %p48 = scmp.ne.s32.totalorder %s43, %s45
    %p49 = scmp.eq.s32.totalorder %s9, 0
    %p50 = por %p48, %p49
    %p51 = scmp.ne.s32.totalorder %s43, %s45
    %p52 = scmp.eq.s32.totalorder %s14, 1
    %p53 = por %p51, %p52
    %p54 = scmp.ne.s32.totalorder %s45, %s46
    %p55 = scmp.eq.s32.totalorder %s14, 0
    %p56 = por %p54, %p55
    %p57 = scmp.ne.s32.totalorder %s45, %s46
    %p58 = scmp.eq.s32.totalorder %s15, 1
    %p59 = por %p57, %p58
    %p61 = scmp.ne.s32.totalorder %s46, %s60
    %p62 = scmp.eq.s32.totalorder %s15, 0
    %p63 = por %p61, %p62
    %s65 = sadd.s32 %s64, 1
    %p68 = scmp.eq.s32.totalorder %s9, 1
    %p69 = scmp.ne.s32.totalorder %s64, %s66
    %p70 = scmp.eq.s32.totalorder %s9, 0
    %p71 = por %p69, %p70
    %p72 = scmp.ne.s32.totalorder %s64, %s66
    %p73 = scmp.eq.s32.totalorder %s14, 1
    %p74 = por %p72, %p73
    %p75 = scmp.ne.s32.totalorder %s66, %s67
    %p76 = scmp.eq.s32.totalorder %s14, 0
    %p77 = por %p75, %p76
    %p78 = scmp.ne.s32.totalorder %s66, %s67
    %p79 = scmp.eq.s32.totalorder %s15, 1
    %p80 = por %p78, %p79
    %p82 = scmp.ne.s32.totalorder %s67, %s81
    %p83 = scmp.eq.s32.totalorder %s15, 0
    %p84 = por %p82, %p83
    %s85 = ssub.s32 %s9, %s16
    %p86 = scmp.eq.s32.totalorder %s85, 0
    %s88 = sadd.s32 %s87, 1
    %s89 = scalar_select %p86, %s87, %s88
    %p92 = pneg %p86
    %p93 = scmp.eq.s32.totalorder %s9, 1
    %p94 = por %p92, %p93
    %p95 = scmp.ne.s32.totalorder %s87, %s90
    %p96 = scmp.eq.s32.totalorder %s9, 0
    %p97 = por %p95, %p96
    %p98 = scmp.ne.s32.totalorder %s87, %s90
    %p99 = scmp.eq.s32.totalorder %s14, 1
    %p100 = por %p98, %p99
    %p101 = scmp.ne.s32.totalorder %s90, %s91
    %p102 = scmp.eq.s32.totalorder %s14, 0
    %p103 = por %p101, %p102
    %p104 = scmp.ne.s32.totalorder %s90, %s91
    %p105 = scmp.eq.s32.totalorder %s15, 1
    %p106 = por %p104, %p105
    %p108 = scmp.ne.s32.totalorder %s91, %s107
    %p109 = scmp.eq.s32.totalorder %s15, 0
    %p110 = por %p108, %p109
    %p111 = scmp.le.s32.totalorder 1, %s9
    %p112 = scmp.lt.s32.totalorder %s9, 3
    %p113 = pnand %p111, %p112
    %p114 = pneg %p113
    // Predicated region
    $region9: #{_lambda_.6} parent=5 // pred_check
      _
    $region10: #{_lambda_.6} parent=5 // pred_check_branch
      %116 = sbr.rel (%p113) target = $region12
    $region11: #{_lambda_.6} parent=5 // pred_region
      %s117 = ssub.s32 %s9, 1
      // Predicated region
      $region13: #{_lambda_.6} parent=11 // pred_check
        %p118 = pneg %p56
      $region14: #{_lambda_.6} parent=11 // pred_check_branch
        %120 = sbr.rel (%p118) target = $region16
      $region15: #{_lambda_.6} parent=11 // pred_region
        _
      $region16: #{_lambda_.6} parent=11 // pred_fallthru
        _
      // Predicated region
      $region17: #{_lambda_.6} parent=11 // pred_check
        %p121 = pneg %p77
      $region18: #{_lambda_.6} parent=11 // pred_check_branch
        %123 = sbr.rel (%p121) target = $region20
      $region19: #{_lambda_.6} parent=11 // pred_region
        _
      $region20: #{_lambda_.6} parent=11 // pred_fallthru
        _
    $region12: #{_lambda_.6} parent=5 // pred_fallthru
      _
    %p124 = scmp.lt.s32.totalorder %s9, 2
    // Predicated region
    $region21: #{_lambda_.6} parent=5 // pred_check
      %p125 = pneg %p124
    $region22: #{_lambda_.6} parent=5 // pred_check_branch
      %127 = sbr.rel (%p125) target = $region24
    $region23: #{_lambda_.6} parent=5 // pred_region
      // Predicated region
      $region25: #{_lambda_.6} parent=23 // pred_check
        %p128 = pneg %p29
      $region26: #{_lambda_.6} parent=23 // pred_check_branch
        %130 = sbr.rel (%p128) target = $region28
      $region27: #{_lambda_.6} parent=23 // pred_region
        %p131 = scmp.lt.s32.totalorder %s9, 1
        %s132 = scalar_select %p131, %s9, 1
        %s133 = smul.addr %s132, 42
        %s134 = smul.addr %s133, 4
        %s135 = scalar_lea.vmem %s0, %s134
      $region28: #{_lambda_.6} parent=23 // pred_fallthru
        _
    $region24: #{_lambda_.6} parent=5 // pred_fallthru
      _
    %p136 = scmp.le.s32.totalorder 1, %s9
    %p137 = scmp.lt.s32.totalorder %s9, 3
    %p138 = pnand %p136, %p137
    %p139 = pneg %p138
    // Predicated region
    $region29: #{_lambda_.6} parent=5 // pred_check
      _
    $region30: #{_lambda_.6} parent=5 // pred_check_branch
      %141 = sbr.rel (%p138) target = $region32
    $region31: #{_lambda_.6} parent=5 // pred_region
      %s142 = ssub.s32 %s9, 1
      %p143 = scmp.lt.s32.totalorder %s14, 1
      %s144 = scalar_select %p143, %s14, 1
      %s145 = smul.addr %s144, 42
      %s146 = smul.addr %s145, 4
      %s147 = scalar_lea.vmem %s0, %s146
      %p148 = pneg %p35
      %p149 = pneg %p32
      %p150 = pneg %p56
      %p151 = pneg %p53
      %p152 = pneg %p77
      %p153 = pneg %p74
      %p154 = pneg %p103
      %p155 = pneg %p100
      %p156 = scmp.lt.s32.totalorder %s14, 1
      %s157 = scalar_select %p156, %s14, 1
      %s158 = smul.addr %s157, 36
      %s159 = smul.addr %s158, 4
      %s160 = scalar_lea.vmem %s3, %s159
      %p161 = scmp.lt.s32.totalorder %s14, 1
      %s162 = scalar_select %p161, %s14, 1
      %s163 = smul.addr %s162, 42
      %s164 = smul.addr %s163, 4
      %s165 = scalar_lea.vmem %s0, %s164
      %p166 = scmp.lt.s32.totalorder %s14, 1
      %s167 = scalar_select %p166, %s14, 1
      %s168 = smul.addr %s167, 36
      %s169 = smul.addr %s168, 4
      %s170 = scalar_lea.vmem %s3, %s169
      %v172 = vld [vmem:[%s165] sm:$0xf]
      %v173 = vld [vmem:[%s165 + $0x4] sm:$0xf]
      %v174 = vld [vmem:[%s165 + $0x8] sm:$0xf]
      %v175 = vld [vmem:[%s165 + $0xc] sm:$0xf]
      %v176 = vld [vmem:[%s165 + $0x10] sm:$0xf]
      %v177 = vld [vmem:[%s165 + $0x14] sm:$0xf]
      %v178 = vld [vmem:[%s165 + $0x18] sm:$0xf]
      %v179 = vld [vmem:[%s165 + $0x1c] sm:$0xf]
      %v180 = vld [vmem:[%s165 + $0x20] sm:$0xf]
      %v181 = vld [vmem:[%s165 + $0x24] sm:$0xf]
      %v182 = vld [vmem:[%s165 + $0x28] sm:$0xf]
      %v183 = vld [vmem:[%s165 + $0x2c] sm:$0xf]
      %v184 = vld [vmem:[%s165 + $0x30] sm:$0xf]
      %v185 = vld [vmem:[%s165 + $0x34] sm:$0xf]
      %v186 = vld [vmem:[%s165 + $0x38] sm:$0xf]
      %v187 = vld [vmem:[%s165 + $0x3c] sm:$0xf]
      %v188 = vld [vmem:[%s165 + $0x40] sm:$0xf]
      %v189 = vld [vmem:[%s165 + $0x44] sm:$0xf]
      %v190 = vld [vmem:[%s165 + $0x48] sm:$0xf]
      %v191 = vld [vmem:[%s165 + $0x4c] sm:$0xf]
      %v192 = vld [vmem:[%s165 + $0x50] sm:$0xf]
      %v193 = vld [vmem:[%s165 + $0x54] sm:$0xf]
      %v194 = vld [vmem:[%s165 + $0x58] sm:$0xf]
      %v195 = vld [vmem:[%s165 + $0x5c] sm:$0xf]
      %v196 = vld [vmem:[%s165 + $0x60] sm:$0xf]
      %v197 = vld [vmem:[%s165 + $0x64] sm:$0xf]
      %v198 = vld [vmem:[%s165 + $0x68] sm:$0xf]
      %v199 = vld [vmem:[%s165 + $0x6c] sm:$0xf]
      %v200 = vld [vmem:[%s165 + $0x70] sm:$0xf]
      %v201 = vld [vmem:[%s165 + $0x74] sm:$0xf]
      %v202 = vld [vmem:[%s165 + $0x78] sm:$0xf]
      %v203 = vld [vmem:[%s165 + $0x7c] sm:$0xf]
      %v204 = vld [vmem:[%s165 + $0x80] sm:$0xf]
      %v205 = vld [vmem:[%s165 + $0x84] sm:$0xf]
      %v206 = vld [vmem:[%s165 + $0x88] sm:$0xf]
      %v207 = vld [vmem:[%s165 + $0x8c] sm:$0xf]
      %v208 = vld [vmem:[%s1] sm:$0x3]
      %v209 = vld [vmem:[%s165 + $0x90] sm:$0x1]
      %s210 = scalar_lea.vmem %s1, 2
      %v211 = vld [vmem:[%s210] sm:$0x3]
      %v249 = vunpack.c.l.b16 %v172
      %v250 = vunpack.c.l.b16 %v173
      %v251 = vunpack.c.l.b16 %v174
      %v252 = vunpack.c.l.b16 %v175
      %v253 = vunpack.c.l.b16 %v176
      %v254 = vunpack.c.l.b16 %v177
      %v255 = vunpack.c.l.b16 %v178
      %v256 = vunpack.c.l.b16 %v179
      %v257 = vunpack.c.l.b16 %v180
      %v258 = vunpack.c.l.b16 %v181
      %v259 = vunpack.c.l.b16 %v182
      %v260 = vunpack.c.l.b16 %v183
      %v261 = vunpack.c.l.b16 %v184
      %v262 = vunpack.c.l.b16 %v185
      %v263 = vunpack.c.l.b16 %v186
      %v264 = vunpack.c.l.b16 %v187
      %v265 = vunpack.c.l.b16 %v188
      %v266 = vunpack.c.l.b16 %v189
      %v267 = vunpack.c.l.b16 %v190
      %v268 = vunpack.c.l.b16 %v191
      %v269 = vunpack.c.l.b16 %v192
      %v270 = vunpack.c.l.b16 %v193
      %v271 = vunpack.c.l.b16 %v194
      %v272 = vunpack.c.l.b16 %v195
      %v273 = vunpack.c.l.b16 %v196
      %v274 = vunpack.c.l.b16 %v197
      %v275 = vunpack.c.l.b16 %v198
      %v276 = vunpack.c.l.b16 %v199
      %v277 = vunpack.c.l.b16 %v200
      %v278 = vunpack.c.l.b16 %v201
      %v279 = vunpack.c.l.b16 %v202
      %v280 = vunpack.c.l.b16 %v203
      %v281 = vunpack.c.l.b16 %v204
      %v282 = vunpack.c.l.b16 %v205
      %v283 = vunpack.c.l.b16 %v206
      %v284 = vunpack.c.l.b16 %v207
      %v285 = vunpack.c.l.b16 %v209
      %v286 = vpack.c.b16 %v250, %v249
      %v287 = vpack.c.b16 %v252, %v251
      %v288 = vpack.c.b16 %v254, %v253
      %v289 = vpack.c.b16 %v256, %v255
      %v290 = vpack.c.b16 %v258, %v257
      %v291 = vpack.c.b16 %v260, %v259
      %v292 = vpack.c.b16 %v262, %v261
      %v293 = vpack.c.b16 %v264, %v263
      %v294 = vpack.c.b16 %v266, %v265
      %v295 = vpack.c.b16 %v268, %v267
      %v296 = vpack.c.b16 %v270, %v269
      %v297 = vpack.c.b16 %v272, %v271
      %v298 = vpack.c.b16 %v274, %v273
      %v299 = vpack.c.b16 %v276, %v275
      %v300 = vpack.c.b16 %v278, %v277
      %v301 = vpack.c.b16 %v280, %v279
      %v302 = vpack.c.b16 %v282, %v281
      %v303 = vpack.c.b16 %v284, %v283
      %v304 = vpack.c.b16 %v285, %v285
      %vm305 = vsmask.f32 7424
      %v307 = vshrl.u32 %v286, 16
      %v309 = vshll.u32 %v286, 16
      %v311 = vrot.slane %v309, 1
      %v312 = vor.u32 %v307, %v311
      %v314 = vshll.u32 %v287, 16
      %v316 = vrot.slane %v314, 1
      %v317 = vsel %vm305, %v312, %v316
      %v318 = vshrl.u32 %v287, 16
      %v320 = vor.u32 %v318, %v316
      %v322 = vshll.u32 %v288, 16
      %v324 = vrot.slane %v322, 1
      %v325 = vsel %vm305, %v320, %v324
      %v326 = vshrl.u32 %v288, 16
      %v328 = vor.u32 %v326, %v324
      %v330 = vshll.u32 %v289, 16
      %v332 = vrot.slane %v330, 1
      %v333 = vsel %vm305, %v328, %v332
      %v334 = vshrl.u32 %v289, 16
      %v336 = vor.u32 %v334, %v332
      %v338 = vshll.u32 %v290, 16
      %v340 = vrot.slane %v338, 1
      %v341 = vsel %vm305, %v336, %v340
      %v342 = vshrl.u32 %v290, 16
      %v344 = vor.u32 %v342, %v340
      %v346 = vshll.u32 %v291, 16
      %v348 = vrot.slane %v346, 1
      %v349 = vsel %vm305, %v344, %v348
      %v350 = vshrl.u32 %v291, 16
      %v352 = vor.u32 %v350, %v348
      %v354 = vshll.u32 %v292, 16
      %v356 = vrot.slane %v354, 1
      %v357 = vsel %vm305, %v352, %v356
      %v358 = vshrl.u32 %v292, 16
      %v360 = vor.u32 %v358, %v356
      %v362 = vshll.u32 %v293, 16
      %v364 = vrot.slane %v362, 1
      %v365 = vsel %vm305, %v360, %v364
      %v366 = vshrl.u32 %v293, 16
      %v368 = vor.u32 %v366, %v364
      %v370 = vshll.u32 %v294, 16
      %v372 = vrot.slane %v370, 1
      %v373 = vsel %vm305, %v368, %v372
      %v374 = vshrl.u32 %v294, 16
      %v376 = vor.u32 %v374, %v372
      %v378 = vshll.u32 %v295, 16
      %v380 = vrot.slane %v378, 1
      %v381 = vsel %vm305, %v376, %v380
      %v382 = vshrl.u32 %v295, 16
      %v384 = vor.u32 %v382, %v380
      %v386 = vshll.u32 %v296, 16
      %v388 = vrot.slane %v386, 1
      %v389 = vsel %vm305, %v384, %v388
      %v390 = vshrl.u32 %v296, 16
      %v392 = vor.u32 %v390, %v388
      %v394 = vshll.u32 %v297, 16
      %v396 = vrot.slane %v394, 1
      %v397 = vsel %vm305, %v392, %v396
      %v398 = vshrl.u32 %v297, 16
      %v400 = vor.u32 %v398, %v396
      %v402 = vshll.u32 %v298, 16
      %v404 = vrot.slane %v402, 1
      %v405 = vsel %vm305, %v400, %v404
      %v406 = vshrl.u32 %v298, 16
      %v408 = vor.u32 %v406, %v404
      %v410 = vshll.u32 %v299, 16
      %v412 = vrot.slane %v410, 1
      %v413 = vsel %vm305, %v408, %v412
      %v414 = vshrl.u32 %v299, 16
      %v416 = vor.u32 %v414, %v412
      %v418 = vshll.u32 %v300, 16
      %v420 = vrot.slane %v418, 1
      %v421 = vsel %vm305, %v416, %v420
      %v422 = vshrl.u32 %v300, 16
      %v424 = vor.u32 %v422, %v420
      %v426 = vshll.u32 %v301, 16
      %v428 = vrot.slane %v426, 1
      %v429 = vsel %vm305, %v424, %v428
      %v430 = vshrl.u32 %v301, 16
      %v432 = vor.u32 %v430, %v428
      %v434 = vshll.u32 %v302, 16
      %v436 = vrot.slane %v434, 1
      %v437 = vsel %vm305, %v432, %v436
      %v438 = vshrl.u32 %v302, 16
      %v440 = vor.u32 %v438, %v436
      %v442 = vshll.u32 %v303, 16
      %v444 = vrot.slane %v442, 1
      %v445 = vsel %vm305, %v440, %v444
      %v446 = vshrl.u32 %v303, 16
      %v448 = vor.u32 %v446, %v444
      %v450 = vshll.u32 %v304, 16
      %v452 = vrot.slane %v450, 1
      %v453 = vsel %vm305, %v448, %v452
      %vm454 = vcmask 23552
      %v456 = vsel %vm454, %v317, 0
      %v459 = vsel %vm454, %v325, 0
      %v462 = vsel %vm454, %v333, 0
      %v465 = vsel %vm454, %v341, 0
      %v468 = vsel %vm454, %v349, 0
      %v471 = vsel %vm454, %v357, 0
      %v474 = vsel %vm454, %v365, 0
      %v477 = vsel %vm454, %v373, 0
      %v480 = vsel %vm454, %v381, 0
      %v483 = vsel %vm454, %v389, 0
      %v486 = vsel %vm454, %v397, 0
      %v489 = vsel %vm454, %v405, 0
      %v492 = vsel %vm454, %v413, 0
      %v495 = vsel %vm454, %v421, 0
      %v498 = vsel %vm454, %v429, 0
      %v501 = vsel %vm454, %v437, 0
      %v504 = vsel %vm454, %v445, 0
      %v507 = vsel %vm454, %v453, 0
      %vm509 = vcmask 1040384
      %vm510 = vcmask 1041408
      %v511 = vsel %vm509, 4294967295, 65535
      %v512 = vsel %vm510, %v511, 0
      %v514 = vand.u32 %v211, %v512
      %516 = vmatpush.bf16.msra.mxu0 0
      %517 = vmatpush.bf16.msra.mxu0 0
      %518 = vmatpush.bf16.msra.mxu0 0
      %519 = vmatpush.bf16.msra.mxu0 0
      %520 = vmatpush.bf16.msra.mxu0 0
      %521 = vmatpush.bf16.msra.mxu0 0
      %522 = vmatpush.bf16.msra.mxu0 0
      %523 = vmatpush.bf16.msra.mxu0 %v514
      %524 = vmatmul.bf16.gmra.mxu0 %v456
      %v525 = vpop.f32.mrf.mxu0
      %v526 = vadd.f32 0.0, %v525
      %v527 = vpop.f32.mrf.mxu0
      %v528 = vadd.f32 0.0, %v527
      %529 = vmatmul.bf16.gmra.mxu0 %v459
      %v530 = vpop.f32.mrf.mxu0
      %v531 = vadd.f32 0.0, %v530
      %v532 = vpop.f32.mrf.mxu0
      %v533 = vadd.f32 0.0, %v532
      %534 = vmatmul.bf16.gmra.mxu0 %v462
      %v535 = vpop.f32.mrf.mxu0
      %v536 = vadd.f32 0.0, %v535
      %v537 = vpop.f32.mrf.mxu0
      %v538 = vadd.f32 0.0, %v537
      %539 = vmatmul.bf16.gmra.mxu0 %v465
      %v540 = vpop.f32.mrf.mxu0
      %v541 = vadd.f32 0.0, %v540
      %v542 = vpop.f32.mrf.mxu0
      %v543 = vadd.f32 0.0, %v542
      %544 = vmatmul.bf16.gmra.mxu0 %v468
      %v545 = vpop.f32.mrf.mxu0
      %v546 = vadd.f32 0.0, %v545
      %v547 = vpop.f32.mrf.mxu0
      %v548 = vadd.f32 0.0, %v547
      %549 = vmatmul.bf16.gmra.mxu0 %v471
      %v550 = vpop.f32.mrf.mxu0
      %v551 = vadd.f32 0.0, %v550
      %v552 = vpop.f32.mrf.mxu0
      %v553 = vadd.f32 0.0, %v552
      %554 = vmatmul.bf16.gmra.mxu0 %v474
      %v555 = vpop.f32.mrf.mxu0
      %v556 = vadd.f32 0.0, %v555
      %v557 = vpop.f32.mrf.mxu0
      %v558 = vadd.f32 0.0, %v557
      %559 = vmatmul.bf16.gmra.mxu0 %v477
      %v560 = vpop.f32.mrf.mxu0
      %v561 = vadd.f32 0.0, %v560
      %v562 = vpop.f32.mrf.mxu0
      %v563 = vadd.f32 0.0, %v562
      %564 = vmatmul.bf16.gmra.mxu0 %v480
      %v565 = vpop.f32.mrf.mxu0
      %v566 = vadd.f32 0.0, %v565
      %v567 = vpop.f32.mrf.mxu0
      %v568 = vadd.f32 0.0, %v567
      %569 = vmatmul.bf16.gmra.mxu0 %v483
      %v570 = vpop.f32.mrf.mxu0
      %v571 = vadd.f32 0.0, %v570
      %v572 = vpop.f32.mrf.mxu0
      %v573 = vadd.f32 0.0, %v572
      %574 = vmatmul.bf16.gmra.mxu0 %v486
      %v575 = vpop.f32.mrf.mxu0
      %v576 = vadd.f32 0.0, %v575
      %v577 = vpop.f32.mrf.mxu0
      %v578 = vadd.f32 0.0, %v577
      %579 = vmatmul.bf16.gmra.mxu0 %v489
      %v580 = vpop.f32.mrf.mxu0
      %v581 = vadd.f32 0.0, %v580
      %v582 = vpop.f32.mrf.mxu0
      %v583 = vadd.f32 0.0, %v582
      %584 = vmatmul.bf16.gmra.mxu0 %v492
      %v585 = vpop.f32.mrf.mxu0
      %v586 = vadd.f32 0.0, %v585
      %v587 = vpop.f32.mrf.mxu0
      %v588 = vadd.f32 0.0, %v587
      %589 = vmatmul.bf16.gmra.mxu0 %v495
      %v590 = vpop.f32.mrf.mxu0
      %v591 = vadd.f32 0.0, %v590
      %v592 = vpop.f32.mrf.mxu0
      %v593 = vadd.f32 0.0, %v592
      %594 = vmatmul.bf16.gmra.mxu0 %v498
      %v595 = vpop.f32.mrf.mxu0
      %v596 = vadd.f32 0.0, %v595
      %v597 = vpop.f32.mrf.mxu0
      %v598 = vadd.f32 0.0, %v597
      %599 = vmatmul.bf16.gmra.mxu0 %v501
      %v600 = vpop.f32.mrf.mxu0
      %v601 = vadd.f32 0.0, %v600
      %v602 = vpop.f32.mrf.mxu0
      %v603 = vadd.f32 0.0, %v602
      %604 = vmatmul.bf16.gmra.mxu0 %v504
      %v605 = vpop.f32.mrf.mxu0
      %v606 = vadd.f32 0.0, %v605
      %v607 = vpop.f32.mrf.mxu0
      %v608 = vadd.f32 0.0, %v607
      %609 = vmatmul.bf16.gmra.mxu0 %v507
      %v610 = vpop.f32.mrf.mxu0
      %v611 = vadd.f32 0.0, %v610
      %v612 = vpop.f32.mrf.mxu0
      %v613 = vadd.f32 0.0, %v612
      %614 = vdwg.mxu0
      %v615 = vsel %vm454, %v286, 0
      %v617 = vsel %vm454, %v287, 0
      %v619 = vsel %vm454, %v288, 0
      %v621 = vsel %vm454, %v289, 0
      %v623 = vsel %vm454, %v290, 0
      %v625 = vsel %vm454, %v291, 0
      %v627 = vsel %vm454, %v292, 0
      %v629 = vsel %vm454, %v293, 0
      %v631 = vsel %vm454, %v294, 0
      %v633 = vsel %vm454, %v295, 0
      %v635 = vsel %vm454, %v296, 0
      %v637 = vsel %vm454, %v297, 0
      %v639 = vsel %vm454, %v298, 0
      %v641 = vsel %vm454, %v299, 0
      %v643 = vsel %vm454, %v300, 0
      %v645 = vsel %vm454, %v301, 0
      %v647 = vsel %vm454, %v302, 0
      %v649 = vsel %vm454, %v303, 0
      %v652 = vand.u32 %v208, %v512
      %654 = vmatpush.bf16.msra.mxu0 0
      %655 = vmatpush.bf16.msra.mxu0 0
      %656 = vmatpush.bf16.msra.mxu0 0
      %657 = vmatpush.bf16.msra.mxu0 0
      %658 = vmatpush.bf16.msra.mxu0 0
      %659 = vmatpush.bf16.msra.mxu0 0
      %660 = vmatpush.bf16.msra.mxu0 0
      %661 = vmatpush.bf16.msra.mxu0 %v652
      %662 = vmatmul.bf16.gmra.mxu0 %v615
      %v663 = vpop.f32.mrf.mxu0
      %v664 = vadd.f32 %v526, %v663
      %v665 = vpop.f32.mrf.mxu0
      %v666 = vadd.f32 %v528, %v665
      %667 = vmatmul.bf16.gmra.mxu0 %v617
      %v668 = vpop.f32.mrf.mxu0
      %v669 = vadd.f32 %v531, %v668
      %v670 = vpop.f32.mrf.mxu0
      %v671 = vadd.f32 %v533, %v670
      %672 = vmatmul.bf16.gmra.mxu0 %v619
      %v673 = vpop.f32.mrf.mxu0
      %v674 = vadd.f32 %v536, %v673
      %v675 = vpop.f32.mrf.mxu0
      %v676 = vadd.f32 %v538, %v675
      %677 = vmatmul.bf16.gmra.mxu0 %v621
      %v678 = vpop.f32.mrf.mxu0
      %v679 = vadd.f32 %v541, %v678
      %v680 = vpop.f32.mrf.mxu0
      %v681 = vadd.f32 %v543, %v680
      %682 = vmatmul.bf16.gmra.mxu0 %v623
      %v683 = vpop.f32.mrf.mxu0
      %v684 = vadd.f32 %v546, %v683
      %v685 = vpop.f32.mrf.mxu0
      %v686 = vadd.f32 %v548, %v685
      %687 = vmatmul.bf16.gmra.mxu0 %v625
      %v688 = vpop.f32.mrf.mxu0
      %v689 = vadd.f32 %v551, %v688
      %v690 = vpop.f32.mrf.mxu0
      %v691 = vadd.f32 %v553, %v690
      %692 = vmatmul.bf16.gmra.mxu0 %v627
      %v693 = vpop.f32.mrf.mxu0
      %v694 = vadd.f32 %v556, %v693
      %v695 = vpop.f32.mrf.mxu0
      %v696 = vadd.f32 %v558, %v695
      %697 = vmatmul.bf16.gmra.mxu0 %v629
      %v698 = vpop.f32.mrf.mxu0
      %v699 = vadd.f32 %v561, %v698
      %v700 = vpop.f32.mrf.mxu0
      %v701 = vadd.f32 %v563, %v700
      %702 = vmatmul.bf16.gmra.mxu0 %v631
      %v703 = vpop.f32.mrf.mxu0
      %v704 = vadd.f32 %v566, %v703
      %v705 = vpop.f32.mrf.mxu0
      %v706 = vadd.f32 %v568, %v705
      %707 = vmatmul.bf16.gmra.mxu0 %v633
      %v708 = vpop.f32.mrf.mxu0
      %v709 = vadd.f32 %v571, %v708
      %v710 = vpop.f32.mrf.mxu0
      %v711 = vadd.f32 %v573, %v710
      %712 = vmatmul.bf16.gmra.mxu0 %v635
      %v713 = vpop.f32.mrf.mxu0
      %v714 = vadd.f32 %v576, %v713
      %v715 = vpop.f32.mrf.mxu0
      %v716 = vadd.f32 %v578, %v715
      %717 = vmatmul.bf16.gmra.mxu0 %v637
      %v718 = vpop.f32.mrf.mxu0
      %v719 = vadd.f32 %v581, %v718
      %v720 = vpop.f32.mrf.mxu0
      %v721 = vadd.f32 %v583, %v720
      %722 = vmatmul.bf16.gmra.mxu0 %v639
      %v723 = vpop.f32.mrf.mxu0
      %v724 = vadd.f32 %v586, %v723
      %v725 = vpop.f32.mrf.mxu0
      %v726 = vadd.f32 %v588, %v725
      %727 = vmatmul.bf16.gmra.mxu0 %v641
      %v728 = vpop.f32.mrf.mxu0
      %v729 = vadd.f32 %v591, %v728
      %v730 = vpop.f32.mrf.mxu0
      %v731 = vadd.f32 %v593, %v730
      %732 = vmatmul.bf16.gmra.mxu0 %v643
      %v733 = vpop.f32.mrf.mxu0
      %v734 = vadd.f32 %v596, %v733
      %v735 = vpop.f32.mrf.mxu0
      %v736 = vadd.f32 %v598, %v735
      %737 = vmatmul.bf16.gmra.mxu0 %v645
      %v738 = vpop.f32.mrf.mxu0
      %v739 = vadd.f32 %v601, %v738
      %v740 = vpop.f32.mrf.mxu0
      %v741 = vadd.f32 %v603, %v740
      %742 = vmatmul.bf16.gmra.mxu0 %v647
      %v743 = vpop.f32.mrf.mxu0
      %v744 = vadd.f32 %v606, %v743
      %v745 = vpop.f32.mrf.mxu0
      %v746 = vadd.f32 %v608, %v745
      %747 = vmatmul.bf16.gmra.mxu0 %v649
      %v748 = vpop.f32.mrf.mxu0
      %v749 = vadd.f32 %v611, %v748
      %v750 = vpop.f32.mrf.mxu0
      %v751 = vadd.f32 %v613, %v750
      %752 = vdwg.mxu0
      %v753 = vld [vmem:[%s165] sm:$0xe]
      %s754 = scalar_lea.vmem %s1, 4
      %v755 = vld [vmem:[%s754] sm:$0x3]
      %v757 = vunpack.c.l.b16 %v753
      %v758 = vpack.c.b16 %v250, %v757
      %vm759 = vcmask 1046528
      %v760 = vrot.slane %v758, 1
      %v761 = vrot.slane %v287, 1
      %v762 = vsel %vm759, %v760, %v761
      %v763 = vrot.slane %v288, 1
      %v764 = vsel %vm759, %v761, %v763
      %v765 = vrot.slane %v289, 1
      %v766 = vsel %vm759, %v763, %v765
      %v767 = vrot.slane %v290, 1
      %v768 = vsel %vm759, %v765, %v767
      %v769 = vrot.slane %v291, 1
      %v770 = vsel %vm759, %v767, %v769
      %v771 = vrot.slane %v292, 1
      %v772 = vsel %vm759, %v769, %v771
      %v773 = vrot.slane %v293, 1
      %v774 = vsel %vm759, %v771, %v773
      %v775 = vrot.slane %v294, 1
      %v776 = vsel %vm759, %v773, %v775
      %v777 = vrot.slane %v295, 1
      %v778 = vsel %vm759, %v775, %v777
      %v779 = vrot.slane %v296, 1
      %v780 = vsel %vm759, %v777, %v779
      %v781 = vrot.slane %v297, 1
      %v782 = vsel %vm759, %v779, %v781
      %v783 = vrot.slane %v298, 1
      %v784 = vsel %vm759, %v781, %v783
      %v785 = vrot.slane %v299, 1
      %v786 = vsel %vm759, %v783, %v785
      %v787 = vrot.slane %v300, 1
      %v788 = vsel %vm759, %v785, %v787
      %v789 = vrot.slane %v301, 1
      %v790 = vsel %vm759, %v787, %v789
      %v791 = vrot.slane %v302, 1
      %v792 = vsel %vm759, %v789, %v791
      %v793 = vrot.slane %v303, 1
      %v794 = vsel %vm759, %v791, %v793
      %v795 = vrot.slane %v304, 1
      %v796 = vsel %vm759, %v793, %v795
      %v798 = vsel %vm454, %v762, 0
      %v801 = vsel %vm454, %v764, 0
      %v804 = vsel %vm454, %v766, 0
      %v807 = vsel %vm454, %v768, 0
      %v810 = vsel %vm454, %v770, 0
      %v813 = vsel %vm454, %v772, 0
      %v816 = vsel %vm454, %v774, 0
      %v819 = vsel %vm454, %v776, 0
      %v822 = vsel %vm454, %v778, 0
      %v825 = vsel %vm454, %v780, 0
      %v828 = vsel %vm454, %v782, 0
      %v831 = vsel %vm454, %v784, 0
      %v834 = vsel %vm454, %v786, 0
      %v837 = vsel %vm454, %v788, 0
      %v840 = vsel %vm454, %v790, 0
      %v843 = vsel %vm454, %v792, 0
      %v846 = vsel %vm454, %v794, 0
      %v849 = vsel %vm454, %v796, 0
      %v852 = vand.u32 %v755, %v512
      %854 = vmatpush.bf16.msra.mxu0 0
      %855 = vmatpush.bf16.msra.mxu0 0
      %856 = vmatpush.bf16.msra.mxu0 0
      %857 = vmatpush.bf16.msra.mxu0 0
      %858 = vmatpush.bf16.msra.mxu0 0
      %859 = vmatpush.bf16.msra.mxu0 0
      %860 = vmatpush.bf16.msra.mxu0 0
      %861 = vmatpush.bf16.msra.mxu0 %v852
      %862 = vmatmul.bf16.gmra.mxu0 %v798
      %v863 = vpop.f32.mrf.mxu0
      %v864 = vadd.f32 0.0, %v863
      %v865 = vpop.f32.mrf.mxu0
      %v866 = vadd.f32 0.0, %v865
      %867 = vmatmul.bf16.gmra.mxu0 %v801
      %v868 = vpop.f32.mrf.mxu0
      %v869 = vadd.f32 0.0, %v868
      %v870 = vpop.f32.mrf.mxu0
      %v871 = vadd.f32 0.0, %v870
      %872 = vmatmul.bf16.gmra.mxu0 %v804
      %v873 = vpop.f32.mrf.mxu0
      %v874 = vadd.f32 0.0, %v873
      %v875 = vpop.f32.mrf.mxu0
      %v876 = vadd.f32 0.0, %v875
      %877 = vmatmul.bf16.gmra.mxu0 %v807
      %v878 = vpop.f32.mrf.mxu0
      %v879 = vadd.f32 0.0, %v878
      %v880 = vpop.f32.mrf.mxu0
      %v881 = vadd.f32 0.0, %v880
      %882 = vmatmul.bf16.gmra.mxu0 %v810
      %v883 = vpop.f32.mrf.mxu0
      %v884 = vadd.f32 0.0, %v883
      %v885 = vpop.f32.mrf.mxu0
      %v886 = vadd.f32 0.0, %v885
      %887 = vmatmul.bf16.gmra.mxu0 %v813
      %v888 = vpop.f32.mrf.mxu0
      %v889 = vadd.f32 0.0, %v888
      %v890 = vpop.f32.mrf.mxu0
      %v891 = vadd.f32 0.0, %v890
      %892 = vmatmul.bf16.gmra.mxu0 %v816
      %v893 = vpop.f32.mrf.mxu0
      %v894 = vadd.f32 0.0, %v893
      %v895 = vpop.f32.mrf.mxu0
      %v896 = vadd.f32 0.0, %v895
      %897 = vmatmul.bf16.gmra.mxu0 %v819
      %v898 = vpop.f32.mrf.mxu0
      %v899 = vadd.f32 0.0, %v898
      %v900 = vpop.f32.mrf.mxu0
      %v901 = vadd.f32 0.0, %v900
      %902 = vmatmul.bf16.gmra.mxu0 %v822
      %v903 = vpop.f32.mrf.mxu0
      %v904 = vadd.f32 0.0, %v903
      %v905 = vpop.f32.mrf.mxu0
      %v906 = vadd.f32 0.0, %v905
      %907 = vmatmul.bf16.gmra.mxu0 %v825
      %v908 = vpop.f32.mrf.mxu0
      %v909 = vadd.f32 0.0, %v908
      %v910 = vpop.f32.mrf.mxu0
      %v911 = vadd.f32 0.0, %v910
      %912 = vmatmul.bf16.gmra.mxu0 %v828
      %v913 = vpop.f32.mrf.mxu0
      %v914 = vadd.f32 0.0, %v913
      %v915 = vpop.f32.mrf.mxu0
      %v916 = vadd.f32 0.0, %v915
      %917 = vmatmul.bf16.gmra.mxu0 %v831
      %v918 = vpop.f32.mrf.mxu0
      %v919 = vadd.f32 0.0, %v918
      %v920 = vpop.f32.mrf.mxu0
      %v921 = vadd.f32 0.0, %v920
      %922 = vmatmul.bf16.gmra.mxu0 %v834
      %v923 = vpop.f32.mrf.mxu0
      %v924 = vadd.f32 0.0, %v923
      %v925 = vpop.f32.mrf.mxu0
      %v926 = vadd.f32 0.0, %v925
      %927 = vmatmul.bf16.gmra.mxu0 %v837
      %v928 = vpop.f32.mrf.mxu0
      %v929 = vadd.f32 0.0, %v928
      %v930 = vpop.f32.mrf.mxu0
      %v931 = vadd.f32 0.0, %v930
      %932 = vmatmul.bf16.gmra.mxu0 %v840
      %v933 = vpop.f32.mrf.mxu0
      %v934 = vadd.f32 0.0, %v933
      %v935 = vpop.f32.mrf.mxu0
      %v936 = vadd.f32 0.0, %v935
      %937 = vmatmul.bf16.gmra.mxu0 %v843
      %v938 = vpop.f32.mrf.mxu0
      %v939 = vadd.f32 0.0, %v938
      %v940 = vpop.f32.mrf.mxu0
      %v941 = vadd.f32 0.0, %v940
      %942 = vmatmul.bf16.gmra.mxu0 %v846
      %v943 = vpop.f32.mrf.mxu0
      %v944 = vadd.f32 0.0, %v943
      %v945 = vpop.f32.mrf.mxu0
      %v946 = vadd.f32 0.0, %v945
      %947 = vmatmul.bf16.gmra.mxu0 %v849
      %v948 = vpop.f32.mrf.mxu0
      %v949 = vadd.f32 0.0, %v948
      %v950 = vpop.f32.mrf.mxu0
      %v951 = vadd.f32 0.0, %v950
      %952 = vdwg.mxu0
      %v953 = vadd.f32 %v664, %v864
      %v954 = vadd.f32 %v666, %v866
      %v955 = vadd.f32 %v669, %v869
      %v956 = vadd.f32 %v671, %v871
      %v957 = vadd.f32 %v674, %v874
      %v958 = vadd.f32 %v676, %v876
      %v959 = vadd.f32 %v679, %v879
      %v960 = vadd.f32 %v681, %v881
      %v961 = vadd.f32 %v684, %v884
      %v962 = vadd.f32 %v686, %v886
      %v963 = vadd.f32 %v689, %v889
      %v964 = vadd.f32 %v691, %v891
      %v965 = vadd.f32 %v694, %v894
      %v966 = vadd.f32 %v696, %v896
      %v967 = vadd.f32 %v699, %v899
      %v968 = vadd.f32 %v701, %v901
      %v969 = vadd.f32 %v704, %v904
      %v970 = vadd.f32 %v706, %v906
      %v971 = vadd.f32 %v709, %v909
      %v972 = vadd.f32 %v711, %v911
      %v973 = vadd.f32 %v714, %v914
      %v974 = vadd.f32 %v716, %v916
      %v975 = vadd.f32 %v719, %v919
      %v976 = vadd.f32 %v721, %v921
      %v977 = vadd.f32 %v724, %v924
      %v978 = vadd.f32 %v726, %v926
      %v979 = vadd.f32 %v729, %v929
      %v980 = vadd.f32 %v731, %v931
      %v981 = vadd.f32 %v734, %v934
      %v982 = vadd.f32 %v736, %v936
      %v983 = vadd.f32 %v739, %v939
      %v984 = vadd.f32 %v741, %v941
      %v985 = vadd.f32 %v744, %v944
      %v986 = vadd.f32 %v746, %v946
      %v987 = vadd.f32 %v749, %v949
      %v988 = vadd.f32 %v751, %v951
      %v989 = vld [vmem:[%s165 + $0x8] sm:$0xe]
      %v990 = vld [vmem:[%s165 + $0xc] sm:$0xf]
      %v991 = vld [vmem:[%s165 + $0x10] sm:$0xf]
      %v992 = vld [vmem:[%s165 + $0x14] sm:$0xf]
      %v993 = vld [vmem:[%s165 + $0x18] sm:$0xf]
      %v994 = vld [vmem:[%s165 + $0x1c] sm:$0xf]
      %v995 = vld [vmem:[%s165 + $0x20] sm:$0xf]
      %v996 = vld [vmem:[%s165 + $0x24] sm:$0xf]
      %v997 = vld [vmem:[%s165 + $0x28] sm:$0xf]
      %v998 = vld [vmem:[%s165 + $0x2c] sm:$0xf]
      %v999 = vld [vmem:[%s165 + $0x30] sm:$0xf]
      %v1000 = vld [vmem:[%s165 + $0x34] sm:$0xf]
      %v1001 = vld [vmem:[%s165 + $0x38] sm:$0xf]
      %v1002 = vld [vmem:[%s165 + $0x3c] sm:$0xf]
      %v1003 = vld [vmem:[%s165 + $0x40] sm:$0xf]
      %v1004 = vld [vmem:[%s165 + $0x44] sm:$0xf]
      %v1005 = vld [vmem:[%s165 + $0x48] sm:$0xf]
      %v1006 = vld [vmem:[%s165 + $0x4c] sm:$0xf]
      %v1007 = vld [vmem:[%s165 + $0x50] sm:$0xf]
      %v1008 = vld [vmem:[%s165 + $0x54] sm:$0xf]
      %v1009 = vld [vmem:[%s165 + $0x58] sm:$0xf]
      %v1010 = vld [vmem:[%s165 + $0x5c] sm:$0xf]
      %v1011 = vld [vmem:[%s165 + $0x60] sm:$0xf]
      %v1012 = vld [vmem:[%s165 + $0x64] sm:$0xf]
      %v1013 = vld [vmem:[%s165 + $0x68] sm:$0xf]
      %v1014 = vld [vmem:[%s165 + $0x6c] sm:$0xf]
      %v1015 = vld [vmem:[%s165 + $0x70] sm:$0xf]
      %v1016 = vld [vmem:[%s165 + $0x74] sm:$0xf]
      %v1017 = vld [vmem:[%s165 + $0x78] sm:$0xf]
      %v1018 = vld [vmem:[%s165 + $0x7c] sm:$0xf]
      %v1019 = vld [vmem:[%s165 + $0x80] sm:$0xf]
      %v1020 = vld [vmem:[%s165 + $0x84] sm:$0xf]
      %v1021 = vld [vmem:[%s165 + $0x88] sm:$0xf]
      %v1022 = vld [vmem:[%s165 + $0x8c] sm:$0xf]
      %v1023 = vld [vmem:[%s165 + $0x90] sm:$0xf]
      %v1024 = vld [vmem:[%s165 + $0x94] sm:$0xf]
      %v1025 = vld [vmem:[%s165 + $0x98] sm:$0x1]
      %s1026 = scalar_lea.vmem %s1, 6
      %v1027 = vld [vmem:[%s1026] sm:$0x3]
      %v1065 = vunpack.c.l.b16 %v989
      %v1066 = vunpack.c.l.b16 %v990
      %v1067 = vunpack.c.l.b16 %v991
      %v1068 = vunpack.c.l.b16 %v992
      %v1069 = vunpack.c.l.b16 %v993
      %v1070 = vunpack.c.l.b16 %v994
      %v1071 = vunpack.c.l.b16 %v995
      %v1072 = vunpack.c.l.b16 %v996
      %v1073 = vunpack.c.l.b16 %v997
      %v1074 = vunpack.c.l.b16 %v998
      %v1075 = vunpack.c.l.b16 %v999
      %v1076 = vunpack.c.l.b16 %v1000
      %v1077 = vunpack.c.l.b16 %v1001
      %v1078 = vunpack.c.l.b16 %v1002
      %v1079 = vunpack.c.l.b16 %v1003
      %v1080 = vunpack.c.l.b16 %v1004
      %v1081 = vunpack.c.l.b16 %v1005
      %v1082 = vunpack.c.l.b16 %v1006
      %v1083 = vunpack.c.l.b16 %v1007
      %v1084 = vunpack.c.l.b16 %v1008
      %v1085 = vunpack.c.l.b16 %v1009
      %v1086 = vunpack.c.l.b16 %v1010
      %v1087 = vunpack.c.l.b16 %v1011
      %v1088 = vunpack.c.l.b16 %v1012
      %v1089 = vunpack.c.l.b16 %v1013
      %v1090 = vunpack.c.l.b16 %v1014
      %v1091 = vunpack.c.l.b16 %v1015
      %v1092 = vunpack.c.l.b16 %v1016
      %v1093 = vunpack.c.l.b16 %v1017
      %v1094 = vunpack.c.l.b16 %v1018
      %v1095 = vunpack.c.l.b16 %v1019
      %v1096 = vunpack.c.l.b16 %v1020
      %v1097 = vunpack.c.l.b16 %v1021
      %v1098 = vunpack.c.l.b16 %v1022
      %v1099 = vunpack.c.l.b16 %v1023
      %v1100 = vunpack.c.l.b16 %v1024
      %v1101 = vunpack.c.l.b16 %v1025
      %v1102 = vpack.c.b16 %v1066, %v1065
      %v1103 = vpack.c.b16 %v1068, %v1067
      %v1104 = vpack.c.b16 %v1070, %v1069
      %v1105 = vpack.c.b16 %v1072, %v1071
      %v1106 = vpack.c.b16 %v1074, %v1073
      %v1107 = vpack.c.b16 %v1076, %v1075
      %v1108 = vpack.c.b16 %v1078, %v1077
      %v1109 = vpack.c.b16 %v1080, %v1079
      %v1110 = vpack.c.b16 %v1082, %v1081
      %v1111 = vpack.c.b16 %v1084, %v1083
      %v1112 = vpack.c.b16 %v1086, %v1085
      %v1113 = vpack.c.b16 %v1088, %v1087
      %v1114 = vpack.c.b16 %v1090, %v1089
      %v1115 = vpack.c.b16 %v1092, %v1091
      %v1116 = vpack.c.b16 %v1094, %v1093
      %v1117 = vpack.c.b16 %v1096, %v1095
      %v1118 = vpack.c.b16 %v1098, %v1097
      %v1119 = vpack.c.b16 %v1100, %v1099
      %v1120 = vpack.c.b16 %v1101, %v1101
      %v1121 = vrot.slane %v1102, 1
      %v1122 = vrot.slane %v1103, 1
      %v1123 = vsel %vm759, %v1121, %v1122
      %v1124 = vrot.slane %v1104, 1
      %v1125 = vsel %vm759, %v1122, %v1124
      %v1126 = vrot.slane %v1105, 1
      %v1127 = vsel %vm759, %v1124, %v1126
      %v1128 = vrot.slane %v1106, 1
      %v1129 = vsel %vm759, %v1126, %v1128
      %v1130 = vrot.slane %v1107, 1
      %v1131 = vsel %vm759, %v1128, %v1130
      %v1132 = vrot.slane %v1108, 1
      %v1133 = vsel %vm759, %v1130, %v1132
      %v1134 = vrot.slane %v1109, 1
      %v1135 = vsel %vm759, %v1132, %v1134
      %v1136 = vrot.slane %v1110, 1
      %v1137 = vsel %vm759, %v1134, %v1136
      %v1138 = vrot.slane %v1111, 1
      %v1139 = vsel %vm759, %v1136, %v1138
      %v1140 = vrot.slane %v1112, 1
      %v1141 = vsel %vm759, %v1138, %v1140
      %v1142 = vrot.slane %v1113, 1
      %v1143 = vsel %vm759, %v1140, %v1142
      %v1144 = vrot.slane %v1114, 1
      %v1145 = vsel %vm759, %v1142, %v1144
      %v1146 = vrot.slane %v1115, 1
      %v1147 = vsel %vm759, %v1144, %v1146
      %v1148 = vrot.slane %v1116, 1
      %v1149 = vsel %vm759, %v1146, %v1148
      %v1150 = vrot.slane %v1117, 1
      %v1151 = vsel %vm759, %v1148, %v1150
      %v1152 = vrot.slane %v1118, 1
      %v1153 = vsel %vm759, %v1150, %v1152
      %v1154 = vrot.slane %v1119, 1
      %v1155 = vsel %vm759, %v1152, %v1154
      %v1156 = vrot.slane %v1120, 1
      %v1157 = vsel %vm759, %v1154, %v1156
      %v1159 = vsel %vm454, %v1123, 0
      %v1162 = vsel %vm454, %v1125, 0
      %v1165 = vsel %vm454, %v1127, 0
      %v1168 = vsel %vm454, %v1129, 0
      %v1171 = vsel %vm454, %v1131, 0
      %v1174 = vsel %vm454, %v1133, 0
      %v1177 = vsel %vm454, %v1135, 0
      %v1180 = vsel %vm454, %v1137, 0
      %v1183 = vsel %vm454, %v1139, 0
      %v1186 = vsel %vm454, %v1141, 0
      %v1189 = vsel %vm454, %v1143, 0
      %v1192 = vsel %vm454, %v1145, 0
      %v1195 = vsel %vm454, %v1147, 0
      %v1198 = vsel %vm454, %v1149, 0
      %v1201 = vsel %vm454, %v1151, 0
      %v1204 = vsel %vm454, %v1153, 0
      %v1207 = vsel %vm454, %v1155, 0
      %v1210 = vsel %vm454, %v1157, 0
      %v1213 = vand.u32 %v1027, %v512
      %1215 = vmatpush.bf16.msra.mxu0 0
      %1216 = vmatpush.bf16.msra.mxu0 0
      %1217 = vmatpush.bf16.msra.mxu0 0
      %1218 = vmatpush.bf16.msra.mxu0 0
      %1219 = vmatpush.bf16.msra.mxu0 0
      %1220 = vmatpush.bf16.msra.mxu0 0
      %1221 = vmatpush.bf16.msra.mxu0 0
      %1222 = vmatpush.bf16.msra.mxu0 %v1213
      %1223 = vmatmul.bf16.gmra.mxu0 %v1159
      %v1224 = vpop.f32.mrf.mxu0
      %v1225 = vadd.f32 0.0, %v1224
      %v1226 = vpop.f32.mrf.mxu0
      %v1227 = vadd.f32 0.0, %v1226
      %1228 = vmatmul.bf16.gmra.mxu0 %v1162
      %v1229 = vpop.f32.mrf.mxu0
      %v1230 = vadd.f32 0.0, %v1229
      %v1231 = vpop.f32.mrf.mxu0
      %v1232 = vadd.f32 0.0, %v1231
      %1233 = vmatmul.bf16.gmra.mxu0 %v1165
      %v1234 = vpop.f32.mrf.mxu0
      %v1235 = vadd.f32 0.0, %v1234
      %v1236 = vpop.f32.mrf.mxu0
      %v1237 = vadd.f32 0.0, %v1236
      %1238 = vmatmul.bf16.gmra.mxu0 %v1168
      %v1239 = vpop.f32.mrf.mxu0
      %v1240 = vadd.f32 0.0, %v1239
      %v1241 = vpop.f32.mrf.mxu0
      %v1242 = vadd.f32 0.0, %v1241
      %1243 = vmatmul.bf16.gmra.mxu0 %v1171
      %v1244 = vpop.f32.mrf.mxu0
      %v1245 = vadd.f32 0.0, %v1244
      %v1246 = vpop.f32.mrf.mxu0
      %v1247 = vadd.f32 0.0, %v1246
      %1248 = vmatmul.bf16.gmra.mxu0 %v1174
      %v1249 = vpop.f32.mrf.mxu0
      %v1250 = vadd.f32 0.0, %v1249
      %v1251 = vpop.f32.mrf.mxu0
      %v1252 = vadd.f32 0.0, %v1251
      %1253 = vmatmul.bf16.gmra.mxu0 %v1177
      %v1254 = vpop.f32.mrf.mxu0
      %v1255 = vadd.f32 0.0, %v1254
      %v1256 = vpop.f32.mrf.mxu0
      %v1257 = vadd.f32 0.0, %v1256
      %1258 = vmatmul.bf16.gmra.mxu0 %v1180
      %v1259 = vpop.f32.mrf.mxu0
      %v1260 = vadd.f32 0.0, %v1259
      %v1261 = vpop.f32.mrf.mxu0
      %v1262 = vadd.f32 0.0, %v1261
      %1263 = vmatmul.bf16.gmra.mxu0 %v1183
      %v1264 = vpop.f32.mrf.mxu0
      %v1265 = vadd.f32 0.0, %v1264
      %v1266 = vpop.f32.mrf.mxu0
      %v1267 = vadd.f32 0.0, %v1266
      %1268 = vmatmul.bf16.gmra.mxu0 %v1186
      %v1269 = vpop.f32.mrf.mxu0
      %v1270 = vadd.f32 0.0, %v1269
      %v1271 = vpop.f32.mrf.mxu0
      %v1272 = vadd.f32 0.0, %v1271
      %1273 = vmatmul.bf16.gmra.mxu0 %v1189
      %v1274 = vpop.f32.mrf.mxu0
      %v1275 = vadd.f32 0.0, %v1274
      %v1276 = vpop.f32.mrf.mxu0
      %v1277 = vadd.f32 0.0, %v1276
      %1278 = vmatmul.bf16.gmra.mxu0 %v1192
      %v1279 = vpop.f32.mrf.mxu0
      %v1280 = vadd.f32 0.0, %v1279
      %v1281 = vpop.f32.mrf.mxu0
      %v1282 = vadd.f32 0.0, %v1281
      %1283 = vmatmul.bf16.gmra.mxu0 %v1195
      %v1284 = vpop.f32.mrf.mxu0
      %v1285 = vadd.f32 0.0, %v1284
      %v1286 = vpop.f32.mrf.mxu0
      %v1287 = vadd.f32 0.0, %v1286
      %1288 = vmatmul.bf16.gmra.mxu0 %v1198
      %v1289 = vpop.f32.mrf.mxu0
      %v1290 = vadd.f32 0.0, %v1289
      %v1291 = vpop.f32.mrf.mxu0
      %v1292 = vadd.f32 0.0, %v1291
      %1293 = vmatmul.bf16.gmra.mxu0 %v1201
      %v1294 = vpop.f32.mrf.mxu0
      %v1295 = vadd.f32 0.0, %v1294
      %v1296 = vpop.f32.mrf.mxu0
      %v1297 = vadd.f32 0.0, %v1296
      %1298 = vmatmul.bf16.gmra.mxu0 %v1204
      %v1299 = vpop.f32.mrf.mxu0
      %v1300 = vadd.f32 0.0, %v1299
      %v1301 = vpop.f32.mrf.mxu0
      %v1302 = vadd.f32 0.0, %v1301
      %1303 = vmatmul.bf16.gmra.mxu0 %v1207
      %v1304 = vpop.f32.mrf.mxu0
      %v1305 = vadd.f32 0.0, %v1304
      %v1306 = vpop.f32.mrf.mxu0
      %v1307 = vadd.f32 0.0, %v1306
      %1308 = vmatmul.bf16.gmra.mxu0 %v1210
      %v1309 = vpop.f32.mrf.mxu0
      %v1310 = vadd.f32 0.0, %v1309
      %v1311 = vpop.f32.mrf.mxu0
      %v1312 = vadd.f32 0.0, %v1311
      %1313 = vdwg.mxu0
      %v1314 = vadd.f32 %v953, %v1225
      %v1315 = vadd.f32 %v954, %v1227
      %v1316 = vadd.f32 %v955, %v1230
      %v1317 = vadd.f32 %v956, %v1232
      %v1318 = vadd.f32 %v957, %v1235
      %v1319 = vadd.f32 %v958, %v1237
      %v1320 = vadd.f32 %v959, %v1240
      %v1321 = vadd.f32 %v960, %v1242
      %v1322 = vadd.f32 %v961, %v1245
      %v1323 = vadd.f32 %v962, %v1247
      %v1324 = vadd.f32 %v963, %v1250
      %v1325 = vadd.f32 %v964, %v1252
      %v1326 = vadd.f32 %v965, %v1255
      %v1327 = vadd.f32 %v966, %v1257
      %v1328 = vadd.f32 %v967, %v1260
      %v1329 = vadd.f32 %v968, %v1262
      %v1330 = vadd.f32 %v969, %v1265
      %v1331 = vadd.f32 %v970, %v1267
      %v1332 = vadd.f32 %v971, %v1270
      %v1333 = vadd.f32 %v972, %v1272
      %v1334 = vadd.f32 %v973, %v1275
      %v1335 = vadd.f32 %v974, %v1277
      %v1336 = vadd.f32 %v975, %v1280
      %v1337 = vadd.f32 %v976, %v1282
      %v1338 = vadd.f32 %v977, %v1285
      %v1339 = vadd.f32 %v978, %v1287
      %v1340 = vadd.f32 %v979, %v1290
      %v1341 = vadd.f32 %v980, %v1292
      %v1342 = vadd.f32 %v981, %v1295
      %v1343 = vadd.f32 %v982, %v1297
      %v1344 = vadd.f32 %v983, %v1300
      %v1345 = vadd.f32 %v984, %v1302
      %v1346 = vadd.f32 %v985, %v1305
      %v1347 = vadd.f32 %v986, %v1307
      %v1348 = vadd.f32 %v987, %v1310
      %v1349 = vadd.f32 %v988, %v1312
      %v1350 = vld [vmem:[%s165 + $0x98] sm:$0x3]
      %s1351 = scalar_lea.vmem %s1, 8
      %v1352 = vld [vmem:[%s1351] sm:$0x3]
      %v1354 = vunpack.c.l.b16 %v1350
      %v1355 = vpack.c.b16 %v1354, %v1354
      %vm1356 = vsmask.f32 6400
      %v1358 = vshrl.u32 %v1102, 16
      %v1360 = vrot.slane %v1358, 1
      %v1361 = vshll.u32 %v1102, 16
      %v1363 = vrot.slane %v1361, 2
      %v1364 = vor.u32 %v1360, %v1363
      %v1366 = vshrl.u32 %v1103, 16
      %v1368 = vrot.slane %v1366, 1
      %v1369 = vshll.u32 %v1103, 16
      %v1371 = vrot.slane %v1369, 2
      %v1372 = vor.u32 %v1368, %v1371
      %v1373 = vsel %vm1356, %v1364, %v1372
      %v1375 = vshrl.u32 %v1104, 16
      %v1377 = vrot.slane %v1375, 1
      %v1378 = vshll.u32 %v1104, 16
      %v1380 = vrot.slane %v1378, 2
      %v1381 = vor.u32 %v1377, %v1380
      %v1382 = vsel %vm1356, %v1372, %v1381
      %v1384 = vshrl.u32 %v1105, 16
      %v1386 = vrot.slane %v1384, 1
      %v1387 = vshll.u32 %v1105, 16
      %v1389 = vrot.slane %v1387, 2
      %v1390 = vor.u32 %v1386, %v1389
      %v1391 = vsel %vm1356, %v1381, %v1390
      %v1393 = vshrl.u32 %v1106, 16
      %v1395 = vrot.slane %v1393, 1
      %v1396 = vshll.u32 %v1106, 16
      %v1398 = vrot.slane %v1396, 2
      %v1399 = vor.u32 %v1395, %v1398
      %v1400 = vsel %vm1356, %v1390, %v1399
      %v1402 = vshrl.u32 %v1107, 16
      %v1404 = vrot.slane %v1402, 1
      %v1405 = vshll.u32 %v1107, 16
      %v1407 = vrot.slane %v1405, 2
      %v1408 = vor.u32 %v1404, %v1407
      %v1409 = vsel %vm1356, %v1399, %v1408
      %v1411 = vshrl.u32 %v1108, 16
      %v1413 = vrot.slane %v1411, 1
      %v1414 = vshll.u32 %v1108, 16
      %v1416 = vrot.slane %v1414, 2
      %v1417 = vor.u32 %v1413, %v1416
      %v1418 = vsel %vm1356, %v1408, %v1417
      %v1420 = vshrl.u32 %v1109, 16
      %v1422 = vrot.slane %v1420, 1
      %v1423 = vshll.u32 %v1109, 16
      %v1425 = vrot.slane %v1423, 2
      %v1426 = vor.u32 %v1422, %v1425
      %v1427 = vsel %vm1356, %v1417, %v1426
      %v1429 = vshrl.u32 %v1110, 16
      %v1431 = vrot.slane %v1429, 1
      %v1432 = vshll.u32 %v1110, 16
      %v1434 = vrot.slane %v1432, 2
      %v1435 = vor.u32 %v1431, %v1434
      %v1436 = vsel %vm1356, %v1426, %v1435
      %v1438 = vshrl.u32 %v1111, 16
      %v1440 = vrot.slane %v1438, 1
      %v1441 = vshll.u32 %v1111, 16
      %v1443 = vrot.slane %v1441, 2
      %v1444 = vor.u32 %v1440, %v1443
      %v1445 = vsel %vm1356, %v1435, %v1444
      %v1447 = vshrl.u32 %v1112, 16
      %v1449 = vrot.slane %v1447, 1
      %v1450 = vshll.u32 %v1112, 16
      %v1452 = vrot.slane %v1450, 2
      %v1453 = vor.u32 %v1449, %v1452
      %v1454 = vsel %vm1356, %v1444, %v1453
      %v1456 = vshrl.u32 %v1113, 16
      %v1458 = vrot.slane %v1456, 1
      %v1459 = vshll.u32 %v1113, 16
      %v1461 = vrot.slane %v1459, 2
      %v1462 = vor.u32 %v1458, %v1461
      %v1463 = vsel %vm1356, %v1453, %v1462
      %v1465 = vshrl.u32 %v1114, 16
      %v1467 = vrot.slane %v1465, 1
      %v1468 = vshll.u32 %v1114, 16
      %v1470 = vrot.slane %v1468, 2
      %v1471 = vor.u32 %v1467, %v1470
      %v1472 = vsel %vm1356, %v1462, %v1471
      %v1474 = vshrl.u32 %v1115, 16
      %v1476 = vrot.slane %v1474, 1
      %v1477 = vshll.u32 %v1115, 16
      %v1479 = vrot.slane %v1477, 2
      %v1480 = vor.u32 %v1476, %v1479
      %v1481 = vsel %vm1356, %v1471, %v1480
      %v1483 = vshrl.u32 %v1116, 16
      %v1485 = vrot.slane %v1483, 1
      %v1486 = vshll.u32 %v1116, 16
      %v1488 = vrot.slane %v1486, 2
      %v1489 = vor.u32 %v1485, %v1488
      %v1490 = vsel %vm1356, %v1480, %v1489
      %v1492 = vshrl.u32 %v1117, 16
      %v1494 = vrot.slane %v1492, 1
      %v1495 = vshll.u32 %v1117, 16
      %v1497 = vrot.slane %v1495, 2
      %v1498 = vor.u32 %v1494, %v1497
      %v1499 = vsel %vm1356, %v1489, %v1498
      %v1501 = vshrl.u32 %v1118, 16
      %v1503 = vrot.slane %v1501, 1
      %v1504 = vshll.u32 %v1118, 16
      %v1506 = vrot.slane %v1504, 2
      %v1507 = vor.u32 %v1503, %v1506
      %v1508 = vsel %vm1356, %v1498, %v1507
      %v1510 = vshrl.u32 %v1119, 16
      %v1512 = vrot.slane %v1510, 1
      %v1513 = vshll.u32 %v1119, 16
      %v1515 = vrot.slane %v1513, 2
      %v1516 = vor.u32 %v1512, %v1515
      %v1517 = vsel %vm1356, %v1507, %v1516
      %v1519 = vshrl.u32 %v1355, 16
      %v1521 = vrot.slane %v1519, 1
      %v1522 = vshll.u32 %v1355, 16
      %v1524 = vrot.slane %v1522, 2
      %v1525 = vor.u32 %v1521, %v1524
      %v1526 = vsel %vm1356, %v1516, %v1525
      %v1528 = vsel %vm454, %v1373, 0
      %v1531 = vsel %vm454, %v1382, 0
      %v1534 = vsel %vm454, %v1391, 0
      %v1537 = vsel %vm454, %v1400, 0
      %v1540 = vsel %vm454, %v1409, 0
      %v1543 = vsel %vm454, %v1418, 0
      %v1546 = vsel %vm454, %v1427, 0
      %v1549 = vsel %vm454, %v1436, 0
      %v1552 = vsel %vm454, %v1445, 0
      %v1555 = vsel %vm454, %v1454, 0
      %v1558 = vsel %vm454, %v1463, 0
      %v1561 = vsel %vm454, %v1472, 0
      %v1564 = vsel %vm454, %v1481, 0
      %v1567 = vsel %vm454, %v1490, 0
      %v1570 = vsel %vm454, %v1499, 0
      %v1573 = vsel %vm454, %v1508, 0
      %v1576 = vsel %vm454, %v1517, 0
      %v1579 = vsel %vm454, %v1526, 0
      %v1582 = vand.u32 %v1352, %v512
      %1584 = vmatpush.bf16.msra.mxu0 0
      %1585 = vmatpush.bf16.msra.mxu0 0
      %1586 = vmatpush.bf16.msra.mxu0 0
      %1587 = vmatpush.bf16.msra.mxu0 0
      %1588 = vmatpush.bf16.msra.mxu0 0
      %1589 = vmatpush.bf16.msra.mxu0 0
      %1590 = vmatpush.bf16.msra.mxu0 0
      %1591 = vmatpush.bf16.msra.mxu0 %v1582
      %1592 = vmatmul.bf16.gmra.mxu0 %v1528
      %v1593 = vpop.f32.mrf.mxu0
      %v1594 = vadd.f32 0.0, %v1593
      %v1595 = vpop.f32.mrf.mxu0
      %v1596 = vadd.f32 0.0, %v1595
      %1597 = vmatmul.bf16.gmra.mxu0 %v1531
      %v1598 = vpop.f32.mrf.mxu0
      %v1599 = vadd.f32 0.0, %v1598
      %v1600 = vpop.f32.mrf.mxu0
      %v1601 = vadd.f32 0.0, %v1600
      %1602 = vmatmul.bf16.gmra.mxu0 %v1534
      %v1603 = vpop.f32.mrf.mxu0
      %v1604 = vadd.f32 0.0, %v1603
      %v1605 = vpop.f32.mrf.mxu0
      %v1606 = vadd.f32 0.0, %v1605
      %1607 = vmatmul.bf16.gmra.mxu0 %v1537
      %v1608 = vpop.f32.mrf.mxu0
      %v1609 = vadd.f32 0.0, %v1608
      %v1610 = vpop.f32.mrf.mxu0
      %v1611 = vadd.f32 0.0, %v1610
      %1612 = vmatmul.bf16.gmra.mxu0 %v1540
      %v1613 = vpop.f32.mrf.mxu0
      %v1614 = vadd.f32 0.0, %v1613
      %v1615 = vpop.f32.mrf.mxu0
      %v1616 = vadd.f32 0.0, %v1615
      %1617 = vmatmul.bf16.gmra.mxu0 %v1543
      %v1618 = vpop.f32.mrf.mxu0
      %v1619 = vadd.f32 0.0, %v1618
      %v1620 = vpop.f32.mrf.mxu0
      %v1621 = vadd.f32 0.0, %v1620
      %1622 = vmatmul.bf16.gmra.mxu0 %v1546
      %v1623 = vpop.f32.mrf.mxu0
      %v1624 = vadd.f32 0.0, %v1623
      %v1625 = vpop.f32.mrf.mxu0
      %v1626 = vadd.f32 0.0, %v1625
      %1627 = vmatmul.bf16.gmra.mxu0 %v1549
      %v1628 = vpop.f32.mrf.mxu0
      %v1629 = vadd.f32 0.0, %v1628
      %v1630 = vpop.f32.mrf.mxu0
      %v1631 = vadd.f32 0.0, %v1630
      %1632 = vmatmul.bf16.gmra.mxu0 %v1552
      %v1633 = vpop.f32.mrf.mxu0
      %v1634 = vadd.f32 0.0, %v1633
      %v1635 = vpop.f32.mrf.mxu0
      %v1636 = vadd.f32 0.0, %v1635
      %1637 = vmatmul.bf16.gmra.mxu0 %v1555
      %v1638 = vpop.f32.mrf.mxu0
      %v1639 = vadd.f32 0.0, %v1638
      %v1640 = vpop.f32.mrf.mxu0
      %v1641 = vadd.f32 0.0, %v1640
      %1642 = vmatmul.bf16.gmra.mxu0 %v1558
      %v1643 = vpop.f32.mrf.mxu0
      %v1644 = vadd.f32 0.0, %v1643
      %v1645 = vpop.f32.mrf.mxu0
      %v1646 = vadd.f32 0.0, %v1645
      %1647 = vmatmul.bf16.gmra.mxu0 %v1561
      %v1648 = vpop.f32.mrf.mxu0
      %v1649 = vadd.f32 0.0, %v1648
      %v1650 = vpop.f32.mrf.mxu0
      %v1651 = vadd.f32 0.0, %v1650
      %1652 = vmatmul.bf16.gmra.mxu0 %v1564
      %v1653 = vpop.f32.mrf.mxu0
      %v1654 = vadd.f32 0.0, %v1653
      %v1655 = vpop.f32.mrf.mxu0
      %v1656 = vadd.f32 0.0, %v1655
      %1657 = vmatmul.bf16.gmra.mxu0 %v1567
      %v1658 = vpop.f32.mrf.mxu0
      %v1659 = vadd.f32 0.0, %v1658
      %v1660 = vpop.f32.mrf.mxu0
      %v1661 = vadd.f32 0.0, %v1660
      %1662 = vmatmul.bf16.gmra.mxu0 %v1570
      %v1663 = vpop.f32.mrf.mxu0
      %v1664 = vadd.f32 0.0, %v1663
      %v1665 = vpop.f32.mrf.mxu0
      %v1666 = vadd.f32 0.0, %v1665
      %1667 = vmatmul.bf16.gmra.mxu0 %v1573
      %v1668 = vpop.f32.mrf.mxu0
      %v1669 = vadd.f32 0.0, %v1668
      %v1670 = vpop.f32.mrf.mxu0
      %v1671 = vadd.f32 0.0, %v1670
      %1672 = vmatmul.bf16.gmra.mxu0 %v1576
      %v1673 = vpop.f32.mrf.mxu0
      %v1674 = vadd.f32 0.0, %v1673
      %v1675 = vpop.f32.mrf.mxu0
      %v1676 = vadd.f32 0.0, %v1675
      %1677 = vmatmul.bf16.gmra.mxu0 %v1579
      %v1678 = vpop.f32.mrf.mxu0
      %v1679 = vadd.f32 0.0, %v1678
      %v1680 = vpop.f32.mrf.mxu0
      %v1681 = vadd.f32 0.0, %v1680
      %1682 = vdwg.mxu0
      %v1683 = vadd.f32 %v1314, %v1594
      %v1684 = vadd.f32 %v1315, %v1596
      %v1685 = vadd.f32 %v1316, %v1599
      %v1686 = vadd.f32 %v1317, %v1601
      %v1687 = vadd.f32 %v1318, %v1604
      %v1688 = vadd.f32 %v1319, %v1606
      %v1689 = vadd.f32 %v1320, %v1609
      %v1690 = vadd.f32 %v1321, %v1611
      %v1691 = vadd.f32 %v1322, %v1614
      %v1692 = vadd.f32 %v1323, %v1616
      %v1693 = vadd.f32 %v1324, %v1619
      %v1694 = vadd.f32 %v1325, %v1621
      %v1695 = vadd.f32 %v1326, %v1624
      %v1696 = vadd.f32 %v1327, %v1626
      %v1697 = vadd.f32 %v1328, %v1629
      %v1698 = vadd.f32 %v1329, %v1631
      %v1699 = vadd.f32 %v1330, %v1634
      %v1700 = vadd.f32 %v1331, %v1636
      %v1701 = vadd.f32 %v1332, %v1639
      %v1702 = vadd.f32 %v1333, %v1641
      %v1703 = vadd.f32 %v1334, %v1644
      %v1704 = vadd.f32 %v1335, %v1646
      %v1705 = vadd.f32 %v1336, %v1649
      %v1706 = vadd.f32 %v1337, %v1651
      %v1707 = vadd.f32 %v1338, %v1654
      %v1708 = vadd.f32 %v1339, %v1656
      %v1709 = vadd.f32 %v1340, %v1659
      %v1710 = vadd.f32 %v1341, %v1661
      %v1711 = vadd.f32 %v1342, %v1664
      %v1712 = vadd.f32 %v1343, %v1666
      %v1713 = vadd.f32 %v1344, %v1669
      %v1714 = vadd.f32 %v1345, %v1671
      %v1715 = vadd.f32 %v1346, %v1674
      %v1716 = vadd.f32 %v1347, %v1676
      %v1717 = vadd.f32 %v1348, %v1679
      %v1718 = vadd.f32 %v1349, %v1681
      %v1719 = vld [vmem:[%s165 + $0x8] sm:$0xc]
      %s1720 = scalar_lea.vmem %s1, 10
      %v1721 = vld [vmem:[%s1720] sm:$0x3]
      %v1723 = vunpack.c.l.b16 %v1719
      %v1724 = vpack.c.b16 %v1066, %v1723
      %vm1725 = vcmask 1045504
      %v1726 = vrot.slane %v1724, 2
      %v1727 = vrot.slane %v1103, 2
      %v1728 = vsel %vm1725, %v1726, %v1727
      %v1729 = vrot.slane %v1104, 2
      %v1730 = vsel %vm1725, %v1727, %v1729
      %v1731 = vrot.slane %v1105, 2
      %v1732 = vsel %vm1725, %v1729, %v1731
      %v1733 = vrot.slane %v1106, 2
      %v1734 = vsel %vm1725, %v1731, %v1733
      %v1735 = vrot.slane %v1107, 2
      %v1736 = vsel %vm1725, %v1733, %v1735
      %v1737 = vrot.slane %v1108, 2
      %v1738 = vsel %vm1725, %v1735, %v1737
      %v1739 = vrot.slane %v1109, 2
      %v1740 = vsel %vm1725, %v1737, %v1739
      %v1741 = vrot.slane %v1110, 2
      %v1742 = vsel %vm1725, %v1739, %v1741
      %v1743 = vrot.slane %v1111, 2
      %v1744 = vsel %vm1725, %v1741, %v1743
      %v1745 = vrot.slane %v1112, 2
      %v1746 = vsel %vm1725, %v1743, %v1745
      %v1747 = vrot.slane %v1113, 2
      %v1748 = vsel %vm1725, %v1745, %v1747
      %v1749 = vrot.slane %v1114, 2
      %v1750 = vsel %vm1725, %v1747, %v1749
      %v1751 = vrot.slane %v1115, 2
      %v1752 = vsel %vm1725, %v1749, %v1751
      %v1753 = vrot.slane %v1116, 2
      %v1754 = vsel %vm1725, %v1751, %v1753
      %v1755 = vrot.slane %v1117, 2
      %v1756 = vsel %vm1725, %v1753, %v1755
      %v1757 = vrot.slane %v1118, 2
      %v1758 = vsel %vm1725, %v1755, %v1757
      %v1759 = vrot.slane %v1119, 2
      %v1760 = vsel %vm1725, %v1757, %v1759
      %v1761 = vrot.slane %v1355, 2
      %v1762 = vsel %vm1725, %v1759, %v1761
      %v1764 = vsel %vm454, %v1728, 0
      %v1767 = vsel %vm454, %v1730, 0
      %v1770 = vsel %vm454, %v1732, 0
      %v1773 = vsel %vm454, %v1734, 0
      %v1776 = vsel %vm454, %v1736, 0
      %v1779 = vsel %vm454, %v1738, 0
      %v1782 = vsel %vm454, %v1740, 0
      %v1785 = vsel %vm454, %v1742, 0
      %v1788 = vsel %vm454, %v1744, 0
      %v1791 = vsel %vm454, %v1746, 0
      %v1794 = vsel %vm454, %v1748, 0
      %v1797 = vsel %vm454, %v1750, 0
      %v1800 = vsel %vm454, %v1752, 0
      %v1803 = vsel %vm454, %v1754, 0
      %v1806 = vsel %vm454, %v1756, 0
      %v1809 = vsel %vm454, %v1758, 0
      %v1812 = vsel %vm454, %v1760, 0
      %v1815 = vsel %vm454, %v1762, 0
      %v1818 = vand.u32 %v1721, %v512
      %1820 = vmatpush.bf16.msra.mxu0 0
      %1821 = vmatpush.bf16.msra.mxu0 0
      %1822 = vmatpush.bf16.msra.mxu0 0
      %1823 = vmatpush.bf16.msra.mxu0 0
      %1824 = vmatpush.bf16.msra.mxu0 0
      %1825 = vmatpush.bf16.msra.mxu0 0
      %1826 = vmatpush.bf16.msra.mxu0 0
      %1827 = vmatpush.bf16.msra.mxu0 %v1818
      %1828 = vmatmul.bf16.gmra.mxu0 %v1764
      %v1829 = vpop.f32.mrf.mxu0
      %v1830 = vadd.f32 0.0, %v1829
      %v1831 = vpop.f32.mrf.mxu0
      %v1832 = vadd.f32 0.0, %v1831
      %1833 = vmatmul.bf16.gmra.mxu0 %v1767
      %v1834 = vpop.f32.mrf.mxu0
      %v1835 = vadd.f32 0.0, %v1834
      %v1836 = vpop.f32.mrf.mxu0
      %v1837 = vadd.f32 0.0, %v1836
      %1838 = vmatmul.bf16.gmra.mxu0 %v1770
      %v1839 = vpop.f32.mrf.mxu0
      %v1840 = vadd.f32 0.0, %v1839
      %v1841 = vpop.f32.mrf.mxu0
      %v1842 = vadd.f32 0.0, %v1841
      %1843 = vmatmul.bf16.gmra.mxu0 %v1773
      %v1844 = vpop.f32.mrf.mxu0
      %v1845 = vadd.f32 0.0, %v1844
      %v1846 = vpop.f32.mrf.mxu0
      %v1847 = vadd.f32 0.0, %v1846
      %1848 = vmatmul.bf16.gmra.mxu0 %v1776
      %v1849 = vpop.f32.mrf.mxu0
      %v1850 = vadd.f32 0.0, %v1849
      %v1851 = vpop.f32.mrf.mxu0
      %v1852 = vadd.f32 0.0, %v1851
      %1853 = vmatmul.bf16.gmra.mxu0 %v1779
      %v1854 = vpop.f32.mrf.mxu0
      %v1855 = vadd.f32 0.0, %v1854
      %v1856 = vpop.f32.mrf.mxu0
      %v1857 = vadd.f32 0.0, %v1856
      %1858 = vmatmul.bf16.gmra.mxu0 %v1782
      %v1859 = vpop.f32.mrf.mxu0
      %v1860 = vadd.f32 0.0, %v1859
      %v1861 = vpop.f32.mrf.mxu0
      %v1862 = vadd.f32 0.0, %v1861
      %1863 = vmatmul.bf16.gmra.mxu0 %v1785
      %v1864 = vpop.f32.mrf.mxu0
      %v1865 = vadd.f32 0.0, %v1864
      %v1866 = vpop.f32.mrf.mxu0
      %v1867 = vadd.f32 0.0, %v1866
      %1868 = vmatmul.bf16.gmra.mxu0 %v1788
      %v1869 = vpop.f32.mrf.mxu0
      %v1870 = vadd.f32 0.0, %v1869
      %v1871 = vpop.f32.mrf.mxu0
      %v1872 = vadd.f32 0.0, %v1871
      %1873 = vmatmul.bf16.gmra.mxu0 %v1791
      %v1874 = vpop.f32.mrf.mxu0
      %v1875 = vadd.f32 0.0, %v1874
      %v1876 = vpop.f32.mrf.mxu0
      %v1877 = vadd.f32 0.0, %v1876
      %1878 = vmatmul.bf16.gmra.mxu0 %v1794
      %v1879 = vpop.f32.mrf.mxu0
      %v1880 = vadd.f32 0.0, %v1879
      %v1881 = vpop.f32.mrf.mxu0
      %v1882 = vadd.f32 0.0, %v1881
      %1883 = vmatmul.bf16.gmra.mxu0 %v1797
      %v1884 = vpop.f32.mrf.mxu0
      %v1885 = vadd.f32 0.0, %v1884
      %v1886 = vpop.f32.mrf.mxu0
      %v1887 = vadd.f32 0.0, %v1886
      %1888 = vmatmul.bf16.gmra.mxu0 %v1800
      %v1889 = vpop.f32.mrf.mxu0
      %v1890 = vadd.f32 0.0, %v1889
      %v1891 = vpop.f32.mrf.mxu0
      %v1892 = vadd.f32 0.0, %v1891
      %1893 = vmatmul.bf16.gmra.mxu0 %v1803
      %v1894 = vpop.f32.mrf.mxu0
      %v1895 = vadd.f32 0.0, %v1894
      %v1896 = vpop.f32.mrf.mxu0
      %v1897 = vadd.f32 0.0, %v1896
      %1898 = vmatmul.bf16.gmra.mxu0 %v1806
      %v1899 = vpop.f32.mrf.mxu0
      %v1900 = vadd.f32 0.0, %v1899
      %v1901 = vpop.f32.mrf.mxu0
      %v1902 = vadd.f32 0.0, %v1901
      %1903 = vmatmul.bf16.gmra.mxu0 %v1809
      %v1904 = vpop.f32.mrf.mxu0
      %v1905 = vadd.f32 0.0, %v1904
      %v1906 = vpop.f32.mrf.mxu0
      %v1907 = vadd.f32 0.0, %v1906
      %1908 = vmatmul.bf16.gmra.mxu0 %v1812
      %v1909 = vpop.f32.mrf.mxu0
      %v1910 = vadd.f32 0.0, %v1909
      %v1911 = vpop.f32.mrf.mxu0
      %v1912 = vadd.f32 0.0, %v1911
      %1913 = vmatmul.bf16.gmra.mxu0 %v1815
      %v1914 = vpop.f32.mrf.mxu0
      %v1915 = vadd.f32 0.0, %v1914
      %v1916 = vpop.f32.mrf.mxu0
      %v1917 = vadd.f32 0.0, %v1916
      %1918 = vdwg.mxu0
      %v1919 = vadd.f32 %v1683, %v1830
      %v1920 = vadd.f32 %v1684, %v1832
      %v1921 = vadd.f32 %v1685, %v1835
      %v1922 = vadd.f32 %v1686, %v1837
      %v1923 = vadd.f32 %v1687, %v1840
      %v1924 = vadd.f32 %v1688, %v1842
      %v1925 = vadd.f32 %v1689, %v1845
      %v1926 = vadd.f32 %v1690, %v1847
      %v1927 = vadd.f32 %v1691, %v1850
      %v1928 = vadd.f32 %v1692, %v1852
      %v1929 = vadd.f32 %v1693, %v1855
      %v1930 = vadd.f32 %v1694, %v1857
      %v1931 = vadd.f32 %v1695, %v1860
      %v1932 = vadd.f32 %v1696, %v1862
      %v1933 = vadd.f32 %v1697, %v1865
      %v1934 = vadd.f32 %v1698, %v1867
      %v1935 = vadd.f32 %v1699, %v1870
      %v1936 = vadd.f32 %v1700, %v1872
      %v1937 = vadd.f32 %v1701, %v1875
      %v1938 = vadd.f32 %v1702, %v1877
      %v1939 = vadd.f32 %v1703, %v1880
      %v1940 = vadd.f32 %v1704, %v1882
      %v1941 = vadd.f32 %v1705, %v1885
      %v1942 = vadd.f32 %v1706, %v1887
      %v1943 = vadd.f32 %v1707, %v1890
      %v1944 = vadd.f32 %v1708, %v1892
      %v1945 = vadd.f32 %v1709, %v1895
      %v1946 = vadd.f32 %v1710, %v1897
      %v1947 = vadd.f32 %v1711, %v1900
      %v1948 = vadd.f32 %v1712, %v1902
      %v1949 = vadd.f32 %v1713, %v1905
      %v1950 = vadd.f32 %v1714, %v1907
      %v1951 = vadd.f32 %v1715, %v1910
      %v1952 = vadd.f32 %v1716, %v1912
      %v1953 = vadd.f32 %v1717, %v1915
      %v1954 = vadd.f32 %v1718, %v1917
      %v1955 = vld [vmem:[%s165 + $0x10] sm:$0xc]
      %v1956 = vld [vmem:[%s165 + $0x14] sm:$0xf]
      %v1957 = vld [vmem:[%s165 + $0x18] sm:$0xf]
      %v1958 = vld [vmem:[%s165 + $0x1c] sm:$0xf]
      %v1959 = vld [vmem:[%s165 + $0x20] sm:$0xf]
      %v1960 = vld [vmem:[%s165 + $0x24] sm:$0xf]
      %v1961 = vld [vmem:[%s165 + $0x28] sm:$0xf]
      %v1962 = vld [vmem:[%s165 + $0x2c] sm:$0xf]
      %v1963 = vld [vmem:[%s165 + $0x30] sm:$0xf]
      %v1964 = vld [vmem:[%s165 + $0x34] sm:$0xf]
      %v1965 = vld [vmem:[%s165 + $0x38] sm:$0xf]
      %v1966 = vld [vmem:[%s165 + $0x3c] sm:$0xf]
      %v1967 = vld [vmem:[%s165 + $0x40] sm:$0xf]
      %v1968 = vld [vmem:[%s165 + $0x44] sm:$0xf]
      %v1969 = vld [vmem:[%s165 + $0x48] sm:$0xf]
      %v1970 = vld [vmem:[%s165 + $0x4c] sm:$0xf]
      %v1971 = vld [vmem:[%s165 + $0x50] sm:$0xf]
      %v1972 = vld [vmem:[%s165 + $0x54] sm:$0xf]
      %v1973 = vld [vmem:[%s165 + $0x58] sm:$0xf]
      %v1974 = vld [vmem:[%s165 + $0x5c] sm:$0xf]
      %v1975 = vld [vmem:[%s165 + $0x60] sm:$0xf]
      %v1976 = vld [vmem:[%s165 + $0x64] sm:$0xf]
      %v1977 = vld [vmem:[%s165 + $0x68] sm:$0xf]
      %v1978 = vld [vmem:[%s165 + $0x6c] sm:$0xf]
      %v1979 = vld [vmem:[%s165 + $0x70] sm:$0xf]
      %v1980 = vld [vmem:[%s165 + $0x74] sm:$0xf]
      %v1981 = vld [vmem:[%s165 + $0x78] sm:$0xf]
      %v1982 = vld [vmem:[%s165 + $0x7c] sm:$0xf]
      %v1983 = vld [vmem:[%s165 + $0x80] sm:$0xf]
      %v1984 = vld [vmem:[%s165 + $0x84] sm:$0xf]
      %v1985 = vld [vmem:[%s165 + $0x88] sm:$0xf]
      %v1986 = vld [vmem:[%s165 + $0x8c] sm:$0xf]
      %v1987 = vld [vmem:[%s165 + $0x90] sm:$0xf]
      %v1988 = vld [vmem:[%s165 + $0x94] sm:$0xf]
      %v1989 = vld [vmem:[%s165 + $0x98] sm:$0xf]
      %v1990 = vld [vmem:[%s165 + $0x9c] sm:$0xf]
      %v1991 = vld [vmem:[%s165 + $0xa0] sm:$0x3]
      %s1992 = scalar_lea.vmem %s1, 12
      %v1993 = vld [vmem:[%s1992] sm:$0x3]
      %v2031 = vunpack.c.l.b16 %v1955
      %v2032 = vunpack.c.l.b16 %v1956
      %v2033 = vunpack.c.l.b16 %v1957
      %v2034 = vunpack.c.l.b16 %v1958
      %v2035 = vunpack.c.l.b16 %v1959
      %v2036 = vunpack.c.l.b16 %v1960
      %v2037 = vunpack.c.l.b16 %v1961
      %v2038 = vunpack.c.l.b16 %v1962
      %v2039 = vunpack.c.l.b16 %v1963
      %v2040 = vunpack.c.l.b16 %v1964
      %v2041 = vunpack.c.l.b16 %v1965
      %v2042 = vunpack.c.l.b16 %v1966
      %v2043 = vunpack.c.l.b16 %v1967
      %v2044 = vunpack.c.l.b16 %v1968
      %v2045 = vunpack.c.l.b16 %v1969
      %v2046 = vunpack.c.l.b16 %v1970
      %v2047 = vunpack.c.l.b16 %v1971
      %v2048 = vunpack.c.l.b16 %v1972
      %v2049 = vunpack.c.l.b16 %v1973
      %v2050 = vunpack.c.l.b16 %v1974
      %v2051 = vunpack.c.l.b16 %v1975
      %v2052 = vunpack.c.l.b16 %v1976
      %v2053 = vunpack.c.l.b16 %v1977
      %v2054 = vunpack.c.l.b16 %v1978
      %v2055 = vunpack.c.l.b16 %v1979
      %v2056 = vunpack.c.l.b16 %v1980
      %v2057 = vunpack.c.l.b16 %v1981
      %v2058 = vunpack.c.l.b16 %v1982
      %v2059 = vunpack.c.l.b16 %v1983
      %v2060 = vunpack.c.l.b16 %v1984
      %v2061 = vunpack.c.l.b16 %v1985
      %v2062 = vunpack.c.l.b16 %v1986
      %v2063 = vunpack.c.l.b16 %v1987
      %v2064 = vunpack.c.l.b16 %v1988
      %v2065 = vunpack.c.l.b16 %v1989
      %v2066 = vunpack.c.l.b16 %v1990
      %v2067 = vunpack.c.l.b16 %v1991
      %v2068 = vpack.c.b16 %v2032, %v2031
      %v2069 = vpack.c.b16 %v2034, %v2033
      %v2070 = vpack.c.b16 %v2036, %v2035
      %v2071 = vpack.c.b16 %v2038, %v2037
      %v2072 = vpack.c.b16 %v2040, %v2039
      %v2073 = vpack.c.b16 %v2042, %v2041
      %v2074 = vpack.c.b16 %v2044, %v2043
      %v2075 = vpack.c.b16 %v2046, %v2045
      %v2076 = vpack.c.b16 %v2048, %v2047
      %v2077 = vpack.c.b16 %v2050, %v2049
      %v2078 = vpack.c.b16 %v2052, %v2051
      %v2079 = vpack.c.b16 %v2054, %v2053
      %v2080 = vpack.c.b16 %v2056, %v2055
      %v2081 = vpack.c.b16 %v2058, %v2057
      %v2082 = vpack.c.b16 %v2060, %v2059
      %v2083 = vpack.c.b16 %v2062, %v2061
      %v2084 = vpack.c.b16 %v2064, %v2063
      %v2085 = vpack.c.b16 %v2066, %v2065
      %v2086 = vpack.c.b16 %v2067, %v2067
      %v2087 = vrot.slane %v2068, 2
      %v2088 = vrot.slane %v2069, 2
      %v2089 = vsel %vm1725, %v2087, %v2088
      %v2090 = vrot.slane %v2070, 2
      %v2091 = vsel %vm1725, %v2088, %v2090
      %v2092 = vrot.slane %v2071, 2
      %v2093 = vsel %vm1725, %v2090, %v2092
      %v2094 = vrot.slane %v2072, 2
      %v2095 = vsel %vm1725, %v2092, %v2094
      %v2096 = vrot.slane %v2073, 2
      %v2097 = vsel %vm1725, %v2094, %v2096
      %v2098 = vrot.slane %v2074, 2
      %v2099 = vsel %vm1725, %v2096, %v2098
      %v2100 = vrot.slane %v2075, 2
      %v2101 = vsel %vm1725, %v2098, %v2100
      %v2102 = vrot.slane %v2076, 2
      %v2103 = vsel %vm1725, %v2100, %v2102
      %v2104 = vrot.slane %v2077, 2
      %v2105 = vsel %vm1725, %v2102, %v2104
      %v2106 = vrot.slane %v2078, 2
      %v2107 = vsel %vm1725, %v2104, %v2106
      %v2108 = vrot.slane %v2079, 2
      %v2109 = vsel %vm1725, %v2106, %v2108
      %v2110 = vrot.slane %v2080, 2
      %v2111 = vsel %vm1725, %v2108, %v2110
      %v2112 = vrot.slane %v2081, 2
      %v2113 = vsel %vm1725, %v2110, %v2112
      %v2114 = vrot.slane %v2082, 2
      %v2115 = vsel %vm1725, %v2112, %v2114
      %v2116 = vrot.slane %v2083, 2
      %v2117 = vsel %vm1725, %v2114, %v2116
      %v2118 = vrot.slane %v2084, 2
      %v2119 = vsel %vm1725, %v2116, %v2118
      %v2120 = vrot.slane %v2085, 2
      %v2121 = vsel %vm1725, %v2118, %v2120
      %v2122 = vrot.slane %v2086, 2
      %v2123 = vsel %vm1725, %v2120, %v2122
      %v2125 = vsel %vm454, %v2089, 0
      %v2128 = vsel %vm454, %v2091, 0
      %v2131 = vsel %vm454, %v2093, 0
      %v2134 = vsel %vm454, %v2095, 0
      %v2137 = vsel %vm454, %v2097, 0
      %v2140 = vsel %vm454, %v2099, 0
      %v2143 = vsel %vm454, %v2101, 0
      %v2146 = vsel %vm454, %v2103, 0
      %v2149 = vsel %vm454, %v2105, 0
      %v2152 = vsel %vm454, %v2107, 0
      %v2155 = vsel %vm454, %v2109, 0
      %v2158 = vsel %vm454, %v2111, 0
      %v2161 = vsel %vm454, %v2113, 0
      %v2164 = vsel %vm454, %v2115, 0
      %v2167 = vsel %vm454, %v2117, 0
      %v2170 = vsel %vm454, %v2119, 0
      %v2173 = vsel %vm454, %v2121, 0
      %v2176 = vsel %vm454, %v2123, 0
      %v2179 = vand.u32 %v1993, %v512
      %2181 = vmatpush.bf16.msra.mxu0 0
      %2182 = vmatpush.bf16.msra.mxu0 0
      %2183 = vmatpush.bf16.msra.mxu0 0
      %2184 = vmatpush.bf16.msra.mxu0 0
      %2185 = vmatpush.bf16.msra.mxu0 0
      %2186 = vmatpush.bf16.msra.mxu0 0
      %2187 = vmatpush.bf16.msra.mxu0 0
      %2188 = vmatpush.bf16.msra.mxu0 %v2179
      %2189 = vmatmul.bf16.gmra.mxu0 %v2125
      %v2190 = vpop.f32.mrf.mxu0
      %v2191 = vadd.f32 0.0, %v2190
      %v2192 = vpop.f32.mrf.mxu0
      %v2193 = vadd.f32 0.0, %v2192
      %2194 = vmatmul.bf16.gmra.mxu0 %v2128
      %v2195 = vpop.f32.mrf.mxu0
      %v2196 = vadd.f32 0.0, %v2195
      %v2197 = vpop.f32.mrf.mxu0
      %v2198 = vadd.f32 0.0, %v2197
      %2199 = vmatmul.bf16.gmra.mxu0 %v2131
      %v2200 = vpop.f32.mrf.mxu0
      %v2201 = vadd.f32 0.0, %v2200
      %v2202 = vpop.f32.mrf.mxu0
      %v2203 = vadd.f32 0.0, %v2202
      %2204 = vmatmul.bf16.gmra.mxu0 %v2134
      %v2205 = vpop.f32.mrf.mxu0
      %v2206 = vadd.f32 0.0, %v2205
      %v2207 = vpop.f32.mrf.mxu0
      %v2208 = vadd.f32 0.0, %v2207
      %2209 = vmatmul.bf16.gmra.mxu0 %v2137
      %v2210 = vpop.f32.mrf.mxu0
      %v2211 = vadd.f32 0.0, %v2210
      %v2212 = vpop.f32.mrf.mxu0
      %v2213 = vadd.f32 0.0, %v2212
      %2214 = vmatmul.bf16.gmra.mxu0 %v2140
      %v2215 = vpop.f32.mrf.mxu0
      %v2216 = vadd.f32 0.0, %v2215
      %v2217 = vpop.f32.mrf.mxu0
      %v2218 = vadd.f32 0.0, %v2217
      %2219 = vmatmul.bf16.gmra.mxu0 %v2143
      %v2220 = vpop.f32.mrf.mxu0
      %v2221 = vadd.f32 0.0, %v2220
      %v2222 = vpop.f32.mrf.mxu0
      %v2223 = vadd.f32 0.0, %v2222
      %2224 = vmatmul.bf16.gmra.mxu0 %v2146
      %v2225 = vpop.f32.mrf.mxu0
      %v2226 = vadd.f32 0.0, %v2225
      %v2227 = vpop.f32.mrf.mxu0
      %v2228 = vadd.f32 0.0, %v2227
      %2229 = vmatmul.bf16.gmra.mxu0 %v2149
      %v2230 = vpop.f32.mrf.mxu0
      %v2231 = vadd.f32 0.0, %v2230
      %v2232 = vpop.f32.mrf.mxu0
      %v2233 = vadd.f32 0.0, %v2232
      %2234 = vmatmul.bf16.gmra.mxu0 %v2152
      %v2235 = vpop.f32.mrf.mxu0
      %v2236 = vadd.f32 0.0, %v2235
      %v2237 = vpop.f32.mrf.mxu0
      %v2238 = vadd.f32 0.0, %v2237
      %2239 = vmatmul.bf16.gmra.mxu0 %v2155
      %v2240 = vpop.f32.mrf.mxu0
      %v2241 = vadd.f32 0.0, %v2240
      %v2242 = vpop.f32.mrf.mxu0
      %v2243 = vadd.f32 0.0, %v2242
      %2244 = vmatmul.bf16.gmra.mxu0 %v2158
      %v2245 = vpop.f32.mrf.mxu0
      %v2246 = vadd.f32 0.0, %v2245
      %v2247 = vpop.f32.mrf.mxu0
      %v2248 = vadd.f32 0.0, %v2247
      %2249 = vmatmul.bf16.gmra.mxu0 %v2161
      %v2250 = vpop.f32.mrf.mxu0
      %v2251 = vadd.f32 0.0, %v2250
      %v2252 = vpop.f32.mrf.mxu0
      %v2253 = vadd.f32 0.0, %v2252
      %2254 = vmatmul.bf16.gmra.mxu0 %v2164
      %v2255 = vpop.f32.mrf.mxu0
      %v2256 = vadd.f32 0.0, %v2255
      %v2257 = vpop.f32.mrf.mxu0
      %v2258 = vadd.f32 0.0, %v2257
      %2259 = vmatmul.bf16.gmra.mxu0 %v2167
      %v2260 = vpop.f32.mrf.mxu0
      %v2261 = vadd.f32 0.0, %v2260
      %v2262 = vpop.f32.mrf.mxu0
      %v2263 = vadd.f32 0.0, %v2262
      %2264 = vmatmul.bf16.gmra.mxu0 %v2170
      %v2265 = vpop.f32.mrf.mxu0
      %v2266 = vadd.f32 0.0, %v2265
      %v2267 = vpop.f32.mrf.mxu0
      %v2268 = vadd.f32 0.0, %v2267
      %2269 = vmatmul.bf16.gmra.mxu0 %v2173
      %v2270 = vpop.f32.mrf.mxu0
      %v2271 = vadd.f32 0.0, %v2270
      %v2272 = vpop.f32.mrf.mxu0
      %v2273 = vadd.f32 0.0, %v2272
      %2274 = vmatmul.bf16.gmra.mxu0 %v2176
      %v2275 = vpop.f32.mrf.mxu0
      %v2276 = vadd.f32 0.0, %v2275
      %v2277 = vpop.f32.mrf.mxu0
      %v2278 = vadd.f32 0.0, %v2277
      %2279 = vdwg.mxu0
      %v2280 = vadd.f32 %v1919, %v2191
      %v2281 = vadd.f32 %v1920, %v2193
      %v2282 = vadd.f32 %v1921, %v2196
      %v2283 = vadd.f32 %v1922, %v2198
      %v2284 = vadd.f32 %v1923, %v2201
      %v2285 = vadd.f32 %v1924, %v2203
      %v2286 = vadd.f32 %v1925, %v2206
      %v2287 = vadd.f32 %v1926, %v2208
      %v2288 = vadd.f32 %v1927, %v2211
      %v2289 = vadd.f32 %v1928, %v2213
      %v2290 = vadd.f32 %v1929, %v2216
      %v2291 = vadd.f32 %v1930, %v2218
      %v2292 = vadd.f32 %v1931, %v2221
      %v2293 = vadd.f32 %v1932, %v2223
      %v2294 = vadd.f32 %v1933, %v2226
      %v2295 = vadd.f32 %v1934, %v2228
      %v2296 = vadd.f32 %v1935, %v2231
      %v2297 = vadd.f32 %v1936, %v2233
      %v2298 = vadd.f32 %v1937, %v2236
      %v2299 = vadd.f32 %v1938, %v2238
      %v2300 = vadd.f32 %v1939, %v2241
      %v2301 = vadd.f32 %v1940, %v2243
      %v2302 = vadd.f32 %v1941, %v2246
      %v2303 = vadd.f32 %v1942, %v2248
      %v2304 = vadd.f32 %v1943, %v2251
      %v2305 = vadd.f32 %v1944, %v2253
      %v2306 = vadd.f32 %v1945, %v2256
      %v2307 = vadd.f32 %v1946, %v2258
      %v2308 = vadd.f32 %v1947, %v2261
      %v2309 = vadd.f32 %v1948, %v2263
      %v2310 = vadd.f32 %v1949, %v2266
      %v2311 = vadd.f32 %v1950, %v2268
      %v2312 = vadd.f32 %v1951, %v2271
      %v2313 = vadd.f32 %v1952, %v2273
      %v2314 = vadd.f32 %v1953, %v2276
      %v2315 = vadd.f32 %v1954, %v2278
      %v2316 = vld [vmem:[%s165 + $0xa0] sm:$0x7]
      %s2317 = scalar_lea.vmem %s1, 14
      %v2318 = vld [vmem:[%s2317] sm:$0x3]
      %v2320 = vunpack.c.l.b16 %v2316
      %v2321 = vpack.c.b16 %v2320, %v2320
      %vm2322 = vsmask.f32 5376
      %v2324 = vshrl.u32 %v2068, 16
      %v2326 = vrot.slane %v2324, 2
      %v2327 = vshll.u32 %v2068, 16
      %v2329 = vrot.slane %v2327, 3
      %v2330 = vor.u32 %v2326, %v2329
      %v2332 = vshrl.u32 %v2069, 16
      %v2334 = vrot.slane %v2332, 2
      %v2335 = vshll.u32 %v2069, 16
      %v2337 = vrot.slane %v2335, 3
      %v2338 = vor.u32 %v2334, %v2337
      %v2339 = vsel %vm2322, %v2330, %v2338
      %v2341 = vshrl.u32 %v2070, 16
      %v2343 = vrot.slane %v2341, 2
      %v2344 = vshll.u32 %v2070, 16
      %v2346 = vrot.slane %v2344, 3
      %v2347 = vor.u32 %v2343, %v2346
      %v2348 = vsel %vm2322, %v2338, %v2347
      %v2350 = vshrl.u32 %v2071, 16
      %v2352 = vrot.slane %v2350, 2
      %v2353 = vshll.u32 %v2071, 16
      %v2355 = vrot.slane %v2353, 3
      %v2356 = vor.u32 %v2352, %v2355
      %v2357 = vsel %vm2322, %v2347, %v2356
      %v2359 = vshrl.u32 %v2072, 16
      %v2361 = vrot.slane %v2359, 2
      %v2362 = vshll.u32 %v2072, 16
      %v2364 = vrot.slane %v2362, 3
      %v2365 = vor.u32 %v2361, %v2364
      %v2366 = vsel %vm2322, %v2356, %v2365
      %v2368 = vshrl.u32 %v2073, 16
      %v2370 = vrot.slane %v2368, 2
      %v2371 = vshll.u32 %v2073, 16
      %v2373 = vrot.slane %v2371, 3
      %v2374 = vor.u32 %v2370, %v2373
      %v2375 = vsel %vm2322, %v2365, %v2374
      %v2377 = vshrl.u32 %v2074, 16
      %v2379 = vrot.slane %v2377, 2
      %v2380 = vshll.u32 %v2074, 16
      %v2382 = vrot.slane %v2380, 3
      %v2383 = vor.u32 %v2379, %v2382
      %v2384 = vsel %vm2322, %v2374, %v2383
      %v2386 = vshrl.u32 %v2075, 16
      %v2388 = vrot.slane %v2386, 2
      %v2389 = vshll.u32 %v2075, 16
      %v2391 = vrot.slane %v2389, 3
      %v2392 = vor.u32 %v2388, %v2391
      %v2393 = vsel %vm2322, %v2383, %v2392
      %v2395 = vshrl.u32 %v2076, 16
      %v2397 = vrot.slane %v2395, 2
      %v2398 = vshll.u32 %v2076, 16
      %v2400 = vrot.slane %v2398, 3
      %v2401 = vor.u32 %v2397, %v2400
      %v2402 = vsel %vm2322, %v2392, %v2401
      %v2404 = vshrl.u32 %v2077, 16
      %v2406 = vrot.slane %v2404, 2
      %v2407 = vshll.u32 %v2077, 16
      %v2409 = vrot.slane %v2407, 3
      %v2410 = vor.u32 %v2406, %v2409
      %v2411 = vsel %vm2322, %v2401, %v2410
      %v2413 = vshrl.u32 %v2078, 16
      %v2415 = vrot.slane %v2413, 2
      %v2416 = vshll.u32 %v2078, 16
      %v2418 = vrot.slane %v2416, 3
      %v2419 = vor.u32 %v2415, %v2418
      %v2420 = vsel %vm2322, %v2410, %v2419
      %v2422 = vshrl.u32 %v2079, 16
      %v2424 = vrot.slane %v2422, 2
      %v2425 = vshll.u32 %v2079, 16
      %v2427 = vrot.slane %v2425, 3
      %v2428 = vor.u32 %v2424, %v2427
      %v2429 = vsel %vm2322, %v2419, %v2428
      %v2431 = vshrl.u32 %v2080, 16
      %v2433 = vrot.slane %v2431, 2
      %v2434 = vshll.u32 %v2080, 16
      %v2436 = vrot.slane %v2434, 3
      %v2437 = vor.u32 %v2433, %v2436
      %v2438 = vsel %vm2322, %v2428, %v2437
      %v2440 = vshrl.u32 %v2081, 16
      %v2442 = vrot.slane %v2440, 2
      %v2443 = vshll.u32 %v2081, 16
      %v2445 = vrot.slane %v2443, 3
      %v2446 = vor.u32 %v2442, %v2445
      %v2447 = vsel %vm2322, %v2437, %v2446
      %v2449 = vshrl.u32 %v2082, 16
      %v2451 = vrot.slane %v2449, 2
      %v2452 = vshll.u32 %v2082, 16
      %v2454 = vrot.slane %v2452, 3
      %v2455 = vor.u32 %v2451, %v2454
      %v2456 = vsel %vm2322, %v2446, %v2455
      %v2458 = vshrl.u32 %v2083, 16
      %v2460 = vrot.slane %v2458, 2
      %v2461 = vshll.u32 %v2083, 16
      %v2463 = vrot.slane %v2461, 3
      %v2464 = vor.u32 %v2460, %v2463
      %v2465 = vsel %vm2322, %v2455, %v2464
      %v2467 = vshrl.u32 %v2084, 16
      %v2469 = vrot.slane %v2467, 2
      %v2470 = vshll.u32 %v2084, 16
      %v2472 = vrot.slane %v2470, 3
      %v2473 = vor.u32 %v2469, %v2472
      %v2474 = vsel %vm2322, %v2464, %v2473
      %v2476 = vshrl.u32 %v2085, 16
      %v2478 = vrot.slane %v2476, 2
      %v2479 = vshll.u32 %v2085, 16
      %v2481 = vrot.slane %v2479, 3
      %v2482 = vor.u32 %v2478, %v2481
      %v2483 = vsel %vm2322, %v2473, %v2482
      %v2485 = vshrl.u32 %v2321, 16
      %v2487 = vrot.slane %v2485, 2
      %v2488 = vshll.u32 %v2321, 16
      %v2490 = vrot.slane %v2488, 3
      %v2491 = vor.u32 %v2487, %v2490
      %v2492 = vsel %vm2322, %v2482, %v2491
      %v2494 = vsel %vm454, %v2339, 0
      %v2497 = vsel %vm454, %v2348, 0
      %v2500 = vsel %vm454, %v2357, 0
      %v2503 = vsel %vm454, %v2366, 0
      %v2506 = vsel %vm454, %v2375, 0
      %v2509 = vsel %vm454, %v2384, 0
      %v2512 = vsel %vm454, %v2393, 0
      %v2515 = vsel %vm454, %v2402, 0
      %v2518 = vsel %vm454, %v2411, 0
      %v2521 = vsel %vm454, %v2420, 0
      %v2524 = vsel %vm454, %v2429, 0
      %v2527 = vsel %vm454, %v2438, 0
      %v2530 = vsel %vm454, %v2447, 0
      %v2533 = vsel %vm454, %v2456, 0
      %v2536 = vsel %vm454, %v2465, 0
      %v2539 = vsel %vm454, %v2474, 0
      %v2542 = vsel %vm454, %v2483, 0
      %v2545 = vsel %vm454, %v2492, 0
      %v2548 = vand.u32 %v2318, %v512
      %2550 = vmatpush.bf16.msra.mxu0 0
      %2551 = vmatpush.bf16.msra.mxu0 0
      %2552 = vmatpush.bf16.msra.mxu0 0
      %2553 = vmatpush.bf16.msra.mxu0 0
      %2554 = vmatpush.bf16.msra.mxu0 0
      %2555 = vmatpush.bf16.msra.mxu0 0
      %2556 = vmatpush.bf16.msra.mxu0 0
      %2557 = vmatpush.bf16.msra.mxu0 %v2548
      %2558 = vmatmul.bf16.gmra.mxu0 %v2494
      %v2559 = vpop.f32.mrf.mxu0
      %v2560 = vadd.f32 0.0, %v2559
      %v2561 = vpop.f32.mrf.mxu0
      %v2562 = vadd.f32 0.0, %v2561
      %2563 = vmatmul.bf16.gmra.mxu0 %v2497
      %v2564 = vpop.f32.mrf.mxu0
      %v2565 = vadd.f32 0.0, %v2564
      %v2566 = vpop.f32.mrf.mxu0
      %v2567 = vadd.f32 0.0, %v2566
      %2568 = vmatmul.bf16.gmra.mxu0 %v2500
      %v2569 = vpop.f32.mrf.mxu0
      %v2570 = vadd.f32 0.0, %v2569
      %v2571 = vpop.f32.mrf.mxu0
      %v2572 = vadd.f32 0.0, %v2571
      %2573 = vmatmul.bf16.gmra.mxu0 %v2503
      %v2574 = vpop.f32.mrf.mxu0
      %v2575 = vadd.f32 0.0, %v2574
      %v2576 = vpop.f32.mrf.mxu0
      %v2577 = vadd.f32 0.0, %v2576
      %2578 = vmatmul.bf16.gmra.mxu0 %v2506
      %v2579 = vpop.f32.mrf.mxu0
      %v2580 = vadd.f32 0.0, %v2579
      %v2581 = vpop.f32.mrf.mxu0
      %v2582 = vadd.f32 0.0, %v2581
      %2583 = vmatmul.bf16.gmra.mxu0 %v2509
      %v2584 = vpop.f32.mrf.mxu0
      %v2585 = vadd.f32 0.0, %v2584
      %v2586 = vpop.f32.mrf.mxu0
      %v2587 = vadd.f32 0.0, %v2586
      %2588 = vmatmul.bf16.gmra.mxu0 %v2512
      %v2589 = vpop.f32.mrf.mxu0
      %v2590 = vadd.f32 0.0, %v2589
      %v2591 = vpop.f32.mrf.mxu0
      %v2592 = vadd.f32 0.0, %v2591
      %2593 = vmatmul.bf16.gmra.mxu0 %v2515
      %v2594 = vpop.f32.mrf.mxu0
      %v2595 = vadd.f32 0.0, %v2594
      %v2596 = vpop.f32.mrf.mxu0
      %v2597 = vadd.f32 0.0, %v2596
      %2598 = vmatmul.bf16.gmra.mxu0 %v2518
      %v2599 = vpop.f32.mrf.mxu0
      %v2600 = vadd.f32 0.0, %v2599
      %v2601 = vpop.f32.mrf.mxu0
      %v2602 = vadd.f32 0.0, %v2601
      %2603 = vmatmul.bf16.gmra.mxu0 %v2521
      %v2604 = vpop.f32.mrf.mxu0
      %v2605 = vadd.f32 0.0, %v2604
      %v2606 = vpop.f32.mrf.mxu0
      %v2607 = vadd.f32 0.0, %v2606
      %2608 = vmatmul.bf16.gmra.mxu0 %v2524
      %v2609 = vpop.f32.mrf.mxu0
      %v2610 = vadd.f32 0.0, %v2609
      %v2611 = vpop.f32.mrf.mxu0
      %v2612 = vadd.f32 0.0, %v2611
      %2613 = vmatmul.bf16.gmra.mxu0 %v2527
      %v2614 = vpop.f32.mrf.mxu0
      %v2615 = vadd.f32 0.0, %v2614
      %v2616 = vpop.f32.mrf.mxu0
      %v2617 = vadd.f32 0.0, %v2616
      %2618 = vmatmul.bf16.gmra.mxu0 %v2530
      %v2619 = vpop.f32.mrf.mxu0
      %v2620 = vadd.f32 0.0, %v2619
      %v2621 = vpop.f32.mrf.mxu0
      %v2622 = vadd.f32 0.0, %v2621
      %2623 = vmatmul.bf16.gmra.mxu0 %v2533
      %v2624 = vpop.f32.mrf.mxu0
      %v2625 = vadd.f32 0.0, %v2624
      %v2626 = vpop.f32.mrf.mxu0
      %v2627 = vadd.f32 0.0, %v2626
      %2628 = vmatmul.bf16.gmra.mxu0 %v2536
      %v2629 = vpop.f32.mrf.mxu0
      %v2630 = vadd.f32 0.0, %v2629
      %v2631 = vpop.f32.mrf.mxu0
      %v2632 = vadd.f32 0.0, %v2631
      %2633 = vmatmul.bf16.gmra.mxu0 %v2539
      %v2634 = vpop.f32.mrf.mxu0
      %v2635 = vadd.f32 0.0, %v2634
      %v2636 = vpop.f32.mrf.mxu0
      %v2637 = vadd.f32 0.0, %v2636
      %2638 = vmatmul.bf16.gmra.mxu0 %v2542
      %v2639 = vpop.f32.mrf.mxu0
      %v2640 = vadd.f32 0.0, %v2639
      %v2641 = vpop.f32.mrf.mxu0
      %v2642 = vadd.f32 0.0, %v2641
      %2643 = vmatmul.bf16.gmra.mxu0 %v2545
      %v2644 = vpop.f32.mrf.mxu0
      %v2645 = vadd.f32 0.0, %v2644
      %v2646 = vpop.f32.mrf.mxu0
      %v2647 = vadd.f32 0.0, %v2646
      %2648 = vdwg.mxu0
      %v2649 = vadd.f32 %v2280, %v2560
      %v2650 = vadd.f32 %v2281, %v2562
      %v2651 = vadd.f32 %v2282, %v2565
      %v2652 = vadd.f32 %v2283, %v2567
      %v2653 = vadd.f32 %v2284, %v2570
      %v2654 = vadd.f32 %v2285, %v2572
      %v2655 = vadd.f32 %v2286, %v2575
      %v2656 = vadd.f32 %v2287, %v2577
      %v2657 = vadd.f32 %v2288, %v2580
      %v2658 = vadd.f32 %v2289, %v2582
      %v2659 = vadd.f32 %v2290, %v2585
      %v2660 = vadd.f32 %v2291, %v2587
      %v2661 = vadd.f32 %v2292, %v2590
      %v2662 = vadd.f32 %v2293, %v2592
      %v2663 = vadd.f32 %v2294, %v2595
      %v2664 = vadd.f32 %v2295, %v2597
      %v2665 = vadd.f32 %v2296, %v2600
      %v2666 = vadd.f32 %v2297, %v2602
      %v2667 = vadd.f32 %v2298, %v2605
      %v2668 = vadd.f32 %v2299, %v2607
      %v2669 = vadd.f32 %v2300, %v2610
      %v2670 = vadd.f32 %v2301, %v2612
      %v2671 = vadd.f32 %v2302, %v2615
      %v2672 = vadd.f32 %v2303, %v2617
      %v2673 = vadd.f32 %v2304, %v2620
      %v2674 = vadd.f32 %v2305, %v2622
      %v2675 = vadd.f32 %v2306, %v2625
      %v2676 = vadd.f32 %v2307, %v2627
      %v2677 = vadd.f32 %v2308, %v2630
      %v2678 = vadd.f32 %v2309, %v2632
      %v2679 = vadd.f32 %v2310, %v2635
      %v2680 = vadd.f32 %v2311, %v2637
      %v2681 = vadd.f32 %v2312, %v2640
      %v2682 = vadd.f32 %v2313, %v2642
      %v2683 = vadd.f32 %v2314, %v2645
      %v2684 = vadd.f32 %v2315, %v2647
      %v2685 = vld [vmem:[%s165 + $0x10] sm:$0x8]
      %s2686 = scalar_lea.vmem %s1, 16
      %v2687 = vld [vmem:[%s2686] sm:$0x3]
      %v2689 = vunpack.c.l.b16 %v2685
      %v2690 = vpack.c.b16 %v2032, %v2689
      %vm2691 = vcmask 1044480
      %v2692 = vrot.slane %v2690, 3
      %v2693 = vrot.slane %v2069, 3
      %v2694 = vsel %vm2691, %v2692, %v2693
      %v2695 = vrot.slane %v2070, 3
      %v2696 = vsel %vm2691, %v2693, %v2695
      %v2697 = vrot.slane %v2071, 3
      %v2698 = vsel %vm2691, %v2695, %v2697
      %v2699 = vrot.slane %v2072, 3
      %v2700 = vsel %vm2691, %v2697, %v2699
      %v2701 = vrot.slane %v2073, 3
      %v2702 = vsel %vm2691, %v2699, %v2701
      %v2703 = vrot.slane %v2074, 3
      %v2704 = vsel %vm2691, %v2701, %v2703
      %v2705 = vrot.slane %v2075, 3
      %v2706 = vsel %vm2691, %v2703, %v2705
      %v2707 = vrot.slane %v2076, 3
      %v2708 = vsel %vm2691, %v2705, %v2707
      %v2709 = vrot.slane %v2077, 3
      %v2710 = vsel %vm2691, %v2707, %v2709
      %v2711 = vrot.slane %v2078, 3
      %v2712 = vsel %vm2691, %v2709, %v2711
      %v2713 = vrot.slane %v2079, 3
      %v2714 = vsel %vm2691, %v2711, %v2713
      %v2715 = vrot.slane %v2080, 3
      %v2716 = vsel %vm2691, %v2713, %v2715
      %v2717 = vrot.slane %v2081, 3
      %v2718 = vsel %vm2691, %v2715, %v2717
      %v2719 = vrot.slane %v2082, 3
      %v2720 = vsel %vm2691, %v2717, %v2719
      %v2721 = vrot.slane %v2083, 3
      %v2722 = vsel %vm2691, %v2719, %v2721
      %v2723 = vrot.slane %v2084, 3
      %v2724 = vsel %vm2691, %v2721, %v2723
      %v2725 = vrot.slane %v2085, 3
      %v2726 = vsel %vm2691, %v2723, %v2725
      %v2727 = vrot.slane %v2321, 3
      %v2728 = vsel %vm2691, %v2725, %v2727
      %v2730 = vsel %vm454, %v2694, 0
      %v2733 = vsel %vm454, %v2696, 0
      %v2736 = vsel %vm454, %v2698, 0
      %v2739 = vsel %vm454, %v2700, 0
      %v2742 = vsel %vm454, %v2702, 0
      %v2745 = vsel %vm454, %v2704, 0
      %v2748 = vsel %vm454, %v2706, 0
      %v2751 = vsel %vm454, %v2708, 0
      %v2754 = vsel %vm454, %v2710, 0
      %v2757 = vsel %vm454, %v2712, 0
      %v2760 = vsel %vm454, %v2714, 0
      %v2763 = vsel %vm454, %v2716, 0
      %v2766 = vsel %vm454, %v2718, 0
      %v2769 = vsel %vm454, %v2720, 0
      %v2772 = vsel %vm454, %v2722, 0
      %v2775 = vsel %vm454, %v2724, 0
      %v2778 = vsel %vm454, %v2726, 0
      %v2781 = vsel %vm454, %v2728, 0
      %v2784 = vand.u32 %v2687, %v512
      %2786 = vmatpush.bf16.msra.mxu0 0
      %2787 = vmatpush.bf16.msra.mxu0 0
      %2788 = vmatpush.bf16.msra.mxu0 0
      %2789 = vmatpush.bf16.msra.mxu0 0
      %2790 = vmatpush.bf16.msra.mxu0 0
      %2791 = vmatpush.bf16.msra.mxu0 0
      %2792 = vmatpush.bf16.msra.mxu0 0
      %2793 = vmatpush.bf16.msra.mxu0 %v2784
      %2794 = vmatmul.bf16.gmra.mxu0 %v2730
      %v2795 = vpop.f32.mrf.mxu0
      %v2796 = vadd.f32 0.0, %v2795
      %v2797 = vpop.f32.mrf.mxu0
      %v2798 = vadd.f32 0.0, %v2797
      %2799 = vmatmul.bf16.gmra.mxu0 %v2733
      %v2800 = vpop.f32.mrf.mxu0
      %v2801 = vadd.f32 0.0, %v2800
      %v2802 = vpop.f32.mrf.mxu0
      %v2803 = vadd.f32 0.0, %v2802
      %2804 = vmatmul.bf16.gmra.mxu0 %v2736
      %v2805 = vpop.f32.mrf.mxu0
      %v2806 = vadd.f32 0.0, %v2805
      %v2807 = vpop.f32.mrf.mxu0
      %v2808 = vadd.f32 0.0, %v2807
      %2809 = vmatmul.bf16.gmra.mxu0 %v2739
      %v2810 = vpop.f32.mrf.mxu0
      %v2811 = vadd.f32 0.0, %v2810
      %v2812 = vpop.f32.mrf.mxu0
      %v2813 = vadd.f32 0.0, %v2812
      %2814 = vmatmul.bf16.gmra.mxu0 %v2742
      %v2815 = vpop.f32.mrf.mxu0
      %v2816 = vadd.f32 0.0, %v2815
      %v2817 = vpop.f32.mrf.mxu0
      %v2818 = vadd.f32 0.0, %v2817
      %2819 = vmatmul.bf16.gmra.mxu0 %v2745
      %v2820 = vpop.f32.mrf.mxu0
      %v2821 = vadd.f32 0.0, %v2820
      %v2822 = vpop.f32.mrf.mxu0
      %v2823 = vadd.f32 0.0, %v2822
      %2824 = vmatmul.bf16.gmra.mxu0 %v2748
      %v2825 = vpop.f32.mrf.mxu0
      %v2826 = vadd.f32 0.0, %v2825
      %v2827 = vpop.f32.mrf.mxu0
      %v2828 = vadd.f32 0.0, %v2827
      %2829 = vmatmul.bf16.gmra.mxu0 %v2751
      %v2830 = vpop.f32.mrf.mxu0
      %v2831 = vadd.f32 0.0, %v2830
      %v2832 = vpop.f32.mrf.mxu0
      %v2833 = vadd.f32 0.0, %v2832
      %2834 = vmatmul.bf16.gmra.mxu0 %v2754
      %v2835 = vpop.f32.mrf.mxu0
      %v2836 = vadd.f32 0.0, %v2835
      %v2837 = vpop.f32.mrf.mxu0
      %v2838 = vadd.f32 0.0, %v2837
      %2839 = vmatmul.bf16.gmra.mxu0 %v2757
      %v2840 = vpop.f32.mrf.mxu0
      %v2841 = vadd.f32 0.0, %v2840
      %v2842 = vpop.f32.mrf.mxu0
      %v2843 = vadd.f32 0.0, %v2842
      %2844 = vmatmul.bf16.gmra.mxu0 %v2760
      %v2845 = vpop.f32.mrf.mxu0
      %v2846 = vadd.f32 0.0, %v2845
      %v2847 = vpop.f32.mrf.mxu0
      %v2848 = vadd.f32 0.0, %v2847
      %2849 = vmatmul.bf16.gmra.mxu0 %v2763
      %v2850 = vpop.f32.mrf.mxu0
      %v2851 = vadd.f32 0.0, %v2850
      %v2852 = vpop.f32.mrf.mxu0
      %v2853 = vadd.f32 0.0, %v2852
      %2854 = vmatmul.bf16.gmra.mxu0 %v2766
      %v2855 = vpop.f32.mrf.mxu0
      %v2856 = vadd.f32 0.0, %v2855
      %v2857 = vpop.f32.mrf.mxu0
      %v2858 = vadd.f32 0.0, %v2857
      %2859 = vmatmul.bf16.gmra.mxu0 %v2769
      %v2860 = vpop.f32.mrf.mxu0
      %v2861 = vadd.f32 0.0, %v2860
      %v2862 = vpop.f32.mrf.mxu0
      %v2863 = vadd.f32 0.0, %v2862
      %2864 = vmatmul.bf16.gmra.mxu0 %v2772
      %v2865 = vpop.f32.mrf.mxu0
      %v2866 = vadd.f32 0.0, %v2865
      %v2867 = vpop.f32.mrf.mxu0
      %v2868 = vadd.f32 0.0, %v2867
      %2869 = vmatmul.bf16.gmra.mxu0 %v2775
      %v2870 = vpop.f32.mrf.mxu0
      %v2871 = vadd.f32 0.0, %v2870
      %v2872 = vpop.f32.mrf.mxu0
      %v2873 = vadd.f32 0.0, %v2872
      %2874 = vmatmul.bf16.gmra.mxu0 %v2778
      %v2875 = vpop.f32.mrf.mxu0
      %v2876 = vadd.f32 0.0, %v2875
      %v2877 = vpop.f32.mrf.mxu0
      %v2878 = vadd.f32 0.0, %v2877
      %2879 = vmatmul.bf16.gmra.mxu0 %v2781
      %v2880 = vpop.f32.mrf.mxu0
      %v2881 = vadd.f32 0.0, %v2880
      %v2882 = vpop.f32.mrf.mxu0
      %v2883 = vadd.f32 0.0, %v2882
      %2884 = vdwg.mxu0
      %v2885 = vadd.f32 %v2649, %v2796
      %v2886 = vadd.f32 %v2650, %v2798
      %v2887 = vadd.f32 %v2651, %v2801
      %v2888 = vadd.f32 %v2652, %v2803
      %v2889 = vadd.f32 %v2653, %v2806
      %v2890 = vadd.f32 %v2654, %v2808
      %v2891 = vadd.f32 %v2655, %v2811
      %v2892 = vadd.f32 %v2656, %v2813
      %v2893 = vadd.f32 %v2657, %v2816
      %v2894 = vadd.f32 %v2658, %v2818
      %v2895 = vadd.f32 %v2659, %v2821
      %v2896 = vadd.f32 %v2660, %v2823
      %v2897 = vadd.f32 %v2661, %v2826
      %v2898 = vadd.f32 %v2662, %v2828
      %v2899 = vadd.f32 %v2663, %v2831
      %v2900 = vadd.f32 %v2664, %v2833
      %v2901 = vadd.f32 %v2665, %v2836
      %v2902 = vadd.f32 %v2666, %v2838
      %v2903 = vadd.f32 %v2667, %v2841
      %v2904 = vadd.f32 %v2668, %v2843
      %v2905 = vadd.f32 %v2669, %v2846
      %v2906 = vadd.f32 %v2670, %v2848
      %v2907 = vadd.f32 %v2671, %v2851
      %v2908 = vadd.f32 %v2672, %v2853
      %v2909 = vadd.f32 %v2673, %v2856
      %v2910 = vadd.f32 %v2674, %v2858
      %v2911 = vadd.f32 %v2675, %v2861
      %v2912 = vadd.f32 %v2676, %v2863
      %v2913 = vadd.f32 %v2677, %v2866
      %v2914 = vadd.f32 %v2678, %v2868
      %v2915 = vadd.f32 %v2679, %v2871
      %v2916 = vadd.f32 %v2680, %v2873
      %v2917 = vadd.f32 %v2681, %v2876
      %v2918 = vadd.f32 %v2682, %v2878
      %v2919 = vadd.f32 %v2683, %v2881
      %v2920 = vadd.f32 %v2684, %v2883
      %v2921 = vld [vmem:[%s2] sm:$0x1]
      %v2923 = vperm.slane %v2921, 0
      %v2925 = vadd.f32 %v2885, %v2923
      %v2926 = vadd.f32 %v2886, %v2923
      %v2927 = vadd.f32 %v2887, %v2923
      %v2928 = vadd.f32 %v2888, %v2923
      %v2929 = vadd.f32 %v2889, %v2923
      %v2930 = vadd.f32 %v2890, %v2923
      %v2931 = vadd.f32 %v2891, %v2923
      %v2932 = vadd.f32 %v2892, %v2923
      %v2933 = vadd.f32 %v2893, %v2923
      %v2934 = vadd.f32 %v2894, %v2923
      %v2935 = vadd.f32 %v2895, %v2923
      %v2936 = vadd.f32 %v2896, %v2923
      %v2937 = vadd.f32 %v2897, %v2923
      %v2938 = vadd.f32 %v2898, %v2923
      %v2939 = vadd.f32 %v2899, %v2923
      %v2940 = vadd.f32 %v2900, %v2923
      %v2941 = vadd.f32 %v2901, %v2923
      %v2942 = vadd.f32 %v2902, %v2923
      %v2943 = vadd.f32 %v2903, %v2923
      %v2944 = vadd.f32 %v2904, %v2923
      %v2945 = vadd.f32 %v2905, %v2923
      %v2946 = vadd.f32 %v2906, %v2923
      %v2947 = vadd.f32 %v2907, %v2923
      %v2948 = vadd.f32 %v2908, %v2923
      %v2949 = vadd.f32 %v2909, %v2923
      %v2950 = vadd.f32 %v2910, %v2923
      %v2951 = vadd.f32 %v2911, %v2923
      %v2952 = vadd.f32 %v2912, %v2923
      %v2953 = vadd.f32 %v2913, %v2923
      %v2954 = vadd.f32 %v2914, %v2923
      %v2955 = vadd.f32 %v2915, %v2923
      %v2956 = vadd.f32 %v2916, %v2923
      %v2957 = vadd.f32 %v2917, %v2923
      %v2958 = vadd.f32 %v2918, %v2923
      %v2959 = vadd.f32 %v2919, %v2923
      %v2960 = vadd.f32 %v2920, %v2923
      %v2961 = vmax.f32 %v2925, 0.0
      %v2962 = vmax.f32 %v2926, 0.0
      %v2963 = vmax.f32 %v2927, 0.0
      %v2964 = vmax.f32 %v2928, 0.0
      %v2965 = vmax.f32 %v2929, 0.0
      %v2966 = vmax.f32 %v2930, 0.0
      %v2967 = vmax.f32 %v2931, 0.0
      %v2968 = vmax.f32 %v2932, 0.0
      %v2969 = vmax.f32 %v2933, 0.0
      %v2970 = vmax.f32 %v2934, 0.0
      %v2971 = vmax.f32 %v2935, 0.0
      %v2972 = vmax.f32 %v2936, 0.0
      %v2973 = vmax.f32 %v2937, 0.0
      %v2974 = vmax.f32 %v2938, 0.0
      %v2975 = vmax.f32 %v2939, 0.0
      %v2976 = vmax.f32 %v2940, 0.0
      %v2977 = vmax.f32 %v2941, 0.0
      %v2978 = vmax.f32 %v2942, 0.0
      %v2979 = vmax.f32 %v2943, 0.0
      %v2980 = vmax.f32 %v2944, 0.0
      %v2981 = vmax.f32 %v2945, 0.0
      %v2982 = vmax.f32 %v2946, 0.0
      %v2983 = vmax.f32 %v2947, 0.0
      %v2984 = vmax.f32 %v2948, 0.0
      %v2985 = vmax.f32 %v2949, 0.0
      %v2986 = vmax.f32 %v2950, 0.0
      %v2987 = vmax.f32 %v2951, 0.0
      %v2988 = vmax.f32 %v2952, 0.0
      %v2989 = vmax.f32 %v2953, 0.0
      %v2990 = vmax.f32 %v2954, 0.0
      %v2991 = vmax.f32 %v2955, 0.0
      %v2992 = vmax.f32 %v2956, 0.0
      %v2993 = vmax.f32 %v2957, 0.0
      %v2994 = vmax.f32 %v2958, 0.0
      %v2995 = vmax.f32 %v2959, 0.0
      %v2996 = vmax.f32 %v2960, 0.0
      %v2997 = vpack.c.bf16 %v2961, %v2961
      %v2998 = vpack.c.bf16 %v2962, %v2962
      %v2999 = vpack.c.bf16 %v2963, %v2963
      %v3000 = vpack.c.bf16 %v2964, %v2964
      %v3001 = vpack.c.bf16 %v2965, %v2965
      %v3002 = vpack.c.bf16 %v2966, %v2966
      %v3003 = vpack.c.bf16 %v2967, %v2967
      %v3004 = vpack.c.bf16 %v2968, %v2968
      %v3005 = vpack.c.bf16 %v2969, %v2969
      %v3006 = vpack.c.bf16 %v2970, %v2970
      %v3007 = vpack.c.bf16 %v2971, %v2971
      %v3008 = vpack.c.bf16 %v2972, %v2972
      %v3009 = vpack.c.bf16 %v2973, %v2973
      %v3010 = vpack.c.bf16 %v2974, %v2974
      %v3011 = vpack.c.bf16 %v2975, %v2975
      %v3012 = vpack.c.bf16 %v2976, %v2976
      %v3013 = vpack.c.bf16 %v2977, %v2977
      %v3014 = vpack.c.bf16 %v2978, %v2978
      %v3015 = vpack.c.bf16 %v2979, %v2979
      %v3016 = vpack.c.bf16 %v2980, %v2980
      %v3017 = vpack.c.bf16 %v2981, %v2981
      %v3018 = vpack.c.bf16 %v2982, %v2982
      %v3019 = vpack.c.bf16 %v2983, %v2983
      %v3020 = vpack.c.bf16 %v2984, %v2984
      %v3021 = vpack.c.bf16 %v2985, %v2985
      %v3022 = vpack.c.bf16 %v2986, %v2986
      %v3023 = vpack.c.bf16 %v2987, %v2987
      %v3024 = vpack.c.bf16 %v2988, %v2988
      %v3025 = vpack.c.bf16 %v2989, %v2989
      %v3026 = vpack.c.bf16 %v2990, %v2990
      %v3027 = vpack.c.bf16 %v2991, %v2991
      %v3028 = vpack.c.bf16 %v2992, %v2992
      %v3029 = vpack.c.bf16 %v2993, %v2993
      %v3030 = vpack.c.bf16 %v2994, %v2994
      %v3031 = vpack.c.bf16 %v2995, %v2995
      %v3032 = vpack.c.bf16 %v2996, %v2996
      %vm3033 = vcmask 27648
      %3034 = vst.msk [vmem:[%s170] sm:$0xf] %vm3033, %v2997
      %3035 = vst.msk [vmem:[%s170 + $0x4] sm:$0xf] %vm3033, %v2998
      %3036 = vst.msk [vmem:[%s170 + $0x8] sm:$0xf] %vm3033, %v2999
      %3037 = vst.msk [vmem:[%s170 + $0xc] sm:$0xf] %vm3033, %v3000
      %3038 = vst.msk [vmem:[%s170 + $0x10] sm:$0xf] %vm3033, %v3001
      %3039 = vst.msk [vmem:[%s170 + $0x14] sm:$0xf] %vm3033, %v3002
      %3040 = vst.msk [vmem:[%s170 + $0x18] sm:$0xf] %vm3033, %v3003
      %3041 = vst.msk [vmem:[%s170 + $0x1c] sm:$0xf] %vm3033, %v3004
      %3042 = vst.msk [vmem:[%s170 + $0x20] sm:$0xf] %vm3033, %v3005
      %3043 = vst.msk [vmem:[%s170 + $0x24] sm:$0xf] %vm3033, %v3006
      %3044 = vst.msk [vmem:[%s170 + $0x28] sm:$0xf] %vm3033, %v3007
      %3045 = vst.msk [vmem:[%s170 + $0x2c] sm:$0xf] %vm3033, %v3008
      %3046 = vst.msk [vmem:[%s170 + $0x30] sm:$0xf] %vm3033, %v3009
      %3047 = vst.msk [vmem:[%s170 + $0x34] sm:$0xf] %vm3033, %v3010
      %3048 = vst.msk [vmem:[%s170 + $0x38] sm:$0xf] %vm3033, %v3011
      %3049 = vst.msk [vmem:[%s170 + $0x3c] sm:$0xf] %vm3033, %v3012
      %3050 = vst.msk [vmem:[%s170 + $0x40] sm:$0xf] %vm3033, %v3013
      %3051 = vst.msk [vmem:[%s170 + $0x44] sm:$0xf] %vm3033, %v3014
      %3052 = vst.msk [vmem:[%s170 + $0x48] sm:$0xf] %vm3033, %v3015
      %3053 = vst.msk [vmem:[%s170 + $0x4c] sm:$0xf] %vm3033, %v3016
      %3054 = vst.msk [vmem:[%s170 + $0x50] sm:$0xf] %vm3033, %v3017
      %3055 = vst.msk [vmem:[%s170 + $0x54] sm:$0xf] %vm3033, %v3018
      %3056 = vst.msk [vmem:[%s170 + $0x58] sm:$0xf] %vm3033, %v3019
      %3057 = vst.msk [vmem:[%s170 + $0x5c] sm:$0xf] %vm3033, %v3020
      %3058 = vst.msk [vmem:[%s170 + $0x60] sm:$0xf] %vm3033, %v3021
      %3059 = vst.msk [vmem:[%s170 + $0x64] sm:$0xf] %vm3033, %v3022
      %3060 = vst.msk [vmem:[%s170 + $0x68] sm:$0xf] %vm3033, %v3023
      %3061 = vst.msk [vmem:[%s170 + $0x6c] sm:$0xf] %vm3033, %v3024
      %3062 = vst.msk [vmem:[%s170 + $0x70] sm:$0xf] %vm3033, %v3025
      %3063 = vst.msk [vmem:[%s170 + $0x74] sm:$0xf] %vm3033, %v3026
      %3064 = vst.msk [vmem:[%s170 + $0x78] sm:$0xf] %vm3033, %v3027
      %3065 = vst.msk [vmem:[%s170 + $0x7c] sm:$0xf] %vm3033, %v3028
      %3066 = vst.msk [vmem:[%s170 + $0x80] sm:$0xf] %vm3033, %v3029
      %3067 = vst.msk [vmem:[%s170 + $0x84] sm:$0xf] %vm3033, %v3030
      %3068 = vst.msk [vmem:[%s170 + $0x88] sm:$0xf] %vm3033, %v3031
      %3069 = vst.msk [vmem:[%s170 + $0x8c] sm:$0xf] %vm3033, %v3032
      %p3070 = scmp.lt.s32.totalorder %s14, 1
      %s3071 = scalar_select %p3070, %s14, 1
      %s3072 = smul.addr %s3071, 36
      %s3073 = smul.addr %s3072, 4
      %s3074 = scalar_lea.vmem %s3, %s3073
      // Predicated region
      $region33: #{_lambda_.6} parent=31 // pred_check
        %p3075 = pneg %p100
      $region34: #{_lambda_.6} parent=31 // pred_check_branch
        %3077 = sbr.rel (%p3075) target = $region36
      $region35: #{_lambda_.6} parent=31 // pred_region
        _
      $region36: #{_lambda_.6} parent=31 // pred_fallthru
        _
    $region32: #{_lambda_.6} parent=5 // pred_fallthru
      _
    %p3078 = scmp.le.s32.totalorder 2, %s9
    // Predicated region
    $region37: #{_lambda_.6} parent=5 // pred_check
      %p3079 = pneg %p3078
    $region38: #{_lambda_.6} parent=5 // pred_check_branch
      %3081 = sbr.rel (%p3079) target = $region40
    $region39: #{_lambda_.6} parent=5 // pred_region
      %s3082 = ssub.s32 %s9, 2
      // Predicated region
      $region41: #{_lambda_.6} parent=39 // pred_check
        %p3083 = pneg %p106
      $region42: #{_lambda_.6} parent=39 // pred_check_branch
        %3085 = sbr.rel (%p3083) target = $region44
      $region43: #{_lambda_.6} parent=39 // pred_region
        %p3086 = scmp.lt.s32.totalorder %s15, 1
        %s3087 = scalar_select %p3086, %s15, 1
        %s3088 = smul.addr %s3087, 36
        %s3089 = smul.addr %s3088, 4
        %s3090 = scalar_lea.vmem %s3, %s3089
      $region44: #{_lambda_.6} parent=39 // pred_fallthru
        _
    $region40: #{_lambda_.6} parent=5 // pred_fallthru
      _
  $region6: #{_lambda_.6} parent=0 // loop_footer
    %s13 = sadd.s32 1, %s9
  $region7: #{_lambda_.6} parent=0 // loop_footer_branch
    %8 = sbr.rel target = $region3
  $region8: #{_lambda_.6} parent=0 // loop_exit
    _

// kernel: _lambda_.8
$region0: #{_lambda_.8}
  #allocation0 [shape = 'u32[]', space=smem, size = 0x4, offset = 0x4, fixed_abs, tag = 'smem constant byte address 0x4 - core index']
  #allocation1 [shape = 'u32[72,128]{1,0:T(1,128)}', space=vmem, size = 0x9000, scoped, tag = 'internal scratch']
  %s0 = inlined_call_operand.vmem [shape: bf16[2,44,8], index: 0, kind: input, shape index: {}]
  %s1 = inlined_call_operand.vmem [shape: bf16[9,8,16], index: 1, kind: input, shape index: {}]
  %s2 = inlined_call_operand.vmem [shape: f32[1,16], index: 2, kind: input, shape index: {}]
  %s3 = inlined_call_operand.vmem [shape: bf16[2,24,16], index: 3, kind: output, shape index: {}]
  %s4 = sld [smem:[#allocation0]]
  $region45: #{_lambda_.8} parent=0
    _
  %s6 = ssub.s32 1, %s4
  %s7 = scalar_select 0, %s6, %s4
  loop: start=0, step=1, limit=4
  $region2: #{_lambda_.8} parent=0 // loop_pre_header
    _
  $region3: #{_lambda_.8} parent=0 // loop_header
    %s9 = sphi 0, %s13
    %p10 = scmp.ge.s32.totalorder %s9, 4
    %s19 = sphi 0, %s21
    %s22 = sphi 0, %s19
    %s23 = sphi 0, %s22
    %s39 = sphi 0, %s23
    %s43 = sphi 0, %s43
    %s45 = sphi 0, %s43
    %s46 = sphi 0, %s45
    %s60 = sphi 0, %s46
    %s64 = sphi 0, %s64
    %s66 = sphi 0, %s64
    %s67 = sphi 0, %s66
    %s81 = sphi 0, %s67
    %s87 = sphi 0, %s89
    %s90 = sphi 0, %s87
    %s91 = sphi 0, %s90
    %s107 = sphi 0, %s91
  $region4: #{_lambda_.8} parent=0 // loop_header_branch
    %12 = sbr.rel (%p10) target = $region8
  $region5: #{_lambda_.8} parent=0 // loop_body
    %s14 = ssub.s32 %s9, 1
    %s15 = ssub.s32 %s9, 2
    %s16 = sadd.s32 %s9, 1
    %s17 = ssub.s32 %s9, %s16
    %p18 = scmp.eq.s32.totalorder %s17, 0
    %s20 = sadd.s32 %s19, 1
    %s21 = scalar_select %p18, %s19, %s20
    %p24 = pneg %p18
    %p25 = scmp.eq.s32.totalorder %s9, 1
    %p26 = por %p24, %p25
    %p27 = scmp.ne.s32.totalorder %s19, %s22
    %p28 = scmp.eq.s32.totalorder %s9, 0
    %p29 = por %p27, %p28
    %p30 = scmp.ne.s32.totalorder %s19, %s22
    %p31 = scmp.eq.s32.totalorder %s14, 1
    %p32 = por %p30, %p31
    %p33 = scmp.ne.s32.totalorder %s22, %s23
    %p34 = scmp.eq.s32.totalorder %s14, 0
    %p35 = por %p33, %p34
    %p36 = scmp.ne.s32.totalorder %s22, %s23
    %p37 = scmp.eq.s32.totalorder %s15, 1
    %p38 = por %p36, %p37
    %p40 = scmp.ne.s32.totalorder %s23, %s39
    %p41 = scmp.eq.s32.totalorder %s15, 0
    %p42 = por %p40, %p41
    %s44 = sadd.s32 %s43, 1
    %p47 = scmp.eq.s32.totalorder %s9, 1
    %p48 = scmp.ne.s32.totalorder %s43, %s45
    %p49 = scmp.eq.s32.totalorder %s9, 0
    %p50 = por %p48, %p49
    %p51 = scmp.ne.s32.totalorder %s43, %s45
    %p52 = scmp.eq.s32.totalorder %s14, 1
    %p53 = por %p51, %p52
    %p54 = scmp.ne.s32.totalorder %s45, %s46
    %p55 = scmp.eq.s32.totalorder %s14, 0
    %p56 = por %p54, %p55
    %p57 = scmp.ne.s32.totalorder %s45, %s46
    %p58 = scmp.eq.s32.totalorder %s15, 1
    %p59 = por %p57, %p58
    %p61 = scmp.ne.s32.totalorder %s46, %s60
    %p62 = scmp.eq.s32.totalorder %s15, 0
    %p63 = por %p61, %p62
    %s65 = sadd.s32 %s64, 1
    %p68 = scmp.eq.s32.totalorder %s9, 1
    %p69 = scmp.ne.s32.totalorder %s64, %s66
    %p70 = scmp.eq.s32.totalorder %s9, 0
    %p71 = por %p69, %p70
    %p72 = scmp.ne.s32.totalorder %s64, %s66
    %p73 = scmp.eq.s32.totalorder %s14, 1
    %p74 = por %p72, %p73
    %p75 = scmp.ne.s32.totalorder %s66, %s67
    %p76 = scmp.eq.s32.totalorder %s14, 0
    %p77 = por %p75, %p76
    %p78 = scmp.ne.s32.totalorder %s66, %s67
    %p79 = scmp.eq.s32.totalorder %s15, 1
    %p80 = por %p78, %p79
    %p82 = scmp.ne.s32.totalorder %s67, %s81
    %p83 = scmp.eq.s32.totalorder %s15, 0
    %p84 = por %p82, %p83
    %s85 = ssub.s32 %s9, %s16
    %p86 = scmp.eq.s32.totalorder %s85, 0
    %s88 = sadd.s32 %s87, 1
    %s89 = scalar_select %p86, %s87, %s88
    %p92 = pneg %p86
    %p93 = scmp.eq.s32.totalorder %s9, 1
    %p94 = por %p92, %p93
    %p95 = scmp.ne.s32.totalorder %s87, %s90
    %p96 = scmp.eq.s32.totalorder %s9, 0
    %p97 = por %p95, %p96
    %p98 = scmp.ne.s32.totalorder %s87, %s90
    %p99 = scmp.eq.s32.totalorder %s14, 1
    %p100 = por %p98, %p99
    %p101 = scmp.ne.s32.totalorder %s90, %s91
    %p102 = scmp.eq.s32.totalorder %s14, 0
    %p103 = por %p101, %p102
    %p104 = scmp.ne.s32.totalorder %s90, %s91
    %p105 = scmp.eq.s32.totalorder %s15, 1
    %p106 = por %p104, %p105
    %p108 = scmp.ne.s32.totalorder %s91, %s107
    %p109 = scmp.eq.s32.totalorder %s15, 0
    %p110 = por %p108, %p109
    %p111 = scmp.le.s32.totalorder 1, %s9
    %p112 = scmp.lt.s32.totalorder %s9, 3
    %p113 = pnand %p111, %p112
    %p114 = pneg %p113
    // Predicated region
    $region9: #{_lambda_.8} parent=5 // pred_check
      _
    $region10: #{_lambda_.8} parent=5 // pred_check_branch
      %116 = sbr.rel (%p113) target = $region12
    $region11: #{_lambda_.8} parent=5 // pred_region
      %s117 = ssub.s32 %s9, 1
      // Predicated region
      $region13: #{_lambda_.8} parent=11 // pred_check
        %p118 = pneg %p56
      $region14: #{_lambda_.8} parent=11 // pred_check_branch
        %120 = sbr.rel (%p118) target = $region16
      $region15: #{_lambda_.8} parent=11 // pred_region
        _
      $region16: #{_lambda_.8} parent=11 // pred_fallthru
        _
      // Predicated region
      $region17: #{_lambda_.8} parent=11 // pred_check
        %p121 = pneg %p77
      $region18: #{_lambda_.8} parent=11 // pred_check_branch
        %123 = sbr.rel (%p121) target = $region20
      $region19: #{_lambda_.8} parent=11 // pred_region
        _
      $region20: #{_lambda_.8} parent=11 // pred_fallthru
        _
    $region12: #{_lambda_.8} parent=5 // pred_fallthru
      _
    %p124 = scmp.lt.s32.totalorder %s9, 2
    // Predicated region
    $region21: #{_lambda_.8} parent=5 // pred_check
      %p125 = pneg %p124
    $region22: #{_lambda_.8} parent=5 // pred_check_branch
      %127 = sbr.rel (%p125) target = $region24
    $region23: #{_lambda_.8} parent=5 // pred_region
      // Predicated region
      $region25: #{_lambda_.8} parent=23 // pred_check
        %p128 = pneg %p29
      $region26: #{_lambda_.8} parent=23 // pred_check_branch
        %130 = sbr.rel (%p128) target = $region28
      $region27: #{_lambda_.8} parent=23 // pred_region
        %p131 = scmp.lt.s32.totalorder %s9, 1
        %s132 = scalar_select %p131, %s9, 1
        %s133 = smul.addr %s132, 6
        %s134 = smul.addr %s133, 4
        %s135 = scalar_lea.vmem %s0, %s134
      $region28: #{_lambda_.8} parent=23 // pred_fallthru
        _
    $region24: #{_lambda_.8} parent=5 // pred_fallthru
      _
    %p136 = scmp.le.s32.totalorder 1, %s9
    %p137 = scmp.lt.s32.totalorder %s9, 3
    %p138 = pnand %p136, %p137
    %p139 = pneg %p138
    // Predicated region
    $region29: #{_lambda_.8} parent=5 // pred_check
      _
    $region30: #{_lambda_.8} parent=5 // pred_check_branch
      %141 = sbr.rel (%p138) target = $region32
    $region31: #{_lambda_.8} parent=5 // pred_region
      %s142 = ssub.s32 %s9, 1
      %p143 = scmp.lt.s32.totalorder %s14, 1
      %s144 = scalar_select %p143, %s14, 1
      %s145 = smul.addr %s144, 6
      %s146 = smul.addr %s145, 4
      %s147 = scalar_lea.vmem %s0, %s146
      %p148 = pneg %p35
      %p149 = pneg %p32
      %p150 = pneg %p56
      %p151 = pneg %p53
      %p152 = pneg %p77
      %p153 = pneg %p74
      %p154 = pneg %p103
      %p155 = pneg %p100
      %p156 = scmp.lt.s32.totalorder %s14, 1
      %s157 = scalar_select %p156, %s14, 1
      %s158 = smul.addr %s157, 3
      %s159 = smul.addr %s158, 4
      %s160 = scalar_lea.vmem %s3, %s159
      %p161 = scmp.lt.s32.totalorder %s14, 1
      %s162 = scalar_select %p161, %s14, 1
      %s163 = smul.addr %s162, 6
      %s164 = smul.addr %s163, 4
      %s165 = scalar_lea.vmem %s0, %s164
      %p166 = scmp.lt.s32.totalorder %s14, 1
      %s167 = scalar_select %p166, %s14, 1
      %s168 = smul.addr %s167, 3
      %s169 = smul.addr %s168, 4
      %s170 = scalar_lea.vmem %s3, %s169
      %v172 = vld [vmem:[%s165] sm:$0xf]
      %v173 = vld [vmem:[%s165 + $0x4] sm:$0xf]
      %v174 = vld [vmem:[%s165 + $0x8] sm:$0xf]
      %v175 = vld [vmem:[%s1] sm:$0xf]
      %v176 = vld [vmem:[%s165 + $0xc] sm:$0x1]
      %s177 = scalar_lea.vmem %s1, 4
      %v178 = vld [vmem:[%s177] sm:$0xf]
      %v183 = vunpack.c.l.b16 %v172
      %v184 = vunpack.c.l.b16 %v173
      %v185 = vunpack.c.l.b16 %v174
      %v186 = vunpack.c.l.b16 %v176
      %v187 = vpack.c.b16 %v184, %v183
      %v188 = vpack.c.b16 %v186, %v185
      %vm189 = vsmask.f32 7424
      %v191 = vshrl.u32 %v187, 16
      %v193 = vshll.u32 %v187, 16
      %v195 = vrot.slane %v193, 1
      %v196 = vor.u32 %v191, %v195
      %v198 = vshll.u32 %v188, 16
      %v200 = vrot.slane %v198, 1
      %v201 = vsel %vm189, %v196, %v200
      %v202 = vshrl.u32 %v188, 16
      %v204 = vor.u32 %v202, %v200
      %vm205 = vcmask 64512
      %v207 = vsel %vm205, %v201, 0
      %v210 = vsel %vm205, %v204, 0
      %vm212 = vcmask 1043456
      %v214 = vsel %vm212, %v178, 0
      %216 = vmatpush.bf16.msra.mxu0 0
      %217 = vmatpush.bf16.msra.mxu0 0
      %218 = vmatpush.bf16.msra.mxu0 0
      %219 = vmatpush.bf16.msra.mxu0 0
      %220 = vmatpush.bf16.msra.mxu0 0
      %221 = vmatpush.bf16.msra.mxu0 0
      %222 = vmatpush.bf16.msra.mxu0 0
      %223 = vmatpush.bf16.msra.mxu0 %v214
      %224 = vmatmul.bf16.gmra.mxu0 %v207
      %v225 = vpop.f32.mrf.mxu0
      %v226 = vadd.f32 0.0, %v225
      %v227 = vpop.f32.mrf.mxu0
      %v228 = vadd.f32 0.0, %v227
      %229 = vmatmul.bf16.gmra.mxu0 %v210
      %v230 = vpop.f32.mrf.mxu0
      %v231 = vadd.f32 0.0, %v230
      %v232 = vpop.f32.mrf.mxu0
      %233 = vdwg.mxu0
      %v234 = vpack.c.b16 %v185, %v185
      %v235 = vsel %vm205, %v187, 0
      %v238 = vsel %vm205, %v234, 0
      %v241 = vsel %vm212, %v175, 0
      %243 = vmatpush.bf16.msra.mxu0 0
      %244 = vmatpush.bf16.msra.mxu0 0
      %245 = vmatpush.bf16.msra.mxu0 0
      %246 = vmatpush.bf16.msra.mxu0 0
      %247 = vmatpush.bf16.msra.mxu0 0
      %248 = vmatpush.bf16.msra.mxu0 0
      %249 = vmatpush.bf16.msra.mxu0 0
      %250 = vmatpush.bf16.msra.mxu0 %v241
      %251 = vmatmul.bf16.gmra.mxu0 %v235
      %v252 = vpop.f32.mrf.mxu0
      %v253 = vadd.f32 %v226, %v252
      %v254 = vpop.f32.mrf.mxu0
      %v255 = vadd.f32 %v228, %v254
      %256 = vmatmul.bf16.gmra.mxu0 %v238
      %v257 = vpop.f32.mrf.mxu0
      %v258 = vadd.f32 %v231, %v257
      %v259 = vpop.f32.mrf.mxu0
      %260 = vdwg.mxu0
      %v261 = vld [vmem:[%s165] sm:$0xe]
      %s262 = scalar_lea.vmem %s1, 8
      %v263 = vld [vmem:[%s262] sm:$0xf]
      %v265 = vunpack.c.l.b16 %v261
      %v266 = vpack.c.b16 %v184, %v265
      %vm267 = vcmask 1046528
      %v268 = vrot.slane %v266, 1
      %v269 = vrot.slane %v188, 1
      %v270 = vsel %vm267, %v268, %v269
      %v272 = vsel %vm205, %v270, 0
      %v275 = vsel %vm205, %v269, 0
      %v278 = vsel %vm212, %v263, 0
      %280 = vmatpush.bf16.msra.mxu0 0
      %281 = vmatpush.bf16.msra.mxu0 0
      %282 = vmatpush.bf16.msra.mxu0 0
      %283 = vmatpush.bf16.msra.mxu0 0
      %284 = vmatpush.bf16.msra.mxu0 0
      %285 = vmatpush.bf16.msra.mxu0 0
      %286 = vmatpush.bf16.msra.mxu0 0
      %287 = vmatpush.bf16.msra.mxu0 %v278
      %288 = vmatmul.bf16.gmra.mxu0 %v272
      %v289 = vpop.f32.mrf.mxu0
      %v290 = vadd.f32 0.0, %v289
      %v291 = vpop.f32.mrf.mxu0
      %v292 = vadd.f32 0.0, %v291
      %293 = vmatmul.bf16.gmra.mxu0 %v275
      %v294 = vpop.f32.mrf.mxu0
      %v295 = vadd.f32 0.0, %v294
      %v296 = vpop.f32.mrf.mxu0
      %297 = vdwg.mxu0
      %v298 = vadd.f32 %v253, %v290
      %v299 = vadd.f32 %v255, %v292
      %v300 = vadd.f32 %v258, %v295
      %v301 = vld [vmem:[%s165] sm:$0x8]
      %v302 = vld [vmem:[%s165 + $0xc] sm:$0x7]
      %s303 = scalar_lea.vmem %s1, 12
      %v304 = vld [vmem:[%s303] sm:$0xf]
      %v307 = vunpack.c.l.b16 %v301
      %v308 = vunpack.c.l.b16 %v302
      %v309 = vpack.c.b16 %v184, %v307
      %v310 = vpack.c.b16 %v308, %v185
      %vm311 = vcmask 1044480
      %v312 = vrot.slane %v309, 3
      %v313 = vrot.slane %v310, 3
      %v314 = vsel %vm311, %v312, %v313
      %v316 = vsel %vm205, %v314, 0
      %v319 = vsel %vm205, %v313, 0
      %v322 = vsel %vm212, %v304, 0
      %324 = vmatpush.bf16.msra.mxu0 0
      %325 = vmatpush.bf16.msra.mxu0 0
      %326 = vmatpush.bf16.msra.mxu0 0
      %327 = vmatpush.bf16.msra.mxu0 0
      %328 = vmatpush.bf16.msra.mxu0 0
      %329 = vmatpush.bf16.msra.mxu0 0
      %330 = vmatpush.bf16.msra.mxu0 0
      %331 = vmatpush.bf16.msra.mxu0 %v322
      %332 = vmatmul.bf16.gmra.mxu0 %v316
      %v333 = vpop.f32.mrf.mxu0
      %v334 = vadd.f32 0.0, %v333
      %v335 = vpop.f32.mrf.mxu0
      %v336 = vadd.f32 0.0, %v335
      %337 = vmatmul.bf16.gmra.mxu0 %v319
      %v338 = vpop.f32.mrf.mxu0
      %v339 = vadd.f32 0.0, %v338
      %v340 = vpop.f32.mrf.mxu0
      %341 = vdwg.mxu0
      %v342 = vadd.f32 %v298, %v334
      %v343 = vadd.f32 %v299, %v336
      %v344 = vadd.f32 %v300, %v339
      %v345 = vld [vmem:[%s165 + $0xc] sm:$0xf]
      %s346 = scalar_lea.vmem %s1, 16
      %v347 = vld [vmem:[%s346] sm:$0xf]
      %v349 = vunpack.c.l.b16 %v345
      %v350 = vpack.c.b16 %v349, %v185
      %vm351 = vsmask.f32 4352
      %v353 = vshrl.u32 %v309, 16
      %v355 = vrot.slane %v353, 3
      %v356 = vshll.u32 %v309, 16
      %v358 = vrot.slane %v356, 4
      %v359 = vor.u32 %v355, %v358
      %v361 = vshrl.u32 %v350, 16
      %v363 = vrot.slane %v361, 3
      %v364 = vshll.u32 %v350, 16
      %v366 = vrot.slane %v364, 4
      %v367 = vor.u32 %v363, %v366
      %v368 = vsel %vm351, %v359, %v367
      %v370 = vsel %vm205, %v368, 0
      %v373 = vsel %vm205, %v367, 0
      %v376 = vsel %vm212, %v347, 0
      %378 = vmatpush.bf16.msra.mxu0 0
      %379 = vmatpush.bf16.msra.mxu0 0
      %380 = vmatpush.bf16.msra.mxu0 0
      %381 = vmatpush.bf16.msra.mxu0 0
      %382 = vmatpush.bf16.msra.mxu0 0
      %383 = vmatpush.bf16.msra.mxu0 0
      %384 = vmatpush.bf16.msra.mxu0 0
      %385 = vmatpush.bf16.msra.mxu0 %v376
      %386 = vmatmul.bf16.gmra.mxu0 %v370
      %v387 = vpop.f32.mrf.mxu0
      %v388 = vadd.f32 0.0, %v387
      %v389 = vpop.f32.mrf.mxu0
      %v390 = vadd.f32 0.0, %v389
      %391 = vmatmul.bf16.gmra.mxu0 %v373
      %v392 = vpop.f32.mrf.mxu0
      %v393 = vadd.f32 0.0, %v392
      %v394 = vpop.f32.mrf.mxu0
      %395 = vdwg.mxu0
      %v396 = vadd.f32 %v342, %v388
      %v397 = vadd.f32 %v343, %v390
      %v398 = vadd.f32 %v344, %v393
      %s399 = scalar_lea.vmem %s1, 20
      %v400 = vld [vmem:[%s399] sm:$0xf]
      %v401 = vpack.c.b16 %v185, %v184
      %v402 = vpack.c.b16 %v349, %v349
      %v404 = vsel %vm205, %v401, 0
      %v407 = vsel %vm205, %v402, 0
      %v410 = vsel %vm212, %v400, 0
      %412 = vmatpush.bf16.msra.mxu0 0
      %413 = vmatpush.bf16.msra.mxu0 0
      %414 = vmatpush.bf16.msra.mxu0 0
      %415 = vmatpush.bf16.msra.mxu0 0
      %416 = vmatpush.bf16.msra.mxu0 0
      %417 = vmatpush.bf16.msra.mxu0 0
      %418 = vmatpush.bf16.msra.mxu0 0
      %419 = vmatpush.bf16.msra.mxu0 %v410
      %420 = vmatmul.bf16.gmra.mxu0 %v404
      %v421 = vpop.f32.mrf.mxu0
      %v422 = vadd.f32 0.0, %v421
      %v423 = vpop.f32.mrf.mxu0
      %v424 = vadd.f32 0.0, %v423
      %425 = vmatmul.bf16.gmra.mxu0 %v407
      %v426 = vpop.f32.mrf.mxu0
      %v427 = vadd.f32 0.0, %v426
      %v428 = vpop.f32.mrf.mxu0
      %429 = vdwg.mxu0
      %v430 = vadd.f32 %v396, %v422
      %v431 = vadd.f32 %v397, %v424
      %v432 = vadd.f32 %v398, %v427
      %v433 = vld [vmem:[%s165 + $0x4] sm:$0xc]
      %v434 = vld [vmem:[%s165 + $0x8] sm:$0xf]
      %v435 = vld [vmem:[%s165 + $0xc] sm:$0xf]
      %v436 = vld [vmem:[%s165 + $0x10] sm:$0x3]
      %s437 = scalar_lea.vmem %s1, 24
      %v438 = vld [vmem:[%s437] sm:$0xf]
      %v443 = vunpack.c.l.b16 %v433
      %v444 = vunpack.c.l.b16 %v434
      %v445 = vunpack.c.l.b16 %v435
      %v446 = vunpack.c.l.b16 %v436
      %v447 = vpack.c.b16 %v444, %v443
      %v448 = vpack.c.b16 %v446, %v445
      %vm449 = vcmask 1045504
      %v450 = vrot.slane %v447, 2
      %v451 = vrot.slane %v448, 2
      %v452 = vsel %vm449, %v450, %v451
      %v454 = vsel %vm205, %v452, 0
      %v457 = vsel %vm205, %v451, 0
      %v460 = vsel %vm212, %v438, 0
      %462 = vmatpush.bf16.msra.mxu0 0
      %463 = vmatpush.bf16.msra.mxu0 0
      %464 = vmatpush.bf16.msra.mxu0 0
      %465 = vmatpush.bf16.msra.mxu0 0
      %466 = vmatpush.bf16.msra.mxu0 0
      %467 = vmatpush.bf16.msra.mxu0 0
      %468 = vmatpush.bf16.msra.mxu0 0
      %469 = vmatpush.bf16.msra.mxu0 %v460
      %470 = vmatmul.bf16.gmra.mxu0 %v454
      %v471 = vpop.f32.mrf.mxu0
      %v472 = vadd.f32 0.0, %v471
      %v473 = vpop.f32.mrf.mxu0
      %v474 = vadd.f32 0.0, %v473
      %475 = vmatmul.bf16.gmra.mxu0 %v457
      %v476 = vpop.f32.mrf.mxu0
      %v477 = vadd.f32 0.0, %v476
      %v478 = vpop.f32.mrf.mxu0
      %479 = vdwg.mxu0
      %v480 = vadd.f32 %v430, %v472
      %v481 = vadd.f32 %v431, %v474
      %v482 = vadd.f32 %v432, %v477
      %v483 = vld [vmem:[%s165 + $0x10] sm:$0x7]
      %s484 = scalar_lea.vmem %s1, 28
      %v485 = vld [vmem:[%s484] sm:$0xf]
      %v487 = vunpack.c.l.b16 %v483
      %v488 = vpack.c.b16 %v487, %v445
      %vm489 = vsmask.f32 5376
      %v491 = vshrl.u32 %v447, 16
      %v493 = vrot.slane %v491, 2
      %v494 = vshll.u32 %v447, 16
      %v496 = vrot.slane %v494, 3
      %v497 = vor.u32 %v493, %v496
      %v499 = vshrl.u32 %v488, 16
      %v501 = vrot.slane %v499, 2
      %v502 = vshll.u32 %v488, 16
      %v504 = vrot.slane %v502, 3
      %v505 = vor.u32 %v501, %v504
      %v506 = vsel %vm489, %v497, %v505
      %v508 = vsel %vm205, %v506, 0
      %v511 = vsel %vm205, %v505, 0
      %v514 = vsel %vm212, %v485, 0
      %516 = vmatpush.bf16.msra.mxu0 0
      %517 = vmatpush.bf16.msra.mxu0 0
      %518 = vmatpush.bf16.msra.mxu0 0
      %519 = vmatpush.bf16.msra.mxu0 0
      %520 = vmatpush.bf16.msra.mxu0 0
      %521 = vmatpush.bf16.msra.mxu0 0
      %522 = vmatpush.bf16.msra.mxu0 0
      %523 = vmatpush.bf16.msra.mxu0 %v514
      %524 = vmatmul.bf16.gmra.mxu0 %v508
      %v525 = vpop.f32.mrf.mxu0
      %v526 = vadd.f32 0.0, %v525
      %v527 = vpop.f32.mrf.mxu0
      %v528 = vadd.f32 0.0, %v527
      %529 = vmatmul.bf16.gmra.mxu0 %v511
      %v530 = vpop.f32.mrf.mxu0
      %v531 = vadd.f32 0.0, %v530
      %v532 = vpop.f32.mrf.mxu0
      %533 = vdwg.mxu0
      %v534 = vadd.f32 %v480, %v526
      %v535 = vadd.f32 %v481, %v528
      %v536 = vadd.f32 %v482, %v531
      %v537 = vld [vmem:[%s165 + $0x4] sm:$0x8]
      %s538 = scalar_lea.vmem %s1, 32
      %v539 = vld [vmem:[%s538] sm:$0xf]
      %v541 = vunpack.c.l.b16 %v537
      %v542 = vpack.c.b16 %v444, %v541
      %v543 = vrot.slane %v542, 3
      %v544 = vrot.slane %v488, 3
      %v545 = vsel %vm311, %v543, %v544
      %v547 = vsel %vm205, %v545, 0
      %v550 = vsel %vm205, %v544, 0
      %v553 = vsel %vm212, %v539, 0
      %555 = vmatpush.bf16.msra.mxu0 0
      %556 = vmatpush.bf16.msra.mxu0 0
      %557 = vmatpush.bf16.msra.mxu0 0
      %558 = vmatpush.bf16.msra.mxu0 0
      %559 = vmatpush.bf16.msra.mxu0 0
      %560 = vmatpush.bf16.msra.mxu0 0
      %561 = vmatpush.bf16.msra.mxu0 0
      %562 = vmatpush.bf16.msra.mxu0 %v553
      %563 = vmatmul.bf16.gmra.mxu0 %v547
      %v564 = vpop.f32.mrf.mxu0
      %v565 = vadd.f32 0.0, %v564
      %v566 = vpop.f32.mrf.mxu0
      %v567 = vadd.f32 0.0, %v566
      %568 = vmatmul.bf16.gmra.mxu0 %v550
      %v569 = vpop.f32.mrf.mxu0
      %v570 = vadd.f32 0.0, %v569
      %v571 = vpop.f32.mrf.mxu0
      %572 = vdwg.mxu0
      %v573 = vadd.f32 %v534, %v565
      %v574 = vadd.f32 %v535, %v567
      %v575 = vadd.f32 %v536, %v570
      %v576 = vld [vmem:[%s2] sm:$0x1]
      %v578 = vperm.slane %v576, 0
      %v580 = vadd.f32 %v573, %v578
      %v581 = vadd.f32 %v574, %v578
      %v582 = vadd.f32 %v575, %v578
      %v583 = vmax.f32 %v580, 0.0
      %v584 = vmax.f32 %v581, 0.0
      %v585 = vmax.f32 %v582, 0.0
      %v586 = vpack.c.bf16 %v583, %v583
      %v587 = vpack.c.bf16 %v584, %v584
      %v588 = vpack.c.bf16 %v585, %v585
      %vm589 = vcmask 125952
      %590 = vst.msk [vmem:[%s170] sm:$0xf] %vm589, %v586
      %591 = vst.msk [vmem:[%s170 + $0x4] sm:$0xf] %vm589, %v587
      %592 = vst.msk [vmem:[%s170 + $0x8] sm:$0xf] %vm589, %v588
      %p593 = scmp.lt.s32.totalorder %s14, 1
      %s594 = scalar_select %p593, %s14, 1
      %s595 = smul.addr %s594, 3
      %s596 = smul.addr %s595, 4
      %s597 = scalar_lea.vmem %s3, %s596
      // Predicated region
      $region33: #{_lambda_.8} parent=31 // pred_check
        %p598 = pneg %p100
      $region34: #{_lambda_.8} parent=31 // pred_check_branch
        %600 = sbr.rel (%p598) target = $region36
      $region35: #{_lambda_.8} parent=31 // pred_region
        _
      $region36: #{_lambda_.8} parent=31 // pred_fallthru
        _
    $region32: #{_lambda_.8} parent=5 // pred_fallthru
      _
    %p601 = scmp.le.s32.totalorder 2, %s9
    // Predicated region
    $region37: #{_lambda_.8} parent=5 // pred_check
      %p602 = pneg %p601
    $region38: #{_lambda_.8} parent=5 // pred_check_branch
      %604 = sbr.rel (%p602) target = $region40
    $region39: #{_lambda_.8} parent=5 // pred_region
      %s605 = ssub.s32 %s9, 2
      // Predicated region
      $region41: #{_lambda_.8} parent=39 // pred_check
        %p606 = pneg %p106
      $region42: #{_lambda_.8} parent=39 // pred_check_branch
        %608 = sbr.rel (%p606) target = $region44
      $region43: #{_lambda_.8} parent=39 // pred_region
        %p609 = scmp.lt.s32.totalorder %s15, 1
        %s610 = scalar_select %p609, %s15, 1
        %s611 = smul.addr %s610, 3
        %s612 = smul.addr %s611, 4
        %s613 = scalar_lea.vmem %s3, %s612
      $region44: #{_lambda_.8} parent=39 // pred_fallthru
        _
    $region40: #{_lambda_.8} parent=5 // pred_fallthru
      _
  $region6: #{_lambda_.8} parent=0 // loop_footer
    %s13 = sadd.s32 1, %s9
  $region7: #{_lambda_.8} parent=0 // loop_footer_branch
    %8 = sbr.rel target = $region3
  $region8: #{_lambda_.8} parent=0 // loop_exit
    _

// kernel: _lambda_.9
$region0: #{_lambda_.9}
  #allocation0 [shape = 'u32[]', space=smem, size = 0x4, offset = 0x4, fixed_abs, tag = 'smem constant byte address 0x4 - core index']
  #allocation1 [shape = 'u32[72,128]{1,0:T(1,128)}', space=vmem, size = 0x9000, scoped, tag = 'internal scratch']
  #allocation2 [shape = 'bf16[16,16]{1,0:T(8,128)(2,1)}', space=vmem, size = 0x1000, scoped, tag = 'scratch operand']
  #allocation3 [shape = 'bf16[2,16,128]{2,1,0:T(8,128)(2,1)}', space=vmem, size = 0x2000, scoped, tag = 'scratch operand']
  #allocation4 [shape = 'f32[2,16,128]{2,1,0:T(8,128)}', space=vmem, size = 0x4000, scoped, tag = 'scratch operand']
  #allocation5 [shape = 's32[2]{0}', space=sflag, size = 0x8, scoped, tag = 'scratch operand']
  #allocation6 [shape = 's32[]', space=sflag, size = 0x4, offset = 0, fixed_abs, tag = 'sflag constant byte address 0x0 - dummy sync flag']
  #allocation7 [shape = 's32[]', space=sflag, size = 0x4, offset = 0, fixed_abs, tag = 'sflag constant byte address 0x0 - dummy sync flag']
  %s0 = inlined_call_operand.vmem [shape: bf16[2,16,128], index: 0, kind: input, shape index: {}]
  %s1 = inlined_call_operand.vmem [shape: bf16[16,16], index: 1, kind: input, shape index: {}]
  %s2 = inlined_call_operand.vmem [shape: bf16[14,128,256], index: 2, kind: input, shape index: {}]
  %s3 = inlined_call_operand.vmem [shape: f32[14,1,128], index: 3, kind: input, shape index: {}]
  %s4 = inlined_call_operand.vmem [shape: f32[2,16,128], index: 4, kind: output, shape index: {0}]
  %s5 = inlined_call_operand.vmem [shape: f32[2,16,128], index: 5, kind: output, shape index: {1}]
  %6 = xla_tuple %s4, %s5
  %s7 = sld [smem:[#allocation0]]
  $region138: #{_lambda_.9} parent=0
    _
  %s9 = ssub.s32 1, %s7
  %s10 = scalar_select 0, %s9, %s7
  loop: start=0, step=1, limit=16
  $region2: #{_lambda_.9} parent=0 // loop_pre_header
    _
  $region3: #{_lambda_.9} parent=0 // loop_header
    %s12 = sphi 0, %s16
    %p13 = scmp.ge.s32.totalorder %s12, 16
    %s22 = sphi 0, %s24
    %s25 = sphi 0, %s22
    %s26 = sphi 0, %s25
    %s42 = sphi 0, %s26
    %s48 = sphi 0, %s50
    %s51 = sphi 0, %s48
    %s52 = sphi 0, %s51
    %s68 = sphi 0, %s52
    %s72 = sphi 0, %s72
    %s74 = sphi 0, %s72
    %s75 = sphi 0, %s74
    %s89 = sphi 0, %s75
    %s93 = sphi 0, %s93
    %s95 = sphi 0, %s93
    %s96 = sphi 0, %s95
    %s110 = sphi 0, %s96
  $region4: #{_lambda_.9} parent=0 // loop_header_branch
    %15 = sbr.rel (%p13) target = $region8
  $region5: #{_lambda_.9} parent=0 // loop_body
    %s17 = ssub.s32 %s12, 1
    %s18 = ssub.s32 %s12, 2
    %s19 = sadd.s32 %s12, 1
    %s20 = ssub.s32 %s12, %s19
    %p21 = scmp.eq.s32.totalorder %s20, 0
    %s23 = sadd.s32 %s22, 1
    %s24 = scalar_select %p21, %s22, %s23
    %p27 = pneg %p21
    %p28 = scmp.eq.s32.totalorder %s12, 13
    %p29 = por %p27, %p28
    %p30 = scmp.ne.s32.totalorder %s22, %s25
    %p31 = scmp.eq.s32.totalorder %s12, 0
    %p32 = por %p30, %p31
    %p33 = scmp.ne.s32.totalorder %s22, %s25
    %p34 = scmp.eq.s32.totalorder %s17, 13
    %p35 = por %p33, %p34
    %p36 = scmp.ne.s32.totalorder %s25, %s26
    %p37 = scmp.eq.s32.totalorder %s17, 0
    %p38 = por %p36, %p37
    %p39 = scmp.ne.s32.totalorder %s25, %s26
    %p40 = scmp.eq.s32.totalorder %s18, 13
    %p41 = por %p39, %p40
    %p43 = scmp.ne.s32.totalorder %s26, %s42
    %p44 = scmp.eq.s32.totalorder %s18, 0
    %p45 = por %p43, %p44
    %s46 = ssub.s32 %s12, %s19
    %p47 = scmp.eq.s32.totalorder %s46, 0
    %s49 = sadd.s32 %s48, 1
    %s50 = scalar_select %p47, %s48, %s49
    %p53 = pneg %p47
    %p54 = scmp.eq.s32.totalorder %s12, 13
    %p55 = por %p53, %p54
    %p56 = scmp.ne.s32.totalorder %s48, %s51
    %p57 = scmp.eq.s32.totalorder %s12, 0
    %p58 = por %p56, %p57
    %p59 = scmp.ne.s32.totalorder %s48, %s51
    %p60 = scmp.eq.s32.totalorder %s17, 13
    %p61 = por %p59, %p60
    %p62 = scmp.ne.s32.totalorder %s51, %s52
    %p63 = scmp.eq.s32.totalorder %s17, 0
    %p64 = por %p62, %p63
    %p65 = scmp.ne.s32.totalorder %s51, %s52
    %p66 = scmp.eq.s32.totalorder %s18, 13
    %p67 = por %p65, %p66
    %p69 = scmp.ne.s32.totalorder %s52, %s68
    %p70 = scmp.eq.s32.totalorder %s18, 0
    %p71 = por %p69, %p70
    %s73 = sadd.s32 %s72, 1
    %p76 = scmp.eq.s32.totalorder %s12, 13
    %p77 = scmp.ne.s32.totalorder %s72, %s74
    %p78 = scmp.eq.s32.totalorder %s12, 0
    %p79 = por %p77, %p78
    %p80 = scmp.ne.s32.totalorder %s72, %s74
    %p81 = scmp.eq.s32.totalorder %s17, 13
    %p82 = por %p80, %p81
    %p83 = scmp.ne.s32.totalorder %s74, %s75
    %p84 = scmp.eq.s32.totalorder %s17, 0
    %p85 = por %p83, %p84
    %p86 = scmp.ne.s32.totalorder %s74, %s75
    %p87 = scmp.eq.s32.totalorder %s18, 13
    %p88 = por %p86, %p87
    %p90 = scmp.ne.s32.totalorder %s75, %s89
    %p91 = scmp.eq.s32.totalorder %s18, 0
    %p92 = por %p90, %p91
    %s94 = sadd.s32 %s93, 1
    %p97 = scmp.eq.s32.totalorder %s12, 13
    %p98 = scmp.ne.s32.totalorder %s93, %s95
    %p99 = scmp.eq.s32.totalorder %s12, 0
    %p100 = por %p98, %p99
    %p101 = scmp.ne.s32.totalorder %s93, %s95
    %p102 = scmp.eq.s32.totalorder %s17, 13
    %p103 = por %p101, %p102
    %p104 = scmp.ne.s32.totalorder %s95, %s96
    %p105 = scmp.eq.s32.totalorder %s17, 0
    %p106 = por %p104, %p105
    %p107 = scmp.ne.s32.totalorder %s95, %s96
    %p108 = scmp.eq.s32.totalorder %s18, 13
    %p109 = por %p107, %p108
    %p111 = scmp.ne.s32.totalorder %s96, %s110
    %p112 = scmp.eq.s32.totalorder %s18, 0
    %p113 = por %p111, %p112
    %p114 = scmp.le.s32.totalorder 1, %s12
    %p115 = scmp.lt.s32.totalorder %s12, 15
    %p116 = pnand %p114, %p115
    %p117 = pneg %p116
    // Predicated region
    $region9: #{_lambda_.9} parent=5 // pred_check
      _
    $region10: #{_lambda_.9} parent=5 // pred_check_branch
      %119 = sbr.rel (%p116) target = $region12
    $region11: #{_lambda_.9} parent=5 // pred_region
      %s120 = ssub.s32 %s12, 1
    $region12: #{_lambda_.9} parent=5 // pred_fallthru
      _
    %p121 = scmp.lt.s32.totalorder %s12, 14
    // Predicated region
    $region13: #{_lambda_.9} parent=5 // pred_check
      %p122 = pneg %p121
    $region14: #{_lambda_.9} parent=5 // pred_check_branch
      %124 = sbr.rel (%p122) target = $region16
    $region15: #{_lambda_.9} parent=5 // pred_region
      // Predicated region
      $region17: #{_lambda_.9} parent=15 // pred_check
        %p125 = pneg %p32
      $region18: #{_lambda_.9} parent=15 // pred_check_branch
        %127 = sbr.rel (%p125) target = $region20
      $region19: #{_lambda_.9} parent=15 // pred_region
        %p128 = scmp.lt.s32.totalorder %s12, 13
        %s129 = scalar_select %p128, %s12, 13
        %s130 = smul.addr %s129, 32
        %s131 = smul.addr %s130, 4
        %s132 = scalar_lea.vmem %s2, %s131
      $region20: #{_lambda_.9} parent=15 // pred_fallthru
        _
      // Predicated region
      $region21: #{_lambda_.9} parent=15 // pred_check
        %p133 = pneg %p58
      $region22: #{_lambda_.9} parent=15 // pred_check_branch
        %135 = sbr.rel (%p133) target = $region24
      $region23: #{_lambda_.9} parent=15 // pred_region
        %p136 = scmp.lt.s32.totalorder %s12, 13
        %s137 = scalar_select %p136, %s12, 13
        %s138 = scalar_lea.vmem %s3, %s137
      $region24: #{_lambda_.9} parent=15 // pred_fallthru
        _
    $region16: #{_lambda_.9} parent=5 // pred_fallthru
      _
    %p139 = scmp.le.s32.totalorder 1, %s12
    %p140 = scmp.lt.s32.totalorder %s12, 15
    %p141 = pnand %p139, %p140
    %p142 = pneg %p141
    // Predicated region
    $region25: #{_lambda_.9} parent=5 // pred_check
      _
    $region26: #{_lambda_.9} parent=5 // pred_check_branch
      %144 = sbr.rel (%p141) target = $region28
    $region27: #{_lambda_.9} parent=5 // pred_region
      %s145 = ssub.s32 %s12, 1
      %p146 = scmp.lt.s32.totalorder %s17, 13
      %s147 = scalar_select %p146, %s17, 13
      %s148 = smul.addr %s147, 32
      %s149 = smul.addr %s148, 4
      %s150 = scalar_lea.vmem %s2, %s149
      %p151 = pneg %p38
      %p152 = pneg %p35
      %p153 = scmp.lt.s32.totalorder %s17, 13
      %s154 = scalar_select %p153, %s17, 13
      %s155 = scalar_lea.vmem %s3, %s154
      %p156 = pneg %p64
      %p157 = pneg %p61
      %p158 = pneg %p85
      %p159 = pneg %p82
      %p160 = pneg %p106
      %p161 = pneg %p103
      %p162 = scmp.lt.s32.totalorder %s17, 13
      %s163 = scalar_select %p162, %s17, 13
      %s164 = smul.addr %s163, 32
      %s165 = smul.addr %s164, 4
      %s166 = scalar_lea.vmem %s2, %s165
      %p167 = scmp.lt.s32.totalorder %s17, 13
      %s168 = scalar_select %p167, %s17, 13
      %s169 = scalar_lea.vmem %s3, %s168
      %p171 = scmp.eq.s32.totalorder %s17, 0
      %p172 = scmp.gt.s32.totalorder %s17, 0
      %p173 = scmp.lt.s32.totalorder %s17, 13
      %p174 = pnand %p172, %p173
      %p175 = pneg %p174
      %p176 = scmp.lt.s32.totalorder %s17, 0
      %s177 = ssub.s32 0, %s17
      %s178 = scalar_select %p176, %s177, %s17
      %s179 = sand.u32 %s178, 1
      %s180 = ssub.s32 0, %s179
      %s181 = scalar_select %p176, %s180, %s179
      %p182 = scmp.ne.s32.totalorder %s181, 0
      %p183 = scmp.lt.s32.totalorder %s181, 0
      %p184 = pnand %p183, %p182
      %p185 = pneg %p184
      %s186 = sadd.s32 %s181, 2
      %s187 = scalar_select %p185, %s186, %s181
      %p188 = scmp.eq.s32.totalorder %s187, 1
      %p189 = scmp.eq.s32.totalorder %s17, 13
      // Predicated region
      $region29: #{_lambda_.9} parent=27 // pred_check
        %p190 = pneg %p171
      $region30: #{_lambda_.9} parent=27 // pred_check_branch
        %192 = sbr.rel (%p190) target = $region32
      $region31: #{_lambda_.9} parent=27 // pred_region
        // Predicated region
        $region33: #{_lambda_.9} parent=31 // pred_check
          _
        $region34: #{_lambda_.9} parent=31 // pred_check_branch
          %194 = sbr.rel (0) target = $region36
        $region35: #{_lambda_.9} parent=31 // pred_region
          // Predicated region
          $region48: #{_lambda_.9} parent=35 // pred_check
            _
          $region49: #{_lambda_.9} parent=35 // pred_check_branch
            %210 = sbr.rel (0) target = $region51
          $region50: #{_lambda_.9} parent=35 // pred_region
            loop: start=0, step=1, limit=1
            $region52: #{_lambda_.9} parent=50 // loop_pre_header
              _
            $region53: #{_lambda_.9} parent=50 // loop_header
              %s212 = sphi 0, %s216
              %p213 = scmp.ge.s32.totalorder %s212, 1
              %s217 = sphi %s1, %s1
              %s218 = sphi [#allocation2], [#allocation2]
            $region54: #{_lambda_.9} parent=50 // loop_header_branch
              %215 = sbr.rel (%p213) target = $region58
            $region55: #{_lambda_.9} parent=50 // loop_body
              %v219 = vld [vmem:[%s217] sm:$0xff]
              %220 = vst [vmem:[%s218] sm:$0xff] %v219
            $region56: #{_lambda_.9} parent=50 // loop_footer
              %s216 = sadd.s32 1, %s212
            $region57: #{_lambda_.9} parent=50 // loop_footer_branch
              %211 = sbr.rel target = $region53
            $region58: #{_lambda_.9} parent=50 // loop_exit
              _
          $region51: #{_lambda_.9} parent=35 // pred_fallthru
            _
          // Predicated region
          $region59: #{_lambda_.9} parent=35 // pred_check
            _
          $region60: #{_lambda_.9} parent=35 // pred_check_branch
            %222 = sbr.rel target = $region62
          $region61: #{_lambda_.9} parent=35 // pred_region
            _
          $region62: #{_lambda_.9} parent=35 // pred_fallthru
            _
        $region36: #{_lambda_.9} parent=31 // pred_fallthru
          _
        // Predicated region
        $region37: #{_lambda_.9} parent=31 // pred_check
          _
        $region38: #{_lambda_.9} parent=31 // pred_check_branch
          %196 = sbr.rel target = $region40
        $region39: #{_lambda_.9} parent=31 // pred_region
          %s198 = ssub.s32 256, 1
          loop: start=0, step=1, limit=1
          $region41: #{_lambda_.9} parent=39 // loop_pre_header
            _
          $region42: #{_lambda_.9} parent=39 // loop_header
            %s200 = sphi 0, %s204
            %p201 = scmp.ge.s32.totalorder %s200, 1
            %s205 = sphi %s1, %s1
            %s206 = sphi [#allocation2], [#allocation2]
          $region43: #{_lambda_.9} parent=39 // loop_header_branch
            %203 = sbr.rel (%p201) target = $region47
          $region44: #{_lambda_.9} parent=39 // loop_body
            %v207 = vld [vmem:[%s205] sm:%s198]
            %208 = vst [vmem:[%s206] sm:%s198] %v207
          $region45: #{_lambda_.9} parent=39 // loop_footer
            %s204 = sadd.s32 1, %s200
          $region46: #{_lambda_.9} parent=39 // loop_footer_branch
            %199 = sbr.rel target = $region42
          $region47: #{_lambda_.9} parent=39 // loop_exit
            _
        $region40: #{_lambda_.9} parent=31 // pred_fallthru
          _
        // Predicated region
        $region63: #{_lambda_.9} parent=31 // pred_check
          _
        $region64: #{_lambda_.9} parent=31 // pred_check_branch
          %225 = sbr.rel (0) target = $region66
        $region65: #{_lambda_.9} parent=31 // pred_region
          %226 = vsyncadd [#allocation5], 128
        $region66: #{_lambda_.9} parent=31 // pred_fallthru
          _
        %s227 = scalar_lea.sflag [#allocation5], 1
        // Predicated region
        $region67: #{_lambda_.9} parent=31 // pred_check
          _
        $region68: #{_lambda_.9} parent=31 // pred_check_branch
          %229 = sbr.rel (0) target = $region70
        $region69: #{_lambda_.9} parent=31 // pred_region
          loop: start=0, step=1, limit=1
          $region71: #{_lambda_.9} parent=69 // loop_pre_header
            _
          $region72: #{_lambda_.9} parent=69 // loop_header
            %s231 = sphi 0, %s235
            %p232 = scmp.ge.s32.totalorder %s231, 1
            %s236 = sphi %s0, %s0
            %s237 = sphi [#allocation3], [#allocation3]
          $region73: #{_lambda_.9} parent=69 // loop_header_branch
            %234 = sbr.rel (%p232) target = $region77
          $region74: #{_lambda_.9} parent=69 // loop_body
            %v238 = vld [vmem:[%s236] sm:$0xff]
            %239 = vst [vmem:[%s237] sm:$0xff] %v238
            %v240 = vld [vmem:[%s236 + $0x8] sm:$0xff]
            %241 = vst [vmem:[%s237 + $0x8] sm:$0xff] %v240
          $region75: #{_lambda_.9} parent=69 // loop_footer
            %s235 = sadd.s32 1, %s231
          $region76: #{_lambda_.9} parent=69 // loop_footer_branch
            %230 = sbr.rel target = $region72
          $region77: #{_lambda_.9} parent=69 // loop_exit
            _
        $region70: #{_lambda_.9} parent=31 // pred_fallthru
          _
        // Predicated region
        $region78: #{_lambda_.9} parent=31 // pred_check
          _
        $region79: #{_lambda_.9} parent=31 // pred_check_branch
          %243 = sbr.rel target = $region81
        $region80: #{_lambda_.9} parent=31 // pred_region
          _
        $region81: #{_lambda_.9} parent=31 // pred_fallthru
          _
        // Predicated region
        $region82: #{_lambda_.9} parent=31 // pred_check
          _
        $region83: #{_lambda_.9} parent=31 // pred_check_branch
          %246 = sbr.rel (0) target = $region85
        $region84: #{_lambda_.9} parent=31 // pred_region
          %247 = vsyncadd %s227, 256
        $region85: #{_lambda_.9} parent=31 // pred_fallthru
          _
        %s248 = smul.u32 4, 2
        %s249 = smul.u32 %s248, 1
        %s250 = sshll.u32 %s249, 4
        %251 = dma.done [#allocation5], %s250
        %s252 = smul.u32 %s248, 2
        %s253 = smul.u32 %s252, 1
        %s254 = sshll.u32 %s253, 4
        %255 = dma.done %s227, %s254
      $region32: #{_lambda_.9} parent=27 // pred_fallthru
        _
      %v256 = vld [vmem:[%s166] sm:$0xff]
      %v257 = vld [vmem:[%s166 + $0x8] sm:$0xff]
      %v258 = vld [vmem:[%s166 + $0x10] sm:$0xff]
      %v259 = vld [vmem:[%s166 + $0x18] sm:$0xff]
      %v260 = vld [vmem:[%s166 + $0x20] sm:$0xff]
      %v261 = vld [vmem:[%s166 + $0x28] sm:$0xff]
      %v262 = vld [vmem:[%s166 + $0x30] sm:$0xff]
      %v263 = vld [vmem:[%s166 + $0x38] sm:$0xff]
      %v264 = vld [vmem:[%s166 + $0x40] sm:$0xff]
      %v265 = vld [vmem:[%s166 + $0x48] sm:$0xff]
      %v266 = vld [vmem:[%s166 + $0x50] sm:$0xff]
      %v267 = vld [vmem:[%s166 + $0x58] sm:$0xff]
      %v268 = vld [vmem:[%s166 + $0x60] sm:$0xff]
      %v269 = vld [vmem:[%s166 + $0x68] sm:$0xff]
      %v270 = vld [vmem:[%s166 + $0x70] sm:$0xff]
      %v271 = vld [vmem:[%s166 + $0x78] sm:$0xff]
      %v272 = vld [vmem:[%s169] sm:$0x1]
      %v273 = vld [vmem:[#allocation2] sm:$0xf]
      %v274 = vld [vmem:[#allocation2 + $0x4] sm:$0xf]
      %v275 = vld [vmem:[#allocation3] sm:$0xf]
      %v276 = vld [vmem:[#allocation3 + $0x4] sm:$0xf]
      %v279 = vunpack.c.l.b16 %v275
      %v280 = vunpack.c.l.b16 %v276
      %v281 = vpack.c.b16 %v280, %v279
      %v299 = vunpack.c.l.b16 %v256
      %v300 = vunpack.c.h.b16 %v256
      %v301 = vunpack.c.l.b16 %v257
      %v302 = vunpack.c.h.b16 %v257
      %v303 = vunpack.c.l.b16 %v258
      %v304 = vunpack.c.h.b16 %v258
      %v305 = vunpack.c.l.b16 %v259
      %v306 = vunpack.c.h.b16 %v259
      %v307 = vunpack.c.l.b16 %v260
      %v308 = vunpack.c.h.b16 %v260
      %v309 = vunpack.c.l.b16 %v261
      %v310 = vunpack.c.h.b16 %v261
      %v311 = vunpack.c.l.b16 %v262
      %v312 = vunpack.c.h.b16 %v262
      %v313 = vunpack.c.l.b16 %v263
      %v314 = vunpack.c.h.b16 %v263
      %v315 = vunpack.c.l.b16 %v264
      %v316 = vunpack.c.h.b16 %v264
      %v317 = vunpack.c.l.b16 %v265
      %v318 = vunpack.c.h.b16 %v265
      %v319 = vunpack.c.l.b16 %v266
      %v320 = vunpack.c.h.b16 %v266
      %v321 = vunpack.c.l.b16 %v267
      %v322 = vunpack.c.h.b16 %v267
      %v323 = vunpack.c.l.b16 %v268
      %v324 = vunpack.c.h.b16 %v268
      %v325 = vunpack.c.l.b16 %v269
      %v326 = vunpack.c.h.b16 %v269
      %v327 = vunpack.c.l.b16 %v270
      %v328 = vunpack.c.h.b16 %v270
      %v329 = vunpack.c.l.b16 %v271
      %v330 = vunpack.c.h.b16 %v271
      %v331 = vpack.c.b16 %v301, %v299
      %v332 = vpack.c.b16 %v302, %v300
      %v333 = vpack.c.b16 %v305, %v303
      %v334 = vpack.c.b16 %v306, %v304
      %v335 = vpack.c.b16 %v309, %v307
      %v336 = vpack.c.b16 %v310, %v308
      %v337 = vpack.c.b16 %v313, %v311
      %v338 = vpack.c.b16 %v314, %v312
      %v339 = vpack.c.b16 %v317, %v315
      %v340 = vpack.c.b16 %v318, %v316
      %v341 = vpack.c.b16 %v321, %v319
      %v342 = vpack.c.b16 %v322, %v320
      %v343 = vpack.c.b16 %v325, %v323
      %v344 = vpack.c.b16 %v326, %v324
      %v345 = vpack.c.b16 %v329, %v327
      %v346 = vpack.c.b16 %v330, %v328
      %363 = vmatpush.bf16.msra.mxu0 %v345
      %364 = vmatpush.bf16.msra.mxu0 %v343
      %365 = vmatpush.bf16.msra.mxu0 %v341
      %366 = vmatpush.bf16.msra.mxu0 %v339
      %367 = vmatpush.bf16.msra.mxu0 %v337
      %368 = vmatpush.bf16.msra.mxu0 %v335
      %369 = vmatpush.bf16.msra.mxu0 %v333
      %370 = vmatpush.bf16.msra.mxu0 %v331
      %371 = vmatmul.bf16.gmra.mxu0 %v281
      %v372 = vpop.f32.mrf.mxu0
      %v373 = vadd.f32 0.0, %v372
      %v374 = vpop.f32.mrf.mxu0
      %v375 = vadd.f32 0.0, %v374
      %376 = vdwg.mxu0
      %377 = vmatpush.bf16.msra.mxu0 %v346
      %378 = vmatpush.bf16.msra.mxu0 %v344
      %379 = vmatpush.bf16.msra.mxu0 %v342
      %380 = vmatpush.bf16.msra.mxu0 %v340
      %381 = vmatpush.bf16.msra.mxu0 %v338
      %382 = vmatpush.bf16.msra.mxu0 %v336
      %383 = vmatpush.bf16.msra.mxu0 %v334
      %384 = vmatpush.bf16.msra.mxu0 %v332
      %385 = vmatmul.bf16.gmra.mxu0 %v281
      %v386 = vpop.f32.mrf.mxu0
      %v387 = vadd.f32 0.0, %v386
      %v388 = vpop.f32.mrf.mxu0
      %v389 = vadd.f32 0.0, %v388
      %390 = vdwg.mxu0
      %v391 = vpack.c.bf16 %v375, %v373
      %v394 = vunpack.c.l.b16 %v273
      %v395 = vunpack.c.l.b16 %v274
      %v396 = vpack.c.b16 %v395, %v394
      %vm397 = vcmask 130048
      %v399 = vsel %vm397, %v396, 0
      %401 = vmatpush.bf16.msra.mxu0 0
      %402 = vmatpush.bf16.msra.mxu0 0
      %403 = vmatpush.bf16.msra.mxu0 0
      %404 = vmatpush.bf16.msra.mxu0 0
      %405 = vmatpush.bf16.msra.mxu0 0
      %406 = vmatpush.bf16.msra.mxu0 0
      %407 = vmatpush.bf16.msra.mxu0 0
      %408 = vmatpush.bf16.msra.mxu0 %v391
      %409 = vmatmul.bf16.gmra.mxu0 %v399
      %v410 = vpop.f32.mrf.mxu0
      %v411 = vadd.f32 %v387, %v410
      %v412 = vpop.f32.mrf.mxu0
      %v413 = vadd.f32 %v389, %v412
      %414 = vdwg.mxu0
      %v416 = vperm.slane %v272, 0
      %v418 = vadd.f32 %v411, %v416
      %v419 = vadd.f32 %v413, %v416
      // Predicated region
      $region86: #{_lambda_.9} parent=27 // pred_check
        %p420 = pneg %p171
      $region87: #{_lambda_.9} parent=27 // pred_check_branch
        %422 = sbr.rel (%p420) target = $region89
      $region88: #{_lambda_.9} parent=27 // pred_region
        %v423 = vmax.f32 %v418, 0.0
        %v424 = vmax.f32 %v419, 0.0
        %425 = vst [vmem:[#allocation4] sm:$0xff] %v423
        %426 = vst [vmem:[#allocation4 + $0x8] sm:$0xff] %v424
        %v427 = vpack.c.bf16 %v423, %v423
        %v428 = vpack.c.bf16 %v424, %v424
        %429 = vst [vmem:[#allocation3] sm:$0xf] %v427
        %430 = vst [vmem:[#allocation3 + $0x4] sm:$0xf] %v428
      $region89: #{_lambda_.9} parent=27 // pred_fallthru
        _
      %p431 = pnand %p175, %p188
      %p432 = pneg %p431
      // Predicated region
      $region90: #{_lambda_.9} parent=27 // pred_check
        _
      $region91: #{_lambda_.9} parent=27 // pred_check_branch
        %434 = sbr.rel (%p431) target = $region93
      $region92: #{_lambda_.9} parent=27 // pred_region
        %v435 = vmax.f32 %v418, 0.0
        %v436 = vmax.f32 %v419, 0.0
        %v437 = vpack.c.bf16 %v435, %v435
        %v438 = vpack.c.bf16 %v436, %v436
        %439 = vst [vmem:[#allocation3] sm:$0xf] %v437
        %440 = vst [vmem:[#allocation3 + $0x4] sm:$0xf] %v438
      $region93: #{_lambda_.9} parent=27 // pred_fallthru
        _
      %p441 = scmp.ne.s32.totalorder %s187, 1
      %p442 = pnand %p175, %p441
      %p443 = pneg %p442
      // Predicated region
      $region94: #{_lambda_.9} parent=27 // pred_check
        _
      $region95: #{_lambda_.9} parent=27 // pred_check_branch
        %445 = sbr.rel (%p442) target = $region97
      $region96: #{_lambda_.9} parent=27 // pred_region
        %v446 = vld [vmem:[#allocation4] sm:$0xff]
        %v447 = vld [vmem:[#allocation4 + $0x8] sm:$0xff]
        %v448 = vmax.f32 %v418, 0.0
        %v449 = vmax.f32 %v419, 0.0
        %v450 = vadd.f32 %v446, %v448
        %v451 = vadd.f32 %v447, %v449
        %v452 = vmul.f32 %v450, 0.5
        %v453 = vmul.f32 %v451, 0.5
        %454 = vst [vmem:[#allocation4] sm:$0xff] %v452
        %455 = vst [vmem:[#allocation4 + $0x8] sm:$0xff] %v453
        %v456 = vpack.c.bf16 %v452, %v452
        %v457 = vpack.c.bf16 %v453, %v453
        %458 = vst [vmem:[#allocation3] sm:$0xf] %v456
        %459 = vst [vmem:[#allocation3 + $0x4] sm:$0xf] %v457
      $region97: #{_lambda_.9} parent=27 // pred_fallthru
        _
      // Predicated region
      $region98: #{_lambda_.9} parent=27 // pred_check
        %p460 = pneg %p189
      $region99: #{_lambda_.9} parent=27 // pred_check_branch
        %462 = sbr.rel (%p460) target = $region101
      $region100: #{_lambda_.9} parent=27 // pred_region
        %v463 = vld [vmem:[#allocation4] sm:$0xff]
        %v464 = vld [vmem:[#allocation4 + $0x8] sm:$0xff]
        %465 = vst [vmem:[%s5] sm:$0xff] %v463
        %466 = vst [vmem:[%s5 + $0x8] sm:$0xff] %v464
        %467 = vst [vmem:[%s4] sm:$0xff] %v418
        %468 = vst [vmem:[%s4 + $0x8] sm:$0xff] %v419
      $region101: #{_lambda_.9} parent=27 // pred_fallthru
        _
      %s469 = scalar_lea.vmem [#allocation3], 8
      %v470 = vld [vmem:[%s469] sm:$0xf]
      %v471 = vld [vmem:[%s469 + $0x4] sm:$0xf]
      %v474 = vunpack.c.l.b16 %v470
      %v475 = vunpack.c.l.b16 %v471
      %v476 = vpack.c.b16 %v475, %v474
      %478 = vmatpush.bf16.msra.mxu0 %v345
      %479 = vmatpush.bf16.msra.mxu0 %v343
      %480 = vmatpush.bf16.msra.mxu0 %v341
      %481 = vmatpush.bf16.msra.mxu0 %v339
      %482 = vmatpush.bf16.msra.mxu0 %v337
      %483 = vmatpush.bf16.msra.mxu0 %v335
      %484 = vmatpush.bf16.msra.mxu0 %v333
      %485 = vmatpush.bf16.msra.mxu0 %v331
      %486 = vmatmul.bf16.gmra.mxu0 %v476
      %v487 = vpop.f32.mrf.mxu0
      %v488 = vadd.f32 0.0, %v487
      %v489 = vpop.f32.mrf.mxu0
      %v490 = vadd.f32 0.0, %v489
      %491 = vdwg.mxu0
      %492 = vmatpush.bf16.msra.mxu0 %v346
      %493 = vmatpush.bf16.msra.mxu0 %v344
      %494 = vmatpush.bf16.msra.mxu0 %v342
      %495 = vmatpush.bf16.msra.mxu0 %v340
      %496 = vmatpush.bf16.msra.mxu0 %v338
      %497 = vmatpush.bf16.msra.mxu0 %v336
      %498 = vmatpush.bf16.msra.mxu0 %v334
      %499 = vmatpush.bf16.msra.mxu0 %v332
      %500 = vmatmul.bf16.gmra.mxu0 %v476
      %v501 = vpop.f32.mrf.mxu0
      %v502 = vadd.f32 0.0, %v501
      %v503 = vpop.f32.mrf.mxu0
      %v504 = vadd.f32 0.0, %v503
      %505 = vdwg.mxu0
      %v506 = vpack.c.bf16 %v490, %v488
      %507 = vmatpush.bf16.msra.mxu0 0
      %508 = vmatpush.bf16.msra.mxu0 0
      %509 = vmatpush.bf16.msra.mxu0 0
      %510 = vmatpush.bf16.msra.mxu0 0
      %511 = vmatpush.bf16.msra.mxu0 0
      %512 = vmatpush.bf16.msra.mxu0 0
      %513 = vmatpush.bf16.msra.mxu0 0
      %514 = vmatpush.bf16.msra.mxu0 %v506
      %515 = vmatmul.bf16.gmra.mxu0 %v399
      %v516 = vpop.f32.mrf.mxu0
      %v517 = vadd.f32 %v502, %v516
      %v518 = vpop.f32.mrf.mxu0
      %v519 = vadd.f32 %v504, %v518
      %520 = vdwg.mxu0
      %v521 = vadd.f32 %v517, %v416
      %v522 = vadd.f32 %v519, %v416
      // Predicated region
      $region102: #{_lambda_.9} parent=27 // pred_check
        %p523 = pneg %p171
      $region103: #{_lambda_.9} parent=27 // pred_check_branch
        %525 = sbr.rel (%p523) target = $region105
      $region104: #{_lambda_.9} parent=27 // pred_region
        %v526 = vmax.f32 %v521, 0.0
        %v527 = vmax.f32 %v522, 0.0
        %s528 = scalar_lea.vmem [#allocation4], 16
        %529 = vst [vmem:[%s528] sm:$0xff] %v526
        %530 = vst [vmem:[%s528 + $0x8] sm:$0xff] %v527
        %v531 = vpack.c.bf16 %v526, %v526
        %v532 = vpack.c.bf16 %v527, %v527
        %533 = vst [vmem:[%s469] sm:$0xf] %v531
        %534 = vst [vmem:[%s469 + $0x4] sm:$0xf] %v532
      $region105: #{_lambda_.9} parent=27 // pred_fallthru
        _
      // Predicated region
      $region106: #{_lambda_.9} parent=27 // pred_check
        _
      $region107: #{_lambda_.9} parent=27 // pred_check_branch
        %536 = sbr.rel (%p431) target = $region109
      $region108: #{_lambda_.9} parent=27 // pred_region
        %v537 = vmax.f32 %v521, 0.0
        %v538 = vmax.f32 %v522, 0.0
        %v539 = vpack.c.bf16 %v537, %v537
        %v540 = vpack.c.bf16 %v538, %v538
        %541 = vst [vmem:[%s469] sm:$0xf] %v539
        %542 = vst [vmem:[%s469 + $0x4] sm:$0xf] %v540
      $region109: #{_lambda_.9} parent=27 // pred_fallthru
        _
      // Predicated region
      $region110: #{_lambda_.9} parent=27 // pred_check
        _
      $region111: #{_lambda_.9} parent=27 // pred_check_branch
        %544 = sbr.rel (%p442) target = $region113
      $region112: #{_lambda_.9} parent=27 // pred_region
        %s545 = scalar_lea.vmem [#allocation4], 16
        %v546 = vld [vmem:[%s545] sm:$0xff]
        %v547 = vld [vmem:[%s545 + $0x8] sm:$0xff]
        %v548 = vmax.f32 %v521, 0.0
        %v549 = vmax.f32 %v522, 0.0
        %v550 = vadd.f32 %v546, %v548
        %v551 = vadd.f32 %v547, %v549
        %v552 = vmul.f32 %v550, 0.5
        %v553 = vmul.f32 %v551, 0.5
        %554 = vst [vmem:[%s545] sm:$0xff] %v552
        %555 = vst [vmem:[%s545 + $0x8] sm:$0xff] %v553
        %v556 = vpack.c.bf16 %v552, %v552
        %v557 = vpack.c.bf16 %v553, %v553
        %558 = vst [vmem:[%s469] sm:$0xf] %v556
        %559 = vst [vmem:[%s469 + $0x4] sm:$0xf] %v557
      $region113: #{_lambda_.9} parent=27 // pred_fallthru
        _
      // Predicated region
      $region114: #{_lambda_.9} parent=27 // pred_check
        %p560 = pneg %p189
      $region115: #{_lambda_.9} parent=27 // pred_check_branch
        %562 = sbr.rel (%p560) target = $region117
      $region116: #{_lambda_.9} parent=27 // pred_region
        %s563 = scalar_lea.vmem [#allocation4], 16
        %v564 = vld [vmem:[%s563] sm:$0xff]
        %v565 = vld [vmem:[%s563 + $0x8] sm:$0xff]
        %s566 = scalar_lea.vmem %s5, 16
        %567 = vst [vmem:[%s566] sm:$0xff] %v564
        %568 = vst [vmem:[%s566 + $0x8] sm:$0xff] %v565
        %s569 = scalar_lea.vmem %s4, 16
        %570 = vst [vmem:[%s569] sm:$0xff] %v521
        %571 = vst [vmem:[%s569 + $0x8] sm:$0xff] %v522
      $region117: #{_lambda_.9} parent=27 // pred_fallthru
        _
      // Predicated region
      $region118: #{_lambda_.9} parent=27 // pred_check
        %p572 = pneg %p82
      $region119: #{_lambda_.9} parent=27 // pred_check_branch
        %574 = sbr.rel (%p572) target = $region121
      $region120: #{_lambda_.9} parent=27 // pred_region
        _
      $region121: #{_lambda_.9} parent=27 // pred_fallthru
        _
      // Predicated region
      $region122: #{_lambda_.9} parent=27 // pred_check
        %p575 = pneg %p103
      $region123: #{_lambda_.9} parent=27 // pred_check_branch
        %577 = sbr.rel (%p575) target = $region125
      $region124: #{_lambda_.9} parent=27 // pred_region
        _
      $region125: #{_lambda_.9} parent=27 // pred_fallthru
        _
      // Predicated region
      $region126: #{_lambda_.9} parent=27 // pred_check
        %p578 = pneg %p82
      $region127: #{_lambda_.9} parent=27 // pred_check_branch
        %580 = sbr.rel (%p578) target = $region129
      $region128: #{_lambda_.9} parent=27 // pred_region
        _
      $region129: #{_lambda_.9} parent=27 // pred_fallthru
        _
      // Predicated region
      $region130: #{_lambda_.9} parent=27 // pred_check
        %p581 = pneg %p103
      $region131: #{_lambda_.9} parent=27 // pred_check_branch
        %583 = sbr.rel (%p581) target = $region133
      $region132: #{_lambda_.9} parent=27 // pred_region
        _
      $region133: #{_lambda_.9} parent=27 // pred_fallthru
        _
    $region28: #{_lambda_.9} parent=5 // pred_fallthru
      _
    %p584 = scmp.le.s32.totalorder 2, %s12
    // Predicated region
    $region134: #{_lambda_.9} parent=5 // pred_check
      %p585 = pneg %p584
    $region135: #{_lambda_.9} parent=5 // pred_check_branch
      %587 = sbr.rel (%p585) target = $region137
    $region136: #{_lambda_.9} parent=5 // pred_region
      %s588 = ssub.s32 %s12, 2
    $region137: #{_lambda_.9} parent=5 // pred_fallthru
      _
  $region6: #{_lambda_.9} parent=0 // loop_footer
    %s16 = sadd.s32 1, %s12
  $region7: #{_lambda_.9} parent=0 // loop_footer_branch
    %11 = sbr.rel target = $region3
  $region8: #{_lambda_.9} parent=0 // loop_exit
    _
  %589 = vsyncmov [#allocation5]
  %s590 = vpop.sfrf %589
  %p591 = scmp.eq.s32.totalorder %s590, 0
  %p592 = pneg %p591
  %594 = shalt.err (%p592)
  %s595 = scalar_lea.sflag [#allocation5], 1
  %596 = vsyncmov %s595
  %s597 = vpop.sfrf %596
  %p598 = scmp.eq.s32.totalorder %s597, 0
  %p599 = pneg %p598
  %601 = shalt.err (%p599)

// kernel: _lambda_.10
$region0: #{_lambda_.10}
  #allocation0 [shape = 'u32[]', space=smem, size = 0x4, offset = 0x4, fixed_abs, tag = 'smem constant byte address 0x4 - core index']
  #allocation1 [shape = 'u32[72,128]{1,0:T(1,128)}', space=vmem, size = 0x9000, scoped, tag = 'internal scratch']
  #allocation2 [shape = 'bf16[32,32]{1,0:T(8,128)(2,1)}', space=vmem, size = 0x2000, scoped, tag = 'scratch operand']
  #allocation3 [shape = 'bf16[2,32,128]{2,1,0:T(8,128)(2,1)}', space=vmem, size = 0x4000, scoped, tag = 'scratch operand']
  #allocation4 [shape = 'f32[2,32,128]{2,1,0:T(8,128)}', space=vmem, size = 0x8000, scoped, tag = 'scratch operand']
  #allocation5 [shape = 's32[2]{0}', space=sflag, size = 0x8, scoped, tag = 'scratch operand']
  #allocation6 [shape = 's32[]', space=sflag, size = 0x4, offset = 0, fixed_abs, tag = 'sflag constant byte address 0x0 - dummy sync flag']
  #allocation7 [shape = 's32[]', space=sflag, size = 0x4, offset = 0, fixed_abs, tag = 'sflag constant byte address 0x0 - dummy sync flag']
  %s0 = inlined_call_operand.vmem [shape: bf16[2,32,128], index: 0, kind: input, shape index: {}]
  %s1 = inlined_call_operand.vmem [shape: bf16[32,32], index: 1, kind: input, shape index: {}]
  %s2 = inlined_call_operand.vmem [shape: bf16[14,128,256], index: 2, kind: input, shape index: {}]
  %s3 = inlined_call_operand.vmem [shape: f32[14,1,128], index: 3, kind: input, shape index: {}]
  %s4 = inlined_call_operand.vmem [shape: f32[2,32,128], index: 4, kind: output, shape index: {0}]
  %s5 = inlined_call_operand.vmem [shape: f32[2,32,128], index: 5, kind: output, shape index: {1}]
  %6 = xla_tuple %s4, %s5
  %s7 = sld [smem:[#allocation0]]
  $region123: #{_lambda_.10} parent=0
    _
  %s9 = ssub.s32 1, %s7
  %s10 = scalar_select 0, %s9, %s7
  loop: start=0, step=1, limit=16
  $region2: #{_lambda_.10} parent=0 // loop_pre_header
    _
  $region3: #{_lambda_.10} parent=0 // loop_header
    %s12 = sphi 0, %s16
    %p13 = scmp.ge.s32.totalorder %s12, 16
    %s22 = sphi 0, %s24
    %s25 = sphi 0, %s22
    %s26 = sphi 0, %s25
    %s42 = sphi 0, %s26
    %s48 = sphi 0, %s50
    %s51 = sphi 0, %s48
    %s52 = sphi 0, %s51
    %s68 = sphi 0, %s52
    %s72 = sphi 0, %s72
    %s74 = sphi 0, %s72
    %s75 = sphi 0, %s74
    %s89 = sphi 0, %s75
    %s93 = sphi 0, %s93
    %s95 = sphi 0, %s93
    %s96 = sphi 0, %s95
    %s110 = sphi 0, %s96
  $region4: #{_lambda_.10} parent=0 // loop_header_branch
    %15 = sbr.rel (%p13) target = $region8
  $region5: #{_lambda_.10} parent=0 // loop_body
    %s17 = ssub.s32 %s12, 1
    %s18 = ssub.s32 %s12, 2
    %s19 = sadd.s32 %s12, 1
    %s20 = ssub.s32 %s12, %s19
    %p21 = scmp.eq.s32.totalorder %s20, 0
    %s23 = sadd.s32 %s22, 1
    %s24 = scalar_select %p21, %s22, %s23
    %p27 = pneg %p21
    %p28 = scmp.eq.s32.totalorder %s12, 13
    %p29 = por %p27, %p28
    %p30 = scmp.ne.s32.totalorder %s22, %s25
    %p31 = scmp.eq.s32.totalorder %s12, 0
    %p32 = por %p30, %p31
    %p33 = scmp.ne.s32.totalorder %s22, %s25
    %p34 = scmp.eq.s32.totalorder %s17, 13
    %p35 = por %p33, %p34
    %p36 = scmp.ne.s32.totalorder %s25, %s26
    %p37 = scmp.eq.s32.totalorder %s17, 0
    %p38 = por %p36, %p37
    %p39 = scmp.ne.s32.totalorder %s25, %s26
    %p40 = scmp.eq.s32.totalorder %s18, 13
    %p41 = por %p39, %p40
    %p43 = scmp.ne.s32.totalorder %s26, %s42
    %p44 = scmp.eq.s32.totalorder %s18, 0
    %p45 = por %p43, %p44
    %s46 = ssub.s32 %s12, %s19
    %p47 = scmp.eq.s32.totalorder %s46, 0
    %s49 = sadd.s32 %s48, 1
    %s50 = scalar_select %p47, %s48, %s49
    %p53 = pneg %p47
    %p54 = scmp.eq.s32.totalorder %s12, 13
    %p55 = por %p53, %p54
    %p56 = scmp.ne.s32.totalorder %s48, %s51
    %p57 = scmp.eq.s32.totalorder %s12, 0
    %p58 = por %p56, %p57
    %p59 = scmp.ne.s32.totalorder %s48, %s51
    %p60 = scmp.eq.s32.totalorder %s17, 13
    %p61 = por %p59, %p60
    %p62 = scmp.ne.s32.totalorder %s51, %s52
    %p63 = scmp.eq.s32.totalorder %s17, 0
    %p64 = por %p62, %p63
    %p65 = scmp.ne.s32.totalorder %s51, %s52
    %p66 = scmp.eq.s32.totalorder %s18, 13
    %p67 = por %p65, %p66
    %p69 = scmp.ne.s32.totalorder %s52, %s68
    %p70 = scmp.eq.s32.totalorder %s18, 0
    %p71 = por %p69, %p70
    %s73 = sadd.s32 %s72, 1
    %p76 = scmp.eq.s32.totalorder %s12, 13
    %p77 = scmp.ne.s32.totalorder %s72, %s74
    %p78 = scmp.eq.s32.totalorder %s12, 0
    %p79 = por %p77, %p78
    %p80 = scmp.ne.s32.totalorder %s72, %s74
    %p81 = scmp.eq.s32.totalorder %s17, 13
    %p82 = por %p80, %p81
    %p83 = scmp.ne.s32.totalorder %s74, %s75
    %p84 = scmp.eq.s32.totalorder %s17, 0
    %p85 = por %p83, %p84
    %p86 = scmp.ne.s32.totalorder %s74, %s75
    %p87 = scmp.eq.s32.totalorder %s18, 13
    %p88 = por %p86, %p87
    %p90 = scmp.ne.s32.totalorder %s75, %s89
    %p91 = scmp.eq.s32.totalorder %s18, 0
    %p92 = por %p90, %p91
    %s94 = sadd.s32 %s93, 1
    %p97 = scmp.eq.s32.totalorder %s12, 13
    %p98 = scmp.ne.s32.totalorder %s93, %s95
    %p99 = scmp.eq.s32.totalorder %s12, 0
    %p100 = por %p98, %p99
    %p101 = scmp.ne.s32.totalorder %s93, %s95
    %p102 = scmp.eq.s32.totalorder %s17, 13
    %p103 = por %p101, %p102
    %p104 = scmp.ne.s32.totalorder %s95, %s96
    %p105 = scmp.eq.s32.totalorder %s17, 0
    %p106 = por %p104, %p105
    %p107 = scmp.ne.s32.totalorder %s95, %s96
    %p108 = scmp.eq.s32.totalorder %s18, 13
    %p109 = por %p107, %p108
    %p111 = scmp.ne.s32.totalorder %s96, %s110
    %p112 = scmp.eq.s32.totalorder %s18, 0
    %p113 = por %p111, %p112
    %p114 = scmp.le.s32.totalorder 1, %s12
    %p115 = scmp.lt.s32.totalorder %s12, 15
    %p116 = pnand %p114, %p115
    %p117 = pneg %p116
    // Predicated region
    $region9: #{_lambda_.10} parent=5 // pred_check
      _
    $region10: #{_lambda_.10} parent=5 // pred_check_branch
      %119 = sbr.rel (%p116) target = $region12
    $region11: #{_lambda_.10} parent=5 // pred_region
      %s120 = ssub.s32 %s12, 1
    $region12: #{_lambda_.10} parent=5 // pred_fallthru
      _
    %p121 = scmp.lt.s32.totalorder %s12, 14
    // Predicated region
    $region13: #{_lambda_.10} parent=5 // pred_check
      %p122 = pneg %p121
    $region14: #{_lambda_.10} parent=5 // pred_check_branch
      %124 = sbr.rel (%p122) target = $region16
    $region15: #{_lambda_.10} parent=5 // pred_region
      // Predicated region
      $region17: #{_lambda_.10} parent=15 // pred_check
        %p125 = pneg %p32
      $region18: #{_lambda_.10} parent=15 // pred_check_branch
        %127 = sbr.rel (%p125) target = $region20
      $region19: #{_lambda_.10} parent=15 // pred_region
        %p128 = scmp.lt.s32.totalorder %s12, 13
        %s129 = scalar_select %p128, %s12, 13
        %s130 = smul.addr %s129, 32
        %s131 = smul.addr %s130, 4
        %s132 = scalar_lea.vmem %s2, %s131
      $region20: #{_lambda_.10} parent=15 // pred_fallthru
        _
      // Predicated region
      $region21: #{_lambda_.10} parent=15 // pred_check
        %p133 = pneg %p58
      $region22: #{_lambda_.10} parent=15 // pred_check_branch
        %135 = sbr.rel (%p133) target = $region24
      $region23: #{_lambda_.10} parent=15 // pred_region
        %p136 = scmp.lt.s32.totalorder %s12, 13
        %s137 = scalar_select %p136, %s12, 13
        %s138 = scalar_lea.vmem %s3, %s137
      $region24: #{_lambda_.10} parent=15 // pred_fallthru
        _
    $region16: #{_lambda_.10} parent=5 // pred_fallthru
      _
    %p139 = scmp.le.s32.totalorder 1, %s12
    %p140 = scmp.lt.s32.totalorder %s12, 15
    %p141 = pnand %p139, %p140
    %p142 = pneg %p141
    // Predicated region
    $region25: #{_lambda_.10} parent=5 // pred_check
      _
    $region26: #{_lambda_.10} parent=5 // pred_check_branch
      %144 = sbr.rel (%p141) target = $region28
    $region27: #{_lambda_.10} parent=5 // pred_region
      %s145 = ssub.s32 %s12, 1
      %p146 = scmp.lt.s32.totalorder %s17, 13
      %s147 = scalar_select %p146, %s17, 13
      %s148 = smul.addr %s147, 32
      %s149 = smul.addr %s148, 4
      %s150 = scalar_lea.vmem %s2, %s149
      %p151 = pneg %p38
      %p152 = pneg %p35
      %p153 = scmp.lt.s32.totalorder %s17, 13
      %s154 = scalar_select %p153, %s17, 13
      %s155 = scalar_lea.vmem %s3, %s154
      %p156 = pneg %p64
      %p157 = pneg %p61
      %p158 = pneg %p85
      %p159 = pneg %p82
      %p160 = pneg %p106
      %p161 = pneg %p103
      %p162 = scmp.lt.s32.totalorder %s17, 13
      %s163 = scalar_select %p162, %s17, 13
      %s164 = smul.addr %s163, 32
      %s165 = smul.addr %s164, 4
      %s166 = scalar_lea.vmem %s2, %s165
      %p167 = scmp.lt.s32.totalorder %s17, 13
      %s168 = scalar_select %p167, %s17, 13
      %s169 = scalar_lea.vmem %s3, %s168
      %p171 = scmp.eq.s32.totalorder %s17, 0
      %p172 = scmp.gt.s32.totalorder %s17, 0
      %p173 = scmp.lt.s32.totalorder %s17, 13
      %p174 = pnand %p172, %p173
      %p175 = pneg %p174
      %p176 = scmp.lt.s32.totalorder %s17, 0
      %s177 = ssub.s32 0, %s17
      %s178 = scalar_select %p176, %s177, %s17
      %s179 = sand.u32 %s178, 1
      %s180 = ssub.s32 0, %s179
      %s181 = scalar_select %p176, %s180, %s179
      %p182 = scmp.ne.s32.totalorder %s181, 0
      %p183 = scmp.lt.s32.totalorder %s181, 0
      %p184 = pnand %p183, %p182
      %p185 = pneg %p184
      %s186 = sadd.s32 %s181, 2
      %s187 = scalar_select %p185, %s186, %s181
      %p188 = scmp.eq.s32.totalorder %s187, 1
      %p189 = scmp.eq.s32.totalorder %s17, 13
      // Predicated region
      $region29: #{_lambda_.10} parent=27 // pred_check
        %p190 = pneg %p171
      $region30: #{_lambda_.10} parent=27 // pred_check_branch
        %192 = sbr.rel (%p190) target = $region32
      $region31: #{_lambda_.10} parent=27 // pred_region
        // Predicated region
        $region33: #{_lambda_.10} parent=31 // pred_check
          _
        $region34: #{_lambda_.10} parent=31 // pred_check_branch
          %194 = sbr.rel (0) target = $region36
        $region35: #{_lambda_.10} parent=31 // pred_region
          loop: start=0, step=1, limit=1
          $region37: #{_lambda_.10} parent=35 // loop_pre_header
            _
          $region38: #{_lambda_.10} parent=35 // loop_header
            %s196 = sphi 0, %s200
            %p197 = scmp.ge.s32.totalorder %s196, 1
            %s201 = sphi %s1, %s1
            %s202 = sphi [#allocation2], [#allocation2]
          $region39: #{_lambda_.10} parent=35 // loop_header_branch
            %199 = sbr.rel (%p197) target = $region43
          $region40: #{_lambda_.10} parent=35 // loop_body
            %v203 = vld [vmem:[%s201] sm:$0xff]
            %204 = vst [vmem:[%s202] sm:$0xff] %v203
            %v205 = vld [vmem:[%s201 + $0x8] sm:$0xff]
            %206 = vst [vmem:[%s202 + $0x8] sm:$0xff] %v205
          $region41: #{_lambda_.10} parent=35 // loop_footer
            %s200 = sadd.s32 1, %s196
          $region42: #{_lambda_.10} parent=35 // loop_footer_branch
            %195 = sbr.rel target = $region38
          $region43: #{_lambda_.10} parent=35 // loop_exit
            _
        $region36: #{_lambda_.10} parent=31 // pred_fallthru
          _
        // Predicated region
        $region44: #{_lambda_.10} parent=31 // pred_check
          _
        $region45: #{_lambda_.10} parent=31 // pred_check_branch
          %208 = sbr.rel target = $region47
        $region46: #{_lambda_.10} parent=31 // pred_region
          _
        $region47: #{_lambda_.10} parent=31 // pred_fallthru
          _
        // Predicated region
        $region48: #{_lambda_.10} parent=31 // pred_check
          _
        $region49: #{_lambda_.10} parent=31 // pred_check_branch
          %211 = sbr.rel (0) target = $region51
        $region50: #{_lambda_.10} parent=31 // pred_region
          %212 = vsyncadd [#allocation5], 256
        $region51: #{_lambda_.10} parent=31 // pred_fallthru
          _
        %s213 = scalar_lea.sflag [#allocation5], 1
        // Predicated region
        $region52: #{_lambda_.10} parent=31 // pred_check
          _
        $region53: #{_lambda_.10} parent=31 // pred_check_branch
          %215 = sbr.rel (0) target = $region55
        $region54: #{_lambda_.10} parent=31 // pred_region
          loop: start=0, step=1, limit=1
          $region56: #{_lambda_.10} parent=54 // loop_pre_header
            _
          $region57: #{_lambda_.10} parent=54 // loop_header
            %s217 = sphi 0, %s221
            %p218 = scmp.ge.s32.totalorder %s217, 1
            %s222 = sphi %s0, %s0
            %s223 = sphi [#allocation3], [#allocation3]
          $region58: #{_lambda_.10} parent=54 // loop_header_branch
            %220 = sbr.rel (%p218) target = $region62
          $region59: #{_lambda_.10} parent=54 // loop_body
            %v224 = vld [vmem:[%s222] sm:$0xff]
            %225 = vst [vmem:[%s223] sm:$0xff] %v224
            %v226 = vld [vmem:[%s222 + $0x8] sm:$0xff]
            %227 = vst [vmem:[%s223 + $0x8] sm:$0xff] %v226
            %v228 = vld [vmem:[%s222 + $0x10] sm:$0xff]
            %229 = vst [vmem:[%s223 + $0x10] sm:$0xff] %v228
            %v230 = vld [vmem:[%s222 + $0x18] sm:$0xff]
            %231 = vst [vmem:[%s223 + $0x18] sm:$0xff] %v230
          $region60: #{_lambda_.10} parent=54 // loop_footer
            %s221 = sadd.s32 1, %s217
          $region61: #{_lambda_.10} parent=54 // loop_footer_branch
            %216 = sbr.rel target = $region57
          $region62: #{_lambda_.10} parent=54 // loop_exit
            _
        $region55: #{_lambda_.10} parent=31 // pred_fallthru
          _
        // Predicated region
        $region63: #{_lambda_.10} parent=31 // pred_check
          _
        $region64: #{_lambda_.10} parent=31 // pred_check_branch
          %233 = sbr.rel target = $region66
        $region65: #{_lambda_.10} parent=31 // pred_region
          _
        $region66: #{_lambda_.10} parent=31 // pred_fallthru
          _
        // Predicated region
        $region67: #{_lambda_.10} parent=31 // pred_check
          _
        $region68: #{_lambda_.10} parent=31 // pred_check_branch
          %236 = sbr.rel (0) target = $region70
        $region69: #{_lambda_.10} parent=31 // pred_region
          %237 = vsyncadd %s213, 512
        $region70: #{_lambda_.10} parent=31 // pred_fallthru
          _
        %s238 = smul.u32 4, 4
        %s239 = smul.u32 %s238, 1
        %s240 = sshll.u32 %s239, 4
        %241 = dma.done [#allocation5], %s240
        %s242 = smul.u32 4, 2
        %s243 = smul.u32 %s242, 4
        %s244 = smul.u32 %s243, 1
        %s245 = sshll.u32 %s244, 4
        %246 = dma.done %s213, %s245
      $region32: #{_lambda_.10} parent=27 // pred_fallthru
        _
      %v247 = vld [vmem:[%s166] sm:$0xff]
      %v248 = vld [vmem:[%s166 + $0x8] sm:$0xff]
      %v249 = vld [vmem:[%s166 + $0x10] sm:$0xff]
      %v250 = vld [vmem:[%s166 + $0x18] sm:$0xff]
      %v251 = vld [vmem:[%s166 + $0x20] sm:$0xff]
      %v252 = vld [vmem:[%s166 + $0x28] sm:$0xff]
      %v253 = vld [vmem:[%s166 + $0x30] sm:$0xff]
      %v254 = vld [vmem:[%s166 + $0x38] sm:$0xff]
      %v255 = vld [vmem:[%s166 + $0x40] sm:$0xff]
      %v256 = vld [vmem:[%s166 + $0x48] sm:$0xff]
      %v257 = vld [vmem:[%s166 + $0x50] sm:$0xff]
      %v258 = vld [vmem:[%s166 + $0x58] sm:$0xff]
      %v259 = vld [vmem:[%s166 + $0x60] sm:$0xff]
      %v260 = vld [vmem:[%s166 + $0x68] sm:$0xff]
      %v261 = vld [vmem:[%s166 + $0x70] sm:$0xff]
      %v262 = vld [vmem:[%s166 + $0x78] sm:$0xff]
      %v263 = vld [vmem:[%s169] sm:$0x1]
      %v264 = vld [vmem:[#allocation2] sm:$0xf]
      %v265 = vld [vmem:[#allocation2 + $0x4] sm:$0xf]
      %v266 = vld [vmem:[#allocation2 + $0x8] sm:$0xf]
      %v267 = vld [vmem:[#allocation2 + $0xc] sm:$0xf]
      %v268 = vld [vmem:[#allocation3] sm:$0xf]
      %v269 = vld [vmem:[#allocation3 + $0x4] sm:$0xf]
      %v270 = vld [vmem:[#allocation3 + $0x8] sm:$0xf]
      %v271 = vld [vmem:[#allocation3 + $0xc] sm:$0xf]
      %v276 = vunpack.c.l.b16 %v268
      %v277 = vunpack.c.l.b16 %v269
      %v278 = vunpack.c.l.b16 %v270
      %v279 = vunpack.c.l.b16 %v271
      %v280 = vpack.c.b16 %v277, %v276
      %v281 = vpack.c.b16 %v279, %v278
      %v300 = vunpack.c.l.b16 %v247
      %v301 = vunpack.c.h.b16 %v247
      %v302 = vunpack.c.l.b16 %v248
      %v303 = vunpack.c.h.b16 %v248
      %v304 = vunpack.c.l.b16 %v249
      %v305 = vunpack.c.h.b16 %v249
      %v306 = vunpack.c.l.b16 %v250
      %v307 = vunpack.c.h.b16 %v250
      %v308 = vunpack.c.l.b16 %v251
      %v309 = vunpack.c.h.b16 %v251
      %v310 = vunpack.c.l.b16 %v252
      %v311 = vunpack.c.h.b16 %v252
      %v312 = vunpack.c.l.b16 %v253
      %v313 = vunpack.c.h.b16 %v253
      %v314 = vunpack.c.l.b16 %v254
      %v315 = vunpack.c.h.b16 %v254
      %v316 = vunpack.c.l.b16 %v255
      %v317 = vunpack.c.h.b16 %v255
      %v318 = vunpack.c.l.b16 %v256
      %v319 = vunpack.c.h.b16 %v256
      %v320 = vunpack.c.l.b16 %v257
      %v321 = vunpack.c.h.b16 %v257
      %v322 = vunpack.c.l.b16 %v258
      %v323 = vunpack.c.h.b16 %v258
      %v324 = vunpack.c.l.b16 %v259
      %v325 = vunpack.c.h.b16 %v259
      %v326 = vunpack.c.l.b16 %v260
      %v327 = vunpack.c.h.b16 %v260
      %v328 = vunpack.c.l.b16 %v261
      %v329 = vunpack.c.h.b16 %v261
      %v330 = vunpack.c.l.b16 %v262
      %v331 = vunpack.c.h.b16 %v262
      %v332 = vpack.c.b16 %v302, %v300
      %v333 = vpack.c.b16 %v303, %v301
      %v334 = vpack.c.b16 %v306, %v304
      %v335 = vpack.c.b16 %v307, %v305
      %v336 = vpack.c.b16 %v310, %v308
      %v337 = vpack.c.b16 %v311, %v309
      %v338 = vpack.c.b16 %v314, %v312
      %v339 = vpack.c.b16 %v315, %v313
      %v340 = vpack.c.b16 %v318, %v316
      %v341 = vpack.c.b16 %v319, %v317
      %v342 = vpack.c.b16 %v322, %v320
      %v343 = vpack.c.b16 %v323, %v321
      %v344 = vpack.c.b16 %v326, %v324
      %v345 = vpack.c.b16 %v327, %v325
      %v346 = vpack.c.b16 %v330, %v328
      %v347 = vpack.c.b16 %v331, %v329
      %364 = vmatpush.bf16.msra.mxu0 %v346
      %365 = vmatpush.bf16.msra.mxu0 %v344
      %366 = vmatpush.bf16.msra.mxu0 %v342
      %367 = vmatpush.bf16.msra.mxu0 %v340
      %368 = vmatpush.bf16.msra.mxu0 %v338
      %369 = vmatpush.bf16.msra.mxu0 %v336
      %370 = vmatpush.bf16.msra.mxu0 %v334
      %371 = vmatpush.bf16.msra.mxu0 %v332
      %372 = vmatmul.bf16.gmra.mxu0 %v280
      %v373 = vpop.f32.mrf.mxu0
      %v374 = vadd.f32 0.0, %v373
      %v375 = vpop.f32.mrf.mxu0
      %v376 = vadd.f32 0.0, %v375
      %377 = vmatmul.bf16.gmra.mxu0 %v281
      %v378 = vpop.f32.mrf.mxu0
      %v379 = vadd.f32 0.0, %v378
      %v380 = vpop.f32.mrf.mxu0
      %v381 = vadd.f32 0.0, %v380
      %382 = vdwg.mxu0
      %383 = vmatpush.bf16.msra.mxu0 %v347
      %384 = vmatpush.bf16.msra.mxu0 %v345
      %385 = vmatpush.bf16.msra.mxu0 %v343
      %386 = vmatpush.bf16.msra.mxu0 %v341
      %387 = vmatpush.bf16.msra.mxu0 %v339
      %388 = vmatpush.bf16.msra.mxu0 %v337
      %389 = vmatpush.bf16.msra.mxu0 %v335
      %390 = vmatpush.bf16.msra.mxu0 %v333
      %391 = vmatmul.bf16.gmra.mxu0 %v280
      %v392 = vpop.f32.mrf.mxu0
      %v393 = vadd.f32 0.0, %v392
      %v394 = vpop.f32.mrf.mxu0
      %v395 = vadd.f32 0.0, %v394
      %396 = vmatmul.bf16.gmra.mxu0 %v281
      %v397 = vpop.f32.mrf.mxu0
      %v398 = vadd.f32 0.0, %v397
      %v399 = vpop.f32.mrf.mxu0
      %v400 = vadd.f32 0.0, %v399
      %401 = vdwg.mxu0
      %v402 = vpack.c.bf16 %v376, %v374
      %v403 = vpack.c.bf16 %v381, %v379
      %v408 = vunpack.c.l.b16 %v264
      %v409 = vunpack.c.l.b16 %v265
      %v410 = vunpack.c.l.b16 %v266
      %v411 = vunpack.c.l.b16 %v267
      %v412 = vpack.c.b16 %v409, %v408
      %v413 = vpack.c.b16 %v411, %v410
      %vm414 = vcmask 261120
      %v416 = vsel %vm414, %v412, 0
      %v419 = vsel %vm414, %v413, 0
      %421 = vmatpush.bf16.msra.mxu0 0
      %422 = vmatpush.bf16.msra.mxu0 0
      %423 = vmatpush.bf16.msra.mxu0 0
      %424 = vmatpush.bf16.msra.mxu0 0
      %425 = vmatpush.bf16.msra.mxu0 0
      %426 = vmatpush.bf16.msra.mxu0 0
      %427 = vmatpush.bf16.msra.mxu0 %v403
      %428 = vmatpush.bf16.msra.mxu0 %v402
      %429 = vmatmul.bf16.gmra.mxu0 %v416
      %v430 = vpop.f32.mrf.mxu0
      %v431 = vadd.f32 %v393, %v430
      %v432 = vpop.f32.mrf.mxu0
      %v433 = vadd.f32 %v395, %v432
      %434 = vmatmul.bf16.gmra.mxu0 %v419
      %v435 = vpop.f32.mrf.mxu0
      %v436 = vadd.f32 %v398, %v435
      %v437 = vpop.f32.mrf.mxu0
      %v438 = vadd.f32 %v400, %v437
      %439 = vdwg.mxu0
      %v441 = vperm.slane %v263, 0
      %v443 = vadd.f32 %v431, %v441
      %v444 = vadd.f32 %v433, %v441
      %v445 = vadd.f32 %v436, %v441
      %v446 = vadd.f32 %v438, %v441
      // Predicated region
      $region71: #{_lambda_.10} parent=27 // pred_check
        %p447 = pneg %p171
      $region72: #{_lambda_.10} parent=27 // pred_check_branch
        %449 = sbr.rel (%p447) target = $region74
      $region73: #{_lambda_.10} parent=27 // pred_region
        %v450 = vmax.f32 %v443, 0.0
        %v451 = vmax.f32 %v444, 0.0
        %v452 = vmax.f32 %v445, 0.0
        %v453 = vmax.f32 %v446, 0.0
        %454 = vst [vmem:[#allocation4] sm:$0xff] %v450
        %455 = vst [vmem:[#allocation4 + $0x8] sm:$0xff] %v451
        %456 = vst [vmem:[#allocation4 + $0x10] sm:$0xff] %v452
        %457 = vst [vmem:[#allocation4 + $0x18] sm:$0xff] %v453
        %v458 = vpack.c.bf16 %v450, %v450
        %v459 = vpack.c.bf16 %v451, %v451
        %v460 = vpack.c.bf16 %v452, %v452
        %v461 = vpack.c.bf16 %v453, %v453
        %462 = vst [vmem:[#allocation3] sm:$0xf] %v458
        %463 = vst [vmem:[#allocation3 + $0x4] sm:$0xf] %v459
        %464 = vst [vmem:[#allocation3 + $0x8] sm:$0xf] %v460
        %465 = vst [vmem:[#allocation3 + $0xc] sm:$0xf] %v461
      $region74: #{_lambda_.10} parent=27 // pred_fallthru
        _
      %p466 = pnand %p175, %p188
      %p467 = pneg %p466
      // Predicated region
      $region75: #{_lambda_.10} parent=27 // pred_check
        _
      $region76: #{_lambda_.10} parent=27 // pred_check_branch
        %469 = sbr.rel (%p466) target = $region78
      $region77: #{_lambda_.10} parent=27 // pred_region
        %v470 = vmax.f32 %v443, 0.0
        %v471 = vmax.f32 %v444, 0.0
        %v472 = vmax.f32 %v445, 0.0
        %v473 = vmax.f32 %v446, 0.0
        %v474 = vpack.c.bf16 %v470, %v470
        %v475 = vpack.c.bf16 %v471, %v471
        %v476 = vpack.c.bf16 %v472, %v472
        %v477 = vpack.c.bf16 %v473, %v473
        %478 = vst [vmem:[#allocation3] sm:$0xf] %v474
        %479 = vst [vmem:[#allocation3 + $0x4] sm:$0xf] %v475
        %480 = vst [vmem:[#allocation3 + $0x8] sm:$0xf] %v476
        %481 = vst [vmem:[#allocation3 + $0xc] sm:$0xf] %v477
      $region78: #{_lambda_.10} parent=27 // pred_fallthru
        _
      %p482 = scmp.ne.s32.totalorder %s187, 1
      %p483 = pnand %p175, %p482
      %p484 = pneg %p483
      // Predicated region
      $region79: #{_lambda_.10} parent=27 // pred_check
        _
      $region80: #{_lambda_.10} parent=27 // pred_check_branch
        %486 = sbr.rel (%p483) target = $region82
      $region81: #{_lambda_.10} parent=27 // pred_region
        %v487 = vld [vmem:[#allocation4] sm:$0xff]
        %v488 = vld [vmem:[#allocation4 + $0x8] sm:$0xff]
        %v489 = vld [vmem:[#allocation4 + $0x10] sm:$0xff]
        %v490 = vld [vmem:[#allocation4 + $0x18] sm:$0xff]
        %v491 = vmax.f32 %v443, 0.0
        %v492 = vmax.f32 %v444, 0.0
        %v493 = vmax.f32 %v445, 0.0
        %v494 = vmax.f32 %v446, 0.0
        %v495 = vadd.f32 %v487, %v491
        %v496 = vadd.f32 %v488, %v492
        %v497 = vadd.f32 %v489, %v493
        %v498 = vadd.f32 %v490, %v494
        %v499 = vmul.f32 %v495, 0.5
        %v500 = vmul.f32 %v496, 0.5
        %v501 = vmul.f32 %v497, 0.5
        %v502 = vmul.f32 %v498, 0.5
        %503 = vst [vmem:[#allocation4] sm:$0xff] %v499
        %504 = vst [vmem:[#allocation4 + $0x8] sm:$0xff] %v500
        %505 = vst [vmem:[#allocation4 + $0x10] sm:$0xff] %v501
        %506 = vst [vmem:[#allocation4 + $0x18] sm:$0xff] %v502
        %v507 = vpack.c.bf16 %v499, %v499
        %v508 = vpack.c.bf16 %v500, %v500
        %v509 = vpack.c.bf16 %v501, %v501
        %v510 = vpack.c.bf16 %v502, %v502
        %511 = vst [vmem:[#allocation3] sm:$0xf] %v507
        %512 = vst [vmem:[#allocation3 + $0x4] sm:$0xf] %v508
        %513 = vst [vmem:[#allocation3 + $0x8] sm:$0xf] %v509
        %514 = vst [vmem:[#allocation3 + $0xc] sm:$0xf] %v510
      $region82: #{_lambda_.10} parent=27 // pred_fallthru
        _
      // Predicated region
      $region83: #{_lambda_.10} parent=27 // pred_check
        %p515 = pneg %p189
      $region84: #{_lambda_.10} parent=27 // pred_check_branch
        %517 = sbr.rel (%p515) target = $region86
      $region85: #{_lambda_.10} parent=27 // pred_region
        %v518 = vld [vmem:[#allocation4] sm:$0xff]
        %v519 = vld [vmem:[#allocation4 + $0x8] sm:$0xff]
        %v520 = vld [vmem:[#allocation4 + $0x10] sm:$0xff]
        %v521 = vld [vmem:[#allocation4 + $0x18] sm:$0xff]
        %522 = vst [vmem:[%s5] sm:$0xff] %v518
        %523 = vst [vmem:[%s5 + $0x8] sm:$0xff] %v519
        %524 = vst [vmem:[%s5 + $0x10] sm:$0xff] %v520
        %525 = vst [vmem:[%s5 + $0x18] sm:$0xff] %v521
        %526 = vst [vmem:[%s4] sm:$0xff] %v443
        %527 = vst [vmem:[%s4 + $0x8] sm:$0xff] %v444
        %528 = vst [vmem:[%s4 + $0x10] sm:$0xff] %v445
        %529 = vst [vmem:[%s4 + $0x18] sm:$0xff] %v446
      $region86: #{_lambda_.10} parent=27 // pred_fallthru
        _
      %s530 = scalar_lea.vmem [#allocation3], 16
      %v531 = vld [vmem:[%s530] sm:$0xf]
      %v532 = vld [vmem:[%s530 + $0x4] sm:$0xf]
      %v533 = vld [vmem:[%s530 + $0x8] sm:$0xf]
      %v534 = vld [vmem:[%s530 + $0xc] sm:$0xf]
      %v539 = vunpack.c.l.b16 %v531
      %v540 = vunpack.c.l.b16 %v532
      %v541 = vunpack.c.l.b16 %v533
      %v542 = vunpack.c.l.b16 %v534
      %v543 = vpack.c.b16 %v540, %v539
      %v544 = vpack.c.b16 %v542, %v541
      %547 = vmatpush.bf16.msra.mxu0 %v346
      %548 = vmatpush.bf16.msra.mxu0 %v344
      %549 = vmatpush.bf16.msra.mxu0 %v342
      %550 = vmatpush.bf16.msra.mxu0 %v340
      %551 = vmatpush.bf16.msra.mxu0 %v338
      %552 = vmatpush.bf16.msra.mxu0 %v336
      %553 = vmatpush.bf16.msra.mxu0 %v334
      %554 = vmatpush.bf16.msra.mxu0 %v332
      %555 = vmatmul.bf16.gmra.mxu0 %v543
      %v556 = vpop.f32.mrf.mxu0
      %v557 = vadd.f32 0.0, %v556
      %v558 = vpop.f32.mrf.mxu0
      %v559 = vadd.f32 0.0, %v558
      %560 = vmatmul.bf16.gmra.mxu0 %v544
      %v561 = vpop.f32.mrf.mxu0
      %v562 = vadd.f32 0.0, %v561
      %v563 = vpop.f32.mrf.mxu0
      %v564 = vadd.f32 0.0, %v563
      %565 = vdwg.mxu0
      %566 = vmatpush.bf16.msra.mxu0 %v347
      %567 = vmatpush.bf16.msra.mxu0 %v345
      %568 = vmatpush.bf16.msra.mxu0 %v343
      %569 = vmatpush.bf16.msra.mxu0 %v341
      %570 = vmatpush.bf16.msra.mxu0 %v339
      %571 = vmatpush.bf16.msra.mxu0 %v337
      %572 = vmatpush.bf16.msra.mxu0 %v335
      %573 = vmatpush.bf16.msra.mxu0 %v333
      %574 = vmatmul.bf16.gmra.mxu0 %v543
      %v575 = vpop.f32.mrf.mxu0
      %v576 = vadd.f32 0.0, %v575
      %v577 = vpop.f32.mrf.mxu0
      %v578 = vadd.f32 0.0, %v577
      %579 = vmatmul.bf16.gmra.mxu0 %v544
      %v580 = vpop.f32.mrf.mxu0
      %v581 = vadd.f32 0.0, %v580
      %v582 = vpop.f32.mrf.mxu0
      %v583 = vadd.f32 0.0, %v582
      %584 = vdwg.mxu0
      %v585 = vpack.c.bf16 %v559, %v557
      %v586 = vpack.c.bf16 %v564, %v562
      %587 = vmatpush.bf16.msra.mxu0 0
      %588 = vmatpush.bf16.msra.mxu0 0
      %589 = vmatpush.bf16.msra.mxu0 0
      %590 = vmatpush.bf16.msra.mxu0 0
      %591 = vmatpush.bf16.msra.mxu0 0
      %592 = vmatpush.bf16.msra.mxu0 0
      %593 = vmatpush.bf16.msra.mxu0 %v586
      %594 = vmatpush.bf16.msra.mxu0 %v585
      %595 = vmatmul.bf16.gmra.mxu0 %v416
      %v596 = vpop.f32.mrf.mxu0
      %v597 = vadd.f32 %v576, %v596
      %v598 = vpop.f32.mrf.mxu0
      %v599 = vadd.f32 %v578, %v598
      %600 = vmatmul.bf16.gmra.mxu0 %v419
      %v601 = vpop.f32.mrf.mxu0
      %v602 = vadd.f32 %v581, %v601
      %v603 = vpop.f32.mrf.mxu0
      %v604 = vadd.f32 %v583, %v603
      %605 = vdwg.mxu0
      %v606 = vadd.f32 %v597, %v441
      %v607 = vadd.f32 %v599, %v441
      %v608 = vadd.f32 %v602, %v441
      %v609 = vadd.f32 %v604, %v441
      // Predicated region
      $region87: #{_lambda_.10} parent=27 // pred_check
        %p610 = pneg %p171
      $region88: #{_lambda_.10} parent=27 // pred_check_branch
        %612 = sbr.rel (%p610) target = $region90
      $region89: #{_lambda_.10} parent=27 // pred_region
        %v613 = vmax.f32 %v606, 0.0
        %v614 = vmax.f32 %v607, 0.0
        %v615 = vmax.f32 %v608, 0.0
        %v616 = vmax.f32 %v609, 0.0
        %s617 = scalar_lea.vmem [#allocation4], 32
        %618 = vst [vmem:[%s617] sm:$0xff] %v613
        %619 = vst [vmem:[%s617 + $0x8] sm:$0xff] %v614
        %620 = vst [vmem:[%s617 + $0x10] sm:$0xff] %v615
        %621 = vst [vmem:[%s617 + $0x18] sm:$0xff] %v616
        %v622 = vpack.c.bf16 %v613, %v613
        %v623 = vpack.c.bf16 %v614, %v614
        %v624 = vpack.c.bf16 %v615, %v615
        %v625 = vpack.c.bf16 %v616, %v616
        %626 = vst [vmem:[%s530] sm:$0xf] %v622
        %627 = vst [vmem:[%s530 + $0x4] sm:$0xf] %v623
        %628 = vst [vmem:[%s530 + $0x8] sm:$0xf] %v624
        %629 = vst [vmem:[%s530 + $0xc] sm:$0xf] %v625
      $region90: #{_lambda_.10} parent=27 // pred_fallthru
        _
      // Predicated region
      $region91: #{_lambda_.10} parent=27 // pred_check
        _
      $region92: #{_lambda_.10} parent=27 // pred_check_branch
        %631 = sbr.rel (%p466) target = $region94
      $region93: #{_lambda_.10} parent=27 // pred_region
        %v632 = vmax.f32 %v606, 0.0
        %v633 = vmax.f32 %v607, 0.0
        %v634 = vmax.f32 %v608, 0.0
        %v635 = vmax.f32 %v609, 0.0
        %v636 = vpack.c.bf16 %v632, %v632
        %v637 = vpack.c.bf16 %v633, %v633
        %v638 = vpack.c.bf16 %v634, %v634
        %v639 = vpack.c.bf16 %v635, %v635
        %640 = vst [vmem:[%s530] sm:$0xf] %v636
        %641 = vst [vmem:[%s530 + $0x4] sm:$0xf] %v637
        %642 = vst [vmem:[%s530 + $0x8] sm:$0xf] %v638
        %643 = vst [vmem:[%s530 + $0xc] sm:$0xf] %v639
      $region94: #{_lambda_.10} parent=27 // pred_fallthru
        _
      // Predicated region
      $region95: #{_lambda_.10} parent=27 // pred_check
        _
      $region96: #{_lambda_.10} parent=27 // pred_check_branch
        %645 = sbr.rel (%p483) target = $region98
      $region97: #{_lambda_.10} parent=27 // pred_region
        %s646 = scalar_lea.vmem [#allocation4], 32
        %v647 = vld [vmem:[%s646] sm:$0xff]
        %v648 = vld [vmem:[%s646 + $0x8] sm:$0xff]
        %v649 = vld [vmem:[%s646 + $0x10] sm:$0xff]
        %v650 = vld [vmem:[%s646 + $0x18] sm:$0xff]
        %v651 = vmax.f32 %v606, 0.0
        %v652 = vmax.f32 %v607, 0.0
        %v653 = vmax.f32 %v608, 0.0
        %v654 = vmax.f32 %v609, 0.0
        %v655 = vadd.f32 %v647, %v651
        %v656 = vadd.f32 %v648, %v652
        %v657 = vadd.f32 %v649, %v653
        %v658 = vadd.f32 %v650, %v654
        %v659 = vmul.f32 %v655, 0.5
        %v660 = vmul.f32 %v656, 0.5
        %v661 = vmul.f32 %v657, 0.5
        %v662 = vmul.f32 %v658, 0.5
        %663 = vst [vmem:[%s646] sm:$0xff] %v659
        %664 = vst [vmem:[%s646 + $0x8] sm:$0xff] %v660
        %665 = vst [vmem:[%s646 + $0x10] sm:$0xff] %v661
        %666 = vst [vmem:[%s646 + $0x18] sm:$0xff] %v662
        %v667 = vpack.c.bf16 %v659, %v659
        %v668 = vpack.c.bf16 %v660, %v660
        %v669 = vpack.c.bf16 %v661, %v661
        %v670 = vpack.c.bf16 %v662, %v662
        %671 = vst [vmem:[%s530] sm:$0xf] %v667
        %672 = vst [vmem:[%s530 + $0x4] sm:$0xf] %v668
        %673 = vst [vmem:[%s530 + $0x8] sm:$0xf] %v669
        %674 = vst [vmem:[%s530 + $0xc] sm:$0xf] %v670
      $region98: #{_lambda_.10} parent=27 // pred_fallthru
        _
      // Predicated region
      $region99: #{_lambda_.10} parent=27 // pred_check
        %p675 = pneg %p189
      $region100: #{_lambda_.10} parent=27 // pred_check_branch
        %677 = sbr.rel (%p675) target = $region102
      $region101: #{_lambda_.10} parent=27 // pred_region
        %s678 = scalar_lea.vmem [#allocation4], 32
        %v679 = vld [vmem:[%s678] sm:$0xff]
        %v680 = vld [vmem:[%s678 + $0x8] sm:$0xff]
        %v681 = vld [vmem:[%s678 + $0x10] sm:$0xff]
        %v682 = vld [vmem:[%s678 + $0x18] sm:$0xff]
        %s683 = scalar_lea.vmem %s5, 32
        %684 = vst [vmem:[%s683] sm:$0xff] %v679
        %685 = vst [vmem:[%s683 + $0x8] sm:$0xff] %v680
        %686 = vst [vmem:[%s683 + $0x10] sm:$0xff] %v681
        %687 = vst [vmem:[%s683 + $0x18] sm:$0xff] %v682
        %s688 = scalar_lea.vmem %s4, 32
        %689 = vst [vmem:[%s688] sm:$0xff] %v606
        %690 = vst [vmem:[%s688 + $0x8] sm:$0xff] %v607
        %691 = vst [vmem:[%s688 + $0x10] sm:$0xff] %v608
        %692 = vst [vmem:[%s688 + $0x18] sm:$0xff] %v609
      $region102: #{_lambda_.10} parent=27 // pred_fallthru
        _
      // Predicated region
      $region103: #{_lambda_.10} parent=27 // pred_check
        %p693 = pneg %p82
      $region104: #{_lambda_.10} parent=27 // pred_check_branch
        %695 = sbr.rel (%p693) target = $region106
      $region105: #{_lambda_.10} parent=27 // pred_region
        _
      $region106: #{_lambda_.10} parent=27 // pred_fallthru
        _
      // Predicated region
      $region107: #{_lambda_.10} parent=27 // pred_check
        %p696 = pneg %p103
      $region108: #{_lambda_.10} parent=27 // pred_check_branch
        %698 = sbr.rel (%p696) target = $region110
      $region109: #{_lambda_.10} parent=27 // pred_region
        _
      $region110: #{_lambda_.10} parent=27 // pred_fallthru
        _
      // Predicated region
      $region111: #{_lambda_.10} parent=27 // pred_check
        %p699 = pneg %p82
      $region112: #{_lambda_.10} parent=27 // pred_check_branch
        %701 = sbr.rel (%p699) target = $region114
      $region113: #{_lambda_.10} parent=27 // pred_region
        _
      $region114: #{_lambda_.10} parent=27 // pred_fallthru
        _
      // Predicated region
      $region115: #{_lambda_.10} parent=27 // pred_check
        %p702 = pneg %p103
      $region116: #{_lambda_.10} parent=27 // pred_check_branch
        %704 = sbr.rel (%p702) target = $region118
      $region117: #{_lambda_.10} parent=27 // pred_region
        _
      $region118: #{_lambda_.10} parent=27 // pred_fallthru
        _
    $region28: #{_lambda_.10} parent=5 // pred_fallthru
      _
    %p705 = scmp.le.s32.totalorder 2, %s12
    // Predicated region
    $region119: #{_lambda_.10} parent=5 // pred_check
      %p706 = pneg %p705
    $region120: #{_lambda_.10} parent=5 // pred_check_branch
      %708 = sbr.rel (%p706) target = $region122
    $region121: #{_lambda_.10} parent=5 // pred_region
      %s709 = ssub.s32 %s12, 2
    $region122: #{_lambda_.10} parent=5 // pred_fallthru
      _
  $region6: #{_lambda_.10} parent=0 // loop_footer
    %s16 = sadd.s32 1, %s12
  $region7: #{_lambda_.10} parent=0 // loop_footer_branch
    %11 = sbr.rel target = $region3
  $region8: #{_lambda_.10} parent=0 // loop_exit
    _
  %710 = vsyncmov [#allocation5]
  %s711 = vpop.sfrf %710
  %p712 = scmp.eq.s32.totalorder %s711, 0
  %p713 = pneg %p712
  %715 = shalt.err (%p713)
  %s716 = scalar_lea.sflag [#allocation5], 1
  %717 = vsyncmov %s716
  %s718 = vpop.sfrf %717
  %p719 = scmp.eq.s32.totalorder %s718, 0
  %p720 = pneg %p719
  %722 = shalt.err (%p720)

// kernel: _lambda_.11
$region0: #{_lambda_.11}
  #allocation0 [shape = 'u32[]', space=smem, size = 0x4, offset = 0x4, fixed_abs, tag = 'smem constant byte address 0x4 - core index']
  #allocation1 [shape = 'u32[72,128]{1,0:T(1,128)}', space=vmem, size = 0x9000, scoped, tag = 'internal scratch']
  #allocation2 [shape = 'bf16[64,64]{1,0:T(8,128)(2,1)}', space=vmem, size = 0x4000, scoped, tag = 'scratch operand']
  #allocation3 [shape = 'bf16[2,64,128]{2,1,0:T(8,128)(2,1)}', space=vmem, size = 0x8000, scoped, tag = 'scratch operand']
  #allocation4 [shape = 'f32[2,64,128]{2,1,0:T(8,128)}', space=vmem, size = 0x10000, scoped, tag = 'scratch operand']
  #allocation5 [shape = 's32[2]{0}', space=sflag, size = 0x8, scoped, tag = 'scratch operand']
  #allocation8 [shape = 's32[]', space=sflag, size = 0x4, offset = 0, fixed_abs, tag = 'sflag constant byte address 0x0 - dummy sync flag']
  #allocation9 [shape = 's32[]', space=sflag, size = 0x4, offset = 0, fixed_abs, tag = 'sflag constant byte address 0x0 - dummy sync flag']
  %s0 = inlined_call_operand.vmem [shape: bf16[2,64,128], index: 0, kind: input, shape index: {}]
  %s1 = inlined_call_operand.vmem [shape: bf16[64,64], index: 1, kind: input, shape index: {}]
  %s2 = inlined_call_operand.vmem [shape: bf16[15,128,256], index: 2, kind: input, shape index: {}]
  %s3 = inlined_call_operand.vmem [shape: f32[15,1,128], index: 3, kind: input, shape index: {}]
  %s4 = inlined_call_operand.vmem [shape: f32[2,64,128], index: 4, kind: output, shape index: {0}]
  %s5 = inlined_call_operand.hbm [shape: f32[2,64,128], index: 5, kind: output, shape index: {1}]
  %6 = xla_tuple %s4, %s5
  %s7 = sld [smem:[#allocation0]]
  $region131: #{_lambda_.11} parent=0
    _
  %s9 = ssub.s32 1, %s7
  %s10 = scalar_select 0, %s9, %s7
  $region1: #{_lambda_.11} parent=0
    #allocation6 [shape = 'u8[65536]{0}', space=vmem, size = 0x10000, scoped, tag = 'output window, operand 1, single buffered']
    #allocation7 [shape = 's32[2]{0}', space=sflag, size = 0x8, scoped, tag = 'scoped memory for _lambda_.11']
    %11 = vsyncpa [#allocation7], 0
    loop: start=0, step=1, limit=17
    $region2: #{_lambda_.11} parent=1 // loop_pre_header
      _
    $region3: #{_lambda_.11} parent=1 // loop_header
      %s13 = sphi 0, %s17
      %p14 = scmp.ge.s32.totalorder %s13, 17
      %s23 = sphi 0, %s25
      %s26 = sphi 0, %s23
      %s27 = sphi 0, %s26
      %s43 = sphi 0, %s27
      %s49 = sphi 0, %s51
      %s52 = sphi 0, %s49
      %s53 = sphi 0, %s52
      %s69 = sphi 0, %s53
      %s73 = sphi 0, %s73
      %s75 = sphi 0, %s73
      %s76 = sphi 0, %s75
      %s90 = sphi 0, %s76
      %s94 = sphi 0, %s94
      %s96 = sphi 0, %s94
      %s97 = sphi 0, %s96
      %s111 = sphi 0, %s97
    $region4: #{_lambda_.11} parent=1 // loop_header_branch
      %16 = sbr.rel (%p14) target = $region8
    $region5: #{_lambda_.11} parent=1 // loop_body
      %s18 = ssub.s32 %s13, 1
      %s19 = ssub.s32 %s13, 2
      %s20 = sadd.s32 %s13, 1
      %s21 = ssub.s32 %s13, %s20
      %p22 = scmp.eq.s32.totalorder %s21, 0
      %s24 = sadd.s32 %s23, 1
      %s25 = scalar_select %p22, %s23, %s24
      %p28 = pneg %p22
      %p29 = scmp.eq.s32.totalorder %s13, 14
      %p30 = por %p28, %p29
      %p31 = scmp.ne.s32.totalorder %s23, %s26
      %p32 = scmp.eq.s32.totalorder %s13, 0
      %p33 = por %p31, %p32
      %p34 = scmp.ne.s32.totalorder %s23, %s26
      %p35 = scmp.eq.s32.totalorder %s18, 14
      %p36 = por %p34, %p35
      %p37 = scmp.ne.s32.totalorder %s26, %s27
      %p38 = scmp.eq.s32.totalorder %s18, 0
      %p39 = por %p37, %p38
      %p40 = scmp.ne.s32.totalorder %s26, %s27
      %p41 = scmp.eq.s32.totalorder %s19, 14
      %p42 = por %p40, %p41
      %p44 = scmp.ne.s32.totalorder %s27, %s43
      %p45 = scmp.eq.s32.totalorder %s19, 0
      %p46 = por %p44, %p45
      %s47 = ssub.s32 %s13, %s20
      %p48 = scmp.eq.s32.totalorder %s47, 0
      %s50 = sadd.s32 %s49, 1
      %s51 = scalar_select %p48, %s49, %s50
      %p54 = pneg %p48
      %p55 = scmp.eq.s32.totalorder %s13, 14
      %p56 = por %p54, %p55
      %p57 = scmp.ne.s32.totalorder %s49, %s52
      %p58 = scmp.eq.s32.totalorder %s13, 0
      %p59 = por %p57, %p58
      %p60 = scmp.ne.s32.totalorder %s49, %s52
      %p61 = scmp.eq.s32.totalorder %s18, 14
      %p62 = por %p60, %p61
      %p63 = scmp.ne.s32.totalorder %s52, %s53
      %p64 = scmp.eq.s32.totalorder %s18, 0
      %p65 = por %p63, %p64
      %p66 = scmp.ne.s32.totalorder %s52, %s53
      %p67 = scmp.eq.s32.totalorder %s19, 14
      %p68 = por %p66, %p67
      %p70 = scmp.ne.s32.totalorder %s53, %s69
      %p71 = scmp.eq.s32.totalorder %s19, 0
      %p72 = por %p70, %p71
      %s74 = sadd.s32 %s73, 1
      %p77 = scmp.eq.s32.totalorder %s13, 14
      %p78 = scmp.ne.s32.totalorder %s73, %s75
      %p79 = scmp.eq.s32.totalorder %s13, 0
      %p80 = por %p78, %p79
      %p81 = scmp.ne.s32.totalorder %s73, %s75
      %p82 = scmp.eq.s32.totalorder %s18, 14
      %p83 = por %p81, %p82
      %p84 = scmp.ne.s32.totalorder %s75, %s76
      %p85 = scmp.eq.s32.totalorder %s18, 0
      %p86 = por %p84, %p85
      %p87 = scmp.ne.s32.totalorder %s75, %s76
      %p88 = scmp.eq.s32.totalorder %s19, 14
      %p89 = por %p87, %p88
      %p91 = scmp.ne.s32.totalorder %s76, %s90
      %p92 = scmp.eq.s32.totalorder %s19, 0
      %p93 = por %p91, %p92
      %s95 = sadd.s32 %s94, 1
      %p98 = scmp.eq.s32.totalorder %s13, 14
      %p99 = scmp.ne.s32.totalorder %s94, %s96
      %p100 = scmp.eq.s32.totalorder %s13, 0
      %p101 = por %p99, %p100
      %p102 = scmp.ne.s32.totalorder %s94, %s96
      %p103 = scmp.eq.s32.totalorder %s18, 14
      %p104 = por %p102, %p103
      %p105 = scmp.ne.s32.totalorder %s96, %s97
      %p106 = scmp.eq.s32.totalorder %s18, 0
      %p107 = por %p105, %p106
      %p108 = scmp.ne.s32.totalorder %s96, %s97
      %p109 = scmp.eq.s32.totalorder %s19, 14
      %p110 = por %p108, %p109
      %p112 = scmp.ne.s32.totalorder %s97, %s111
      %p113 = scmp.eq.s32.totalorder %s19, 0
      %p114 = por %p112, %p113
      %p115 = scmp.le.s32.totalorder 1, %s13
      %p116 = scmp.lt.s32.totalorder %s13, 16
      %p117 = pnand %p115, %p116
      %p118 = pneg %p117
      // Predicated region
      $region9: #{_lambda_.11} parent=5 // pred_check
        _
      $region10: #{_lambda_.11} parent=5 // pred_check_branch
        %120 = sbr.rel (%p117) target = $region12
      $region11: #{_lambda_.11} parent=5 // pred_region
        %s121 = ssub.s32 %s13, 1
      $region12: #{_lambda_.11} parent=5 // pred_fallthru
        _
      %p122 = scmp.lt.s32.totalorder %s13, 15
      // Predicated region
      $region13: #{_lambda_.11} parent=5 // pred_check
        %p123 = pneg %p122
      $region14: #{_lambda_.11} parent=5 // pred_check_branch
        %125 = sbr.rel (%p123) target = $region16
      $region15: #{_lambda_.11} parent=5 // pred_region
        // Predicated region
        $region17: #{_lambda_.11} parent=15 // pred_check
          %p126 = pneg %p33
        $region18: #{_lambda_.11} parent=15 // pred_check_branch
          %128 = sbr.rel (%p126) target = $region20
        $region19: #{_lambda_.11} parent=15 // pred_region
          %p129 = scmp.lt.s32.totalorder %s13, 14
          %s130 = scalar_select %p129, %s13, 14
          %s131 = smul.addr %s130, 32
          %s132 = smul.addr %s131, 4
          %s133 = scalar_lea.vmem %s2, %s132
        $region20: #{_lambda_.11} parent=15 // pred_fallthru
          _
        // Predicated region
        $region21: #{_lambda_.11} parent=15 // pred_check
          %p134 = pneg %p59
        $region22: #{_lambda_.11} parent=15 // pred_check_branch
          %136 = sbr.rel (%p134) target = $region24
        $region23: #{_lambda_.11} parent=15 // pred_region
          %p137 = scmp.lt.s32.totalorder %s13, 14
          %s138 = scalar_select %p137, %s13, 14
          %s139 = scalar_lea.vmem %s3, %s138
        $region24: #{_lambda_.11} parent=15 // pred_fallthru
          _
      $region16: #{_lambda_.11} parent=5 // pred_fallthru
        _
      %p140 = scmp.le.s32.totalorder 1, %s13
      %p141 = scmp.lt.s32.totalorder %s13, 16
      %p142 = pnand %p140, %p141
      %p143 = pneg %p142
      // Predicated region
      $region25: #{_lambda_.11} parent=5 // pred_check
        _
      $region26: #{_lambda_.11} parent=5 // pred_check_branch
        %145 = sbr.rel (%p142) target = $region28
      $region27: #{_lambda_.11} parent=5 // pred_region
        %s146 = ssub.s32 %s13, 1
        %p147 = scmp.lt.s32.totalorder %s18, 14
        %s148 = scalar_select %p147, %s18, 14
        %s149 = smul.addr %s148, 32
        %s150 = smul.addr %s149, 4
        %s151 = scalar_lea.vmem %s2, %s150
        %p152 = pneg %p39
        %p153 = pneg %p36
        %p154 = scmp.lt.s32.totalorder %s18, 14
        %s155 = scalar_select %p154, %s18, 14
        %s156 = scalar_lea.vmem %s3, %s155
        %p157 = pneg %p65
        %p158 = pneg %p62
        %p159 = pneg %p86
        %p160 = pneg %p83
        %p161 = pneg %p107
        %p162 = pneg %p104
        %p163 = scmp.lt.s32.totalorder %s18, 14
        %s164 = scalar_select %p163, %s18, 14
        %s165 = smul.addr %s164, 32
        %s166 = smul.addr %s165, 4
        %s167 = scalar_lea.vmem %s2, %s166
        %p168 = scmp.lt.s32.totalorder %s18, 14
        %s169 = scalar_select %p168, %s18, 14
        %s170 = scalar_lea.vmem %s3, %s169
        %p172 = scmp.eq.s32.totalorder %s18, 0
        %p173 = scmp.gt.s32.totalorder %s18, 0
        %p174 = scmp.lt.s32.totalorder %s18, 13
        %p175 = pnand %p173, %p174
        %p176 = pneg %p175
        %p177 = scmp.lt.s32.totalorder %s18, 0
        %s178 = ssub.s32 0, %s18
        %s179 = scalar_select %p177, %s178, %s18
        %s180 = sand.u32 %s179, 1
        %s181 = ssub.s32 0, %s180
        %s182 = scalar_select %p177, %s181, %s180
        %p183 = scmp.ne.s32.totalorder %s182, 0
        %p184 = scmp.lt.s32.totalorder %s182, 0
        %p185 = pnand %p184, %p183
        %p186 = pneg %p185
        %s187 = sadd.s32 %s182, 2
        %s188 = scalar_select %p186, %s187, %s182
        %p189 = scmp.eq.s32.totalorder %s188, 1
        %p190 = scmp.eq.s32.totalorder %s18, 13
        // Predicated region
        $region29: #{_lambda_.11} parent=27 // pred_check
          %p191 = pneg %p172
        $region30: #{_lambda_.11} parent=27 // pred_check_branch
          %193 = sbr.rel (%p191) target = $region32
        $region31: #{_lambda_.11} parent=27 // pred_region
          // Predicated region
          $region33: #{_lambda_.11} parent=31 // pred_check
            _
          $region34: #{_lambda_.11} parent=31 // pred_check_branch
            %195 = sbr.rel (0) target = $region36
          $region35: #{_lambda_.11} parent=31 // pred_region
            loop: start=0, step=1, limit=1
            $region37: #{_lambda_.11} parent=35 // loop_pre_header
              _
            $region38: #{_lambda_.11} parent=35 // loop_header
              %s197 = sphi 0, %s201
              %p198 = scmp.ge.s32.totalorder %s197, 1
              %s202 = sphi %s1, %s1
              %s203 = sphi [#allocation2], [#allocation2]
            $region39: #{_lambda_.11} parent=35 // loop_header_branch
              %200 = sbr.rel (%p198) target = $region43
            $region40: #{_lambda_.11} parent=35 // loop_body
              %v204 = vld [vmem:[%s202] sm:$0xff]
              %205 = vst [vmem:[%s203] sm:$0xff] %v204
              %v206 = vld [vmem:[%s202 + $0x8] sm:$0xff]
              %207 = vst [vmem:[%s203 + $0x8] sm:$0xff] %v206
              %v208 = vld [vmem:[%s202 + $0x10] sm:$0xff]
              %209 = vst [vmem:[%s203 + $0x10] sm:$0xff] %v208
              %v210 = vld [vmem:[%s202 + $0x18] sm:$0xff]
              %211 = vst [vmem:[%s203 + $0x18] sm:$0xff] %v210
            $region41: #{_lambda_.11} parent=35 // loop_footer
              %s201 = sadd.s32 1, %s197
            $region42: #{_lambda_.11} parent=35 // loop_footer_branch
              %196 = sbr.rel target = $region38
            $region43: #{_lambda_.11} parent=35 // loop_exit
              _
          $region36: #{_lambda_.11} parent=31 // pred_fallthru
            _
          // Predicated region
          $region44: #{_lambda_.11} parent=31 // pred_check
            _
          $region45: #{_lambda_.11} parent=31 // pred_check_branch
            %213 = sbr.rel target = $region47
          $region46: #{_lambda_.11} parent=31 // pred_region
            _
          $region47: #{_lambda_.11} parent=31 // pred_fallthru
            _
          // Predicated region
          $region48: #{_lambda_.11} parent=31 // pred_check
            _
          $region49: #{_lambda_.11} parent=31 // pred_check_branch
            %216 = sbr.rel (0) target = $region51
          $region50: #{_lambda_.11} parent=31 // pred_region
            %217 = vsyncadd [#allocation5], 512
          $region51: #{_lambda_.11} parent=31 // pred_fallthru
            _
          %s218 = scalar_lea.sflag [#allocation5], 1
          // Predicated region
          $region52: #{_lambda_.11} parent=31 // pred_check
            _
          $region53: #{_lambda_.11} parent=31 // pred_check_branch
            %220 = sbr.rel (0) target = $region55
          $region54: #{_lambda_.11} parent=31 // pred_region
            loop: start=0, step=1, limit=1
            $region56: #{_lambda_.11} parent=54 // loop_pre_header
              _
            $region57: #{_lambda_.11} parent=54 // loop_header
              %s222 = sphi 0, %s226
              %p223 = scmp.ge.s32.totalorder %s222, 1
              %s227 = sphi %s0, %s0
              %s228 = sphi [#allocation3], [#allocation3]
            $region58: #{_lambda_.11} parent=54 // loop_header_branch
              %225 = sbr.rel (%p223) target = $region62
            $region59: #{_lambda_.11} parent=54 // loop_body
              %v229 = vld [vmem:[%s227] sm:$0xff]
              %230 = vst [vmem:[%s228] sm:$0xff] %v229
              %v231 = vld [vmem:[%s227 + $0x8] sm:$0xff]
              %232 = vst [vmem:[%s228 + $0x8] sm:$0xff] %v231
              %v233 = vld [vmem:[%s227 + $0x10] sm:$0xff]
              %234 = vst [vmem:[%s228 + $0x10] sm:$0xff] %v233
              %v235 = vld [vmem:[%s227 + $0x18] sm:$0xff]
              %236 = vst [vmem:[%s228 + $0x18] sm:$0xff] %v235
              %v237 = vld [vmem:[%s227 + $0x20] sm:$0xff]
              %238 = vst [vmem:[%s228 + $0x20] sm:$0xff] %v237
              %v239 = vld [vmem:[%s227 + $0x28] sm:$0xff]
              %240 = vst [vmem:[%s228 + $0x28] sm:$0xff] %v239
              %v241 = vld [vmem:[%s227 + $0x30] sm:$0xff]
              %242 = vst [vmem:[%s228 + $0x30] sm:$0xff] %v241
              %v243 = vld [vmem:[%s227 + $0x38] sm:$0xff]
              %244 = vst [vmem:[%s228 + $0x38] sm:$0xff] %v243
            $region60: #{_lambda_.11} parent=54 // loop_footer
              %s226 = sadd.s32 1, %s222
            $region61: #{_lambda_.11} parent=54 // loop_footer_branch
              %221 = sbr.rel target = $region57
            $region62: #{_lambda_.11} parent=54 // loop_exit
              _
          $region55: #{_lambda_.11} parent=31 // pred_fallthru
            _
          // Predicated region
          $region63: #{_lambda_.11} parent=31 // pred_check
            _
          $region64: #{_lambda_.11} parent=31 // pred_check_branch
            %246 = sbr.rel target = $region66
          $region65: #{_lambda_.11} parent=31 // pred_region
            _
          $region66: #{_lambda_.11} parent=31 // pred_fallthru
            _
          // Predicated region
          $region67: #{_lambda_.11} parent=31 // pred_check
            _
          $region68: #{_lambda_.11} parent=31 // pred_check_branch
            %249 = sbr.rel (0) target = $region70
          $region69: #{_lambda_.11} parent=31 // pred_region
            %250 = vsyncadd %s218, 1024
          $region70: #{_lambda_.11} parent=31 // pred_fallthru
            _
          %s251 = smul.u32 4, 8
          %s252 = smul.u32 %s251, 1
          %s253 = sshll.u32 %s252, 4
          %254 = dma.done [#allocation5], %s253
          %s255 = smul.u32 4, 2
          %s256 = smul.u32 %s255, 8
          %s257 = smul.u32 %s256, 1
          %s258 = sshll.u32 %s257, 4
          %259 = dma.done %s218, %s258
        $region32: #{_lambda_.11} parent=27 // pred_fallthru
          _
        %v260 = vld [vmem:[%s167] sm:$0xff]
        %v261 = vld [vmem:[%s167 + $0x8] sm:$0xff]
        %v262 = vld [vmem:[%s167 + $0x10] sm:$0xff]
        %v263 = vld [vmem:[%s167 + $0x18] sm:$0xff]
        %v264 = vld [vmem:[%s167 + $0x20] sm:$0xff]
        %v265 = vld [vmem:[%s167 + $0x28] sm:$0xff]
        %v266 = vld [vmem:[%s167 + $0x30] sm:$0xff]
        %v267 = vld [vmem:[%s167 + $0x38] sm:$0xff]
        %v268 = vld [vmem:[%s167 + $0x40] sm:$0xff]
        %v269 = vld [vmem:[%s167 + $0x48] sm:$0xff]
        %v270 = vld [vmem:[%s167 + $0x50] sm:$0xff]
        %v271 = vld [vmem:[%s167 + $0x58] sm:$0xff]
        %v272 = vld [vmem:[%s167 + $0x60] sm:$0xff]
        %v273 = vld [vmem:[%s167 + $0x68] sm:$0xff]
        %v274 = vld [vmem:[%s167 + $0x70] sm:$0xff]
        %v275 = vld [vmem:[%s167 + $0x78] sm:$0xff]
        %v276 = vld [vmem:[%s170] sm:$0x1]
        %v277 = vld [vmem:[#allocation2] sm:$0xf]
        %v278 = vld [vmem:[#allocation2 + $0x4] sm:$0xf]
        %v279 = vld [vmem:[#allocation2 + $0x8] sm:$0xf]
        %v280 = vld [vmem:[#allocation2 + $0xc] sm:$0xf]
        %v281 = vld [vmem:[#allocation2 + $0x10] sm:$0xf]
        %v282 = vld [vmem:[#allocation2 + $0x14] sm:$0xf]
        %v283 = vld [vmem:[#allocation2 + $0x18] sm:$0xf]
        %v284 = vld [vmem:[#allocation2 + $0x1c] sm:$0xf]
        %v285 = vld [vmem:[#allocation3] sm:$0xf]
        %v286 = vld [vmem:[#allocation3 + $0x4] sm:$0xf]
        %v287 = vld [vmem:[#allocation3 + $0x8] sm:$0xf]
        %v288 = vld [vmem:[#allocation3 + $0xc] sm:$0xf]
        %v289 = vld [vmem:[#allocation3 + $0x10] sm:$0xf]
        %v290 = vld [vmem:[#allocation3 + $0x14] sm:$0xf]
        %v291 = vld [vmem:[#allocation3 + $0x18] sm:$0xf]
        %v292 = vld [vmem:[#allocation3 + $0x1c] sm:$0xf]
        %v301 = vunpack.c.l.b16 %v285
        %v302 = vunpack.c.l.b16 %v286
        %v303 = vunpack.c.l.b16 %v287
        %v304 = vunpack.c.l.b16 %v288
        %v305 = vunpack.c.l.b16 %v289
        %v306 = vunpack.c.l.b16 %v290
        %v307 = vunpack.c.l.b16 %v291
        %v308 = vunpack.c.l.b16 %v292
        %v309 = vpack.c.b16 %v302, %v301
        %v310 = vpack.c.b16 %v304, %v303
        %v311 = vpack.c.b16 %v306, %v305
        %v312 = vpack.c.b16 %v308, %v307
        %v333 = vunpack.c.l.b16 %v260
        %v334 = vunpack.c.h.b16 %v260
        %v335 = vunpack.c.l.b16 %v261
        %v336 = vunpack.c.h.b16 %v261
        %v337 = vunpack.c.l.b16 %v262
        %v338 = vunpack.c.h.b16 %v262
        %v339 = vunpack.c.l.b16 %v263
        %v340 = vunpack.c.h.b16 %v263
        %v341 = vunpack.c.l.b16 %v264
        %v342 = vunpack.c.h.b16 %v264
        %v343 = vunpack.c.l.b16 %v265
        %v344 = vunpack.c.h.b16 %v265
        %v345 = vunpack.c.l.b16 %v266
        %v346 = vunpack.c.h.b16 %v266
        %v347 = vunpack.c.l.b16 %v267
        %v348 = vunpack.c.h.b16 %v267
        %v349 = vunpack.c.l.b16 %v268
        %v350 = vunpack.c.h.b16 %v268
        %v351 = vunpack.c.l.b16 %v269
        %v352 = vunpack.c.h.b16 %v269
        %v353 = vunpack.c.l.b16 %v270
        %v354 = vunpack.c.h.b16 %v270
        %v355 = vunpack.c.l.b16 %v271
        %v356 = vunpack.c.h.b16 %v271
        %v357 = vunpack.c.l.b16 %v272
        %v358 = vunpack.c.h.b16 %v272
        %v359 = vunpack.c.l.b16 %v273
        %v360 = vunpack.c.h.b16 %v273
        %v361 = vunpack.c.l.b16 %v274
        %v362 = vunpack.c.h.b16 %v274
        %v363 = vunpack.c.l.b16 %v275
        %v364 = vunpack.c.h.b16 %v275
        %v365 = vpack.c.b16 %v335, %v333
        %v366 = vpack.c.b16 %v336, %v334
        %v367 = vpack.c.b16 %v339, %v337
        %v368 = vpack.c.b16 %v340, %v338
        %v369 = vpack.c.b16 %v343, %v341
        %v370 = vpack.c.b16 %v344, %v342
        %v371 = vpack.c.b16 %v347, %v345
        %v372 = vpack.c.b16 %v348, %v346
        %v373 = vpack.c.b16 %v351, %v349
        %v374 = vpack.c.b16 %v352, %v350
        %v375 = vpack.c.b16 %v355, %v353
        %v376 = vpack.c.b16 %v356, %v354
        %v377 = vpack.c.b16 %v359, %v357
        %v378 = vpack.c.b16 %v360, %v358
        %v379 = vpack.c.b16 %v363, %v361
        %v380 = vpack.c.b16 %v364, %v362
        %397 = vmatpush.bf16.msra.mxu0 %v379
        %398 = vmatpush.bf16.msra.mxu0 %v377
        %399 = vmatpush.bf16.msra.mxu0 %v375
        %400 = vmatpush.bf16.msra.mxu0 %v373
        %401 = vmatpush.bf16.msra.mxu0 %v371
        %402 = vmatpush.bf16.msra.mxu0 %v369
        %403 = vmatpush.bf16.msra.mxu0 %v367
        %404 = vmatpush.bf16.msra.mxu0 %v365
        %405 = vmatmul.bf16.gmra.mxu0 %v309
        %v406 = vpop.f32.mrf.mxu0
        %v407 = vadd.f32 0.0, %v406
        %v408 = vpop.f32.mrf.mxu0
        %v409 = vadd.f32 0.0, %v408
        %410 = vmatmul.bf16.gmra.mxu0 %v310
        %v411 = vpop.f32.mrf.mxu0
        %v412 = vadd.f32 0.0, %v411
        %v413 = vpop.f32.mrf.mxu0
        %v414 = vadd.f32 0.0, %v413
        %415 = vmatmul.bf16.gmra.mxu0 %v311
        %v416 = vpop.f32.mrf.mxu0
        %v417 = vadd.f32 0.0, %v416
        %v418 = vpop.f32.mrf.mxu0
        %v419 = vadd.f32 0.0, %v418
        %420 = vmatmul.bf16.gmra.mxu0 %v312
        %v421 = vpop.f32.mrf.mxu0
        %v422 = vadd.f32 0.0, %v421
        %v423 = vpop.f32.mrf.mxu0
        %v424 = vadd.f32 0.0, %v423
        %425 = vdwg.mxu0
        %426 = vmatpush.bf16.msra.mxu0 %v380
        %427 = vmatpush.bf16.msra.mxu0 %v378
        %428 = vmatpush.bf16.msra.mxu0 %v376
        %429 = vmatpush.bf16.msra.mxu0 %v374
        %430 = vmatpush.bf16.msra.mxu0 %v372
        %431 = vmatpush.bf16.msra.mxu0 %v370
        %432 = vmatpush.bf16.msra.mxu0 %v368
        %433 = vmatpush.bf16.msra.mxu0 %v366
        %434 = vmatmul.bf16.gmra.mxu0 %v309
        %v435 = vpop.f32.mrf.mxu0
        %v436 = vadd.f32 0.0, %v435
        %v437 = vpop.f32.mrf.mxu0
        %v438 = vadd.f32 0.0, %v437
        %439 = vmatmul.bf16.gmra.mxu0 %v310
        %v440 = vpop.f32.mrf.mxu0
        %v441 = vadd.f32 0.0, %v440
        %v442 = vpop.f32.mrf.mxu0
        %v443 = vadd.f32 0.0, %v442
        %444 = vmatmul.bf16.gmra.mxu0 %v311
        %v445 = vpop.f32.mrf.mxu0
        %v446 = vadd.f32 0.0, %v445
        %v447 = vpop.f32.mrf.mxu0
        %v448 = vadd.f32 0.0, %v447
        %449 = vmatmul.bf16.gmra.mxu0 %v312
        %v450 = vpop.f32.mrf.mxu0
        %v451 = vadd.f32 0.0, %v450
        %v452 = vpop.f32.mrf.mxu0
        %v453 = vadd.f32 0.0, %v452
        %454 = vdwg.mxu0
        %v455 = vpack.c.bf16 %v409, %v407
        %v456 = vpack.c.bf16 %v414, %v412
        %v457 = vpack.c.bf16 %v419, %v417
        %v458 = vpack.c.bf16 %v424, %v422
        %v467 = vunpack.c.l.b16 %v277
        %v468 = vunpack.c.l.b16 %v278
        %v469 = vunpack.c.l.b16 %v279
        %v470 = vunpack.c.l.b16 %v280
        %v471 = vunpack.c.l.b16 %v281
        %v472 = vunpack.c.l.b16 %v282
        %v473 = vunpack.c.l.b16 %v283
        %v474 = vunpack.c.l.b16 %v284
        %v475 = vpack.c.b16 %v468, %v467
        %v476 = vpack.c.b16 %v470, %v469
        %v477 = vpack.c.b16 %v472, %v471
        %v478 = vpack.c.b16 %v474, %v473
        %vm479 = vcmask 523264
        %v481 = vsel %vm479, %v475, 0
        %v484 = vsel %vm479, %v476, 0
        %v487 = vsel %vm479, %v477, 0
        %v490 = vsel %vm479, %v478, 0
        %492 = vmatpush.bf16.msra.mxu0 0
        %493 = vmatpush.bf16.msra.mxu0 0
        %494 = vmatpush.bf16.msra.mxu0 0
        %495 = vmatpush.bf16.msra.mxu0 0
        %496 = vmatpush.bf16.msra.mxu0 %v458
        %497 = vmatpush.bf16.msra.mxu0 %v457
        %498 = vmatpush.bf16.msra.mxu0 %v456
        %499 = vmatpush.bf16.msra.mxu0 %v455
        %500 = vmatmul.bf16.gmra.mxu0 %v481
        %v501 = vpop.f32.mrf.mxu0
        %v502 = vadd.f32 %v436, %v501
        %v503 = vpop.f32.mrf.mxu0
        %v504 = vadd.f32 %v438, %v503
        %505 = vmatmul.bf16.gmra.mxu0 %v484
        %v506 = vpop.f32.mrf.mxu0
        %v507 = vadd.f32 %v441, %v506
        %v508 = vpop.f32.mrf.mxu0
        %v509 = vadd.f32 %v443, %v508
        %510 = vmatmul.bf16.gmra.mxu0 %v487
        %v511 = vpop.f32.mrf.mxu0
        %v512 = vadd.f32 %v446, %v511
        %v513 = vpop.f32.mrf.mxu0
        %v514 = vadd.f32 %v448, %v513
        %515 = vmatmul.bf16.gmra.mxu0 %v490
        %v516 = vpop.f32.mrf.mxu0
        %v517 = vadd.f32 %v451, %v516
        %v518 = vpop.f32.mrf.mxu0
        %v519 = vadd.f32 %v453, %v518
        %520 = vdwg.mxu0
        %v522 = vperm.slane %v276, 0
        %v524 = vadd.f32 %v502, %v522
        %v525 = vadd.f32 %v504, %v522
        %v526 = vadd.f32 %v507, %v522
        %v527 = vadd.f32 %v509, %v522
        %v528 = vadd.f32 %v512, %v522
        %v529 = vadd.f32 %v514, %v522
        %v530 = vadd.f32 %v517, %v522
        %v531 = vadd.f32 %v519, %v522
        // Predicated region
        $region71: #{_lambda_.11} parent=27 // pred_check
          %p532 = pneg %p172
        $region72: #{_lambda_.11} parent=27 // pred_check_branch
          %534 = sbr.rel (%p532) target = $region74
        $region73: #{_lambda_.11} parent=27 // pred_region
          %v535 = vmax.f32 %v524, 0.0
          %v536 = vmax.f32 %v525, 0.0
          %v537 = vmax.f32 %v526, 0.0
          %v538 = vmax.f32 %v527, 0.0
          %v539 = vmax.f32 %v528, 0.0
          %v540 = vmax.f32 %v529, 0.0
          %v541 = vmax.f32 %v530, 0.0
          %v542 = vmax.f32 %v531, 0.0
          %543 = vst [vmem:[#allocation4] sm:$0xff] %v535
          %544 = vst [vmem:[#allocation4 + $0x8] sm:$0xff] %v536
          %545 = vst [vmem:[#allocation4 + $0x10] sm:$0xff] %v537
          %546 = vst [vmem:[#allocation4 + $0x18] sm:$0xff] %v538
          %547 = vst [vmem:[#allocation4 + $0x20] sm:$0xff] %v539
          %548 = vst [vmem:[#allocation4 + $0x28] sm:$0xff] %v540
          %549 = vst [vmem:[#allocation4 + $0x30] sm:$0xff] %v541
          %550 = vst [vmem:[#allocation4 + $0x38] sm:$0xff] %v542
          %v551 = vpack.c.bf16 %v535, %v535
          %v552 = vpack.c.bf16 %v536, %v536
          %v553 = vpack.c.bf16 %v537, %v537
          %v554 = vpack.c.bf16 %v538, %v538
          %v555 = vpack.c.bf16 %v539, %v539
          %v556 = vpack.c.bf16 %v540, %v540
          %v557 = vpack.c.bf16 %v541, %v541
          %v558 = vpack.c.bf16 %v542, %v542
          %559 = vst [vmem:[#allocation3] sm:$0xf] %v551
          %560 = vst [vmem:[#allocation3 + $0x4] sm:$0xf] %v552
          %561 = vst [vmem:[#allocation3 + $0x8] sm:$0xf] %v553
          %562 = vst [vmem:[#allocation3 + $0xc] sm:$0xf] %v554
          %563 = vst [vmem:[#allocation3 + $0x10] sm:$0xf] %v555
          %564 = vst [vmem:[#allocation3 + $0x14] sm:$0xf] %v556
          %565 = vst [vmem:[#allocation3 + $0x18] sm:$0xf] %v557
          %566 = vst [vmem:[#allocation3 + $0x1c] sm:$0xf] %v558
        $region74: #{_lambda_.11} parent=27 // pred_fallthru
          _
        %p567 = pnand %p176, %p189
        %p568 = pneg %p567
        // Predicated region
        $region75: #{_lambda_.11} parent=27 // pred_check
          _
        $region76: #{_lambda_.11} parent=27 // pred_check_branch
          %570 = sbr.rel (%p567) target = $region78
        $region77: #{_lambda_.11} parent=27 // pred_region
          %v571 = vmax.f32 %v524, 0.0
          %v572 = vmax.f32 %v525, 0.0
          %v573 = vmax.f32 %v526, 0.0
          %v574 = vmax.f32 %v527, 0.0
          %v575 = vmax.f32 %v528, 0.0
          %v576 = vmax.f32 %v529, 0.0
          %v577 = vmax.f32 %v530, 0.0
          %v578 = vmax.f32 %v531, 0.0
          %v579 = vpack.c.bf16 %v571, %v571
          %v580 = vpack.c.bf16 %v572, %v572
          %v581 = vpack.c.bf16 %v573, %v573
          %v582 = vpack.c.bf16 %v574, %v574
          %v583 = vpack.c.bf16 %v575, %v575
          %v584 = vpack.c.bf16 %v576, %v576
          %v585 = vpack.c.bf16 %v577, %v577
          %v586 = vpack.c.bf16 %v578, %v578
          %587 = vst [vmem:[#allocation3] sm:$0xf] %v579
          %588 = vst [vmem:[#allocation3 + $0x4] sm:$0xf] %v580
          %589 = vst [vmem:[#allocation3 + $0x8] sm:$0xf] %v581
          %590 = vst [vmem:[#allocation3 + $0xc] sm:$0xf] %v582
          %591 = vst [vmem:[#allocation3 + $0x10] sm:$0xf] %v583
          %592 = vst [vmem:[#allocation3 + $0x14] sm:$0xf] %v584
          %593 = vst [vmem:[#allocation3 + $0x18] sm:$0xf] %v585
          %594 = vst [vmem:[#allocation3 + $0x1c] sm:$0xf] %v586
        $region78: #{_lambda_.11} parent=27 // pred_fallthru
          _
        %p595 = scmp.ne.s32.totalorder %s188, 1
        %p596 = pnand %p176, %p595
        %p597 = pneg %p596
        // Predicated region
        $region79: #{_lambda_.11} parent=27 // pred_check
          _
        $region80: #{_lambda_.11} parent=27 // pred_check_branch
          %599 = sbr.rel (%p596) target = $region82
        $region81: #{_lambda_.11} parent=27 // pred_region
          %v600 = vld [vmem:[#allocation4] sm:$0xff]
          %v601 = vld [vmem:[#allocation4 + $0x8] sm:$0xff]
          %v602 = vld [vmem:[#allocation4 + $0x10] sm:$0xff]
          %v603 = vld [vmem:[#allocation4 + $0x18] sm:$0xff]
          %v604 = vld [vmem:[#allocation4 + $0x20] sm:$0xff]
          %v605 = vld [vmem:[#allocation4 + $0x28] sm:$0xff]
          %v606 = vld [vmem:[#allocation4 + $0x30] sm:$0xff]
          %v607 = vld [vmem:[#allocation4 + $0x38] sm:$0xff]
          %v608 = vmax.f32 %v524, 0.0
          %v609 = vmax.f32 %v525, 0.0
          %v610 = vmax.f32 %v526, 0.0
          %v611 = vmax.f32 %v527, 0.0
          %v612 = vmax.f32 %v528, 0.0
          %v613 = vmax.f32 %v529, 0.0
          %v614 = vmax.f32 %v530, 0.0
          %v615 = vmax.f32 %v531, 0.0
          %v616 = vadd.f32 %v600, %v608
          %v617 = vadd.f32 %v601, %v609
          %v618 = vadd.f32 %v602, %v610
          %v619 = vadd.f32 %v603, %v611
          %v620 = vadd.f32 %v604, %v612
          %v621 = vadd.f32 %v605, %v613
          %v622 = vadd.f32 %v606, %v614
          %v623 = vadd.f32 %v607, %v615
          %v624 = vmul.f32 %v616, 0.5
          %v625 = vmul.f32 %v617, 0.5
          %v626 = vmul.f32 %v618, 0.5
          %v627 = vmul.f32 %v619, 0.5
          %v628 = vmul.f32 %v620, 0.5
          %v629 = vmul.f32 %v621, 0.5
          %v630 = vmul.f32 %v622, 0.5
          %v631 = vmul.f32 %v623, 0.5
          %632 = vst [vmem:[#allocation4] sm:$0xff] %v624
          %633 = vst [vmem:[#allocation4 + $0x8] sm:$0xff] %v625
          %634 = vst [vmem:[#allocation4 + $0x10] sm:$0xff] %v626
          %635 = vst [vmem:[#allocation4 + $0x18] sm:$0xff] %v627
          %636 = vst [vmem:[#allocation4 + $0x20] sm:$0xff] %v628
          %637 = vst [vmem:[#allocation4 + $0x28] sm:$0xff] %v629
          %638 = vst [vmem:[#allocation4 + $0x30] sm:$0xff] %v630
          %639 = vst [vmem:[#allocation4 + $0x38] sm:$0xff] %v631
          %v640 = vpack.c.bf16 %v624, %v624
          %v641 = vpack.c.bf16 %v625, %v625
          %v642 = vpack.c.bf16 %v626, %v626
          %v643 = vpack.c.bf16 %v627, %v627
          %v644 = vpack.c.bf16 %v628, %v628
          %v645 = vpack.c.bf16 %v629, %v629
          %v646 = vpack.c.bf16 %v630, %v630
          %v647 = vpack.c.bf16 %v631, %v631
          %648 = vst [vmem:[#allocation3] sm:$0xf] %v640
          %649 = vst [vmem:[#allocation3 + $0x4] sm:$0xf] %v641
          %650 = vst [vmem:[#allocation3 + $0x8] sm:$0xf] %v642
          %651 = vst [vmem:[#allocation3 + $0xc] sm:$0xf] %v643
          %652 = vst [vmem:[#allocation3 + $0x10] sm:$0xf] %v644
          %653 = vst [vmem:[#allocation3 + $0x14] sm:$0xf] %v645
          %654 = vst [vmem:[#allocation3 + $0x18] sm:$0xf] %v646
          %655 = vst [vmem:[#allocation3 + $0x1c] sm:$0xf] %v647
        $region82: #{_lambda_.11} parent=27 // pred_fallthru
          _
        // Predicated region
        $region83: #{_lambda_.11} parent=27 // pred_check
          %p656 = pneg %p190
        $region84: #{_lambda_.11} parent=27 // pred_check_branch
          %658 = sbr.rel (%p656) target = $region86
        $region85: #{_lambda_.11} parent=27 // pred_region
          %v659 = vld [vmem:[#allocation4] sm:$0xff]
          %v660 = vld [vmem:[#allocation4 + $0x8] sm:$0xff]
          %v661 = vld [vmem:[#allocation4 + $0x10] sm:$0xff]
          %v662 = vld [vmem:[#allocation4 + $0x18] sm:$0xff]
          %v663 = vld [vmem:[#allocation4 + $0x20] sm:$0xff]
          %v664 = vld [vmem:[#allocation4 + $0x28] sm:$0xff]
          %v665 = vld [vmem:[#allocation4 + $0x30] sm:$0xff]
          %v666 = vld [vmem:[#allocation4 + $0x38] sm:$0xff]
          %667 = vst [vmem:[#allocation6] sm:$0xff] %v659
          %668 = vst [vmem:[#allocation6 + $0x8] sm:$0xff] %v660
          %669 = vst [vmem:[#allocation6 + $0x10] sm:$0xff] %v661
          %670 = vst [vmem:[#allocation6 + $0x18] sm:$0xff] %v662
          %671 = vst [vmem:[#allocation6 + $0x20] sm:$0xff] %v663
          %672 = vst [vmem:[#allocation6 + $0x28] sm:$0xff] %v664
          %673 = vst [vmem:[#allocation6 + $0x30] sm:$0xff] %v665
          %674 = vst [vmem:[#allocation6 + $0x38] sm:$0xff] %v666
          %v675 = vmax.f32 %v524, 0.0
          %v676 = vmax.f32 %v525, 0.0
          %v677 = vmax.f32 %v526, 0.0
          %v678 = vmax.f32 %v527, 0.0
          %v679 = vmax.f32 %v528, 0.0
          %v680 = vmax.f32 %v529, 0.0
          %v681 = vmax.f32 %v530, 0.0
          %v682 = vmax.f32 %v531, 0.0
          %v683 = vpack.c.bf16 %v675, %v675
          %v684 = vpack.c.bf16 %v676, %v676
          %v685 = vpack.c.bf16 %v677, %v677
          %v686 = vpack.c.bf16 %v678, %v678
          %v687 = vpack.c.bf16 %v679, %v679
          %v688 = vpack.c.bf16 %v680, %v680
          %v689 = vpack.c.bf16 %v681, %v681
          %v690 = vpack.c.bf16 %v682, %v682
          %691 = vst [vmem:[#allocation3] sm:$0xf] %v683
          %692 = vst [vmem:[#allocation3 + $0x4] sm:$0xf] %v684
          %693 = vst [vmem:[#allocation3 + $0x8] sm:$0xf] %v685
          %694 = vst [vmem:[#allocation3 + $0xc] sm:$0xf] %v686
          %695 = vst [vmem:[#allocation3 + $0x10] sm:$0xf] %v687
          %696 = vst [vmem:[#allocation3 + $0x14] sm:$0xf] %v688
          %697 = vst [vmem:[#allocation3 + $0x18] sm:$0xf] %v689
          %698 = vst [vmem:[#allocation3 + $0x1c] sm:$0xf] %v690
        $region86: #{_lambda_.11} parent=27 // pred_fallthru
          _
        %p699 = scmp.eq.s32.totalorder %s18, 14
        // Predicated region
        $region87: #{_lambda_.11} parent=27 // pred_check
          %p700 = pneg %p699
        $region88: #{_lambda_.11} parent=27 // pred_check_branch
          %702 = sbr.rel (%p700) target = $region90
        $region89: #{_lambda_.11} parent=27 // pred_region
          %703 = vst [vmem:[%s4] sm:$0xff] %v524
          %704 = vst [vmem:[%s4 + $0x8] sm:$0xff] %v525
          %705 = vst [vmem:[%s4 + $0x10] sm:$0xff] %v526
          %706 = vst [vmem:[%s4 + $0x18] sm:$0xff] %v527
          %707 = vst [vmem:[%s4 + $0x20] sm:$0xff] %v528
          %708 = vst [vmem:[%s4 + $0x28] sm:$0xff] %v529
          %709 = vst [vmem:[%s4 + $0x30] sm:$0xff] %v530
          %710 = vst [vmem:[%s4 + $0x38] sm:$0xff] %v531
        $region90: #{_lambda_.11} parent=27 // pred_fallthru
          _
        %s711 = scalar_lea.vmem [#allocation3], 32
        %v712 = vld [vmem:[%s711] sm:$0xf]
        %v713 = vld [vmem:[%s711 + $0x4] sm:$0xf]
        %v714 = vld [vmem:[%s711 + $0x8] sm:$0xf]
        %v715 = vld [vmem:[%s711 + $0xc] sm:$0xf]
        %v716 = vld [vmem:[%s711 + $0x10] sm:$0xf]
        %v717 = vld [vmem:[%s711 + $0x14] sm:$0xf]
        %v718 = vld [vmem:[%s711 + $0x18] sm:$0xf]
        %v719 = vld [vmem:[%s711 + $0x1c] sm:$0xf]
        %v728 = vunpack.c.l.b16 %v712
        %v729 = vunpack.c.l.b16 %v713
        %v730 = vunpack.c.l.b16 %v714
        %v731 = vunpack.c.l.b16 %v715
        %v732 = vunpack.c.l.b16 %v716
        %v733 = vunpack.c.l.b16 %v717
        %v734 = vunpack.c.l.b16 %v718
        %v735 = vunpack.c.l.b16 %v719
        %v736 = vpack.c.b16 %v729, %v728
        %v737 = vpack.c.b16 %v731, %v730
        %v738 = vpack.c.b16 %v733, %v732
        %v739 = vpack.c.b16 %v735, %v734
        %744 = vmatpush.bf16.msra.mxu0 %v379
        %745 = vmatpush.bf16.msra.mxu0 %v377
        %746 = vmatpush.bf16.msra.mxu0 %v375
        %747 = vmatpush.bf16.msra.mxu0 %v373
        %748 = vmatpush.bf16.msra.mxu0 %v371
        %749 = vmatpush.bf16.msra.mxu0 %v369
        %750 = vmatpush.bf16.msra.mxu0 %v367
        %751 = vmatpush.bf16.msra.mxu0 %v365
        %752 = vmatmul.bf16.gmra.mxu0 %v736
        %v753 = vpop.f32.mrf.mxu0
        %v754 = vadd.f32 0.0, %v753
        %v755 = vpop.f32.mrf.mxu0
        %v756 = vadd.f32 0.0, %v755
        %757 = vmatmul.bf16.gmra.mxu0 %v737
        %v758 = vpop.f32.mrf.mxu0
        %v759 = vadd.f32 0.0, %v758
        %v760 = vpop.f32.mrf.mxu0
        %v761 = vadd.f32 0.0, %v760
        %762 = vmatmul.bf16.gmra.mxu0 %v738
        %v763 = vpop.f32.mrf.mxu0
        %v764 = vadd.f32 0.0, %v763
        %v765 = vpop.f32.mrf.mxu0
        %v766 = vadd.f32 0.0, %v765
        %767 = vmatmul.bf16.gmra.mxu0 %v739
        %v768 = vpop.f32.mrf.mxu0
        %v769 = vadd.f32 0.0, %v768
        %v770 = vpop.f32.mrf.mxu0
        %v771 = vadd.f32 0.0, %v770
        %772 = vdwg.mxu0
        %773 = vmatpush.bf16.msra.mxu0 %v380
        %774 = vmatpush.bf16.msra.mxu0 %v378
        %775 = vmatpush.bf16.msra.mxu0 %v376
        %776 = vmatpush.bf16.msra.mxu0 %v374
        %777 = vmatpush.bf16.msra.mxu0 %v372
        %778 = vmatpush.bf16.msra.mxu0 %v370
        %779 = vmatpush.bf16.msra.mxu0 %v368
        %780 = vmatpush.bf16.msra.mxu0 %v366
        %781 = vmatmul.bf16.gmra.mxu0 %v736
        %v782 = vpop.f32.mrf.mxu0
        %v783 = vadd.f32 0.0, %v782
        %v784 = vpop.f32.mrf.mxu0
        %v785 = vadd.f32 0.0, %v784
        %786 = vmatmul.bf16.gmra.mxu0 %v737
        %v787 = vpop.f32.mrf.mxu0
        %v788 = vadd.f32 0.0, %v787
        %v789 = vpop.f32.mrf.mxu0
        %v790 = vadd.f32 0.0, %v789
        %791 = vmatmul.bf16.gmra.mxu0 %v738
        %v792 = vpop.f32.mrf.mxu0
        %v793 = vadd.f32 0.0, %v792
        %v794 = vpop.f32.mrf.mxu0
        %v795 = vadd.f32 0.0, %v794
        %796 = vmatmul.bf16.gmra.mxu0 %v739
        %v797 = vpop.f32.mrf.mxu0
        %v798 = vadd.f32 0.0, %v797
        %v799 = vpop.f32.mrf.mxu0
        %v800 = vadd.f32 0.0, %v799
        %801 = vdwg.mxu0
        %v802 = vpack.c.bf16 %v756, %v754
        %v803 = vpack.c.bf16 %v761, %v759
        %v804 = vpack.c.bf16 %v766, %v764
        %v805 = vpack.c.bf16 %v771, %v769
        %806 = vmatpush.bf16.msra.mxu0 0
        %807 = vmatpush.bf16.msra.mxu0 0
        %808 = vmatpush.bf16.msra.mxu0 0
        %809 = vmatpush.bf16.msra.mxu0 0
        %810 = vmatpush.bf16.msra.mxu0 %v805
        %811 = vmatpush.bf16.msra.mxu0 %v804
        %812 = vmatpush.bf16.msra.mxu0 %v803
        %813 = vmatpush.bf16.msra.mxu0 %v802
        %814 = vmatmul.bf16.gmra.mxu0 %v481
        %v815 = vpop.f32.mrf.mxu0
        %v816 = vadd.f32 %v783, %v815
        %v817 = vpop.f32.mrf.mxu0
        %v818 = vadd.f32 %v785, %v817
        %819 = vmatmul.bf16.gmra.mxu0 %v484
        %v820 = vpop.f32.mrf.mxu0
        %v821 = vadd.f32 %v788, %v820
        %v822 = vpop.f32.mrf.mxu0
        %v823 = vadd.f32 %v790, %v822
        %824 = vmatmul.bf16.gmra.mxu0 %v487
        %v825 = vpop.f32.mrf.mxu0
        %v826 = vadd.f32 %v793, %v825
        %v827 = vpop.f32.mrf.mxu0
        %v828 = vadd.f32 %v795, %v827
        %829 = vmatmul.bf16.gmra.mxu0 %v490
        %v830 = vpop.f32.mrf.mxu0
        %v831 = vadd.f32 %v798, %v830
        %v832 = vpop.f32.mrf.mxu0
        %v833 = vadd.f32 %v800, %v832
        %834 = vdwg.mxu0
        %v835 = vadd.f32 %v816, %v522
        %v836 = vadd.f32 %v818, %v522
        %v837 = vadd.f32 %v821, %v522
        %v838 = vadd.f32 %v823, %v522
        %v839 = vadd.f32 %v826, %v522
        %v840 = vadd.f32 %v828, %v522
        %v841 = vadd.f32 %v831, %v522
        %v842 = vadd.f32 %v833, %v522
        // Predicated region
        $region91: #{_lambda_.11} parent=27 // pred_check
          %p843 = pneg %p172
        $region92: #{_lambda_.11} parent=27 // pred_check_branch
          %845 = sbr.rel (%p843) target = $region94
        $region93: #{_lambda_.11} parent=27 // pred_region
          %v846 = vmax.f32 %v835, 0.0
          %v847 = vmax.f32 %v836, 0.0
          %v848 = vmax.f32 %v837, 0.0
          %v849 = vmax.f32 %v838, 0.0
          %v850 = vmax.f32 %v839, 0.0
          %v851 = vmax.f32 %v840, 0.0
          %v852 = vmax.f32 %v841, 0.0
          %v853 = vmax.f32 %v842, 0.0
          %s854 = scalar_lea.vmem [#allocation4], 64
          %855 = vst [vmem:[%s854] sm:$0xff] %v846
          %856 = vst [vmem:[%s854 + $0x8] sm:$0xff] %v847
          %857 = vst [vmem:[%s854 + $0x10] sm:$0xff] %v848
          %858 = vst [vmem:[%s854 + $0x18] sm:$0xff] %v849
          %859 = vst [vmem:[%s854 + $0x20] sm:$0xff] %v850
          %860 = vst [vmem:[%s854 + $0x28] sm:$0xff] %v851
          %861 = vst [vmem:[%s854 + $0x30] sm:$0xff] %v852
          %862 = vst [vmem:[%s854 + $0x38] sm:$0xff] %v853
          %v863 = vpack.c.bf16 %v846, %v846
          %v864 = vpack.c.bf16 %v847, %v847
          %v865 = vpack.c.bf16 %v848, %v848
          %v866 = vpack.c.bf16 %v849, %v849
          %v867 = vpack.c.bf16 %v850, %v850
          %v868 = vpack.c.bf16 %v851, %v851
          %v869 = vpack.c.bf16 %v852, %v852
          %v870 = vpack.c.bf16 %v853, %v853
          %871 = vst [vmem:[%s711] sm:$0xf] %v863
          %872 = vst [vmem:[%s711 + $0x4] sm:$0xf] %v864
          %873 = vst [vmem:[%s711 + $0x8] sm:$0xf] %v865
          %874 = vst [vmem:[%s711 + $0xc] sm:$0xf] %v866
          %875 = vst [vmem:[%s711 + $0x10] sm:$0xf] %v867
          %876 = vst [vmem:[%s711 + $0x14] sm:$0xf] %v868
          %877 = vst [vmem:[%s711 + $0x18] sm:$0xf] %v869
          %878 = vst [vmem:[%s711 + $0x1c] sm:$0xf] %v870
        $region94: #{_lambda_.11} parent=27 // pred_fallthru
          _
        // Predicated region
        $region95: #{_lambda_.11} parent=27 // pred_check
          _
        $region96: #{_lambda_.11} parent=27 // pred_check_branch
          %880 = sbr.rel (%p567) target = $region98
        $region97: #{_lambda_.11} parent=27 // pred_region
          %v881 = vmax.f32 %v835, 0.0
          %v882 = vmax.f32 %v836, 0.0
          %v883 = vmax.f32 %v837, 0.0
          %v884 = vmax.f32 %v838, 0.0
          %v885 = vmax.f32 %v839, 0.0
          %v886 = vmax.f32 %v840, 0.0
          %v887 = vmax.f32 %v841, 0.0
          %v888 = vmax.f32 %v842, 0.0
          %v889 = vpack.c.bf16 %v881, %v881
          %v890 = vpack.c.bf16 %v882, %v882
          %v891 = vpack.c.bf16 %v883, %v883
          %v892 = vpack.c.bf16 %v884, %v884
          %v893 = vpack.c.bf16 %v885, %v885
          %v894 = vpack.c.bf16 %v886, %v886
          %v895 = vpack.c.bf16 %v887, %v887
          %v896 = vpack.c.bf16 %v888, %v888
          %897 = vst [vmem:[%s711] sm:$0xf] %v889
          %898 = vst [vmem:[%s711 + $0x4] sm:$0xf] %v890
          %899 = vst [vmem:[%s711 + $0x8] sm:$0xf] %v891
          %900 = vst [vmem:[%s711 + $0xc] sm:$0xf] %v892
          %901 = vst [vmem:[%s711 + $0x10] sm:$0xf] %v893
          %902 = vst [vmem:[%s711 + $0x14] sm:$0xf] %v894
          %903 = vst [vmem:[%s711 + $0x18] sm:$0xf] %v895
          %904 = vst [vmem:[%s711 + $0x1c] sm:$0xf] %v896
        $region98: #{_lambda_.11} parent=27 // pred_fallthru
          _
        // Predicated region
        $region99: #{_lambda_.11} parent=27 // pred_check
          _
        $region100: #{_lambda_.11} parent=27 // pred_check_branch
          %906 = sbr.rel (%p596) target = $region102
        $region101: #{_lambda_.11} parent=27 // pred_region
          %s907 = scalar_lea.vmem [#allocation4], 64
          %v908 = vld [vmem:[%s907] sm:$0xff]
          %v909 = vld [vmem:[%s907 + $0x8] sm:$0xff]
          %v910 = vld [vmem:[%s907 + $0x10] sm:$0xff]
          %v911 = vld [vmem:[%s907 + $0x18] sm:$0xff]
          %v912 = vld [vmem:[%s907 + $0x20] sm:$0xff]
          %v913 = vld [vmem:[%s907 + $0x28] sm:$0xff]
          %v914 = vld [vmem:[%s907 + $0x30] sm:$0xff]
          %v915 = vld [vmem:[%s907 + $0x38] sm:$0xff]
          %v916 = vmax.f32 %v835, 0.0
          %v917 = vmax.f32 %v836, 0.0
          %v918 = vmax.f32 %v837, 0.0
          %v919 = vmax.f32 %v838, 0.0
          %v920 = vmax.f32 %v839, 0.0
          %v921 = vmax.f32 %v840, 0.0
          %v922 = vmax.f32 %v841, 0.0
          %v923 = vmax.f32 %v842, 0.0
          %v924 = vadd.f32 %v908, %v916
          %v925 = vadd.f32 %v909, %v917
          %v926 = vadd.f32 %v910, %v918
          %v927 = vadd.f32 %v911, %v919
          %v928 = vadd.f32 %v912, %v920
          %v929 = vadd.f32 %v913, %v921
          %v930 = vadd.f32 %v914, %v922
          %v931 = vadd.f32 %v915, %v923
          %v932 = vmul.f32 %v924, 0.5
          %v933 = vmul.f32 %v925, 0.5
          %v934 = vmul.f32 %v926, 0.5
          %v935 = vmul.f32 %v927, 0.5
          %v936 = vmul.f32 %v928, 0.5
          %v937 = vmul.f32 %v929, 0.5
          %v938 = vmul.f32 %v930, 0.5
          %v939 = vmul.f32 %v931, 0.5
          %940 = vst [vmem:[%s907] sm:$0xff] %v932
          %941 = vst [vmem:[%s907 + $0x8] sm:$0xff] %v933
          %942 = vst [vmem:[%s907 + $0x10] sm:$0xff] %v934
          %943 = vst [vmem:[%s907 + $0x18] sm:$0xff] %v935
          %944 = vst [vmem:[%s907 + $0x20] sm:$0xff] %v936
          %945 = vst [vmem:[%s907 + $0x28] sm:$0xff] %v937
          %946 = vst [vmem:[%s907 + $0x30] sm:$0xff] %v938
          %947 = vst [vmem:[%s907 + $0x38] sm:$0xff] %v939
          %v948 = vpack.c.bf16 %v932, %v932
          %v949 = vpack.c.bf16 %v933, %v933
          %v950 = vpack.c.bf16 %v934, %v934
          %v951 = vpack.c.bf16 %v935, %v935
          %v952 = vpack.c.bf16 %v936, %v936
          %v953 = vpack.c.bf16 %v937, %v937
          %v954 = vpack.c.bf16 %v938, %v938
          %v955 = vpack.c.bf16 %v939, %v939
          %956 = vst [vmem:[%s711] sm:$0xf] %v948
          %957 = vst [vmem:[%s711 + $0x4] sm:$0xf] %v949
          %958 = vst [vmem:[%s711 + $0x8] sm:$0xf] %v950
          %959 = vst [vmem:[%s711 + $0xc] sm:$0xf] %v951
          %960 = vst [vmem:[%s711 + $0x10] sm:$0xf] %v952
          %961 = vst [vmem:[%s711 + $0x14] sm:$0xf] %v953
          %962 = vst [vmem:[%s711 + $0x18] sm:$0xf] %v954
          %963 = vst [vmem:[%s711 + $0x1c] sm:$0xf] %v955
        $region102: #{_lambda_.11} parent=27 // pred_fallthru
          _
        // Predicated region
        $region103: #{_lambda_.11} parent=27 // pred_check
          %p964 = pneg %p190
        $region104: #{_lambda_.11} parent=27 // pred_check_branch
          %966 = sbr.rel (%p964) target = $region106
        $region105: #{_lambda_.11} parent=27 // pred_region
          %s967 = scalar_lea.vmem [#allocation4], 64
          %v968 = vld [vmem:[%s967] sm:$0xff]
          %v969 = vld [vmem:[%s967 + $0x8] sm:$0xff]
          %v970 = vld [vmem:[%s967 + $0x10] sm:$0xff]
          %v971 = vld [vmem:[%s967 + $0x18] sm:$0xff]
          %v972 = vld [vmem:[%s967 + $0x20] sm:$0xff]
          %v973 = vld [vmem:[%s967 + $0x28] sm:$0xff]
          %v974 = vld [vmem:[%s967 + $0x30] sm:$0xff]
          %v975 = vld [vmem:[%s967 + $0x38] sm:$0xff]
          %s976 = scalar_lea.vmem [#allocation6], 64
          %977 = vst [vmem:[%s976] sm:$0xff] %v968
          %978 = vst [vmem:[%s976 + $0x8] sm:$0xff] %v969
          %979 = vst [vmem:[%s976 + $0x10] sm:$0xff] %v970
          %980 = vst [vmem:[%s976 + $0x18] sm:$0xff] %v971
          %981 = vst [vmem:[%s976 + $0x20] sm:$0xff] %v972
          %982 = vst [vmem:[%s976 + $0x28] sm:$0xff] %v973
          %983 = vst [vmem:[%s976 + $0x30] sm:$0xff] %v974
          %984 = vst [vmem:[%s976 + $0x38] sm:$0xff] %v975
          %v985 = vmax.f32 %v835, 0.0
          %v986 = vmax.f32 %v836, 0.0
          %v987 = vmax.f32 %v837, 0.0
          %v988 = vmax.f32 %v838, 0.0
          %v989 = vmax.f32 %v839, 0.0
          %v990 = vmax.f32 %v840, 0.0
          %v991 = vmax.f32 %v841, 0.0
          %v992 = vmax.f32 %v842, 0.0
          %v993 = vpack.c.bf16 %v985, %v985
          %v994 = vpack.c.bf16 %v986, %v986
          %v995 = vpack.c.bf16 %v987, %v987
          %v996 = vpack.c.bf16 %v988, %v988
          %v997 = vpack.c.bf16 %v989, %v989
          %v998 = vpack.c.bf16 %v990, %v990
          %v999 = vpack.c.bf16 %v991, %v991
          %v1000 = vpack.c.bf16 %v992, %v992
          %1001 = vst [vmem:[%s711] sm:$0xf] %v993
          %1002 = vst [vmem:[%s711 + $0x4] sm:$0xf] %v994
          %1003 = vst [vmem:[%s711 + $0x8] sm:$0xf] %v995
          %1004 = vst [vmem:[%s711 + $0xc] sm:$0xf] %v996
          %1005 = vst [vmem:[%s711 + $0x10] sm:$0xf] %v997
          %1006 = vst [vmem:[%s711 + $0x14] sm:$0xf] %v998
          %1007 = vst [vmem:[%s711 + $0x18] sm:$0xf] %v999
          %1008 = vst [vmem:[%s711 + $0x1c] sm:$0xf] %v1000
        $region106: #{_lambda_.11} parent=27 // pred_fallthru
          _
        // Predicated region
        $region107: #{_lambda_.11} parent=27 // pred_check
          %p1009 = pneg %p699
        $region108: #{_lambda_.11} parent=27 // pred_check_branch
          %1011 = sbr.rel (%p1009) target = $region110
        $region109: #{_lambda_.11} parent=27 // pred_region
          %s1012 = scalar_lea.vmem %s4, 64
          %1013 = vst [vmem:[%s1012] sm:$0xff] %v835
          %1014 = vst [vmem:[%s1012 + $0x8] sm:$0xff] %v836
          %1015 = vst [vmem:[%s1012 + $0x10] sm:$0xff] %v837
          %1016 = vst [vmem:[%s1012 + $0x18] sm:$0xff] %v838
          %1017 = vst [vmem:[%s1012 + $0x20] sm:$0xff] %v839
          %1018 = vst [vmem:[%s1012 + $0x28] sm:$0xff] %v840
          %1019 = vst [vmem:[%s1012 + $0x30] sm:$0xff] %v841
          %1020 = vst [vmem:[%s1012 + $0x38] sm:$0xff] %v842
        $region110: #{_lambda_.11} parent=27 // pred_fallthru
          _
        // Predicated region
        $region111: #{_lambda_.11} parent=27 // pred_check
          %p1021 = pneg %p83
        $region112: #{_lambda_.11} parent=27 // pred_check_branch
          %1023 = sbr.rel (%p1021) target = $region114
        $region113: #{_lambda_.11} parent=27 // pred_region
          _
        $region114: #{_lambda_.11} parent=27 // pred_fallthru
          _
        // Predicated region
        $region115: #{_lambda_.11} parent=27 // pred_check
          %p1024 = pneg %p104
        $region116: #{_lambda_.11} parent=27 // pred_check_branch
          %1026 = sbr.rel (%p1024) target = $region118
        $region117: #{_lambda_.11} parent=27 // pred_region
          %1028 = vsyncadd [#allocation7], 0
          %s1029 = sshll.u32 [#allocation6], 4
          %s1030 = int_to_ptr.vmem [resolvable:$true] %s1029
          %s1031 = sshll.u32 %s5, 4
          %s1032 = int_to_ptr.hbm [resolvable:$true] %s1031
          %1037 = dma.vmem_to_hbm [thread:$0]  %s1030, 2048, %s1032, [#allocation7], 128, 128, 8
        $region118: #{_lambda_.11} parent=27 // pred_fallthru
          _
        // Predicated region
        $region119: #{_lambda_.11} parent=27 // pred_check
          %p1038 = pneg %p83
        $region120: #{_lambda_.11} parent=27 // pred_check_branch
          %1040 = sbr.rel (%p1038) target = $region122
        $region121: #{_lambda_.11} parent=27 // pred_region
          _
        $region122: #{_lambda_.11} parent=27 // pred_fallthru
          _
        // Predicated region
        $region123: #{_lambda_.11} parent=27 // pred_check
          %p1041 = pneg %p104
        $region124: #{_lambda_.11} parent=27 // pred_check_branch
          %1043 = sbr.rel (%p1041) target = $region126
        $region125: #{_lambda_.11} parent=27 // pred_region
          %1045 = dma.done [#allocation7], 2048
        $region126: #{_lambda_.11} parent=27 // pred_fallthru
          _
      $region28: #{_lambda_.11} parent=5 // pred_fallthru
        _
      %p1046 = scmp.le.s32.totalorder 2, %s13
      // Predicated region
      $region127: #{_lambda_.11} parent=5 // pred_check
        %p1047 = pneg %p1046
      $region128: #{_lambda_.11} parent=5 // pred_check_branch
        %1049 = sbr.rel (%p1047) target = $region130
      $region129: #{_lambda_.11} parent=5 // pred_region
        %s1050 = ssub.s32 %s13, 2
      $region130: #{_lambda_.11} parent=5 // pred_fallthru
        _
    $region6: #{_lambda_.11} parent=1 // loop_footer
      %s17 = sadd.s32 1, %s13
    $region7: #{_lambda_.11} parent=1 // loop_footer_branch
      %12 = sbr.rel target = $region3
    $region8: #{_lambda_.11} parent=1 // loop_exit
      _
    %1051 = vsyncpa [#allocation7], 1
    %s1052 = scalar_lea.sflag [#allocation7], 1
    %1053 = vsyncpa %s1052, 1
  %1054 = vsyncmov [#allocation5]
  %s1055 = vpop.sfrf %1054
  %p1056 = scmp.eq.s32.totalorder %s1055, 0
  %p1057 = pneg %p1056
  %1059 = shalt.err (%p1057)
  %s1060 = scalar_lea.sflag [#allocation5], 1
  %1061 = vsyncmov %s1060
  %s1062 = vpop.sfrf %1061
  %p1063 = scmp.eq.s32.totalorder %s1062, 0
  %p1064 = pneg %p1063
  %1066 = shalt.err (%p1064)

</llo_original>
